<compile_context>
chip_gen: v6e
topology: v6e:2x2x1
jax: 0.10.0
libtpu: 0.0.40
codegen_flags: <defaults>
</compile_context>

<pallas_src>
from functools import partial

import jax
import jax.numpy as jnp
from jax.experimental import pallas as pl
from jax.experimental.pallas import tpu as pltpu


VMEM_LIMIT = 8 * 1024 * 1024   # right-sized scoped-VMEM budget (largest block ~3 MB)


# ----------------------------------------------------------------------------
# Pallas kernels
# ----------------------------------------------------------------------------
def matmul_affine_kernel(x_ref, w_ref, shift_ref, o_ref, *, apply_relu):
    """o = relu(x @ w + shift); bf16 operands, f32 MXU accumulate, f32 epilogue."""
    acc = jnp.dot(x_ref[...], w_ref[...], preferred_element_type=jnp.float32)
    y = acc + shift_ref[...]
    if apply_relu:
        y = jnp.maximum(y, 0.0)
    o_ref[...] = y.astype(o_ref.dtype)


def max_tree_kernel(x_ref, o_ref, *, n_win):
    """Elementwise VPU max-tree over the leading window axis (lane-dense rows)."""
    m = x_ref[0]
    for i in range(1, n_win):
        m = jnp.maximum(m, x_ref[i])
    o_ref[...] = m


def conv2_tail_kernel(p2_ref, w2_ref, s2_ref, w3_ref, s3_ref, w4_ref, s4_ref,
                      w5_ref, s5_ref, wf1_ref, b1_ref, wf2_ref, b2_ref,
                      o_ref, pool_sc, *, batch, win):
    """Fused conv2 GEMM + maxpool2 + conv3/4/5 center-tap GEMMs + fc1 + fc2."""
    f32, bf16 = jnp.float32, jnp.bfloat16
    # conv2 (3x3x3, BN folded) as one GEMM on the im2col patches: (B*27,1728)x(1728,128)
    h = jnp.dot(p2_ref[...], w2_ref[...], preferred_element_type=f32) + s2_ref[...]
    h = jnp.maximum(h, 0.0)
    # MaxPool3d(3,3) on the 3^3 map: per-sample max over its 27 spatial rows.
    for b in range(batch):
        blk = h[b * win:(b + 1) * win, :]
        pool_sc[b:b + 1, :] = jnp.max(blk, axis=0, keepdims=True)
    z = pool_sc[0:batch, :].astype(bf16)
    # conv3/4/5 on a 1^3 map with padding=1 reduce to their center taps;
    # AdaptiveAvgPool3d((1,1,1)) and Dropout (eval) are identity.
    z = jnp.maximum(jnp.dot(z, w3_ref[...], preferred_element_type=f32) + s3_ref[...], 0.0).astype(bf16)
    z = jnp.maximum(jnp.dot(z, w4_ref[...], preferred_element_type=f32) + s4_ref[...], 0.0).astype(bf16)
    z = jnp.maximum(jnp.dot(z, w5_ref[...], preferred_element_type=f32) + s5_ref[...], 0.0).astype(bf16)
    z = jnp.maximum(jnp.dot(z, wf1_ref[...], preferred_element_type=f32) + b1_ref[...], 0.0).astype(bf16)
    o_ref[...] = (jnp.dot(z, wf2_ref[...], preferred_element_type=f32)
                  + b2_ref[...]).astype(o_ref.dtype)


# ----------------------------------------------------------------------------
# Pallas wrappers
# ----------------------------------------------------------------------------
def gemm_affine(x, w, shift, *, relu, out_dtype, nblocks=None, max_block_rows=4096):
    """x: (M, K) bf16, w: (K, N) bf16 (BN scale pre-folded), shift: (N,) f32."""
    M, K = x.shape
    N = w.shape[1]
    shift2 = shift.reshape(1, N).astype(jnp.float32)
    if nblocks is None:
        nblocks = pl.cdiv(M, max_block_rows)
    if nblocks <= 1:
        TM = M                                          # single full block
    else:
        TM = min(M, ((pl.cdiv(M, nblocks) + 7) // 8) * 8)  # 8-aligned even split
    grid = (pl.cdiv(M, TM),)
    return pl.pallas_call(
        partial(matmul_affine_kernel, apply_relu=relu),
        out_shape=jax.ShapeDtypeStruct((M, N), out_dtype),
        grid=grid,
        in_specs=[
            pl.BlockSpec((TM, K), lambda i: (i, 0)),
            pl.BlockSpec((K, N), lambda i: (0, 0)),
            pl.BlockSpec((1, N), lambda i: (0, 0)),
        ],
        out_specs=pl.BlockSpec((TM, N), lambda i: (i, 0)),
        compiler_params=pltpu.CompilerParams(
            dimension_semantics=("parallel",),
            vmem_limit_bytes=VMEM_LIMIT),
    )(x, w, shift2)


def maxpool3d_cl(x, k):
    """MaxPool3d(kernel=k, stride=k) on channels-last (B,D,H,W,C), lane-dense."""
    B, D, H, W, C = x.shape
    Do, Ho, Wo = D // k, H // k, W // k
    x = x[:, :Do * k, :Ho * k, :Wo * k, :]              # floor-mode crop
    taps = [x[:, dz::k, dy::k, dx::k, :]
            for dz in range(k) for dy in range(k) for dx in range(k)]
    stacked = jnp.stack(taps, axis=0)                   # (k^3, B, Do, Ho, Wo, C)
    flat = B * Do * Ho * Wo * C
    lanes = 128 if flat % 128 == 0 else C               # free row-major regroup to 128 lanes
    rows = flat // lanes
    stacked = stacked.reshape(k ** 3, rows, lanes)
    out = pl.pallas_call(
        partial(max_tree_kernel, n_win=k ** 3),
        out_shape=jax.ShapeDtypeStruct((rows, lanes), x.dtype),
        compiler_params=pltpu.CompilerParams(vmem_limit_bytes=VMEM_LIMIT),
    )(stacked)
    return out.reshape(B, Do, Ho, Wo, C)


# ----------------------------------------------------------------------------
# Glue: im2col (channels-last), BN folding, layers
# ----------------------------------------------------------------------------
def im2col3d_cl(x, k, stride, pad, k_pad=None):
    """(B,D,H,W,C) -> (B*Do*Ho*Wo, ntaps*C); column order (kd, kh, kw, Cin).

    If k_pad is given, zero taps are appended so the column count equals k_pad
    (built inside the same stack -> no extra pad copy of the big matrix).
    """
    if pad > 0:
        x = jnp.pad(x, ((0, 0), (pad, pad), (pad, pad), (pad, pad), (0, 0)))
    B, D, H, W, C = x.shape
    Do = (D - k) // stride + 1
    Ho = (H - k) // stride + 1
    Wo = (W - k) // stride + 1
    taps = [x[:, dz:dz + stride * Do:stride,
               dy:dy + stride * Ho:stride,
               dx:dx + stride * Wo:stride, :]
            for dz in range(k) for dy in range(k) for dx in range(k)]
    if k_pad is not None:
        extra = k_pad - k ** 3 * C
        assert extra >= 0 and extra % C == 0
        taps += [jnp.zeros_like(taps[0])] * (extra // C)
    p = jnp.stack(taps, axis=4)                         # (B,Do,Ho,Wo,ntaps,C)
    return p.reshape(B * Do * Ho * Wo, len(taps) * C), (Do, Ho, Wo)


def bn_fold(gamma, beta, mean, var, conv_bias, eps=1e-5):
    scale = gamma / jnp.sqrt(var + eps)
    shift = (conv_bias - mean) * scale + beta
    return scale, shift


def conv_bn_relu_cl(x, p, name, stride, pad):
    """Generic Conv3d+BN+ReLU (im2col + fused Pallas GEMM) — fallback path."""
    w = p[name + "_w"]                                   # (Cout, Cin, k, k, k) f32
    Cout, Cin, k = w.shape[0], w.shape[1], w.shape[2]
    B = x.shape[0]
    scale, shift = bn_fold(p[name + "_bn_g"], p[name + "_bn_b"],
                           p[name + "_bn_m"], p[name + "_bn_v"], p[name + "_b"])
    wmat = jnp.transpose(w, (2, 3, 4, 1, 0)).reshape(k ** 3 * Cin, Cout)
    wmat = (wmat * scale[None, :]).astype(jnp.bfloat16)  # fold BN scale in f32, then cast
    patches, (Do, Ho, Wo) = im2col3d_cl(x, k, stride, pad)
    out = gemm_affine(patches, wmat, shift, relu=True, out_dtype=jnp.bfloat16)
    return out.reshape(B, Do, Ho, Wo, Cout)


def conv1_gemm(x_cl, p):
    """conv1 (5^3, stride 2, Cin=1) + BN + ReLU as one lane-dense Pallas GEMM.

    K padded 125->128; two adjacent output voxels paired per GEMM row with a
    block-diagonal weight so the output is N=128 (unmasked stores); M split
    into 2 aligned blocks ("parallel" -> both v7x TensorCores engage).
    """
    w = p["conv1_w"]                                     # (64, 1, 5, 5, 5)
    Cout, k = w.shape[0], w.shape[2]
    B = x_cl.shape[0]
    scale, shift = bn_fold(p["conv1_bn_g"], p["conv1_bn_b"],
                           p["conv1_bn_m"], p["conv1_bn_v"], p["conv1_b"])
    wmat = jnp.transpose(w, (2, 3, 4, 1, 0)).reshape(k ** 3, Cout) * scale[None, :]
    wmat = jnp.concatenate(
        [wmat, jnp.zeros((128 - k ** 3, Cout), jnp.float32)], axis=0)   # K: 125 -> 128
    patches, (Do, Ho, Wo) = im2col3d_cl(x_cl, k, stride=2, pad=0, k_pad=128)
    M = patches.shape[0]
    if M % 2 == 0:
        z = jnp.zeros_like(wmat)
        wpair = jnp.concatenate(
            [jnp.concatenate([wmat, z], axis=1),
             jnp.concatenate([z, wmat], axis=1)], axis=0).astype(jnp.bfloat16)  # (256,128)
        spair = jnp.concatenate([shift, shift], axis=0)
        out = gemm_affine(patches.reshape(M // 2, 256), wpair, spair,
                          relu=True, out_dtype=jnp.bfloat16, nblocks=2)
        out = out.reshape(M, Cout)
    else:  # odd row count: plain (M,128)x(128,64) GEMM
        out = gemm_affine(patches, wmat.astype(jnp.bfloat16), shift,
                          relu=True, out_dtype=jnp.bfloat16, nblocks=2)
    return out.reshape(B, Do, Ho, Wo, Cout)


def fused_conv2_tail(p, pooled):
    """pooled: (B,5,5,5,64) bf16 -> logits (B, num_classes) f32, ONE pallas_call."""
    B = pooled.shape[0]
    nc = p["fc2_w"].shape[0]

    s2c, shift2 = bn_fold(p["conv2_bn_g"], p["conv2_bn_b"],
                          p["conv2_bn_m"], p["conv2_bn_v"], p["conv2_b"])
    w2 = p["conv2_w"]                                    # (128, 64, 3, 3, 3)
    w2mat = jnp.transpose(w2, (2, 3, 4, 1, 0)).reshape(27 * 64, 128)
    w2mat = (w2mat * s2c[None, :]).astype(jnp.bfloat16)
    s2 = shift2.reshape(1, -1).astype(jnp.float32)

    def conv_center(name):
        w = p[name + "_w"]                               # 1^3 map + pad=1 -> center tap only
        scale, shift = bn_fold(p[name + "_bn_g"], p[name + "_bn_b"],
                               p[name + "_bn_m"], p[name + "_bn_v"], p[name + "_b"])
        wm = (w[:, :, 1, 1, 1].T * scale[None, :]).astype(jnp.bfloat16)   # (Cin, Cout)
        return wm, shift.reshape(1, -1).astype(jnp.float32)

    w3, s3 = conv_center("conv3")
    w4, s4 = conv_center("conv4")
    w5, s5 = conv_center("conv5")
    wf1 = p["fc1_w"].T.astype(jnp.bfloat16)
    b1 = p["fc1_b"].reshape(1, -1).astype(jnp.float32)
    wf2 = p["fc2_w"].T.astype(jnp.bfloat16)
    b2 = p["fc2_b"].reshape(1, -1).astype(jnp.float32)

    # conv2 im2col on the tiny (32 KB) pooled tensor (XLA side).
    patches, (d2, h2, w2o) = im2col3d_cl(pooled, 3, stride=1, pad=0)
    assert (d2, h2, w2o) == (3, 3, 3) and patches.shape == (B * 27, 27 * 64)

    return pl.pallas_call(
        partial(conv2_tail_kernel, batch=B, win=27),
        out_shape=jax.ShapeDtypeStruct((B, nc), jnp.float32),
        scratch_shapes=[pltpu.VMEM((max(B, 8), 128), jnp.float32)],
        compiler_params=pltpu.CompilerParams(vmem_limit_bytes=VMEM_LIMIT),
    )(patches, w2mat, s2, w3, s3, w4, s4, w5, s5, wf1, b1, wf2, b2)


def mrinet_forward(params, x):
    B = x.shape[0]
    # NCDHW -> channels-last bf16 (Cin=1, so the transpose is a free reshape).
    x = jnp.transpose(x, (0, 2, 3, 4, 1)).astype(jnp.bfloat16)
    x = conv1_gemm(x, params)                  # (B, 15, 15, 15, 64) for 33^3 input
    x = maxpool3d_cl(x, 3)                     # (B, 5, 5, 5, 64)

    if x.shape[1:4] == (5, 5, 5):
        # conv2 output is 3^3 and maxpool2 output is 1^3 -> conv2 GEMM, pool2,
        # conv3/4/5 center taps, fc1, fc2 all fuse into one Pallas call.
        return fused_conv2_tail(params, x)

    # General (larger-input) fallback: per-layer convs + pools + avg-pool + FCs.
    x = conv_bn_relu_cl(x, params, "conv2", stride=1, pad=0)
    x = maxpool3d_cl(x, 3)
    x = conv_bn_relu_cl(x, params, "conv3", stride=1, pad=1)
    x = conv_bn_relu_cl(x, params, "conv4", stride=1, pad=1)
    x = conv_bn_relu_cl(x, params, "conv5", stride=1, pad=1)
    feat = jnp.mean(x.astype(jnp.float32).reshape(B, -1, x.shape[-1]), axis=1)
    h = gemm_affine(feat.astype(jnp.bfloat16), params["fc1_w"].T.astype(jnp.bfloat16),
                    params["fc1_b"], relu=True, out_dtype=jnp.bfloat16)
    return gemm_affine(h, params["fc2_w"].T.astype(jnp.bfloat16),
                       params["fc2_b"], relu=False, out_dtype=jnp.float32)


# ----------------------------------------------------------------------------
# Deterministic parameter init (matches module's shapes; synthetic weights)
# ----------------------------------------------------------------------------
def init_params(key, num_classes=2):
    ks = iter(jax.random.split(key, 16))
    p = {}

    def add_conv(name, cout, cin, k):
        fan = cin * k ** 3
        p[name + "_w"] = (jax.random.normal(next(ks), (cout, cin, k, k, k), jnp.float32)
                          * (2.0 / fan) ** 0.5)
        p[name + "_b"] = jnp.zeros((cout,), jnp.float32)
        p[name + "_bn_g"] = jnp.ones((cout,), jnp.float32)
        p[name + "_bn_b"] = jnp.zeros((cout,), jnp.float32)
        p[name + "_bn_m"] = jnp.zeros((cout,), jnp.float32)
        p[name + "_bn_v"] = jnp.ones((cout,), jnp.float32)

    add_conv("conv1", 64, 1, 5)
    add_conv("conv2", 128, 64, 3)
    add_conv("conv3", 192, 128, 3)
    add_conv("conv4", 192, 192, 3)
    add_conv("conv5", 128, 192, 3)

    p["fc1_w"] = jax.random.normal(next(ks), (64, 128), jnp.float32) * (1.0 / 128) ** 0.5
    p["fc1_b"] = jnp.zeros((64,), jnp.float32)
    p["fc2_w"] = jax.random.normal(next(ks), (num_classes, 64), jnp.float32) * (1.0 / 64) ** 0.5
    p["fc2_b"] = jnp.zeros((num_classes,), jnp.float32)
    return p


# ----------------------------------------------------------------------------
if __name__ == "__main__":
    key = jax.random.PRNGKey(0)
    pkey, xkey = jax.random.split(key)

    params = init_params(pkey, num_classes=2)
    # Smallest spatial size that survives the downsampling stack: 33^3.
    x = jax.random.normal(xkey, (2, 1, 33, 33, 33), jnp.float32)

    fwd = jax.jit(mrinet_forward)
    logits = fwd(params, x)
    jax.block_until_ready(logits)

    assert logits.shape == (2, 2), logits.shape
    assert bool(jnp.all(jnp.isfinite(logits)))
    print("KERNEL_OK")
</pallas_src>

<mosaic_0001>
module attributes {stable_mosaic.version = 11 : i64} {
  func.func @matmul_affine_kernel(%arg0: i32, %arg1: memref<1688x256xbf16, #tpu.memory_space<vmem>>, %arg2: memref<256x128xbf16, #tpu.memory_space<vmem>>, %arg3: memref<1x128xf32, #tpu.memory_space<vmem>>, %arg4: memref<1688x128xbf16, #tpu.memory_space<vmem>>) attributes {dimension_semantics = [#tpu.dimension_semantics<parallel>], iteration_bounds = array<i64: 2>, scalar_prefetch = 0 : i64, scratch_operands = 0 : i64, tpu.core_type = #tpu.core_type<tc>, window_params = [{transform_indices = @transform_0, window_bounds = array<i64: 1688, 256>}, {pipeline_mode = #tpu.pipeline_mode<synchronous>, transform_indices = @transform_1, window_bounds = array<i64: 256, 128>}, {pipeline_mode = #tpu.pipeline_mode<synchronous>, transform_indices = @transform_2, window_bounds = array<i64: 1, 128>}, {transform_indices = @transform_3, window_bounds = array<i64: 1688, 128>}]} {
    %c0 = arith.constant 0 : index
    %c0_0 = arith.constant 0 : index
    %0 = vector.load %arg1[%c0, %c0_0] : memref<1688x256xbf16, #tpu.memory_space<vmem>>, vector<1688x256xbf16>
    %c0_1 = arith.constant 0 : index
    %c0_2 = arith.constant 0 : index
    %1 = vector.load %arg2[%c0_1, %c0_2] : memref<256x128xbf16, #tpu.memory_space<vmem>>, vector<256x128xbf16>
    %cst = arith.constant dense<0.000000e+00> : vector<1688x128xf32>
    %2 = tpu.matmul %0, %1, %cst {dimension_numbers = #tpu.dot_dimension_numbers<[1], [0], [0], [1], [0, 0, 1, 1], [], []>} : vector<1688x256xbf16>, vector<256x128xbf16>, vector<1688x128xf32> -> vector<1688x128xf32>
    %c0_3 = arith.constant 0 : index
    %c0_4 = arith.constant 0 : index
    %3 = vector.load %arg3[%c0_3, %c0_4] : memref<1x128xf32, #tpu.memory_space<vmem>>, vector<1x128xf32>
    %4 = vector.broadcast %3 : vector<1x128xf32> to vector<1688x128xf32>
    %5 = arith.addf %2, %4 : vector<1688x128xf32>
    %cst_5 = arith.constant 0.000000e+00 : f32
    %6 = vector.broadcast %cst_5 : f32 to vector<1688x128xf32>
    %7 = arith.maximumf %5, %6 : vector<1688x128xf32>
    %8 = arith.truncf %7 : vector<1688x128xf32> to vector<1688x128xbf16>
    %c0_6 = arith.constant 0 : index
    %c0_7 = arith.constant 0 : index
    %9 = vector.load %arg4[%c0_6, %c0_7] : memref<1688x128xbf16, #tpu.memory_space<vmem>>, vector<1688x128xbf16>
    tpu.vector_store %arg4[%c0_6, %c0_7], %8 {strides = array<i32>} : memref<1688x128xbf16, #tpu.memory_space<vmem>>, vector<1688x128xbf16>,
    return
  }
  func.func @transform_0(%arg0: i32) -> (i32, i32) {
    %c0_i32 = arith.constant 0 : i32
    %c0_i32_0 = arith.constant 0 : i32
    return %arg0, %c0_i32 : i32, i32
  }
  func.func @transform_1(%arg0: i32) -> (i32, i32) {
    %c0_i32 = arith.constant 0 : i32
    %c0_i32_0 = arith.constant 0 : i32
    %c0_i32_1 = arith.constant 0 : i32
    return %c0_i32, %c0_i32_0 : i32, i32
  }
  func.func @transform_2(%arg0: i32) -> (i32, i32) {
    %c0_i32 = arith.constant 0 : i32
    %c0_i32_0 = arith.constant 0 : i32
    %c0_i32_1 = arith.constant 0 : i32
    return %c0_i32, %c0_i32_0 : i32, i32
  }
  func.func @transform_3(%arg0: i32) -> (i32, i32) {
    %c0_i32 = arith.constant 0 : i32
    %c0_i32_0 = arith.constant 0 : i32
    return %arg0, %c0_i32 : i32, i32
  }
}

module attributes {stable_mosaic.version = 11 : i64} {
  func.func @max_tree_kernel(%arg0: memref<27x125x128xbf16, #tpu.memory_space<vmem>>, %arg1: memref<125x128xbf16, #tpu.memory_space<vmem>>) attributes {dimension_semantics = [], scalar_prefetch = 0 : i64, scratch_operands = 0 : i64, tpu.core_type = #tpu.core_type<tc>} {
    %c0 = arith.constant 0 : index
    %c0_0 = arith.constant 0 : index
    %c0_1 = arith.constant 0 : index
    %0 = vector.load %arg0[%c0, %c0_0, %c0_1] : memref<27x125x128xbf16, #tpu.memory_space<vmem>>, vector<1x125x128xbf16>
    %1 = vector.shape_cast %0 : vector<1x125x128xbf16> to vector<125x128xbf16>
    %c1 = arith.constant 1 : index
    %c0_2 = arith.constant 0 : index
    %c0_3 = arith.constant 0 : index
    %2 = vector.load %arg0[%c1, %c0_2, %c0_3] : memref<27x125x128xbf16, #tpu.memory_space<vmem>>, vector<1x125x128xbf16>
    %3 = vector.shape_cast %2 : vector<1x125x128xbf16> to vector<125x128xbf16>
    %4 = arith.maximumf %1, %3 : vector<125x128xbf16>
    %c2 = arith.constant 2 : index
    %c0_4 = arith.constant 0 : index
    %c0_5 = arith.constant 0 : index
    %5 = vector.load %arg0[%c2, %c0_4, %c0_5] : memref<27x125x128xbf16, #tpu.memory_space<vmem>>, vector<1x125x128xbf16>
    %6 = vector.shape_cast %5 : vector<1x125x128xbf16> to vector<125x128xbf16>
    %7 = arith.maximumf %4, %6 : vector<125x128xbf16>
    %c3 = arith.constant 3 : index
    %c0_6 = arith.constant 0 : index
    %c0_7 = arith.constant 0 : index
    %8 = vector.load %arg0[%c3, %c0_6, %c0_7] : memref<27x125x128xbf16, #tpu.memory_space<vmem>>, vector<1x125x128xbf16>
    %9 = vector.shape_cast %8 : vector<1x125x128xbf16> to vector<125x128xbf16>
    %10 = arith.maximumf %7, %9 : vector<125x128xbf16>
    %c4 = arith.constant 4 : index
    %c0_8 = arith.constant 0 : index
    %c0_9 = arith.constant 0 : index
    %11 = vector.load %arg0[%c4, %c0_8, %c0_9] : memref<27x125x128xbf16, #tpu.memory_space<vmem>>, vector<1x125x128xbf16>
    %12 = vector.shape_cast %11 : vector<1x125x128xbf16> to vector<125x128xbf16>
    %13 = arith.maximumf %10, %12 : vector<125x128xbf16>
    %c5 = arith.constant 5 : index
    %c0_10 = arith.constant 0 : index
    %c0_11 = arith.constant 0 : index
    %14 = vector.load %arg0[%c5, %c0_10, %c0_11] : memref<27x125x128xbf16, #tpu.memory_space<vmem>>, vector<1x125x128xbf16>
    %15 = vector.shape_cast %14 : vector<1x125x128xbf16> to vector<125x128xbf16>
    %16 = arith.maximumf %13, %15 : vector<125x128xbf16>
    %c6 = arith.constant 6 : index
    %c0_12 = arith.constant 0 : index
    %c0_13 = arith.constant 0 : index
    %17 = vector.load %arg0[%c6, %c0_12, %c0_13] : memref<27x125x128xbf16, #tpu.memory_space<vmem>>, vector<1x125x128xbf16>
    %18 = vector.shape_cast %17 : vector<1x125x128xbf16> to vector<125x128xbf16>
    %19 = arith.maximumf %16, %18 : vector<125x128xbf16>
    %c7 = arith.constant 7 : index
    %c0_14 = arith.constant 0 : index
    %c0_15 = arith.constant 0 : index
    %20 = vector.load %arg0[%c7, %c0_14, %c0_15] : memref<27x125x128xbf16, #tpu.memory_space<vmem>>, vector<1x125x128xbf16>
    %21 = vector.shape_cast %20 : vector<1x125x128xbf16> to vector<125x128xbf16>
    %22 = arith.maximumf %19, %21 : vector<125x128xbf16>
    %c8 = arith.constant 8 : index
    %c0_16 = arith.constant 0 : index
    %c0_17 = arith.constant 0 : index
    %23 = vector.load %arg0[%c8, %c0_16, %c0_17] : memref<27x125x128xbf16, #tpu.memory_space<vmem>>, vector<1x125x128xbf16>
    %24 = vector.shape_cast %23 : vector<1x125x128xbf16> to vector<125x128xbf16>
    %25 = arith.maximumf %22, %24 : vector<125x128xbf16>
    %c9 = arith.constant 9 : index
    %c0_18 = arith.constant 0 : index
    %c0_19 = arith.constant 0 : index
    %26 = vector.load %arg0[%c9, %c0_18, %c0_19] : memref<27x125x128xbf16, #tpu.memory_space<vmem>>, vector<1x125x128xbf16>
    %27 = vector.shape_cast %26 : vector<1x125x128xbf16> to vector<125x128xbf16>
    %28 = arith.maximumf %25, %27 : vector<125x128xbf16>
    %c10 = arith.constant 10 : index
    %c0_20 = arith.constant 0 : index
    %c0_21 = arith.constant 0 : index
    %29 = vector.load %arg0[%c10, %c0_20, %c0_21] : memref<27x125x128xbf16, #tpu.memory_space<vmem>>, vector<1x125x128xbf16>
    %30 = vector.shape_cast %29 : vector<1x125x128xbf16> to vector<125x128xbf16>
    %31 = arith.maximumf %28, %30 : vector<125x128xbf16>
    %c11 = arith.constant 11 : index
    %c0_22 = arith.constant 0 : index
    %c0_23 = arith.constant 0 : index
    %32 = vector.load %arg0[%c11, %c0_22, %c0_23] : memref<27x125x128xbf16, #tpu.memory_space<vmem>>, vector<1x125x128xbf16>
    %33 = vector.shape_cast %32 : vector<1x125x128xbf16> to vector<125x128xbf16>
    %34 = arith.maximumf %31, %33 : vector<125x128xbf16>
    %c12 = arith.constant 12 : index
    %c0_24 = arith.constant 0 : index
    %c0_25 = arith.constant 0 : index
    %35 = vector.load %arg0[%c12, %c0_24, %c0_25] : memref<27x125x128xbf16, #tpu.memory_space<vmem>>, vector<1x125x128xbf16>
    %36 = vector.shape_cast %35 : vector<1x125x128xbf16> to vector<125x128xbf16>
    %37 = arith.maximumf %34, %36 : vector<125x128xbf16>
    %c13 = arith.constant 13 : index
    %c0_26 = arith.constant 0 : index
    %c0_27 = arith.constant 0 : index
    %38 = vector.load %arg0[%c13, %c0_26, %c0_27] : memref<27x125x128xbf16, #tpu.memory_space<vmem>>, vector<1x125x128xbf16>
    %39 = vector.shape_cast %38 : vector<1x125x128xbf16> to vector<125x128xbf16>
    %40 = arith.maximumf %37, %39 : vector<125x128xbf16>
    %c14 = arith.constant 14 : index
    %c0_28 = arith.constant 0 : index
    %c0_29 = arith.constant 0 : index
    %41 = vector.load %arg0[%c14, %c0_28, %c0_29] : memref<27x125x128xbf16, #tpu.memory_space<vmem>>, vector<1x125x128xbf16>
    %42 = vector.shape_cast %41 : vector<1x125x128xbf16> to vector<125x128xbf16>
    %43 = arith.maximumf %40, %42 : vector<125x128xbf16>
    %c15 = arith.constant 15 : index
    %c0_30 = arith.constant 0 : index
    %c0_31 = arith.constant 0 : index
    %44 = vector.load %arg0[%c15, %c0_30, %c0_31] : memref<27x125x128xbf16, #tpu.memory_space<vmem>>, vector<1x125x128xbf16>
    %45 = vector.shape_cast %44 : vector<1x125x128xbf16> to vector<125x128xbf16>
    %46 = arith.maximumf %43, %45 : vector<125x128xbf16>
    %c16 = arith.constant 16 : index
    %c0_32 = arith.constant 0 : index
    %c0_33 = arith.constant 0 : index
    %47 = vector.load %arg0[%c16, %c0_32, %c0_33] : memref<27x125x128xbf16, #tpu.memory_space<vmem>>, vector<1x125x128xbf16>
    %48 = vector.shape_cast %47 : vector<1x125x128xbf16> to vector<125x128xbf16>
    %49 = arith.maximumf %46, %48 : vector<125x128xbf16>
    %c17 = arith.constant 17 : index
    %c0_34 = arith.constant 0 : index
    %c0_35 = arith.constant 0 : index
    %50 = vector.load %arg0[%c17, %c0_34, %c0_35] : memref<27x125x128xbf16, #tpu.memory_space<vmem>>, vector<1x125x128xbf16>
    %51 = vector.shape_cast %50 : vector<1x125x128xbf16> to vector<125x128xbf16>
    %52 = arith.maximumf %49, %51 : vector<125x128xbf16>
    %c18 = arith.constant 18 : index
    %c0_36 = arith.constant 0 : index
    %c0_37 = arith.constant 0 : index
    %53 = vector.load %arg0[%c18, %c0_36, %c0_37] : memref<27x125x128xbf16, #tpu.memory_space<vmem>>, vector<1x125x128xbf16>
    %54 = vector.shape_cast %53 : vector<1x125x128xbf16> to vector<125x128xbf16>
    %55 = arith.maximumf %52, %54 : vector<125x128xbf16>
    %c19 = arith.constant 19 : index
    %c0_38 = arith.constant 0 : index
    %c0_39 = arith.constant 0 : index
    %56 = vector.load %arg0[%c19, %c0_38, %c0_39] : memref<27x125x128xbf16, #tpu.memory_space<vmem>>, vector<1x125x128xbf16>
    %57 = vector.shape_cast %56 : vector<1x125x128xbf16> to vector<125x128xbf16>
    %58 = arith.maximumf %55, %57 : vector<125x128xbf16>
    %c20 = arith.constant 20 : index
    %c0_40 = arith.constant 0 : index
    %c0_41 = arith.constant 0 : index
    %59 = vector.load %arg0[%c20, %c0_40, %c0_41] : memref<27x125x128xbf16, #tpu.memory_space<vmem>>, vector<1x125x128xbf16>
    %60 = vector.shape_cast %59 : vector<1x125x128xbf16> to vector<125x128xbf16>
    %61 = arith.maximumf %58, %60 : vector<125x128xbf16>
    %c21 = arith.constant 21 : index
    %c0_42 = arith.constant 0 : index
    %c0_43 = arith.constant 0 : index
    %62 = vector.load %arg0[%c21, %c0_42, %c0_43] : memref<27x125x128xbf16, #tpu.memory_space<vmem>>, vector<1x125x128xbf16>
    %63 = vector.shape_cast %62 : vector<1x125x128xbf16> to vector<125x128xbf16>
    %64 = arith.maximumf %61, %63 : vector<125x128xbf16>
    %c22 = arith.constant 22 : index
    %c0_44 = arith.constant 0 : index
    %c0_45 = arith.constant 0 : index
    %65 = vector.load %arg0[%c22, %c0_44, %c0_45] : memref<27x125x128xbf16, #tpu.memory_space<vmem>>, vector<1x125x128xbf16>
    %66 = vector.shape_cast %65 : vector<1x125x128xbf16> to vector<125x128xbf16>
    %67 = arith.maximumf %64, %66 : vector<125x128xbf16>
    %c23 = arith.constant 23 : index
    %c0_46 = arith.constant 0 : index
    %c0_47 = arith.constant 0 : index
    %68 = vector.load %arg0[%c23, %c0_46, %c0_47] : memref<27x125x128xbf16, #tpu.memory_space<vmem>>, vector<1x125x128xbf16>
    %69 = vector.shape_cast %68 : vector<1x125x128xbf16> to vector<125x128xbf16>
    %70 = arith.maximumf %67, %69 : vector<125x128xbf16>
    %c24 = arith.constant 24 : index
    %c0_48 = arith.constant 0 : index
    %c0_49 = arith.constant 0 : index
    %71 = vector.load %arg0[%c24, %c0_48, %c0_49] : memref<27x125x128xbf16, #tpu.memory_space<vmem>>, vector<1x125x128xbf16>
    %72 = vector.shape_cast %71 : vector<1x125x128xbf16> to vector<125x128xbf16>
    %73 = arith.maximumf %70, %72 : vector<125x128xbf16>
    %c25 = arith.constant 25 : index
    %c0_50 = arith.constant 0 : index
    %c0_51 = arith.constant 0 : index
    %74 = vector.load %arg0[%c25, %c0_50, %c0_51] : memref<27x125x128xbf16, #tpu.memory_space<vmem>>, vector<1x125x128xbf16>
    %75 = vector.shape_cast %74 : vector<1x125x128xbf16> to vector<125x128xbf16>
    %76 = arith.maximumf %73, %75 : vector<125x128xbf16>
    %c26 = arith.constant 26 : index
    %c0_52 = arith.constant 0 : index
    %c0_53 = arith.constant 0 : index
    %77 = vector.load %arg0[%c26, %c0_52, %c0_53] : memref<27x125x128xbf16, #tpu.memory_space<vmem>>, vector<1x125x128xbf16>
    %78 = vector.shape_cast %77 : vector<1x125x128xbf16> to vector<125x128xbf16>
    %79 = arith.maximumf %76, %78 : vector<125x128xbf16>
    %c0_54 = arith.constant 0 : index
    %c0_55 = arith.constant 0 : index
    %80 = vector.load %arg1[%c0_54, %c0_55] : memref<125x128xbf16, #tpu.memory_space<vmem>>, vector<125x128xbf16>
    tpu.vector_store %arg1[%c0_54, %c0_55], %79 {strides = array<i32>} : memref<125x128xbf16, #tpu.memory_space<vmem>>, vector<125x128xbf16>,
    return
  }
}

module attributes {stable_mosaic.version = 11 : i64} {
  func.func @conv2_tail_kernel(%arg0: memref<54x1728xbf16, #tpu.memory_space<vmem>>, %arg1: memref<1728x128xbf16, #tpu.memory_space<vmem>>, %arg2: memref<1x128xf32, #tpu.memory_space<vmem>>, %arg3: memref<128x192xbf16, #tpu.memory_space<vmem>>, %arg4: memref<1x192xf32, #tpu.memory_space<vmem>>, %arg5: memref<192x192xbf16, #tpu.memory_space<vmem>>, %arg6: memref<1x192xf32, #tpu.memory_space<vmem>>, %arg7: memref<192x128xbf16, #tpu.memory_space<vmem>>, %arg8: memref<1x128xf32, #tpu.memory_space<vmem>>, %arg9: memref<128x64xbf16, #tpu.memory_space<vmem>>, %arg10: memref<1x64xf32, #tpu.memory_space<vmem>>, %arg11: memref<64x2xbf16, #tpu.memory_space<vmem>>, %arg12: memref<1x2xf32, #tpu.memory_space<vmem>>, %arg13: memref<2x2xf32, #tpu.memory_space<vmem>>, %arg14: memref<8x128xf32, #tpu.memory_space<vmem>>) attributes {dimension_semantics = [], scalar_prefetch = 0 : i64, scratch_operands = 1 : i64, tpu.core_type = #tpu.core_type<tc>} {
    %c0 = arith.constant 0 : index
    %c0_0 = arith.constant 0 : index
    %0 = vector.load %arg0[%c0, %c0_0] : memref<54x1728xbf16, #tpu.memory_space<vmem>>, vector<54x1728xbf16>
    %c0_1 = arith.constant 0 : index
    %c0_2 = arith.constant 0 : index
    %1 = vector.load %arg1[%c0_1, %c0_2] : memref<1728x128xbf16, #tpu.memory_space<vmem>>, vector<1728x128xbf16>
    %cst = arith.constant dense<0.000000e+00> : vector<54x128xf32>
    %2 = tpu.matmul %0, %1, %cst {dimension_numbers = #tpu.dot_dimension_numbers<[1], [0], [0], [1], [0, 0, 1, 1], [], []>} : vector<54x1728xbf16>, vector<1728x128xbf16>, vector<54x128xf32> -> vector<54x128xf32>
    %c0_3 = arith.constant 0 : index
    %c0_4 = arith.constant 0 : index
    %3 = vector.load %arg2[%c0_3, %c0_4] : memref<1x128xf32, #tpu.memory_space<vmem>>, vector<1x128xf32>
    %4 = vector.broadcast %3 : vector<1x128xf32> to vector<54x128xf32>
    %5 = arith.addf %2, %4 : vector<54x128xf32>
    %cst_5 = arith.constant 0.000000e+00 : f32
    %6 = vector.broadcast %cst_5 : f32 to vector<54x128xf32>
    %7 = arith.maximumf %5, %6 : vector<54x128xf32>
    %8 = vector.extract_strided_slice %7 {offsets = [0, 0], sizes = [27, 128], strides = [1, 1]} : vector<54x128xf32> to vector<27x128xf32>
    %cst_6 = arith.constant dense<0xFF800000> : vector<128xf32>
    %9 = vector.multi_reduction <maximumf>, %8, %cst_6 [0] : vector<27x128xf32> to vector<128xf32>
    %10 = vector.shape_cast %9 : vector<128xf32> to vector<1x128xf32>
    %c0_7 = arith.constant 0 : index
    %c0_8 = arith.constant 0 : index
    %11 = vector.load %arg14[%c0_7, %c0_8] : memref<8x128xf32, #tpu.memory_space<vmem>>, vector<1x128xf32>
    tpu.vector_store %arg14[%c0_7, %c0_8], %10 {strides = array<i32>} : memref<8x128xf32, #tpu.memory_space<vmem>>, vector<1x128xf32>,
    %12 = vector.extract_strided_slice %7 {offsets = [27, 0], sizes = [27, 128], strides = [1, 1]} : vector<54x128xf32> to vector<27x128xf32>
    %cst_9 = arith.constant dense<0xFF800000> : vector<128xf32>
    %13 = vector.multi_reduction <maximumf>, %12, %cst_9 [0] : vector<27x128xf32> to vector<128xf32>
    %14 = vector.shape_cast %13 : vector<128xf32> to vector<1x128xf32>
    %c1 = arith.constant 1 : index
    %c0_10 = arith.constant 0 : index
    %15 = vector.load %arg14[%c1, %c0_10] : memref<8x128xf32, #tpu.memory_space<vmem>>, vector<1x128xf32>
    tpu.vector_store %arg14[%c1, %c0_10], %14 {strides = array<i32>} : memref<8x128xf32, #tpu.memory_space<vmem>>, vector<1x128xf32>,
    %c0_11 = arith.constant 0 : index
    %c0_12 = arith.constant 0 : index
    %16 = vector.load %arg14[%c0_11, %c0_12] : memref<8x128xf32, #tpu.memory_space<vmem>>, vector<2x128xf32>
    %17 = arith.truncf %16 : vector<2x128xf32> to vector<2x128xbf16>
    %c0_13 = arith.constant 0 : index
    %c0_14 = arith.constant 0 : index
    %18 = vector.load %arg3[%c0_13, %c0_14] : memref<128x192xbf16, #tpu.memory_space<vmem>>, vector<128x192xbf16>
    %cst_15 = arith.constant dense<0.000000e+00> : vector<2x192xf32>
    %19 = tpu.matmul %17, %18, %cst_15 {dimension_numbers = #tpu.dot_dimension_numbers<[1], [0], [0], [1], [0, 0, 1, 1], [], []>} : vector<2x128xbf16>, vector<128x192xbf16>, vector<2x192xf32> -> vector<2x192xf32>
    %c0_16 = arith.constant 0 : index
    %c0_17 = arith.constant 0 : index
    %20 = vector.load %arg4[%c0_16, %c0_17] : memref<1x192xf32, #tpu.memory_space<vmem>>, vector<1x192xf32>
    %21 = vector.broadcast %20 : vector<1x192xf32> to vector<2x192xf32>
    %22 = arith.addf %19, %21 : vector<2x192xf32>
    %cst_18 = arith.constant 0.000000e+00 : f32
    %23 = vector.broadcast %cst_18 : f32 to vector<2x192xf32>
    %24 = arith.maximumf %22, %23 : vector<2x192xf32>
    %25 = arith.truncf %24 : vector<2x192xf32> to vector<2x192xbf16>
    %c0_19 = arith.constant 0 : index
    %c0_20 = arith.constant 0 : index
    %26 = vector.load %arg5[%c0_19, %c0_20] : memref<192x192xbf16, #tpu.memory_space<vmem>>, vector<192x192xbf16>
    %cst_21 = arith.constant dense<0.000000e+00> : vector<2x192xf32>
    %27 = tpu.matmul %25, %26, %cst_21 {dimension_numbers = #tpu.dot_dimension_numbers<[1], [0], [0], [1], [0, 0, 1, 1], [], []>} : vector<2x192xbf16>, vector<192x192xbf16>, vector<2x192xf32> -> vector<2x192xf32>
    %c0_22 = arith.constant 0 : index
    %c0_23 = arith.constant 0 : index
    %28 = vector.load %arg6[%c0_22, %c0_23] : memref<1x192xf32, #tpu.memory_space<vmem>>, vector<1x192xf32>
    %29 = vector.broadcast %28 : vector<1x192xf32> to vector<2x192xf32>
    %30 = arith.addf %27, %29 : vector<2x192xf32>
    %cst_24 = arith.constant 0.000000e+00 : f32
    %31 = vector.broadcast %cst_24 : f32 to vector<2x192xf32>
    %32 = arith.maximumf %30, %31 : vector<2x192xf32>
    %33 = arith.truncf %32 : vector<2x192xf32> to vector<2x192xbf16>
    %c0_25 = arith.constant 0 : index
    %c0_26 = arith.constant 0 : index
    %34 = vector.load %arg7[%c0_25, %c0_26] : memref<192x128xbf16, #tpu.memory_space<vmem>>, vector<192x128xbf16>
    %cst_27 = arith.constant dense<0.000000e+00> : vector<2x128xf32>
    %35 = tpu.matmul %33, %34, %cst_27 {dimension_numbers = #tpu.dot_dimension_numbers<[1], [0], [0], [1], [0, 0, 1, 1], [], []>} : vector<2x192xbf16>, vector<192x128xbf16>, vector<2x128xf32> -> vector<2x128xf32>
    %c0_28 = arith.constant 0 : index
    %c0_29 = arith.constant 0 : index
    %36 = vector.load %arg8[%c0_28, %c0_29] : memref<1x128xf32, #tpu.memory_space<vmem>>, vector<1x128xf32>
    %37 = vector.broadcast %36 : vector<1x128xf32> to vector<2x128xf32>
    %38 = arith.addf %35, %37 : vector<2x128xf32>
    %cst_30 = arith.constant 0.000000e+00 : f32
    %39 = vector.broadcast %cst_30 : f32 to vector<2x128xf32>
    %40 = arith.maximumf %38, %39 : vector<2x128xf32>
    %41 = arith.truncf %40 : vector<2x128xf32> to vector<2x128xbf16>
    %c0_31 = arith.constant 0 : index
    %c0_32 = arith.constant 0 : index
    %42 = vector.load %arg9[%c0_31, %c0_32] : memref<128x64xbf16, #tpu.memory_space<vmem>>, vector<128x64xbf16>
    %cst_33 = arith.constant dense<0.000000e+00> : vector<2x64xf32>
    %43 = tpu.matmul %41, %42, %cst_33 {dimension_numbers = #tpu.dot_dimension_numbers<[1], [0], [0], [1], [0, 0, 1, 1], [], []>} : vector<2x128xbf16>, vector<128x64xbf16>, vector<2x64xf32> -> vector<2x64xf32>
    %c0_34 = arith.constant 0 : index
    %c0_35 = arith.constant 0 : index
    %44 = vector.load %arg10[%c0_34, %c0_35] : memref<1x64xf32, #tpu.memory_space<vmem>>, vector<1x64xf32>
    %45 = vector.broadcast %44 : vector<1x64xf32> to vector<2x64xf32>
    %46 = arith.addf %43, %45 : vector<2x64xf32>
    %cst_36 = arith.constant 0.000000e+00 : f32
    %47 = vector.broadcast %cst_36 : f32 to vector<2x64xf32>
    %48 = arith.maximumf %46, %47 : vector<2x64xf32>
    %49 = arith.truncf %48 : vector<2x64xf32> to vector<2x64xbf16>
    %c0_37 = arith.constant 0 : index
    %c0_38 = arith.constant 0 : index
    %50 = vector.load %arg11[%c0_37, %c0_38] : memref<64x2xbf16, #tpu.memory_space<vmem>>, vector<64x2xbf16>
    %cst_39 = arith.constant dense<0.000000e+00> : vector<2x2xf32>
    %51 = tpu.matmul %49, %50, %cst_39 {dimension_numbers = #tpu.dot_dimension_numbers<[1], [0], [0], [1], [0, 0, 1, 1], [], []>} : vector<2x64xbf16>, vector<64x2xbf16>, vector<2x2xf32> -> vector<2x2xf32>
    %c0_40 = arith.constant 0 : index
    %c0_41 = arith.constant 0 : index
    %52 = vector.load %arg12[%c0_40, %c0_41] : memref<1x2xf32, #tpu.memory_space<vmem>>, vector<1x2xf32>
    %53 = vector.broadcast %52 : vector<1x2xf32> to vector<2x2xf32>
    %54 = arith.addf %51, %53 : vector<2x2xf32>
    %c0_42 = arith.constant 0 : index
    %c0_43 = arith.constant 0 : index
    %55 = vector.load %arg13[%c0_42, %c0_43] : memref<2x2xf32, #tpu.memory_space<vmem>>, vector<2x2xf32>
    tpu.vector_store %arg13[%c0_42, %c0_43], %54 {strides = array<i32>} : memref<2x2xf32, #tpu.memory_space<vmem>>, vector<2x2xf32>,
    return
  }
}

</mosaic_0001>

<llo_original>
// kernel: mrinet_forward.3
$region0: #{mrinet_forward.3}
  #allocation0 [shape = 'u32[]', space=smem, size = 0x4, offset = 0x4, fixed_abs, tag = 'smem constant byte address 0x4 - core index']
  #allocation1 [shape = 'u32[144,128]{1,0:T(1,128)}', space=vmem, size = 0x12000, scoped, tag = 'internal scratch']
  %s0 = inlined_call_operand.vmem [shape: bf16[3375,256], index: 0, kind: input, shape index: {}]
  %s1 = inlined_call_operand.vmem [shape: bf16[256,128], index: 1, kind: input, shape index: {}]
  %s2 = inlined_call_operand.vmem [shape: f32[1,128], index: 2, kind: input, shape index: {}]
  %s3 = inlined_call_operand.vmem [shape: bf16[3375,128], index: 3, kind: output, shape index: {}]
  %s4 = sld [smem:[#allocation0]]
  $region45: #{mrinet_forward.3} parent=0
    _
  %s6 = ssub.s32 1, %s4
  %s7 = scalar_select 0, %s6, %s4
  loop: start=0, step=1, limit=4
  $region2: #{mrinet_forward.3} parent=0 // loop_pre_header
    _
  $region3: #{mrinet_forward.3} parent=0 // loop_header
    %s9 = sphi 0, %s13
    %p10 = scmp.ge.s32.totalorder %s9, 4
    %s19 = sphi 0, %s21
    %s22 = sphi 0, %s19
    %s23 = sphi 0, %s22
    %s39 = sphi 0, %s23
    %s43 = sphi 0, %s43
    %s45 = sphi 0, %s43
    %s46 = sphi 0, %s45
    %s60 = sphi 0, %s46
    %s64 = sphi 0, %s64
    %s66 = sphi 0, %s64
    %s67 = sphi 0, %s66
    %s81 = sphi 0, %s67
    %s87 = sphi 0, %s89
    %s90 = sphi 0, %s87
    %s91 = sphi 0, %s90
    %s107 = sphi 0, %s91
  $region4: #{mrinet_forward.3} parent=0 // loop_header_branch
    %12 = sbr.rel (%p10) target = $region8
  $region5: #{mrinet_forward.3} parent=0 // loop_body
    %s14 = ssub.s32 %s9, 1
    %s15 = ssub.s32 %s9, 2
    %s16 = sadd.s32 %s9, 1
    %s17 = ssub.s32 %s9, %s16
    %p18 = scmp.eq.s32.totalorder %s17, 0
    %s20 = sadd.s32 %s19, 1
    %s21 = scalar_select %p18, %s19, %s20
    %p24 = pneg %p18
    %p25 = scmp.eq.s32.totalorder %s9, 1
    %p26 = por %p24, %p25
    %p27 = scmp.ne.s32.totalorder %s19, %s22
    %p28 = scmp.eq.s32.totalorder %s9, 0
    %p29 = por %p27, %p28
    %p30 = scmp.ne.s32.totalorder %s19, %s22
    %p31 = scmp.eq.s32.totalorder %s14, 1
    %p32 = por %p30, %p31
    %p33 = scmp.ne.s32.totalorder %s22, %s23
    %p34 = scmp.eq.s32.totalorder %s14, 0
    %p35 = por %p33, %p34
    %p36 = scmp.ne.s32.totalorder %s22, %s23
    %p37 = scmp.eq.s32.totalorder %s15, 1
    %p38 = por %p36, %p37
    %p40 = scmp.ne.s32.totalorder %s23, %s39
    %p41 = scmp.eq.s32.totalorder %s15, 0
    %p42 = por %p40, %p41
    %s44 = sadd.s32 %s43, 1
    %p47 = scmp.eq.s32.totalorder %s9, 1
    %p48 = scmp.ne.s32.totalorder %s43, %s45
    %p49 = scmp.eq.s32.totalorder %s9, 0
    %p50 = por %p48, %p49
    %p51 = scmp.ne.s32.totalorder %s43, %s45
    %p52 = scmp.eq.s32.totalorder %s14, 1
    %p53 = por %p51, %p52
    %p54 = scmp.ne.s32.totalorder %s45, %s46
    %p55 = scmp.eq.s32.totalorder %s14, 0
    %p56 = por %p54, %p55
    %p57 = scmp.ne.s32.totalorder %s45, %s46
    %p58 = scmp.eq.s32.totalorder %s15, 1
    %p59 = por %p57, %p58
    %p61 = scmp.ne.s32.totalorder %s46, %s60
    %p62 = scmp.eq.s32.totalorder %s15, 0
    %p63 = por %p61, %p62
    %s65 = sadd.s32 %s64, 1
    %p68 = scmp.eq.s32.totalorder %s9, 1
    %p69 = scmp.ne.s32.totalorder %s64, %s66
    %p70 = scmp.eq.s32.totalorder %s9, 0
    %p71 = por %p69, %p70
    %p72 = scmp.ne.s32.totalorder %s64, %s66
    %p73 = scmp.eq.s32.totalorder %s14, 1
    %p74 = por %p72, %p73
    %p75 = scmp.ne.s32.totalorder %s66, %s67
    %p76 = scmp.eq.s32.totalorder %s14, 0
    %p77 = por %p75, %p76
    %p78 = scmp.ne.s32.totalorder %s66, %s67
    %p79 = scmp.eq.s32.totalorder %s15, 1
    %p80 = por %p78, %p79
    %p82 = scmp.ne.s32.totalorder %s67, %s81
    %p83 = scmp.eq.s32.totalorder %s15, 0
    %p84 = por %p82, %p83
    %s85 = ssub.s32 %s9, %s16
    %p86 = scmp.eq.s32.totalorder %s85, 0
    %s88 = sadd.s32 %s87, 1
    %s89 = scalar_select %p86, %s87, %s88
    %p92 = pneg %p86
    %p93 = scmp.eq.s32.totalorder %s9, 1
    %p94 = por %p92, %p93
    %p95 = scmp.ne.s32.totalorder %s87, %s90
    %p96 = scmp.eq.s32.totalorder %s9, 0
    %p97 = por %p95, %p96
    %p98 = scmp.ne.s32.totalorder %s87, %s90
    %p99 = scmp.eq.s32.totalorder %s14, 1
    %p100 = por %p98, %p99
    %p101 = scmp.ne.s32.totalorder %s90, %s91
    %p102 = scmp.eq.s32.totalorder %s14, 0
    %p103 = por %p101, %p102
    %p104 = scmp.ne.s32.totalorder %s90, %s91
    %p105 = scmp.eq.s32.totalorder %s15, 1
    %p106 = por %p104, %p105
    %p108 = scmp.ne.s32.totalorder %s91, %s107
    %p109 = scmp.eq.s32.totalorder %s15, 0
    %p110 = por %p108, %p109
    %p111 = scmp.le.s32.totalorder 1, %s9
    %p112 = scmp.lt.s32.totalorder %s9, 3
    %p113 = pnand %p111, %p112
    %p114 = pneg %p113
    // Predicated region
    $region9: #{mrinet_forward.3} parent=5 // pred_check
      _
    $region10: #{mrinet_forward.3} parent=5 // pred_check_branch
      %116 = sbr.rel (%p113) target = $region12
    $region11: #{mrinet_forward.3} parent=5 // pred_region
      %s117 = ssub.s32 %s9, 1
      // Predicated region
      $region13: #{mrinet_forward.3} parent=11 // pred_check
        %p118 = pneg %p56
      $region14: #{mrinet_forward.3} parent=11 // pred_check_branch
        %120 = sbr.rel (%p118) target = $region16
      $region15: #{mrinet_forward.3} parent=11 // pred_region
        _
      $region16: #{mrinet_forward.3} parent=11 // pred_fallthru
        _
      // Predicated region
      $region17: #{mrinet_forward.3} parent=11 // pred_check
        %p121 = pneg %p77
      $region18: #{mrinet_forward.3} parent=11 // pred_check_branch
        %123 = sbr.rel (%p121) target = $region20
      $region19: #{mrinet_forward.3} parent=11 // pred_region
        _
      $region20: #{mrinet_forward.3} parent=11 // pred_fallthru
        _
    $region12: #{mrinet_forward.3} parent=5 // pred_fallthru
      _
    %p124 = scmp.lt.s32.totalorder %s9, 2
    // Predicated region
    $region21: #{mrinet_forward.3} parent=5 // pred_check
      %p125 = pneg %p124
    $region22: #{mrinet_forward.3} parent=5 // pred_check_branch
      %127 = sbr.rel (%p125) target = $region24
    $region23: #{mrinet_forward.3} parent=5 // pred_region
      // Predicated region
      $region25: #{mrinet_forward.3} parent=23 // pred_check
        %p128 = pneg %p29
      $region26: #{mrinet_forward.3} parent=23 // pred_check_branch
        %130 = sbr.rel (%p128) target = $region28
      $region27: #{mrinet_forward.3} parent=23 // pred_region
        %s131 = smul.u32 211, %s9
        %p132 = scmp.lt.s32.totalorder %s131, 421
        %s133 = scalar_select %p132, %s131, 421
        %s134 = smul.addr %s133, 2
        %s135 = smul.addr %s134, 4
        %s136 = scalar_lea.vmem %s0, %s135
        %s137 = smul.u32 211, %s9
      $region28: #{mrinet_forward.3} parent=23 // pred_fallthru
        _
    $region24: #{mrinet_forward.3} parent=5 // pred_fallthru
      _
    %p138 = scmp.le.s32.totalorder 1, %s9
    %p139 = scmp.lt.s32.totalorder %s9, 3
    %p140 = pnand %p138, %p139
    %p141 = pneg %p140
    // Predicated region
    $region29: #{mrinet_forward.3} parent=5 // pred_check
      _
    $region30: #{mrinet_forward.3} parent=5 // pred_check_branch
      %143 = sbr.rel (%p140) target = $region32
    $region31: #{mrinet_forward.3} parent=5 // pred_region
      %s144 = ssub.s32 %s9, 1
      %s145 = smul.u32 211, %s14
      %p146 = scmp.lt.s32.totalorder %s145, 421
      %s147 = scalar_select %p146, %s145, 421
      %s148 = smul.addr %s147, 2
      %s149 = smul.addr %s148, 4
      %s150 = scalar_lea.vmem %s0, %s149
      %p151 = pneg %p35
      %p152 = pneg %p32
      %p153 = pneg %p56
      %p154 = pneg %p53
      %p155 = pneg %p77
      %p156 = pneg %p74
      %p157 = pneg %p103
      %p158 = pneg %p100
      %s159 = smul.u32 211, %s14
      %p160 = scmp.lt.s32.totalorder %s159, 421
      %s161 = scalar_select %p160, %s159, 421
      %s162 = smul.addr %s161, 4
      %s163 = scalar_lea.vmem %s3, %s162
      %s164 = smul.u32 211, %s14
      %p165 = scmp.lt.s32.totalorder %s164, 421
      %s166 = scalar_select %p165, %s164, 421
      %s167 = smul.addr %s166, 2
      %s168 = smul.addr %s167, 4
      %s169 = scalar_lea.vmem %s0, %s168
      %s170 = smul.u32 211, %s14
      %s171 = smul.u32 211, %s14
      %p172 = scmp.lt.s32.totalorder %s171, 421
      %s173 = scalar_select %p172, %s171, 421
      %s174 = smul.addr %s173, 4
      %s175 = scalar_lea.vmem %s3, %s174
      %s176 = smul.u32 211, %s14
      %v178 = vld [vmem:[%s169] sm:$0xff]
      %v179 = vld [vmem:[%s169 + $0x8] sm:$0xff]
      %v180 = vld [vmem:[%s169 + $0x10] sm:$0xff]
      %v181 = vld [vmem:[%s169 + $0x18] sm:$0xff]
      %v182 = vld [vmem:[%s169 + $0x20] sm:$0xff]
      %v183 = vld [vmem:[%s169 + $0x28] sm:$0xff]
      %v184 = vld [vmem:[%s169 + $0x30] sm:$0xff]
      %v185 = vld [vmem:[%s169 + $0x38] sm:$0xff]
      %v186 = vld [vmem:[%s169 + $0x40] sm:$0xff]
      %v187 = vld [vmem:[%s169 + $0x48] sm:$0xff]
      %v188 = vld [vmem:[%s169 + $0x50] sm:$0xff]
      %v189 = vld [vmem:[%s169 + $0x58] sm:$0xff]
      %v190 = vld [vmem:[%s169 + $0x60] sm:$0xff]
      %v191 = vld [vmem:[%s169 + $0x68] sm:$0xff]
      %v192 = vld [vmem:[%s169 + $0x70] sm:$0xff]
      %v193 = vld [vmem:[%s169 + $0x78] sm:$0xff]
      %v194 = vld [vmem:[%s169 + $0x80] sm:$0xff]
      %v195 = vld [vmem:[%s169 + $0x88] sm:$0xff]
      %v196 = vld [vmem:[%s169 + $0x90] sm:$0xff]
      %v197 = vld [vmem:[%s169 + $0x98] sm:$0xff]
      %v198 = vld [vmem:[%s169 + $0xa0] sm:$0xff]
      %v199 = vld [vmem:[%s169 + $0xa8] sm:$0xff]
      %v200 = vld [vmem:[%s169 + $0xb0] sm:$0xff]
      %v201 = vld [vmem:[%s169 + $0xb8] sm:$0xff]
      %v202 = vld [vmem:[%s169 + $0xc0] sm:$0xff]
      %v203 = vld [vmem:[%s169 + $0xc8] sm:$0xff]
      %v204 = vld [vmem:[%s169 + $0xd0] sm:$0xff]
      %v205 = vld [vmem:[%s169 + $0xd8] sm:$0xff]
      %v206 = vld [vmem:[%s169 + $0xe0] sm:$0xff]
      %v207 = vld [vmem:[%s169 + $0xe8] sm:$0xff]
      %v208 = vld [vmem:[%s169 + $0xf0] sm:$0xff]
      %v209 = vld [vmem:[%s169 + $0xf8] sm:$0xff]
      %v210 = vld [vmem:[%s169 + $0x100] sm:$0xff]
      %v211 = vld [vmem:[%s169 + $0x108] sm:$0xff]
      %v212 = vld [vmem:[%s169 + $0x110] sm:$0xff]
      %v213 = vld [vmem:[%s169 + $0x118] sm:$0xff]
      %v214 = vld [vmem:[%s169 + $0x120] sm:$0xff]
      %v215 = vld [vmem:[%s169 + $0x128] sm:$0xff]
      %v216 = vld [vmem:[%s169 + $0x130] sm:$0xff]
      %v217 = vld [vmem:[%s169 + $0x138] sm:$0xff]
      %v218 = vld [vmem:[%s169 + $0x140] sm:$0xff]
      %v219 = vld [vmem:[%s169 + $0x148] sm:$0xff]
      %v220 = vld [vmem:[%s169 + $0x150] sm:$0xff]
      %v221 = vld [vmem:[%s169 + $0x158] sm:$0xff]
      %v222 = vld [vmem:[%s169 + $0x160] sm:$0xff]
      %v223 = vld [vmem:[%s169 + $0x168] sm:$0xff]
      %v224 = vld [vmem:[%s169 + $0x170] sm:$0xff]
      %v225 = vld [vmem:[%s169 + $0x178] sm:$0xff]
      %v226 = vld [vmem:[%s169 + $0x180] sm:$0xff]
      %v227 = vld [vmem:[%s169 + $0x188] sm:$0xff]
      %v228 = vld [vmem:[%s169 + $0x190] sm:$0xff]
      %v229 = vld [vmem:[%s169 + $0x198] sm:$0xff]
      %v230 = vld [vmem:[%s169 + $0x1a0] sm:$0xff]
      %v231 = vld [vmem:[%s169 + $0x1a8] sm:$0xff]
      %v232 = vld [vmem:[%s169 + $0x1b0] sm:$0xff]
      %v233 = vld [vmem:[%s169 + $0x1b8] sm:$0xff]
      %v234 = vld [vmem:[%s169 + $0x1c0] sm:$0xff]
      %v235 = vld [vmem:[%s169 + $0x1c8] sm:$0xff]
      %v236 = vld [vmem:[%s169 + $0x1d0] sm:$0xff]
      %v237 = vld [vmem:[%s169 + $0x1d8] sm:$0xff]
      %v238 = vld [vmem:[%s169 + $0x1e0] sm:$0xff]
      %v239 = vld [vmem:[%s169 + $0x1e8] sm:$0xff]
      %v240 = vld [vmem:[%s169 + $0x1f0] sm:$0xff]
      %v241 = vld [vmem:[%s169 + $0x1f8] sm:$0xff]
      %v242 = vld [vmem:[%s169 + $0x200] sm:$0xff]
      %v243 = vld [vmem:[%s169 + $0x208] sm:$0xff]
      %v244 = vld [vmem:[%s169 + $0x210] sm:$0xff]
      %v245 = vld [vmem:[%s169 + $0x218] sm:$0xff]
      %v246 = vld [vmem:[%s169 + $0x220] sm:$0xff]
      %v247 = vld [vmem:[%s169 + $0x228] sm:$0xff]
      %v248 = vld [vmem:[%s169 + $0x230] sm:$0xff]
      %v249 = vld [vmem:[%s169 + $0x238] sm:$0xff]
      %v250 = vld [vmem:[%s169 + $0x240] sm:$0xff]
      %v251 = vld [vmem:[%s169 + $0x248] sm:$0xff]
      %v252 = vld [vmem:[%s169 + $0x250] sm:$0xff]
      %v253 = vld [vmem:[%s169 + $0x258] sm:$0xff]
      %v254 = vld [vmem:[%s169 + $0x260] sm:$0xff]
      %v255 = vld [vmem:[%s169 + $0x268] sm:$0xff]
      %v256 = vld [vmem:[%s169 + $0x270] sm:$0xff]
      %v257 = vld [vmem:[%s169 + $0x278] sm:$0xff]
      %v258 = vld [vmem:[%s169 + $0x280] sm:$0xff]
      %v259 = vld [vmem:[%s169 + $0x288] sm:$0xff]
      %v260 = vld [vmem:[%s169 + $0x290] sm:$0xff]
      %v261 = vld [vmem:[%s169 + $0x298] sm:$0xff]
      %v262 = vld [vmem:[%s169 + $0x2a0] sm:$0xff]
      %v263 = vld [vmem:[%s169 + $0x2a8] sm:$0xff]
      %v264 = vld [vmem:[%s169 + $0x2b0] sm:$0xff]
      %v265 = vld [vmem:[%s169 + $0x2b8] sm:$0xff]
      %v266 = vld [vmem:[%s169 + $0x2c0] sm:$0xff]
      %v267 = vld [vmem:[%s169 + $0x2c8] sm:$0xff]
      %v268 = vld [vmem:[%s169 + $0x2d0] sm:$0xff]
      %v269 = vld [vmem:[%s169 + $0x2d8] sm:$0xff]
      %v270 = vld [vmem:[%s169 + $0x2e0] sm:$0xff]
      %v271 = vld [vmem:[%s169 + $0x2e8] sm:$0xff]
      %v272 = vld [vmem:[%s169 + $0x2f0] sm:$0xff]
      %v273 = vld [vmem:[%s169 + $0x2f8] sm:$0xff]
      %v274 = vld [vmem:[%s169 + $0x300] sm:$0xff]
      %v275 = vld [vmem:[%s169 + $0x308] sm:$0xff]
      %v276 = vld [vmem:[%s169 + $0x310] sm:$0xff]
      %v277 = vld [vmem:[%s169 + $0x318] sm:$0xff]
      %v278 = vld [vmem:[%s169 + $0x320] sm:$0xff]
      %v279 = vld [vmem:[%s169 + $0x328] sm:$0xff]
      %v280 = vld [vmem:[%s169 + $0x330] sm:$0xff]
      %v281 = vld [vmem:[%s169 + $0x338] sm:$0xff]
      %v282 = vld [vmem:[%s169 + $0x340] sm:$0xff]
      %v283 = vld [vmem:[%s169 + $0x348] sm:$0xff]
      %v284 = vld [vmem:[%s169 + $0x350] sm:$0xff]
      %v285 = vld [vmem:[%s169 + $0x358] sm:$0xff]
      %v286 = vld [vmem:[%s169 + $0x360] sm:$0xff]
      %v287 = vld [vmem:[%s169 + $0x368] sm:$0xff]
      %v288 = vld [vmem:[%s169 + $0x370] sm:$0xff]
      %v289 = vld [vmem:[%s169 + $0x378] sm:$0xff]
      %v290 = vld [vmem:[%s169 + $0x380] sm:$0xff]
      %v291 = vld [vmem:[%s169 + $0x388] sm:$0xff]
      %v292 = vld [vmem:[%s169 + $0x390] sm:$0xff]
      %v293 = vld [vmem:[%s169 + $0x398] sm:$0xff]
      %v294 = vld [vmem:[%s169 + $0x3a0] sm:$0xff]
      %v295 = vld [vmem:[%s169 + $0x3a8] sm:$0xff]
      %v296 = vld [vmem:[%s169 + $0x3b0] sm:$0xff]
      %v297 = vld [vmem:[%s169 + $0x3b8] sm:$0xff]
      %v298 = vld [vmem:[%s169 + $0x3c0] sm:$0xff]
      %v299 = vld [vmem:[%s169 + $0x3c8] sm:$0xff]
      %v300 = vld [vmem:[%s169 + $0x3d0] sm:$0xff]
      %v301 = vld [vmem:[%s169 + $0x3d8] sm:$0xff]
      %v302 = vld [vmem:[%s169 + $0x3e0] sm:$0xff]
      %v303 = vld [vmem:[%s169 + $0x3e8] sm:$0xff]
      %v304 = vld [vmem:[%s169 + $0x3f0] sm:$0xff]
      %v305 = vld [vmem:[%s169 + $0x3f8] sm:$0xff]
      %v306 = vld [vmem:[%s169 + $0x400] sm:$0xff]
      %v307 = vld [vmem:[%s169 + $0x408] sm:$0xff]
      %v308 = vld [vmem:[%s169 + $0x410] sm:$0xff]
      %v309 = vld [vmem:[%s169 + $0x418] sm:$0xff]
      %v310 = vld [vmem:[%s169 + $0x420] sm:$0xff]
      %v311 = vld [vmem:[%s169 + $0x428] sm:$0xff]
      %v312 = vld [vmem:[%s169 + $0x430] sm:$0xff]
      %v313 = vld [vmem:[%s169 + $0x438] sm:$0xff]
      %v314 = vld [vmem:[%s169 + $0x440] sm:$0xff]
      %v315 = vld [vmem:[%s169 + $0x448] sm:$0xff]
      %v316 = vld [vmem:[%s169 + $0x450] sm:$0xff]
      %v317 = vld [vmem:[%s169 + $0x458] sm:$0xff]
      %v318 = vld [vmem:[%s169 + $0x460] sm:$0xff]
      %v319 = vld [vmem:[%s169 + $0x468] sm:$0xff]
      %v320 = vld [vmem:[%s169 + $0x470] sm:$0xff]
      %v321 = vld [vmem:[%s169 + $0x478] sm:$0xff]
      %v322 = vld [vmem:[%s169 + $0x480] sm:$0xff]
      %v323 = vld [vmem:[%s169 + $0x488] sm:$0xff]
      %v324 = vld [vmem:[%s169 + $0x490] sm:$0xff]
      %v325 = vld [vmem:[%s169 + $0x498] sm:$0xff]
      %v326 = vld [vmem:[%s169 + $0x4a0] sm:$0xff]
      %v327 = vld [vmem:[%s169 + $0x4a8] sm:$0xff]
      %v328 = vld [vmem:[%s169 + $0x4b0] sm:$0xff]
      %v329 = vld [vmem:[%s169 + $0x4b8] sm:$0xff]
      %v330 = vld [vmem:[%s169 + $0x4c0] sm:$0xff]
      %v331 = vld [vmem:[%s169 + $0x4c8] sm:$0xff]
      %v332 = vld [vmem:[%s169 + $0x4d0] sm:$0xff]
      %v333 = vld [vmem:[%s169 + $0x4d8] sm:$0xff]
      %v334 = vld [vmem:[%s169 + $0x4e0] sm:$0xff]
      %v335 = vld [vmem:[%s169 + $0x4e8] sm:$0xff]
      %v336 = vld [vmem:[%s169 + $0x4f0] sm:$0xff]
      %v337 = vld [vmem:[%s169 + $0x4f8] sm:$0xff]
      %v338 = vld [vmem:[%s169 + $0x500] sm:$0xff]
      %v339 = vld [vmem:[%s169 + $0x508] sm:$0xff]
      %v340 = vld [vmem:[%s169 + $0x510] sm:$0xff]
      %v341 = vld [vmem:[%s169 + $0x518] sm:$0xff]
      %v342 = vld [vmem:[%s169 + $0x520] sm:$0xff]
      %v343 = vld [vmem:[%s169 + $0x528] sm:$0xff]
      %v344 = vld [vmem:[%s169 + $0x530] sm:$0xff]
      %v345 = vld [vmem:[%s169 + $0x538] sm:$0xff]
      %v346 = vld [vmem:[%s169 + $0x540] sm:$0xff]
      %v347 = vld [vmem:[%s169 + $0x548] sm:$0xff]
      %v348 = vld [vmem:[%s169 + $0x550] sm:$0xff]
      %v349 = vld [vmem:[%s169 + $0x558] sm:$0xff]
      %v350 = vld [vmem:[%s169 + $0x560] sm:$0xff]
      %v351 = vld [vmem:[%s169 + $0x568] sm:$0xff]
      %v352 = vld [vmem:[%s169 + $0x570] sm:$0xff]
      %v353 = vld [vmem:[%s169 + $0x578] sm:$0xff]
      %v354 = vld [vmem:[%s169 + $0x580] sm:$0xff]
      %v355 = vld [vmem:[%s169 + $0x588] sm:$0xff]
      %v356 = vld [vmem:[%s169 + $0x590] sm:$0xff]
      %v357 = vld [vmem:[%s169 + $0x598] sm:$0xff]
      %v358 = vld [vmem:[%s169 + $0x5a0] sm:$0xff]
      %v359 = vld [vmem:[%s169 + $0x5a8] sm:$0xff]
      %v360 = vld [vmem:[%s169 + $0x5b0] sm:$0xff]
      %v361 = vld [vmem:[%s169 + $0x5b8] sm:$0xff]
      %v362 = vld [vmem:[%s169 + $0x5c0] sm:$0xff]
      %v363 = vld [vmem:[%s169 + $0x5c8] sm:$0xff]
      %v364 = vld [vmem:[%s169 + $0x5d0] sm:$0xff]
      %v365 = vld [vmem:[%s169 + $0x5d8] sm:$0xff]
      %v366 = vld [vmem:[%s169 + $0x5e0] sm:$0xff]
      %v367 = vld [vmem:[%s169 + $0x5e8] sm:$0xff]
      %v368 = vld [vmem:[%s169 + $0x5f0] sm:$0xff]
      %v369 = vld [vmem:[%s169 + $0x5f8] sm:$0xff]
      %v370 = vld [vmem:[%s169 + $0x600] sm:$0xff]
      %v371 = vld [vmem:[%s169 + $0x608] sm:$0xff]
      %v372 = vld [vmem:[%s169 + $0x610] sm:$0xff]
      %v373 = vld [vmem:[%s169 + $0x618] sm:$0xff]
      %v374 = vld [vmem:[%s169 + $0x620] sm:$0xff]
      %v375 = vld [vmem:[%s169 + $0x628] sm:$0xff]
      %v376 = vld [vmem:[%s169 + $0x630] sm:$0xff]
      %v377 = vld [vmem:[%s169 + $0x638] sm:$0xff]
      %v378 = vld [vmem:[%s169 + $0x640] sm:$0xff]
      %v379 = vld [vmem:[%s169 + $0x648] sm:$0xff]
      %v380 = vld [vmem:[%s169 + $0x650] sm:$0xff]
      %v381 = vld [vmem:[%s169 + $0x658] sm:$0xff]
      %v382 = vld [vmem:[%s169 + $0x660] sm:$0xff]
      %v383 = vld [vmem:[%s169 + $0x668] sm:$0xff]
      %v384 = vld [vmem:[%s169 + $0x670] sm:$0xff]
      %v385 = vld [vmem:[%s169 + $0x678] sm:$0xff]
      %v386 = vld [vmem:[%s169 + $0x680] sm:$0xff]
      %v387 = vld [vmem:[%s169 + $0x688] sm:$0xff]
      %v388 = vld [vmem:[%s169 + $0x690] sm:$0xff]
      %v389 = vld [vmem:[%s1] sm:$0xf]
      %v390 = vld [vmem:[%s1 + $0x4] sm:$0xf]
      %v391 = vld [vmem:[%s1 + $0x8] sm:$0xf]
      %v392 = vld [vmem:[%s1 + $0xc] sm:$0xf]
      %v393 = vld [vmem:[%s1 + $0x10] sm:$0xf]
      %v394 = vld [vmem:[%s1 + $0x14] sm:$0xf]
      %v395 = vld [vmem:[%s1 + $0x18] sm:$0xf]
      %v396 = vld [vmem:[%s1 + $0x1c] sm:$0xf]
      %v397 = vld [vmem:[%s1 + $0x20] sm:$0xf]
      %v398 = vld [vmem:[%s1 + $0x24] sm:$0xf]
      %v399 = vld [vmem:[%s1 + $0x28] sm:$0xf]
      %v400 = vld [vmem:[%s1 + $0x2c] sm:$0xf]
      %v401 = vld [vmem:[%s1 + $0x30] sm:$0xf]
      %v402 = vld [vmem:[%s1 + $0x34] sm:$0xf]
      %v403 = vld [vmem:[%s1 + $0x38] sm:$0xf]
      %v404 = vld [vmem:[%s1 + $0x3c] sm:$0xf]
      %v405 = vld [vmem:[%s1 + $0x40] sm:$0xf]
      %v406 = vld [vmem:[%s1 + $0x44] sm:$0xf]
      %v407 = vld [vmem:[%s1 + $0x48] sm:$0xf]
      %v408 = vld [vmem:[%s1 + $0x4c] sm:$0xf]
      %v409 = vld [vmem:[%s1 + $0x50] sm:$0xf]
      %v410 = vld [vmem:[%s1 + $0x54] sm:$0xf]
      %v411 = vld [vmem:[%s1 + $0x58] sm:$0xf]
      %v412 = vld [vmem:[%s1 + $0x5c] sm:$0xf]
      %v413 = vld [vmem:[%s1 + $0x60] sm:$0xf]
      %v414 = vld [vmem:[%s1 + $0x64] sm:$0xf]
      %v415 = vld [vmem:[%s1 + $0x68] sm:$0xf]
      %v416 = vld [vmem:[%s1 + $0x6c] sm:$0xf]
      %v417 = vld [vmem:[%s1 + $0x70] sm:$0xf]
      %v418 = vld [vmem:[%s1 + $0x74] sm:$0xf]
      %v419 = vld [vmem:[%s1 + $0x78] sm:$0xf]
      %v420 = vld [vmem:[%s1 + $0x7c] sm:$0xf]
      %v421 = vld [vmem:[%s2] sm:$0x1]
      %v423 = vlaneseq
      %v424 = vshrl.u32 %v423, 7
      %v425 = vsub.s32 0, %v424
      %v426 = vrot.slane %v421, %v425
      %v639 = vunpack.c.l.b16 %v178
      %v640 = vunpack.c.h.b16 %v178
      %v641 = vunpack.c.l.b16 %v179
      %v642 = vunpack.c.h.b16 %v179
      %v643 = vunpack.c.l.b16 %v180
      %v644 = vunpack.c.h.b16 %v180
      %v645 = vunpack.c.l.b16 %v181
      %v646 = vunpack.c.h.b16 %v181
      %v647 = vunpack.c.l.b16 %v182
      %v648 = vunpack.c.h.b16 %v182
      %v649 = vunpack.c.l.b16 %v183
      %v650 = vunpack.c.h.b16 %v183
      %v651 = vunpack.c.l.b16 %v184
      %v652 = vunpack.c.h.b16 %v184
      %v653 = vunpack.c.l.b16 %v185
      %v654 = vunpack.c.h.b16 %v185
      %v655 = vunpack.c.l.b16 %v186
      %v656 = vunpack.c.h.b16 %v186
      %v657 = vunpack.c.l.b16 %v187
      %v658 = vunpack.c.h.b16 %v187
      %v659 = vunpack.c.l.b16 %v188
      %v660 = vunpack.c.h.b16 %v188
      %v661 = vunpack.c.l.b16 %v189
      %v662 = vunpack.c.h.b16 %v189
      %v663 = vunpack.c.l.b16 %v190
      %v664 = vunpack.c.h.b16 %v190
      %v665 = vunpack.c.l.b16 %v191
      %v666 = vunpack.c.h.b16 %v191
      %v667 = vunpack.c.l.b16 %v192
      %v668 = vunpack.c.h.b16 %v192
      %v669 = vunpack.c.l.b16 %v193
      %v670 = vunpack.c.h.b16 %v193
      %v671 = vunpack.c.l.b16 %v194
      %v672 = vunpack.c.h.b16 %v194
      %v673 = vunpack.c.l.b16 %v195
      %v674 = vunpack.c.h.b16 %v195
      %v675 = vunpack.c.l.b16 %v196
      %v676 = vunpack.c.h.b16 %v196
      %v677 = vunpack.c.l.b16 %v197
      %v678 = vunpack.c.h.b16 %v197
      %v679 = vunpack.c.l.b16 %v198
      %v680 = vunpack.c.h.b16 %v198
      %v681 = vunpack.c.l.b16 %v199
      %v682 = vunpack.c.h.b16 %v199
      %v683 = vunpack.c.l.b16 %v200
      %v684 = vunpack.c.h.b16 %v200
      %v685 = vunpack.c.l.b16 %v201
      %v686 = vunpack.c.h.b16 %v201
      %v687 = vunpack.c.l.b16 %v202
      %v688 = vunpack.c.h.b16 %v202
      %v689 = vunpack.c.l.b16 %v203
      %v690 = vunpack.c.h.b16 %v203
      %v691 = vunpack.c.l.b16 %v204
      %v692 = vunpack.c.h.b16 %v204
      %v693 = vunpack.c.l.b16 %v205
      %v694 = vunpack.c.h.b16 %v205
      %v695 = vunpack.c.l.b16 %v206
      %v696 = vunpack.c.h.b16 %v206
      %v697 = vunpack.c.l.b16 %v207
      %v698 = vunpack.c.h.b16 %v207
      %v699 = vunpack.c.l.b16 %v208
      %v700 = vunpack.c.h.b16 %v208
      %v701 = vunpack.c.l.b16 %v209
      %v702 = vunpack.c.h.b16 %v209
      %v703 = vunpack.c.l.b16 %v210
      %v704 = vunpack.c.h.b16 %v210
      %v705 = vunpack.c.l.b16 %v211
      %v706 = vunpack.c.h.b16 %v211
      %v707 = vunpack.c.l.b16 %v212
      %v708 = vunpack.c.h.b16 %v212
      %v709 = vunpack.c.l.b16 %v213
      %v710 = vunpack.c.h.b16 %v213
      %v711 = vunpack.c.l.b16 %v214
      %v712 = vunpack.c.h.b16 %v214
      %v713 = vunpack.c.l.b16 %v215
      %v714 = vunpack.c.h.b16 %v215
      %v715 = vunpack.c.l.b16 %v216
      %v716 = vunpack.c.h.b16 %v216
      %v717 = vunpack.c.l.b16 %v217
      %v718 = vunpack.c.h.b16 %v217
      %v719 = vunpack.c.l.b16 %v218
      %v720 = vunpack.c.h.b16 %v218
      %v721 = vunpack.c.l.b16 %v219
      %v722 = vunpack.c.h.b16 %v219
      %v723 = vunpack.c.l.b16 %v220
      %v724 = vunpack.c.h.b16 %v220
      %v725 = vunpack.c.l.b16 %v221
      %v726 = vunpack.c.h.b16 %v221
      %v727 = vunpack.c.l.b16 %v222
      %v728 = vunpack.c.h.b16 %v222
      %v729 = vunpack.c.l.b16 %v223
      %v730 = vunpack.c.h.b16 %v223
      %v731 = vunpack.c.l.b16 %v224
      %v732 = vunpack.c.h.b16 %v224
      %v733 = vunpack.c.l.b16 %v225
      %v734 = vunpack.c.h.b16 %v225
      %v735 = vunpack.c.l.b16 %v226
      %v736 = vunpack.c.h.b16 %v226
      %v737 = vunpack.c.l.b16 %v227
      %v738 = vunpack.c.h.b16 %v227
      %v739 = vunpack.c.l.b16 %v228
      %v740 = vunpack.c.h.b16 %v228
      %v741 = vunpack.c.l.b16 %v229
      %v742 = vunpack.c.h.b16 %v229
      %v743 = vunpack.c.l.b16 %v230
      %v744 = vunpack.c.h.b16 %v230
      %v745 = vunpack.c.l.b16 %v231
      %v746 = vunpack.c.h.b16 %v231
      %v747 = vunpack.c.l.b16 %v232
      %v748 = vunpack.c.h.b16 %v232
      %v749 = vunpack.c.l.b16 %v233
      %v750 = vunpack.c.h.b16 %v233
      %v751 = vunpack.c.l.b16 %v234
      %v752 = vunpack.c.h.b16 %v234
      %v753 = vunpack.c.l.b16 %v235
      %v754 = vunpack.c.h.b16 %v235
      %v755 = vunpack.c.l.b16 %v236
      %v756 = vunpack.c.h.b16 %v236
      %v757 = vunpack.c.l.b16 %v237
      %v758 = vunpack.c.h.b16 %v237
      %v759 = vunpack.c.l.b16 %v238
      %v760 = vunpack.c.h.b16 %v238
      %v761 = vunpack.c.l.b16 %v239
      %v762 = vunpack.c.h.b16 %v239
      %v763 = vunpack.c.l.b16 %v240
      %v764 = vunpack.c.h.b16 %v240
      %v765 = vunpack.c.l.b16 %v241
      %v766 = vunpack.c.h.b16 %v241
      %v767 = vunpack.c.l.b16 %v242
      %v768 = vunpack.c.h.b16 %v242
      %v769 = vunpack.c.l.b16 %v243
      %v770 = vunpack.c.h.b16 %v243
      %v771 = vunpack.c.l.b16 %v244
      %v772 = vunpack.c.h.b16 %v244
      %v773 = vunpack.c.l.b16 %v245
      %v774 = vunpack.c.h.b16 %v245
      %v775 = vunpack.c.l.b16 %v246
      %v776 = vunpack.c.h.b16 %v246
      %v777 = vunpack.c.l.b16 %v247
      %v778 = vunpack.c.h.b16 %v247
      %v779 = vunpack.c.l.b16 %v248
      %v780 = vunpack.c.h.b16 %v248
      %v781 = vunpack.c.l.b16 %v249
      %v782 = vunpack.c.h.b16 %v249
      %v783 = vunpack.c.l.b16 %v250
      %v784 = vunpack.c.h.b16 %v250
      %v785 = vunpack.c.l.b16 %v251
      %v786 = vunpack.c.h.b16 %v251
      %v787 = vunpack.c.l.b16 %v252
      %v788 = vunpack.c.h.b16 %v252
      %v789 = vunpack.c.l.b16 %v253
      %v790 = vunpack.c.h.b16 %v253
      %v791 = vunpack.c.l.b16 %v254
      %v792 = vunpack.c.h.b16 %v254
      %v793 = vunpack.c.l.b16 %v255
      %v794 = vunpack.c.h.b16 %v255
      %v795 = vunpack.c.l.b16 %v256
      %v796 = vunpack.c.h.b16 %v256
      %v797 = vunpack.c.l.b16 %v257
      %v798 = vunpack.c.h.b16 %v257
      %v799 = vunpack.c.l.b16 %v258
      %v800 = vunpack.c.h.b16 %v258
      %v801 = vunpack.c.l.b16 %v259
      %v802 = vunpack.c.h.b16 %v259
      %v803 = vunpack.c.l.b16 %v260
      %v804 = vunpack.c.h.b16 %v260
      %v805 = vunpack.c.l.b16 %v261
      %v806 = vunpack.c.h.b16 %v261
      %v807 = vunpack.c.l.b16 %v262
      %v808 = vunpack.c.h.b16 %v262
      %v809 = vunpack.c.l.b16 %v263
      %v810 = vunpack.c.h.b16 %v263
      %v811 = vunpack.c.l.b16 %v264
      %v812 = vunpack.c.h.b16 %v264
      %v813 = vunpack.c.l.b16 %v265
      %v814 = vunpack.c.h.b16 %v265
      %v815 = vunpack.c.l.b16 %v266
      %v816 = vunpack.c.h.b16 %v266
      %v817 = vunpack.c.l.b16 %v267
      %v818 = vunpack.c.h.b16 %v267
      %v819 = vunpack.c.l.b16 %v268
      %v820 = vunpack.c.h.b16 %v268
      %v821 = vunpack.c.l.b16 %v269
      %v822 = vunpack.c.h.b16 %v269
      %v823 = vunpack.c.l.b16 %v270
      %v824 = vunpack.c.h.b16 %v270
      %v825 = vunpack.c.l.b16 %v271
      %v826 = vunpack.c.h.b16 %v271
      %v827 = vunpack.c.l.b16 %v272
      %v828 = vunpack.c.h.b16 %v272
      %v829 = vunpack.c.l.b16 %v273
      %v830 = vunpack.c.h.b16 %v273
      %v831 = vunpack.c.l.b16 %v274
      %v832 = vunpack.c.h.b16 %v274
      %v833 = vunpack.c.l.b16 %v275
      %v834 = vunpack.c.h.b16 %v275
      %v835 = vunpack.c.l.b16 %v276
      %v836 = vunpack.c.h.b16 %v276
      %v837 = vunpack.c.l.b16 %v277
      %v838 = vunpack.c.h.b16 %v277
      %v839 = vunpack.c.l.b16 %v278
      %v840 = vunpack.c.h.b16 %v278
      %v841 = vunpack.c.l.b16 %v279
      %v842 = vunpack.c.h.b16 %v279
      %v843 = vunpack.c.l.b16 %v280
      %v844 = vunpack.c.h.b16 %v280
      %v845 = vunpack.c.l.b16 %v281
      %v846 = vunpack.c.h.b16 %v281
      %v847 = vunpack.c.l.b16 %v282
      %v848 = vunpack.c.h.b16 %v282
      %v849 = vunpack.c.l.b16 %v283
      %v850 = vunpack.c.h.b16 %v283
      %v851 = vunpack.c.l.b16 %v284
      %v852 = vunpack.c.h.b16 %v284
      %v853 = vunpack.c.l.b16 %v285
      %v854 = vunpack.c.h.b16 %v285
      %v855 = vunpack.c.l.b16 %v286
      %v856 = vunpack.c.h.b16 %v286
      %v857 = vunpack.c.l.b16 %v287
      %v858 = vunpack.c.h.b16 %v287
      %v859 = vunpack.c.l.b16 %v288
      %v860 = vunpack.c.h.b16 %v288
      %v861 = vunpack.c.l.b16 %v289
      %v862 = vunpack.c.h.b16 %v289
      %v863 = vunpack.c.l.b16 %v290
      %v864 = vunpack.c.h.b16 %v290
      %v865 = vunpack.c.l.b16 %v291
      %v866 = vunpack.c.h.b16 %v291
      %v867 = vunpack.c.l.b16 %v292
      %v868 = vunpack.c.h.b16 %v292
      %v869 = vunpack.c.l.b16 %v293
      %v870 = vunpack.c.h.b16 %v293
      %v871 = vunpack.c.l.b16 %v294
      %v872 = vunpack.c.h.b16 %v294
      %v873 = vunpack.c.l.b16 %v295
      %v874 = vunpack.c.h.b16 %v295
      %v875 = vunpack.c.l.b16 %v296
      %v876 = vunpack.c.h.b16 %v296
      %v877 = vunpack.c.l.b16 %v297
      %v878 = vunpack.c.h.b16 %v297
      %v879 = vunpack.c.l.b16 %v298
      %v880 = vunpack.c.h.b16 %v298
      %v881 = vunpack.c.l.b16 %v299
      %v882 = vunpack.c.h.b16 %v299
      %v883 = vunpack.c.l.b16 %v300
      %v884 = vunpack.c.h.b16 %v300
      %v885 = vunpack.c.l.b16 %v301
      %v886 = vunpack.c.h.b16 %v301
      %v887 = vunpack.c.l.b16 %v302
      %v888 = vunpack.c.h.b16 %v302
      %v889 = vunpack.c.l.b16 %v303
      %v890 = vunpack.c.h.b16 %v303
      %v891 = vunpack.c.l.b16 %v304
      %v892 = vunpack.c.h.b16 %v304
      %v893 = vunpack.c.l.b16 %v305
      %v894 = vunpack.c.h.b16 %v305
      %v895 = vunpack.c.l.b16 %v306
      %v896 = vunpack.c.h.b16 %v306
      %v897 = vunpack.c.l.b16 %v307
      %v898 = vunpack.c.h.b16 %v307
      %v899 = vunpack.c.l.b16 %v308
      %v900 = vunpack.c.h.b16 %v308
      %v901 = vunpack.c.l.b16 %v309
      %v902 = vunpack.c.h.b16 %v309
      %v903 = vunpack.c.l.b16 %v310
      %v904 = vunpack.c.h.b16 %v310
      %v905 = vunpack.c.l.b16 %v311
      %v906 = vunpack.c.h.b16 %v311
      %v907 = vunpack.c.l.b16 %v312
      %v908 = vunpack.c.h.b16 %v312
      %v909 = vunpack.c.l.b16 %v313
      %v910 = vunpack.c.h.b16 %v313
      %v911 = vunpack.c.l.b16 %v314
      %v912 = vunpack.c.h.b16 %v314
      %v913 = vunpack.c.l.b16 %v315
      %v914 = vunpack.c.h.b16 %v315
      %v915 = vunpack.c.l.b16 %v316
      %v916 = vunpack.c.h.b16 %v316
      %v917 = vunpack.c.l.b16 %v317
      %v918 = vunpack.c.h.b16 %v317
      %v919 = vunpack.c.l.b16 %v318
      %v920 = vunpack.c.h.b16 %v318
      %v921 = vunpack.c.l.b16 %v319
      %v922 = vunpack.c.h.b16 %v319
      %v923 = vunpack.c.l.b16 %v320
      %v924 = vunpack.c.h.b16 %v320
      %v925 = vunpack.c.l.b16 %v321
      %v926 = vunpack.c.h.b16 %v321
      %v927 = vunpack.c.l.b16 %v322
      %v928 = vunpack.c.h.b16 %v322
      %v929 = vunpack.c.l.b16 %v323
      %v930 = vunpack.c.h.b16 %v323
      %v931 = vunpack.c.l.b16 %v324
      %v932 = vunpack.c.h.b16 %v324
      %v933 = vunpack.c.l.b16 %v325
      %v934 = vunpack.c.h.b16 %v325
      %v935 = vunpack.c.l.b16 %v326
      %v936 = vunpack.c.h.b16 %v326
      %v937 = vunpack.c.l.b16 %v327
      %v938 = vunpack.c.h.b16 %v327
      %v939 = vunpack.c.l.b16 %v328
      %v940 = vunpack.c.h.b16 %v328
      %v941 = vunpack.c.l.b16 %v329
      %v942 = vunpack.c.h.b16 %v329
      %v943 = vunpack.c.l.b16 %v330
      %v944 = vunpack.c.h.b16 %v330
      %v945 = vunpack.c.l.b16 %v331
      %v946 = vunpack.c.h.b16 %v331
      %v947 = vunpack.c.l.b16 %v332
      %v948 = vunpack.c.h.b16 %v332
      %v949 = vunpack.c.l.b16 %v333
      %v950 = vunpack.c.h.b16 %v333
      %v951 = vunpack.c.l.b16 %v334
      %v952 = vunpack.c.h.b16 %v334
      %v953 = vunpack.c.l.b16 %v335
      %v954 = vunpack.c.h.b16 %v335
      %v955 = vunpack.c.l.b16 %v336
      %v956 = vunpack.c.h.b16 %v336
      %v957 = vunpack.c.l.b16 %v337
      %v958 = vunpack.c.h.b16 %v337
      %v959 = vunpack.c.l.b16 %v338
      %v960 = vunpack.c.h.b16 %v338
      %v961 = vunpack.c.l.b16 %v339
      %v962 = vunpack.c.h.b16 %v339
      %v963 = vunpack.c.l.b16 %v340
      %v964 = vunpack.c.h.b16 %v340
      %v965 = vunpack.c.l.b16 %v341
      %v966 = vunpack.c.h.b16 %v341
      %v967 = vunpack.c.l.b16 %v342
      %v968 = vunpack.c.h.b16 %v342
      %v969 = vunpack.c.l.b16 %v343
      %v970 = vunpack.c.h.b16 %v343
      %v971 = vunpack.c.l.b16 %v344
      %v972 = vunpack.c.h.b16 %v344
      %v973 = vunpack.c.l.b16 %v345
      %v974 = vunpack.c.h.b16 %v345
      %v975 = vunpack.c.l.b16 %v346
      %v976 = vunpack.c.h.b16 %v346
      %v977 = vunpack.c.l.b16 %v347
      %v978 = vunpack.c.h.b16 %v347
      %v979 = vunpack.c.l.b16 %v348
      %v980 = vunpack.c.h.b16 %v348
      %v981 = vunpack.c.l.b16 %v349
      %v982 = vunpack.c.h.b16 %v349
      %v983 = vunpack.c.l.b16 %v350
      %v984 = vunpack.c.h.b16 %v350
      %v985 = vunpack.c.l.b16 %v351
      %v986 = vunpack.c.h.b16 %v351
      %v987 = vunpack.c.l.b16 %v352
      %v988 = vunpack.c.h.b16 %v352
      %v989 = vunpack.c.l.b16 %v353
      %v990 = vunpack.c.h.b16 %v353
      %v991 = vunpack.c.l.b16 %v354
      %v992 = vunpack.c.h.b16 %v354
      %v993 = vunpack.c.l.b16 %v355
      %v994 = vunpack.c.h.b16 %v355
      %v995 = vunpack.c.l.b16 %v356
      %v996 = vunpack.c.h.b16 %v356
      %v997 = vunpack.c.l.b16 %v357
      %v998 = vunpack.c.h.b16 %v357
      %v999 = vunpack.c.l.b16 %v358
      %v1000 = vunpack.c.h.b16 %v358
      %v1001 = vunpack.c.l.b16 %v359
      %v1002 = vunpack.c.h.b16 %v359
      %v1003 = vunpack.c.l.b16 %v360
      %v1004 = vunpack.c.h.b16 %v360
      %v1005 = vunpack.c.l.b16 %v361
      %v1006 = vunpack.c.h.b16 %v361
      %v1007 = vunpack.c.l.b16 %v362
      %v1008 = vunpack.c.h.b16 %v362
      %v1009 = vunpack.c.l.b16 %v363
      %v1010 = vunpack.c.h.b16 %v363
      %v1011 = vunpack.c.l.b16 %v364
      %v1012 = vunpack.c.h.b16 %v364
      %v1013 = vunpack.c.l.b16 %v365
      %v1014 = vunpack.c.h.b16 %v365
      %v1015 = vunpack.c.l.b16 %v366
      %v1016 = vunpack.c.h.b16 %v366
      %v1017 = vunpack.c.l.b16 %v367
      %v1018 = vunpack.c.h.b16 %v367
      %v1019 = vunpack.c.l.b16 %v368
      %v1020 = vunpack.c.h.b16 %v368
      %v1021 = vunpack.c.l.b16 %v369
      %v1022 = vunpack.c.h.b16 %v369
      %v1023 = vunpack.c.l.b16 %v370
      %v1024 = vunpack.c.h.b16 %v370
      %v1025 = vunpack.c.l.b16 %v371
      %v1026 = vunpack.c.h.b16 %v371
      %v1027 = vunpack.c.l.b16 %v372
      %v1028 = vunpack.c.h.b16 %v372
      %v1029 = vunpack.c.l.b16 %v373
      %v1030 = vunpack.c.h.b16 %v373
      %v1031 = vunpack.c.l.b16 %v374
      %v1032 = vunpack.c.h.b16 %v374
      %v1033 = vunpack.c.l.b16 %v375
      %v1034 = vunpack.c.h.b16 %v375
      %v1035 = vunpack.c.l.b16 %v376
      %v1036 = vunpack.c.h.b16 %v376
      %v1037 = vunpack.c.l.b16 %v377
      %v1038 = vunpack.c.h.b16 %v377
      %v1039 = vunpack.c.l.b16 %v378
      %v1040 = vunpack.c.h.b16 %v378
      %v1041 = vunpack.c.l.b16 %v379
      %v1042 = vunpack.c.h.b16 %v379
      %v1043 = vunpack.c.l.b16 %v380
      %v1044 = vunpack.c.h.b16 %v380
      %v1045 = vunpack.c.l.b16 %v381
      %v1046 = vunpack.c.h.b16 %v381
      %v1047 = vunpack.c.l.b16 %v382
      %v1048 = vunpack.c.h.b16 %v382
      %v1049 = vunpack.c.l.b16 %v383
      %v1050 = vunpack.c.h.b16 %v383
      %v1051 = vunpack.c.l.b16 %v384
      %v1052 = vunpack.c.h.b16 %v384
      %v1053 = vunpack.c.l.b16 %v385
      %v1054 = vunpack.c.h.b16 %v385
      %v1055 = vunpack.c.l.b16 %v386
      %v1056 = vunpack.c.h.b16 %v386
      %v1057 = vunpack.c.l.b16 %v387
      %v1058 = vunpack.c.h.b16 %v387
      %v1059 = vunpack.c.l.b16 %v388
      %v1060 = vunpack.c.h.b16 %v388
      %v1061 = vpack.c.b16 %v641, %v639
      %v1062 = vpack.c.b16 %v642, %v640
      %v1063 = vpack.c.b16 %v645, %v643
      %v1064 = vpack.c.b16 %v646, %v644
      %v1065 = vpack.c.b16 %v649, %v647
      %v1066 = vpack.c.b16 %v650, %v648
      %v1067 = vpack.c.b16 %v653, %v651
      %v1068 = vpack.c.b16 %v654, %v652
      %v1069 = vpack.c.b16 %v657, %v655
      %v1070 = vpack.c.b16 %v658, %v656
      %v1071 = vpack.c.b16 %v661, %v659
      %v1072 = vpack.c.b16 %v662, %v660
      %v1073 = vpack.c.b16 %v665, %v663
      %v1074 = vpack.c.b16 %v666, %v664
      %v1075 = vpack.c.b16 %v669, %v667
      %v1076 = vpack.c.b16 %v670, %v668
      %v1077 = vpack.c.b16 %v673, %v671
      %v1078 = vpack.c.b16 %v674, %v672
      %v1079 = vpack.c.b16 %v677, %v675
      %v1080 = vpack.c.b16 %v678, %v676
      %v1081 = vpack.c.b16 %v681, %v679
      %v1082 = vpack.c.b16 %v682, %v680
      %v1083 = vpack.c.b16 %v685, %v683
      %v1084 = vpack.c.b16 %v686, %v684
      %v1085 = vpack.c.b16 %v689, %v687
      %v1086 = vpack.c.b16 %v690, %v688
      %v1087 = vpack.c.b16 %v693, %v691
      %v1088 = vpack.c.b16 %v694, %v692
      %v1089 = vpack.c.b16 %v697, %v695
      %v1090 = vpack.c.b16 %v698, %v696
      %v1091 = vpack.c.b16 %v701, %v699
      %v1092 = vpack.c.b16 %v702, %v700
      %v1093 = vpack.c.b16 %v705, %v703
      %v1094 = vpack.c.b16 %v706, %v704
      %v1095 = vpack.c.b16 %v709, %v707
      %v1096 = vpack.c.b16 %v710, %v708
      %v1097 = vpack.c.b16 %v713, %v711
      %v1098 = vpack.c.b16 %v714, %v712
      %v1099 = vpack.c.b16 %v717, %v715
      %v1100 = vpack.c.b16 %v718, %v716
      %v1101 = vpack.c.b16 %v721, %v719
      %v1102 = vpack.c.b16 %v722, %v720
      %v1103 = vpack.c.b16 %v725, %v723
      %v1104 = vpack.c.b16 %v726, %v724
      %v1105 = vpack.c.b16 %v729, %v727
      %v1106 = vpack.c.b16 %v730, %v728
      %v1107 = vpack.c.b16 %v733, %v731
      %v1108 = vpack.c.b16 %v734, %v732
      %v1109 = vpack.c.b16 %v737, %v735
      %v1110 = vpack.c.b16 %v738, %v736
      %v1111 = vpack.c.b16 %v741, %v739
      %v1112 = vpack.c.b16 %v742, %v740
      %v1113 = vpack.c.b16 %v745, %v743
      %v1114 = vpack.c.b16 %v746, %v744
      %v1115 = vpack.c.b16 %v749, %v747
      %v1116 = vpack.c.b16 %v750, %v748
      %v1117 = vpack.c.b16 %v753, %v751
      %v1118 = vpack.c.b16 %v754, %v752
      %v1119 = vpack.c.b16 %v757, %v755
      %v1120 = vpack.c.b16 %v758, %v756
      %v1121 = vpack.c.b16 %v761, %v759
      %v1122 = vpack.c.b16 %v762, %v760
      %v1123 = vpack.c.b16 %v765, %v763
      %v1124 = vpack.c.b16 %v766, %v764
      %v1125 = vpack.c.b16 %v769, %v767
      %v1126 = vpack.c.b16 %v770, %v768
      %v1127 = vpack.c.b16 %v773, %v771
      %v1128 = vpack.c.b16 %v774, %v772
      %v1129 = vpack.c.b16 %v777, %v775
      %v1130 = vpack.c.b16 %v778, %v776
      %v1131 = vpack.c.b16 %v781, %v779
      %v1132 = vpack.c.b16 %v782, %v780
      %v1133 = vpack.c.b16 %v785, %v783
      %v1134 = vpack.c.b16 %v786, %v784
      %v1135 = vpack.c.b16 %v789, %v787
      %v1136 = vpack.c.b16 %v790, %v788
      %v1137 = vpack.c.b16 %v793, %v791
      %v1138 = vpack.c.b16 %v794, %v792
      %v1139 = vpack.c.b16 %v797, %v795
      %v1140 = vpack.c.b16 %v798, %v796
      %v1141 = vpack.c.b16 %v801, %v799
      %v1142 = vpack.c.b16 %v802, %v800
      %v1143 = vpack.c.b16 %v805, %v803
      %v1144 = vpack.c.b16 %v806, %v804
      %v1145 = vpack.c.b16 %v809, %v807
      %v1146 = vpack.c.b16 %v810, %v808
      %v1147 = vpack.c.b16 %v813, %v811
      %v1148 = vpack.c.b16 %v814, %v812
      %v1149 = vpack.c.b16 %v817, %v815
      %v1150 = vpack.c.b16 %v818, %v816
      %v1151 = vpack.c.b16 %v821, %v819
      %v1152 = vpack.c.b16 %v822, %v820
      %v1153 = vpack.c.b16 %v825, %v823
      %v1154 = vpack.c.b16 %v826, %v824
      %v1155 = vpack.c.b16 %v829, %v827
      %v1156 = vpack.c.b16 %v830, %v828
      %v1157 = vpack.c.b16 %v833, %v831
      %v1158 = vpack.c.b16 %v834, %v832
      %v1159 = vpack.c.b16 %v837, %v835
      %v1160 = vpack.c.b16 %v838, %v836
      %v1161 = vpack.c.b16 %v841, %v839
      %v1162 = vpack.c.b16 %v842, %v840
      %v1163 = vpack.c.b16 %v845, %v843
      %v1164 = vpack.c.b16 %v846, %v844
      %v1165 = vpack.c.b16 %v849, %v847
      %v1166 = vpack.c.b16 %v850, %v848
      %v1167 = vpack.c.b16 %v853, %v851
      %v1168 = vpack.c.b16 %v854, %v852
      %v1169 = vpack.c.b16 %v857, %v855
      %v1170 = vpack.c.b16 %v858, %v856
      %v1171 = vpack.c.b16 %v861, %v859
      %v1172 = vpack.c.b16 %v862, %v860
      %v1173 = vpack.c.b16 %v865, %v863
      %v1174 = vpack.c.b16 %v866, %v864
      %v1175 = vpack.c.b16 %v869, %v867
      %v1176 = vpack.c.b16 %v870, %v868
      %v1177 = vpack.c.b16 %v873, %v871
      %v1178 = vpack.c.b16 %v874, %v872
      %v1179 = vpack.c.b16 %v877, %v875
      %v1180 = vpack.c.b16 %v878, %v876
      %v1181 = vpack.c.b16 %v881, %v879
      %v1182 = vpack.c.b16 %v882, %v880
      %v1183 = vpack.c.b16 %v885, %v883
      %v1184 = vpack.c.b16 %v886, %v884
      %v1185 = vpack.c.b16 %v889, %v887
      %v1186 = vpack.c.b16 %v890, %v888
      %v1187 = vpack.c.b16 %v893, %v891
      %v1188 = vpack.c.b16 %v894, %v892
      %v1189 = vpack.c.b16 %v897, %v895
      %v1190 = vpack.c.b16 %v898, %v896
      %v1191 = vpack.c.b16 %v901, %v899
      %v1192 = vpack.c.b16 %v902, %v900
      %v1193 = vpack.c.b16 %v905, %v903
      %v1194 = vpack.c.b16 %v906, %v904
      %v1195 = vpack.c.b16 %v909, %v907
      %v1196 = vpack.c.b16 %v910, %v908
      %v1197 = vpack.c.b16 %v913, %v911
      %v1198 = vpack.c.b16 %v914, %v912
      %v1199 = vpack.c.b16 %v917, %v915
      %v1200 = vpack.c.b16 %v918, %v916
      %v1201 = vpack.c.b16 %v921, %v919
      %v1202 = vpack.c.b16 %v922, %v920
      %v1203 = vpack.c.b16 %v925, %v923
      %v1204 = vpack.c.b16 %v926, %v924
      %v1205 = vpack.c.b16 %v929, %v927
      %v1206 = vpack.c.b16 %v930, %v928
      %v1207 = vpack.c.b16 %v933, %v931
      %v1208 = vpack.c.b16 %v934, %v932
      %v1209 = vpack.c.b16 %v937, %v935
      %v1210 = vpack.c.b16 %v938, %v936
      %v1211 = vpack.c.b16 %v941, %v939
      %v1212 = vpack.c.b16 %v942, %v940
      %v1213 = vpack.c.b16 %v945, %v943
      %v1214 = vpack.c.b16 %v946, %v944
      %v1215 = vpack.c.b16 %v949, %v947
      %v1216 = vpack.c.b16 %v950, %v948
      %v1217 = vpack.c.b16 %v953, %v951
      %v1218 = vpack.c.b16 %v954, %v952
      %v1219 = vpack.c.b16 %v957, %v955
      %v1220 = vpack.c.b16 %v958, %v956
      %v1221 = vpack.c.b16 %v961, %v959
      %v1222 = vpack.c.b16 %v962, %v960
      %v1223 = vpack.c.b16 %v965, %v963
      %v1224 = vpack.c.b16 %v966, %v964
      %v1225 = vpack.c.b16 %v969, %v967
      %v1226 = vpack.c.b16 %v970, %v968
      %v1227 = vpack.c.b16 %v973, %v971
      %v1228 = vpack.c.b16 %v974, %v972
      %v1229 = vpack.c.b16 %v977, %v975
      %v1230 = vpack.c.b16 %v978, %v976
      %v1231 = vpack.c.b16 %v981, %v979
      %v1232 = vpack.c.b16 %v982, %v980
      %v1233 = vpack.c.b16 %v985, %v983
      %v1234 = vpack.c.b16 %v986, %v984
      %v1235 = vpack.c.b16 %v989, %v987
      %v1236 = vpack.c.b16 %v990, %v988
      %v1237 = vpack.c.b16 %v993, %v991
      %v1238 = vpack.c.b16 %v994, %v992
      %v1239 = vpack.c.b16 %v997, %v995
      %v1240 = vpack.c.b16 %v998, %v996
      %v1241 = vpack.c.b16 %v1001, %v999
      %v1242 = vpack.c.b16 %v1002, %v1000
      %v1243 = vpack.c.b16 %v1005, %v1003
      %v1244 = vpack.c.b16 %v1006, %v1004
      %v1245 = vpack.c.b16 %v1009, %v1007
      %v1246 = vpack.c.b16 %v1010, %v1008
      %v1247 = vpack.c.b16 %v1013, %v1011
      %v1248 = vpack.c.b16 %v1014, %v1012
      %v1249 = vpack.c.b16 %v1017, %v1015
      %v1250 = vpack.c.b16 %v1018, %v1016
      %v1251 = vpack.c.b16 %v1021, %v1019
      %v1252 = vpack.c.b16 %v1022, %v1020
      %v1253 = vpack.c.b16 %v1025, %v1023
      %v1254 = vpack.c.b16 %v1026, %v1024
      %v1255 = vpack.c.b16 %v1029, %v1027
      %v1256 = vpack.c.b16 %v1030, %v1028
      %v1257 = vpack.c.b16 %v1033, %v1031
      %v1258 = vpack.c.b16 %v1034, %v1032
      %v1259 = vpack.c.b16 %v1037, %v1035
      %v1260 = vpack.c.b16 %v1038, %v1036
      %v1261 = vpack.c.b16 %v1041, %v1039
      %v1262 = vpack.c.b16 %v1042, %v1040
      %v1263 = vpack.c.b16 %v1045, %v1043
      %v1264 = vpack.c.b16 %v1046, %v1044
      %v1265 = vpack.c.b16 %v1049, %v1047
      %v1266 = vpack.c.b16 %v1050, %v1048
      %v1267 = vpack.c.b16 %v1053, %v1051
      %v1268 = vpack.c.b16 %v1054, %v1052
      %v1269 = vpack.c.b16 %v1057, %v1055
      %v1270 = vpack.c.b16 %v1058, %v1056
      %v1271 = vpack.c.b16 %v1059, %v1059
      %v1272 = vpack.c.b16 %v1060, %v1060
      %v1517 = vunpack.c.l.b16 %v389
      %v1518 = vunpack.c.l.b16 %v390
      %v1519 = vunpack.c.l.b16 %v391
      %v1520 = vunpack.c.l.b16 %v392
      %v1521 = vunpack.c.l.b16 %v393
      %v1522 = vunpack.c.l.b16 %v394
      %v1523 = vunpack.c.l.b16 %v395
      %v1524 = vunpack.c.l.b16 %v396
      %v1525 = vunpack.c.l.b16 %v397
      %v1526 = vunpack.c.l.b16 %v398
      %v1527 = vunpack.c.l.b16 %v399
      %v1528 = vunpack.c.l.b16 %v400
      %v1529 = vunpack.c.l.b16 %v401
      %v1530 = vunpack.c.l.b16 %v402
      %v1531 = vunpack.c.l.b16 %v403
      %v1532 = vunpack.c.l.b16 %v404
      %v1533 = vunpack.c.l.b16 %v405
      %v1534 = vunpack.c.l.b16 %v406
      %v1535 = vunpack.c.l.b16 %v407
      %v1536 = vunpack.c.l.b16 %v408
      %v1537 = vunpack.c.l.b16 %v409
      %v1538 = vunpack.c.l.b16 %v410
      %v1539 = vunpack.c.l.b16 %v411
      %v1540 = vunpack.c.l.b16 %v412
      %v1541 = vunpack.c.l.b16 %v413
      %v1542 = vunpack.c.l.b16 %v414
      %v1543 = vunpack.c.l.b16 %v415
      %v1544 = vunpack.c.l.b16 %v416
      %v1545 = vunpack.c.l.b16 %v417
      %v1546 = vunpack.c.l.b16 %v418
      %v1547 = vunpack.c.l.b16 %v419
      %v1548 = vunpack.c.l.b16 %v420
      %v1549 = vpack.c.b16 %v1518, %v1517
      %v1550 = vpack.c.b16 %v1520, %v1519
      %v1551 = vpack.c.b16 %v1522, %v1521
      %v1552 = vpack.c.b16 %v1524, %v1523
      %v1553 = vpack.c.b16 %v1526, %v1525
      %v1554 = vpack.c.b16 %v1528, %v1527
      %v1555 = vpack.c.b16 %v1530, %v1529
      %v1556 = vpack.c.b16 %v1532, %v1531
      %v1557 = vpack.c.b16 %v1534, %v1533
      %v1558 = vpack.c.b16 %v1536, %v1535
      %v1559 = vpack.c.b16 %v1538, %v1537
      %v1560 = vpack.c.b16 %v1540, %v1539
      %v1561 = vpack.c.b16 %v1542, %v1541
      %v1562 = vpack.c.b16 %v1544, %v1543
      %v1563 = vpack.c.b16 %v1546, %v1545
      %v1564 = vpack.c.b16 %v1548, %v1547
      %1581 = vmatprep.subr.bf16.mxu0 0
      %1582 = vmatpush1.bf16.msra.mxu0 %v1556
      %1583 = vmatprep.subr.bf16.mxu0 0
      %1584 = vmatpush1.bf16.msra.mxu0 %v1555
      %1585 = vmatprep.subr.bf16.mxu0 0
      %1586 = vmatpush1.bf16.msra.mxu0 %v1554
      %1587 = vmatprep.subr.bf16.mxu0 0
      %1588 = vmatpush1.bf16.msra.mxu0 %v1553
      %1589 = vmatprep.subr.bf16.mxu0 0
      %1590 = vmatpush1.bf16.msra.mxu0 %v1552
      %1591 = vmatprep.subr.bf16.mxu0 0
      %1592 = vmatpush1.bf16.msra.mxu0 %v1551
      %1593 = vmatprep.subr.bf16.mxu0 0
      %1594 = vmatpush1.bf16.msra.mxu0 %v1550
      %1595 = vmatprep.subr.bf16.mxu0 0
      %1596 = vmatpush1.bf16.msra.mxu0 %v1549
      %1597 = vmatprep.subr.bf16.mxu0 0
      %1598 = vmatpush2.bf16.msra.mxu0 %v1564
      %1599 = vmatprep.subr.bf16.mxu0 0
      %1600 = vmatpush2.bf16.msra.mxu0 %v1563
      %1601 = vmatprep.subr.bf16.mxu0 0
      %1602 = vmatpush2.bf16.msra.mxu0 %v1562
      %1603 = vmatprep.subr.bf16.mxu0 0
      %1604 = vmatpush2.bf16.msra.mxu0 %v1561
      %1605 = vmatprep.subr.bf16.mxu0 0
      %1606 = vmatpush2.bf16.msra.mxu0 %v1560
      %1607 = vmatprep.subr.bf16.mxu0 0
      %1608 = vmatpush2.bf16.msra.mxu0 %v1559
      %1609 = vmatprep.subr.bf16.mxu0 0
      %1610 = vmatpush2.bf16.msra.mxu0 %v1558
      %1611 = vmatprep.subr.bf16.mxu0 0
      %1612 = vmatpush2.bf16.msra.mxu0 %v1557
      %1613 = vmatprep.mubr.bf16.mxu0 %v1062
      %1614 = vmatmul.mubr.bf16.gmra.mxu0 %v1061
      %v1615 = vpop.f32.mrf.mxu0
      %v1616 = vadd.f32 %v426, %v1615
      %v1617 = vpop.f32.mrf.mxu0
      %v1618 = vpop.f32.mrf.mxu0
      %v1619 = vadd.f32 %v426, %v1618
      %v1620 = vpop.f32.mrf.mxu0
      %1621 = vmatprep.mubr.bf16.mxu0 %v1064
      %1622 = vmatmul.mubr.bf16.gmra.mxu0 %v1063
      %v1623 = vpop.f32.mrf.mxu0
      %v1624 = vadd.f32 %v426, %v1623
      %v1625 = vpop.f32.mrf.mxu0
      %v1626 = vpop.f32.mrf.mxu0
      %v1627 = vadd.f32 %v426, %v1626
      %v1628 = vpop.f32.mrf.mxu0
      %1629 = vmatprep.mubr.bf16.mxu0 %v1066
      %1630 = vmatmul.mubr.bf16.gmra.mxu0 %v1065
      %v1631 = vpop.f32.mrf.mxu0
      %v1632 = vadd.f32 %v426, %v1631
      %v1633 = vpop.f32.mrf.mxu0
      %v1634 = vpop.f32.mrf.mxu0
      %v1635 = vadd.f32 %v426, %v1634
      %v1636 = vpop.f32.mrf.mxu0
      %1637 = vmatprep.mubr.bf16.mxu0 %v1068
      %1638 = vmatmul.mubr.bf16.gmra.mxu0 %v1067
      %v1639 = vpop.f32.mrf.mxu0
      %v1640 = vadd.f32 %v426, %v1639
      %v1641 = vpop.f32.mrf.mxu0
      %v1642 = vpop.f32.mrf.mxu0
      %v1643 = vadd.f32 %v426, %v1642
      %v1644 = vpop.f32.mrf.mxu0
      %1645 = vmatprep.mubr.bf16.mxu0 %v1070
      %1646 = vmatmul.mubr.bf16.gmra.mxu0 %v1069
      %v1647 = vpop.f32.mrf.mxu0
      %v1648 = vadd.f32 %v426, %v1647
      %v1649 = vpop.f32.mrf.mxu0
      %v1650 = vpop.f32.mrf.mxu0
      %v1651 = vadd.f32 %v426, %v1650
      %v1652 = vpop.f32.mrf.mxu0
      %1653 = vmatprep.mubr.bf16.mxu0 %v1072
      %1654 = vmatmul.mubr.bf16.gmra.mxu0 %v1071
      %v1655 = vpop.f32.mrf.mxu0
      %v1656 = vadd.f32 %v426, %v1655
      %v1657 = vpop.f32.mrf.mxu0
      %v1658 = vpop.f32.mrf.mxu0
      %v1659 = vadd.f32 %v426, %v1658
      %v1660 = vpop.f32.mrf.mxu0
      %1661 = vmatprep.mubr.bf16.mxu0 %v1074
      %1662 = vmatmul.mubr.bf16.gmra.mxu0 %v1073
      %v1663 = vpop.f32.mrf.mxu0
      %v1664 = vadd.f32 %v426, %v1663
      %v1665 = vpop.f32.mrf.mxu0
      %v1666 = vpop.f32.mrf.mxu0
      %v1667 = vadd.f32 %v426, %v1666
      %v1668 = vpop.f32.mrf.mxu0
      %1669 = vmatprep.mubr.bf16.mxu0 %v1076
      %1670 = vmatmul.mubr.bf16.gmra.mxu0 %v1075
      %v1671 = vpop.f32.mrf.mxu0
      %v1672 = vadd.f32 %v426, %v1671
      %v1673 = vpop.f32.mrf.mxu0
      %v1674 = vpop.f32.mrf.mxu0
      %v1675 = vadd.f32 %v426, %v1674
      %v1676 = vpop.f32.mrf.mxu0
      %1677 = vmatprep.mubr.bf16.mxu0 %v1078
      %1678 = vmatmul.mubr.bf16.gmra.mxu0 %v1077
      %v1679 = vpop.f32.mrf.mxu0
      %v1680 = vadd.f32 %v426, %v1679
      %v1681 = vpop.f32.mrf.mxu0
      %v1682 = vpop.f32.mrf.mxu0
      %v1683 = vadd.f32 %v426, %v1682
      %v1684 = vpop.f32.mrf.mxu0
      %1685 = vmatprep.mubr.bf16.mxu0 %v1080
      %1686 = vmatmul.mubr.bf16.gmra.mxu0 %v1079
      %v1687 = vpop.f32.mrf.mxu0
      %v1688 = vadd.f32 %v426, %v1687
      %v1689 = vpop.f32.mrf.mxu0
      %v1690 = vpop.f32.mrf.mxu0
      %v1691 = vadd.f32 %v426, %v1690
      %v1692 = vpop.f32.mrf.mxu0
      %1693 = vmatprep.mubr.bf16.mxu0 %v1082
      %1694 = vmatmul.mubr.bf16.gmra.mxu0 %v1081
      %v1695 = vpop.f32.mrf.mxu0
      %v1696 = vadd.f32 %v426, %v1695
      %v1697 = vpop.f32.mrf.mxu0
      %v1698 = vpop.f32.mrf.mxu0
      %v1699 = vadd.f32 %v426, %v1698
      %v1700 = vpop.f32.mrf.mxu0
      %1701 = vmatprep.mubr.bf16.mxu0 %v1084
      %1702 = vmatmul.mubr.bf16.gmra.mxu0 %v1083
      %v1703 = vpop.f32.mrf.mxu0
      %v1704 = vadd.f32 %v426, %v1703
      %v1705 = vpop.f32.mrf.mxu0
      %v1706 = vpop.f32.mrf.mxu0
      %v1707 = vadd.f32 %v426, %v1706
      %v1708 = vpop.f32.mrf.mxu0
      %1709 = vmatprep.mubr.bf16.mxu0 %v1086
      %1710 = vmatmul.mubr.bf16.gmra.mxu0 %v1085
      %v1711 = vpop.f32.mrf.mxu0
      %v1712 = vadd.f32 %v426, %v1711
      %v1713 = vpop.f32.mrf.mxu0
      %v1714 = vpop.f32.mrf.mxu0
      %v1715 = vadd.f32 %v426, %v1714
      %v1716 = vpop.f32.mrf.mxu0
      %1717 = vmatprep.mubr.bf16.mxu0 %v1088
      %1718 = vmatmul.mubr.bf16.gmra.mxu0 %v1087
      %v1719 = vpop.f32.mrf.mxu0
      %v1720 = vadd.f32 %v426, %v1719
      %v1721 = vpop.f32.mrf.mxu0
      %v1722 = vpop.f32.mrf.mxu0
      %v1723 = vadd.f32 %v426, %v1722
      %v1724 = vpop.f32.mrf.mxu0
      %1725 = vmatprep.mubr.bf16.mxu0 %v1090
      %1726 = vmatmul.mubr.bf16.gmra.mxu0 %v1089
      %v1727 = vpop.f32.mrf.mxu0
      %v1728 = vadd.f32 %v426, %v1727
      %v1729 = vpop.f32.mrf.mxu0
      %v1730 = vpop.f32.mrf.mxu0
      %v1731 = vadd.f32 %v426, %v1730
      %v1732 = vpop.f32.mrf.mxu0
      %1733 = vmatprep.mubr.bf16.mxu0 %v1092
      %1734 = vmatmul.mubr.bf16.gmra.mxu0 %v1091
      %v1735 = vpop.f32.mrf.mxu0
      %v1736 = vadd.f32 %v426, %v1735
      %v1737 = vpop.f32.mrf.mxu0
      %v1738 = vpop.f32.mrf.mxu0
      %v1739 = vadd.f32 %v426, %v1738
      %v1740 = vpop.f32.mrf.mxu0
      %1741 = vmatprep.mubr.bf16.mxu0 %v1094
      %1742 = vmatmul.mubr.bf16.gmra.mxu0 %v1093
      %v1743 = vpop.f32.mrf.mxu0
      %v1744 = vadd.f32 %v426, %v1743
      %v1745 = vpop.f32.mrf.mxu0
      %v1746 = vpop.f32.mrf.mxu0
      %v1747 = vadd.f32 %v426, %v1746
      %v1748 = vpop.f32.mrf.mxu0
      %1749 = vmatprep.mubr.bf16.mxu0 %v1096
      %1750 = vmatmul.mubr.bf16.gmra.mxu0 %v1095
      %v1751 = vpop.f32.mrf.mxu0
      %v1752 = vadd.f32 %v426, %v1751
      %v1753 = vpop.f32.mrf.mxu0
      %v1754 = vpop.f32.mrf.mxu0
      %v1755 = vadd.f32 %v426, %v1754
      %v1756 = vpop.f32.mrf.mxu0
      %1757 = vmatprep.mubr.bf16.mxu0 %v1098
      %1758 = vmatmul.mubr.bf16.gmra.mxu0 %v1097
      %v1759 = vpop.f32.mrf.mxu0
      %v1760 = vadd.f32 %v426, %v1759
      %v1761 = vpop.f32.mrf.mxu0
      %v1762 = vpop.f32.mrf.mxu0
      %v1763 = vadd.f32 %v426, %v1762
      %v1764 = vpop.f32.mrf.mxu0
      %1765 = vmatprep.mubr.bf16.mxu0 %v1100
      %1766 = vmatmul.mubr.bf16.gmra.mxu0 %v1099
      %v1767 = vpop.f32.mrf.mxu0
      %v1768 = vadd.f32 %v426, %v1767
      %v1769 = vpop.f32.mrf.mxu0
      %v1770 = vpop.f32.mrf.mxu0
      %v1771 = vadd.f32 %v426, %v1770
      %v1772 = vpop.f32.mrf.mxu0
      %1773 = vmatprep.mubr.bf16.mxu0 %v1102
      %1774 = vmatmul.mubr.bf16.gmra.mxu0 %v1101
      %v1775 = vpop.f32.mrf.mxu0
      %v1776 = vadd.f32 %v426, %v1775
      %v1777 = vpop.f32.mrf.mxu0
      %v1778 = vpop.f32.mrf.mxu0
      %v1779 = vadd.f32 %v426, %v1778
      %v1780 = vpop.f32.mrf.mxu0
      %1781 = vmatprep.mubr.bf16.mxu0 %v1104
      %1782 = vmatmul.mubr.bf16.gmra.mxu0 %v1103
      %v1783 = vpop.f32.mrf.mxu0
      %v1784 = vadd.f32 %v426, %v1783
      %v1785 = vpop.f32.mrf.mxu0
      %v1786 = vpop.f32.mrf.mxu0
      %v1787 = vadd.f32 %v426, %v1786
      %v1788 = vpop.f32.mrf.mxu0
      %1789 = vmatprep.mubr.bf16.mxu0 %v1106
      %1790 = vmatmul.mubr.bf16.gmra.mxu0 %v1105
      %v1791 = vpop.f32.mrf.mxu0
      %v1792 = vadd.f32 %v426, %v1791
      %v1793 = vpop.f32.mrf.mxu0
      %v1794 = vpop.f32.mrf.mxu0
      %v1795 = vadd.f32 %v426, %v1794
      %v1796 = vpop.f32.mrf.mxu0
      %1797 = vmatprep.mubr.bf16.mxu0 %v1108
      %1798 = vmatmul.mubr.bf16.gmra.mxu0 %v1107
      %v1799 = vpop.f32.mrf.mxu0
      %v1800 = vadd.f32 %v426, %v1799
      %v1801 = vpop.f32.mrf.mxu0
      %v1802 = vpop.f32.mrf.mxu0
      %v1803 = vadd.f32 %v426, %v1802
      %v1804 = vpop.f32.mrf.mxu0
      %1805 = vmatprep.mubr.bf16.mxu0 %v1110
      %1806 = vmatmul.mubr.bf16.gmra.mxu0 %v1109
      %v1807 = vpop.f32.mrf.mxu0
      %v1808 = vadd.f32 %v426, %v1807
      %v1809 = vpop.f32.mrf.mxu0
      %v1810 = vpop.f32.mrf.mxu0
      %v1811 = vadd.f32 %v426, %v1810
      %v1812 = vpop.f32.mrf.mxu0
      %1813 = vmatprep.mubr.bf16.mxu0 %v1112
      %1814 = vmatmul.mubr.bf16.gmra.mxu0 %v1111
      %v1815 = vpop.f32.mrf.mxu0
      %v1816 = vadd.f32 %v426, %v1815
      %v1817 = vpop.f32.mrf.mxu0
      %v1818 = vpop.f32.mrf.mxu0
      %v1819 = vadd.f32 %v426, %v1818
      %v1820 = vpop.f32.mrf.mxu0
      %1821 = vmatprep.mubr.bf16.mxu0 %v1114
      %1822 = vmatmul.mubr.bf16.gmra.mxu0 %v1113
      %v1823 = vpop.f32.mrf.mxu0
      %v1824 = vadd.f32 %v426, %v1823
      %v1825 = vpop.f32.mrf.mxu0
      %v1826 = vpop.f32.mrf.mxu0
      %v1827 = vadd.f32 %v426, %v1826
      %v1828 = vpop.f32.mrf.mxu0
      %1829 = vmatprep.mubr.bf16.mxu0 %v1116
      %1830 = vmatmul.mubr.bf16.gmra.mxu0 %v1115
      %v1831 = vpop.f32.mrf.mxu0
      %v1832 = vadd.f32 %v426, %v1831
      %v1833 = vpop.f32.mrf.mxu0
      %v1834 = vpop.f32.mrf.mxu0
      %v1835 = vadd.f32 %v426, %v1834
      %v1836 = vpop.f32.mrf.mxu0
      %1837 = vmatprep.mubr.bf16.mxu0 %v1118
      %1838 = vmatmul.mubr.bf16.gmra.mxu0 %v1117
      %v1839 = vpop.f32.mrf.mxu0
      %v1840 = vadd.f32 %v426, %v1839
      %v1841 = vpop.f32.mrf.mxu0
      %v1842 = vpop.f32.mrf.mxu0
      %v1843 = vadd.f32 %v426, %v1842
      %v1844 = vpop.f32.mrf.mxu0
      %1845 = vmatprep.mubr.bf16.mxu0 %v1120
      %1846 = vmatmul.mubr.bf16.gmra.mxu0 %v1119
      %v1847 = vpop.f32.mrf.mxu0
      %v1848 = vadd.f32 %v426, %v1847
      %v1849 = vpop.f32.mrf.mxu0
      %v1850 = vpop.f32.mrf.mxu0
      %v1851 = vadd.f32 %v426, %v1850
      %v1852 = vpop.f32.mrf.mxu0
      %1853 = vmatprep.mubr.bf16.mxu0 %v1122
      %1854 = vmatmul.mubr.bf16.gmra.mxu0 %v1121
      %v1855 = vpop.f32.mrf.mxu0
      %v1856 = vadd.f32 %v426, %v1855
      %v1857 = vpop.f32.mrf.mxu0
      %v1858 = vpop.f32.mrf.mxu0
      %v1859 = vadd.f32 %v426, %v1858
      %v1860 = vpop.f32.mrf.mxu0
      %1861 = vmatprep.mubr.bf16.mxu0 %v1124
      %1862 = vmatmul.mubr.bf16.gmra.mxu0 %v1123
      %v1863 = vpop.f32.mrf.mxu0
      %v1864 = vadd.f32 %v426, %v1863
      %v1865 = vpop.f32.mrf.mxu0
      %v1866 = vpop.f32.mrf.mxu0
      %v1867 = vadd.f32 %v426, %v1866
      %v1868 = vpop.f32.mrf.mxu0
      %1869 = vmatprep.mubr.bf16.mxu0 %v1126
      %1870 = vmatmul.mubr.bf16.gmra.mxu0 %v1125
      %v1871 = vpop.f32.mrf.mxu0
      %v1872 = vadd.f32 %v426, %v1871
      %v1873 = vpop.f32.mrf.mxu0
      %v1874 = vpop.f32.mrf.mxu0
      %v1875 = vadd.f32 %v426, %v1874
      %v1876 = vpop.f32.mrf.mxu0
      %1877 = vmatprep.mubr.bf16.mxu0 %v1128
      %1878 = vmatmul.mubr.bf16.gmra.mxu0 %v1127
      %v1879 = vpop.f32.mrf.mxu0
      %v1880 = vadd.f32 %v426, %v1879
      %v1881 = vpop.f32.mrf.mxu0
      %v1882 = vpop.f32.mrf.mxu0
      %v1883 = vadd.f32 %v426, %v1882
      %v1884 = vpop.f32.mrf.mxu0
      %1885 = vmatprep.mubr.bf16.mxu0 %v1130
      %1886 = vmatmul.mubr.bf16.gmra.mxu0 %v1129
      %v1887 = vpop.f32.mrf.mxu0
      %v1888 = vadd.f32 %v426, %v1887
      %v1889 = vpop.f32.mrf.mxu0
      %v1890 = vpop.f32.mrf.mxu0
      %v1891 = vadd.f32 %v426, %v1890
      %v1892 = vpop.f32.mrf.mxu0
      %1893 = vmatprep.mubr.bf16.mxu0 %v1132
      %1894 = vmatmul.mubr.bf16.gmra.mxu0 %v1131
      %v1895 = vpop.f32.mrf.mxu0
      %v1896 = vadd.f32 %v426, %v1895
      %v1897 = vpop.f32.mrf.mxu0
      %v1898 = vpop.f32.mrf.mxu0
      %v1899 = vadd.f32 %v426, %v1898
      %v1900 = vpop.f32.mrf.mxu0
      %1901 = vmatprep.mubr.bf16.mxu0 %v1134
      %1902 = vmatmul.mubr.bf16.gmra.mxu0 %v1133
      %v1903 = vpop.f32.mrf.mxu0
      %v1904 = vadd.f32 %v426, %v1903
      %v1905 = vpop.f32.mrf.mxu0
      %v1906 = vpop.f32.mrf.mxu0
      %v1907 = vadd.f32 %v426, %v1906
      %v1908 = vpop.f32.mrf.mxu0
      %1909 = vmatprep.mubr.bf16.mxu0 %v1136
      %1910 = vmatmul.mubr.bf16.gmra.mxu0 %v1135
      %v1911 = vpop.f32.mrf.mxu0
      %v1912 = vadd.f32 %v426, %v1911
      %v1913 = vpop.f32.mrf.mxu0
      %v1914 = vpop.f32.mrf.mxu0
      %v1915 = vadd.f32 %v426, %v1914
      %v1916 = vpop.f32.mrf.mxu0
      %1917 = vmatprep.mubr.bf16.mxu0 %v1138
      %1918 = vmatmul.mubr.bf16.gmra.mxu0 %v1137
      %v1919 = vpop.f32.mrf.mxu0
      %v1920 = vadd.f32 %v426, %v1919
      %v1921 = vpop.f32.mrf.mxu0
      %v1922 = vpop.f32.mrf.mxu0
      %v1923 = vadd.f32 %v426, %v1922
      %v1924 = vpop.f32.mrf.mxu0
      %1925 = vmatprep.mubr.bf16.mxu0 %v1140
      %1926 = vmatmul.mubr.bf16.gmra.mxu0 %v1139
      %v1927 = vpop.f32.mrf.mxu0
      %v1928 = vadd.f32 %v426, %v1927
      %v1929 = vpop.f32.mrf.mxu0
      %v1930 = vpop.f32.mrf.mxu0
      %v1931 = vadd.f32 %v426, %v1930
      %v1932 = vpop.f32.mrf.mxu0
      %1933 = vmatprep.mubr.bf16.mxu0 %v1142
      %1934 = vmatmul.mubr.bf16.gmra.mxu0 %v1141
      %v1935 = vpop.f32.mrf.mxu0
      %v1936 = vadd.f32 %v426, %v1935
      %v1937 = vpop.f32.mrf.mxu0
      %v1938 = vpop.f32.mrf.mxu0
      %v1939 = vadd.f32 %v426, %v1938
      %v1940 = vpop.f32.mrf.mxu0
      %1941 = vmatprep.mubr.bf16.mxu0 %v1144
      %1942 = vmatmul.mubr.bf16.gmra.mxu0 %v1143
      %v1943 = vpop.f32.mrf.mxu0
      %v1944 = vadd.f32 %v426, %v1943
      %v1945 = vpop.f32.mrf.mxu0
      %v1946 = vpop.f32.mrf.mxu0
      %v1947 = vadd.f32 %v426, %v1946
      %v1948 = vpop.f32.mrf.mxu0
      %1949 = vmatprep.mubr.bf16.mxu0 %v1146
      %1950 = vmatmul.mubr.bf16.gmra.mxu0 %v1145
      %v1951 = vpop.f32.mrf.mxu0
      %v1952 = vadd.f32 %v426, %v1951
      %v1953 = vpop.f32.mrf.mxu0
      %v1954 = vpop.f32.mrf.mxu0
      %v1955 = vadd.f32 %v426, %v1954
      %v1956 = vpop.f32.mrf.mxu0
      %1957 = vmatprep.mubr.bf16.mxu0 %v1148
      %1958 = vmatmul.mubr.bf16.gmra.mxu0 %v1147
      %v1959 = vpop.f32.mrf.mxu0
      %v1960 = vadd.f32 %v426, %v1959
      %v1961 = vpop.f32.mrf.mxu0
      %v1962 = vpop.f32.mrf.mxu0
      %v1963 = vadd.f32 %v426, %v1962
      %v1964 = vpop.f32.mrf.mxu0
      %1965 = vmatprep.mubr.bf16.mxu0 %v1150
      %1966 = vmatmul.mubr.bf16.gmra.mxu0 %v1149
      %v1967 = vpop.f32.mrf.mxu0
      %v1968 = vadd.f32 %v426, %v1967
      %v1969 = vpop.f32.mrf.mxu0
      %v1970 = vpop.f32.mrf.mxu0
      %v1971 = vadd.f32 %v426, %v1970
      %v1972 = vpop.f32.mrf.mxu0
      %1973 = vmatprep.mubr.bf16.mxu0 %v1152
      %1974 = vmatmul.mubr.bf16.gmra.mxu0 %v1151
      %v1975 = vpop.f32.mrf.mxu0
      %v1976 = vadd.f32 %v426, %v1975
      %v1977 = vpop.f32.mrf.mxu0
      %v1978 = vpop.f32.mrf.mxu0
      %v1979 = vadd.f32 %v426, %v1978
      %v1980 = vpop.f32.mrf.mxu0
      %1981 = vmatprep.mubr.bf16.mxu0 %v1154
      %1982 = vmatmul.mubr.bf16.gmra.mxu0 %v1153
      %v1983 = vpop.f32.mrf.mxu0
      %v1984 = vadd.f32 %v426, %v1983
      %v1985 = vpop.f32.mrf.mxu0
      %v1986 = vpop.f32.mrf.mxu0
      %v1987 = vadd.f32 %v426, %v1986
      %v1988 = vpop.f32.mrf.mxu0
      %1989 = vmatprep.mubr.bf16.mxu0 %v1156
      %1990 = vmatmul.mubr.bf16.gmra.mxu0 %v1155
      %v1991 = vpop.f32.mrf.mxu0
      %v1992 = vadd.f32 %v426, %v1991
      %v1993 = vpop.f32.mrf.mxu0
      %v1994 = vpop.f32.mrf.mxu0
      %v1995 = vadd.f32 %v426, %v1994
      %v1996 = vpop.f32.mrf.mxu0
      %1997 = vmatprep.mubr.bf16.mxu0 %v1158
      %1998 = vmatmul.mubr.bf16.gmra.mxu0 %v1157
      %v1999 = vpop.f32.mrf.mxu0
      %v2000 = vadd.f32 %v426, %v1999
      %v2001 = vpop.f32.mrf.mxu0
      %v2002 = vpop.f32.mrf.mxu0
      %v2003 = vadd.f32 %v426, %v2002
      %v2004 = vpop.f32.mrf.mxu0
      %2005 = vmatprep.mubr.bf16.mxu0 %v1160
      %2006 = vmatmul.mubr.bf16.gmra.mxu0 %v1159
      %v2007 = vpop.f32.mrf.mxu0
      %v2008 = vadd.f32 %v426, %v2007
      %v2009 = vpop.f32.mrf.mxu0
      %v2010 = vpop.f32.mrf.mxu0
      %v2011 = vadd.f32 %v426, %v2010
      %v2012 = vpop.f32.mrf.mxu0
      %2013 = vmatprep.mubr.bf16.mxu0 %v1162
      %2014 = vmatmul.mubr.bf16.gmra.mxu0 %v1161
      %v2015 = vpop.f32.mrf.mxu0
      %v2016 = vadd.f32 %v426, %v2015
      %v2017 = vpop.f32.mrf.mxu0
      %v2018 = vpop.f32.mrf.mxu0
      %v2019 = vadd.f32 %v426, %v2018
      %v2020 = vpop.f32.mrf.mxu0
      %2021 = vmatprep.mubr.bf16.mxu0 %v1164
      %2022 = vmatmul.mubr.bf16.gmra.mxu0 %v1163
      %v2023 = vpop.f32.mrf.mxu0
      %v2024 = vadd.f32 %v426, %v2023
      %v2025 = vpop.f32.mrf.mxu0
      %v2026 = vpop.f32.mrf.mxu0
      %v2027 = vadd.f32 %v426, %v2026
      %v2028 = vpop.f32.mrf.mxu0
      %2029 = vmatprep.mubr.bf16.mxu0 %v1166
      %2030 = vmatmul.mubr.bf16.gmra.mxu0 %v1165
      %v2031 = vpop.f32.mrf.mxu0
      %v2032 = vadd.f32 %v426, %v2031
      %v2033 = vpop.f32.mrf.mxu0
      %v2034 = vpop.f32.mrf.mxu0
      %v2035 = vadd.f32 %v426, %v2034
      %v2036 = vpop.f32.mrf.mxu0
      %2037 = vmatprep.mubr.bf16.mxu0 %v1168
      %2038 = vmatmul.mubr.bf16.gmra.mxu0 %v1167
      %v2039 = vpop.f32.mrf.mxu0
      %v2040 = vadd.f32 %v426, %v2039
      %v2041 = vpop.f32.mrf.mxu0
      %v2042 = vpop.f32.mrf.mxu0
      %v2043 = vadd.f32 %v426, %v2042
      %v2044 = vpop.f32.mrf.mxu0
      %2045 = vmatprep.mubr.bf16.mxu0 %v1170
      %2046 = vmatmul.mubr.bf16.gmra.mxu0 %v1169
      %v2047 = vpop.f32.mrf.mxu0
      %v2048 = vadd.f32 %v426, %v2047
      %v2049 = vpop.f32.mrf.mxu0
      %v2050 = vpop.f32.mrf.mxu0
      %v2051 = vadd.f32 %v426, %v2050
      %v2052 = vpop.f32.mrf.mxu0
      %2053 = vmatprep.mubr.bf16.mxu0 %v1172
      %2054 = vmatmul.mubr.bf16.gmra.mxu0 %v1171
      %v2055 = vpop.f32.mrf.mxu0
      %v2056 = vadd.f32 %v426, %v2055
      %v2057 = vpop.f32.mrf.mxu0
      %v2058 = vpop.f32.mrf.mxu0
      %v2059 = vadd.f32 %v426, %v2058
      %v2060 = vpop.f32.mrf.mxu0
      %2061 = vmatprep.mubr.bf16.mxu0 %v1174
      %2062 = vmatmul.mubr.bf16.gmra.mxu0 %v1173
      %v2063 = vpop.f32.mrf.mxu0
      %v2064 = vadd.f32 %v426, %v2063
      %v2065 = vpop.f32.mrf.mxu0
      %v2066 = vpop.f32.mrf.mxu0
      %v2067 = vadd.f32 %v426, %v2066
      %v2068 = vpop.f32.mrf.mxu0
      %2069 = vmatprep.mubr.bf16.mxu0 %v1176
      %2070 = vmatmul.mubr.bf16.gmra.mxu0 %v1175
      %v2071 = vpop.f32.mrf.mxu0
      %v2072 = vadd.f32 %v426, %v2071
      %v2073 = vpop.f32.mrf.mxu0
      %v2074 = vpop.f32.mrf.mxu0
      %v2075 = vadd.f32 %v426, %v2074
      %v2076 = vpop.f32.mrf.mxu0
      %2077 = vmatprep.mubr.bf16.mxu0 %v1178
      %2078 = vmatmul.mubr.bf16.gmra.mxu0 %v1177
      %v2079 = vpop.f32.mrf.mxu0
      %v2080 = vadd.f32 %v426, %v2079
      %v2081 = vpop.f32.mrf.mxu0
      %v2082 = vpop.f32.mrf.mxu0
      %v2083 = vadd.f32 %v426, %v2082
      %v2084 = vpop.f32.mrf.mxu0
      %2085 = vmatprep.mubr.bf16.mxu0 %v1180
      %2086 = vmatmul.mubr.bf16.gmra.mxu0 %v1179
      %v2087 = vpop.f32.mrf.mxu0
      %v2088 = vadd.f32 %v426, %v2087
      %v2089 = vpop.f32.mrf.mxu0
      %v2090 = vpop.f32.mrf.mxu0
      %v2091 = vadd.f32 %v426, %v2090
      %v2092 = vpop.f32.mrf.mxu0
      %2093 = vmatprep.mubr.bf16.mxu0 %v1182
      %2094 = vmatmul.mubr.bf16.gmra.mxu0 %v1181
      %v2095 = vpop.f32.mrf.mxu0
      %v2096 = vadd.f32 %v426, %v2095
      %v2097 = vpop.f32.mrf.mxu0
      %v2098 = vpop.f32.mrf.mxu0
      %v2099 = vadd.f32 %v426, %v2098
      %v2100 = vpop.f32.mrf.mxu0
      %2101 = vmatprep.mubr.bf16.mxu0 %v1184
      %2102 = vmatmul.mubr.bf16.gmra.mxu0 %v1183
      %v2103 = vpop.f32.mrf.mxu0
      %v2104 = vadd.f32 %v426, %v2103
      %v2105 = vpop.f32.mrf.mxu0
      %v2106 = vpop.f32.mrf.mxu0
      %v2107 = vadd.f32 %v426, %v2106
      %v2108 = vpop.f32.mrf.mxu0
      %2109 = vmatprep.mubr.bf16.mxu0 %v1186
      %2110 = vmatmul.mubr.bf16.gmra.mxu0 %v1185
      %v2111 = vpop.f32.mrf.mxu0
      %v2112 = vadd.f32 %v426, %v2111
      %v2113 = vpop.f32.mrf.mxu0
      %v2114 = vpop.f32.mrf.mxu0
      %v2115 = vadd.f32 %v426, %v2114
      %v2116 = vpop.f32.mrf.mxu0
      %2117 = vmatprep.mubr.bf16.mxu0 %v1188
      %2118 = vmatmul.mubr.bf16.gmra.mxu0 %v1187
      %v2119 = vpop.f32.mrf.mxu0
      %v2120 = vadd.f32 %v426, %v2119
      %v2121 = vpop.f32.mrf.mxu0
      %v2122 = vpop.f32.mrf.mxu0
      %v2123 = vadd.f32 %v426, %v2122
      %v2124 = vpop.f32.mrf.mxu0
      %2125 = vmatprep.mubr.bf16.mxu0 %v1190
      %2126 = vmatmul.mubr.bf16.gmra.mxu0 %v1189
      %v2127 = vpop.f32.mrf.mxu0
      %v2128 = vadd.f32 %v426, %v2127
      %v2129 = vpop.f32.mrf.mxu0
      %v2130 = vpop.f32.mrf.mxu0
      %v2131 = vadd.f32 %v426, %v2130
      %v2132 = vpop.f32.mrf.mxu0
      %2133 = vmatprep.mubr.bf16.mxu0 %v1192
      %2134 = vmatmul.mubr.bf16.gmra.mxu0 %v1191
      %v2135 = vpop.f32.mrf.mxu0
      %v2136 = vadd.f32 %v426, %v2135
      %v2137 = vpop.f32.mrf.mxu0
      %v2138 = vpop.f32.mrf.mxu0
      %v2139 = vadd.f32 %v426, %v2138
      %v2140 = vpop.f32.mrf.mxu0
      %2141 = vmatprep.mubr.bf16.mxu0 %v1194
      %2142 = vmatmul.mubr.bf16.gmra.mxu0 %v1193
      %v2143 = vpop.f32.mrf.mxu0
      %v2144 = vadd.f32 %v426, %v2143
      %v2145 = vpop.f32.mrf.mxu0
      %v2146 = vpop.f32.mrf.mxu0
      %v2147 = vadd.f32 %v426, %v2146
      %v2148 = vpop.f32.mrf.mxu0
      %2149 = vmatprep.mubr.bf16.mxu0 %v1196
      %2150 = vmatmul.mubr.bf16.gmra.mxu0 %v1195
      %v2151 = vpop.f32.mrf.mxu0
      %v2152 = vadd.f32 %v426, %v2151
      %v2153 = vpop.f32.mrf.mxu0
      %v2154 = vpop.f32.mrf.mxu0
      %v2155 = vadd.f32 %v426, %v2154
      %v2156 = vpop.f32.mrf.mxu0
      %2157 = vmatprep.mubr.bf16.mxu0 %v1198
      %2158 = vmatmul.mubr.bf16.gmra.mxu0 %v1197
      %v2159 = vpop.f32.mrf.mxu0
      %v2160 = vadd.f32 %v426, %v2159
      %v2161 = vpop.f32.mrf.mxu0
      %v2162 = vpop.f32.mrf.mxu0
      %v2163 = vadd.f32 %v426, %v2162
      %v2164 = vpop.f32.mrf.mxu0
      %2165 = vmatprep.mubr.bf16.mxu0 %v1200
      %2166 = vmatmul.mubr.bf16.gmra.mxu0 %v1199
      %v2167 = vpop.f32.mrf.mxu0
      %v2168 = vadd.f32 %v426, %v2167
      %v2169 = vpop.f32.mrf.mxu0
      %v2170 = vpop.f32.mrf.mxu0
      %v2171 = vadd.f32 %v426, %v2170
      %v2172 = vpop.f32.mrf.mxu0
      %2173 = vmatprep.mubr.bf16.mxu0 %v1202
      %2174 = vmatmul.mubr.bf16.gmra.mxu0 %v1201
      %v2175 = vpop.f32.mrf.mxu0
      %v2176 = vadd.f32 %v426, %v2175
      %v2177 = vpop.f32.mrf.mxu0
      %v2178 = vpop.f32.mrf.mxu0
      %v2179 = vadd.f32 %v426, %v2178
      %v2180 = vpop.f32.mrf.mxu0
      %2181 = vmatprep.mubr.bf16.mxu0 %v1204
      %2182 = vmatmul.mubr.bf16.gmra.mxu0 %v1203
      %v2183 = vpop.f32.mrf.mxu0
      %v2184 = vadd.f32 %v426, %v2183
      %v2185 = vpop.f32.mrf.mxu0
      %v2186 = vpop.f32.mrf.mxu0
      %v2187 = vadd.f32 %v426, %v2186
      %v2188 = vpop.f32.mrf.mxu0
      %2189 = vmatprep.mubr.bf16.mxu0 %v1206
      %2190 = vmatmul.mubr.bf16.gmra.mxu0 %v1205
      %v2191 = vpop.f32.mrf.mxu0
      %v2192 = vadd.f32 %v426, %v2191
      %v2193 = vpop.f32.mrf.mxu0
      %v2194 = vpop.f32.mrf.mxu0
      %v2195 = vadd.f32 %v426, %v2194
      %v2196 = vpop.f32.mrf.mxu0
      %2197 = vmatprep.mubr.bf16.mxu0 %v1208
      %2198 = vmatmul.mubr.bf16.gmra.mxu0 %v1207
      %v2199 = vpop.f32.mrf.mxu0
      %v2200 = vadd.f32 %v426, %v2199
      %v2201 = vpop.f32.mrf.mxu0
      %v2202 = vpop.f32.mrf.mxu0
      %v2203 = vadd.f32 %v426, %v2202
      %v2204 = vpop.f32.mrf.mxu0
      %2205 = vmatprep.mubr.bf16.mxu0 %v1210
      %2206 = vmatmul.mubr.bf16.gmra.mxu0 %v1209
      %v2207 = vpop.f32.mrf.mxu0
      %v2208 = vadd.f32 %v426, %v2207
      %v2209 = vpop.f32.mrf.mxu0
      %v2210 = vpop.f32.mrf.mxu0
      %v2211 = vadd.f32 %v426, %v2210
      %v2212 = vpop.f32.mrf.mxu0
      %2213 = vmatprep.mubr.bf16.mxu0 %v1212
      %2214 = vmatmul.mubr.bf16.gmra.mxu0 %v1211
      %v2215 = vpop.f32.mrf.mxu0
      %v2216 = vadd.f32 %v426, %v2215
      %v2217 = vpop.f32.mrf.mxu0
      %v2218 = vpop.f32.mrf.mxu0
      %v2219 = vadd.f32 %v426, %v2218
      %v2220 = vpop.f32.mrf.mxu0
      %2221 = vmatprep.mubr.bf16.mxu0 %v1214
      %2222 = vmatmul.mubr.bf16.gmra.mxu0 %v1213
      %v2223 = vpop.f32.mrf.mxu0
      %v2224 = vadd.f32 %v426, %v2223
      %v2225 = vpop.f32.mrf.mxu0
      %v2226 = vpop.f32.mrf.mxu0
      %v2227 = vadd.f32 %v426, %v2226
      %v2228 = vpop.f32.mrf.mxu0
      %2229 = vmatprep.mubr.bf16.mxu0 %v1216
      %2230 = vmatmul.mubr.bf16.gmra.mxu0 %v1215
      %v2231 = vpop.f32.mrf.mxu0
      %v2232 = vadd.f32 %v426, %v2231
      %v2233 = vpop.f32.mrf.mxu0
      %v2234 = vpop.f32.mrf.mxu0
      %v2235 = vadd.f32 %v426, %v2234
      %v2236 = vpop.f32.mrf.mxu0
      %2237 = vmatprep.mubr.bf16.mxu0 %v1218
      %2238 = vmatmul.mubr.bf16.gmra.mxu0 %v1217
      %v2239 = vpop.f32.mrf.mxu0
      %v2240 = vadd.f32 %v426, %v2239
      %v2241 = vpop.f32.mrf.mxu0
      %v2242 = vpop.f32.mrf.mxu0
      %v2243 = vadd.f32 %v426, %v2242
      %v2244 = vpop.f32.mrf.mxu0
      %2245 = vmatprep.mubr.bf16.mxu0 %v1220
      %2246 = vmatmul.mubr.bf16.gmra.mxu0 %v1219
      %v2247 = vpop.f32.mrf.mxu0
      %v2248 = vadd.f32 %v426, %v2247
      %v2249 = vpop.f32.mrf.mxu0
      %v2250 = vpop.f32.mrf.mxu0
      %v2251 = vadd.f32 %v426, %v2250
      %v2252 = vpop.f32.mrf.mxu0
      %2253 = vmatprep.mubr.bf16.mxu0 %v1222
      %2254 = vmatmul.mubr.bf16.gmra.mxu0 %v1221
      %v2255 = vpop.f32.mrf.mxu0
      %v2256 = vadd.f32 %v426, %v2255
      %v2257 = vpop.f32.mrf.mxu0
      %v2258 = vpop.f32.mrf.mxu0
      %v2259 = vadd.f32 %v426, %v2258
      %v2260 = vpop.f32.mrf.mxu0
      %2261 = vmatprep.mubr.bf16.mxu0 %v1224
      %2262 = vmatmul.mubr.bf16.gmra.mxu0 %v1223
      %v2263 = vpop.f32.mrf.mxu0
      %v2264 = vadd.f32 %v426, %v2263
      %v2265 = vpop.f32.mrf.mxu0
      %v2266 = vpop.f32.mrf.mxu0
      %v2267 = vadd.f32 %v426, %v2266
      %v2268 = vpop.f32.mrf.mxu0
      %2269 = vmatprep.mubr.bf16.mxu0 %v1226
      %2270 = vmatmul.mubr.bf16.gmra.mxu0 %v1225
      %v2271 = vpop.f32.mrf.mxu0
      %v2272 = vadd.f32 %v426, %v2271
      %v2273 = vpop.f32.mrf.mxu0
      %v2274 = vpop.f32.mrf.mxu0
      %v2275 = vadd.f32 %v426, %v2274
      %v2276 = vpop.f32.mrf.mxu0
      %2277 = vmatprep.mubr.bf16.mxu0 %v1228
      %2278 = vmatmul.mubr.bf16.gmra.mxu0 %v1227
      %v2279 = vpop.f32.mrf.mxu0
      %v2280 = vadd.f32 %v426, %v2279
      %v2281 = vpop.f32.mrf.mxu0
      %v2282 = vpop.f32.mrf.mxu0
      %v2283 = vadd.f32 %v426, %v2282
      %v2284 = vpop.f32.mrf.mxu0
      %2285 = vmatprep.mubr.bf16.mxu0 %v1230
      %2286 = vmatmul.mubr.bf16.gmra.mxu0 %v1229
      %v2287 = vpop.f32.mrf.mxu0
      %v2288 = vadd.f32 %v426, %v2287
      %v2289 = vpop.f32.mrf.mxu0
      %v2290 = vpop.f32.mrf.mxu0
      %v2291 = vadd.f32 %v426, %v2290
      %v2292 = vpop.f32.mrf.mxu0
      %2293 = vmatprep.mubr.bf16.mxu0 %v1232
      %2294 = vmatmul.mubr.bf16.gmra.mxu0 %v1231
      %v2295 = vpop.f32.mrf.mxu0
      %v2296 = vadd.f32 %v426, %v2295
      %v2297 = vpop.f32.mrf.mxu0
      %v2298 = vpop.f32.mrf.mxu0
      %v2299 = vadd.f32 %v426, %v2298
      %v2300 = vpop.f32.mrf.mxu0
      %2301 = vmatprep.mubr.bf16.mxu0 %v1234
      %2302 = vmatmul.mubr.bf16.gmra.mxu0 %v1233
      %v2303 = vpop.f32.mrf.mxu0
      %v2304 = vadd.f32 %v426, %v2303
      %v2305 = vpop.f32.mrf.mxu0
      %v2306 = vpop.f32.mrf.mxu0
      %v2307 = vadd.f32 %v426, %v2306
      %v2308 = vpop.f32.mrf.mxu0
      %2309 = vmatprep.mubr.bf16.mxu0 %v1236
      %2310 = vmatmul.mubr.bf16.gmra.mxu0 %v1235
      %v2311 = vpop.f32.mrf.mxu0
      %v2312 = vadd.f32 %v426, %v2311
      %v2313 = vpop.f32.mrf.mxu0
      %v2314 = vpop.f32.mrf.mxu0
      %v2315 = vadd.f32 %v426, %v2314
      %v2316 = vpop.f32.mrf.mxu0
      %2317 = vmatprep.mubr.bf16.mxu0 %v1238
      %2318 = vmatmul.mubr.bf16.gmra.mxu0 %v1237
      %v2319 = vpop.f32.mrf.mxu0
      %v2320 = vadd.f32 %v426, %v2319
      %v2321 = vpop.f32.mrf.mxu0
      %v2322 = vpop.f32.mrf.mxu0
      %v2323 = vadd.f32 %v426, %v2322
      %v2324 = vpop.f32.mrf.mxu0
      %2325 = vmatprep.mubr.bf16.mxu0 %v1240
      %2326 = vmatmul.mubr.bf16.gmra.mxu0 %v1239
      %v2327 = vpop.f32.mrf.mxu0
      %v2328 = vadd.f32 %v426, %v2327
      %v2329 = vpop.f32.mrf.mxu0
      %v2330 = vpop.f32.mrf.mxu0
      %v2331 = vadd.f32 %v426, %v2330
      %v2332 = vpop.f32.mrf.mxu0
      %2333 = vmatprep.mubr.bf16.mxu0 %v1242
      %2334 = vmatmul.mubr.bf16.gmra.mxu0 %v1241
      %v2335 = vpop.f32.mrf.mxu0
      %v2336 = vadd.f32 %v426, %v2335
      %v2337 = vpop.f32.mrf.mxu0
      %v2338 = vpop.f32.mrf.mxu0
      %v2339 = vadd.f32 %v426, %v2338
      %v2340 = vpop.f32.mrf.mxu0
      %2341 = vmatprep.mubr.bf16.mxu0 %v1244
      %2342 = vmatmul.mubr.bf16.gmra.mxu0 %v1243
      %v2343 = vpop.f32.mrf.mxu0
      %v2344 = vadd.f32 %v426, %v2343
      %v2345 = vpop.f32.mrf.mxu0
      %v2346 = vpop.f32.mrf.mxu0
      %v2347 = vadd.f32 %v426, %v2346
      %v2348 = vpop.f32.mrf.mxu0
      %2349 = vmatprep.mubr.bf16.mxu0 %v1246
      %2350 = vmatmul.mubr.bf16.gmra.mxu0 %v1245
      %v2351 = vpop.f32.mrf.mxu0
      %v2352 = vadd.f32 %v426, %v2351
      %v2353 = vpop.f32.mrf.mxu0
      %v2354 = vpop.f32.mrf.mxu0
      %v2355 = vadd.f32 %v426, %v2354
      %v2356 = vpop.f32.mrf.mxu0
      %2357 = vmatprep.mubr.bf16.mxu0 %v1248
      %2358 = vmatmul.mubr.bf16.gmra.mxu0 %v1247
      %v2359 = vpop.f32.mrf.mxu0
      %v2360 = vadd.f32 %v426, %v2359
      %v2361 = vpop.f32.mrf.mxu0
      %v2362 = vpop.f32.mrf.mxu0
      %v2363 = vadd.f32 %v426, %v2362
      %v2364 = vpop.f32.mrf.mxu0
      %2365 = vmatprep.mubr.bf16.mxu0 %v1250
      %2366 = vmatmul.mubr.bf16.gmra.mxu0 %v1249
      %v2367 = vpop.f32.mrf.mxu0
      %v2368 = vadd.f32 %v426, %v2367
      %v2369 = vpop.f32.mrf.mxu0
      %v2370 = vpop.f32.mrf.mxu0
      %v2371 = vadd.f32 %v426, %v2370
      %v2372 = vpop.f32.mrf.mxu0
      %2373 = vmatprep.mubr.bf16.mxu0 %v1252
      %2374 = vmatmul.mubr.bf16.gmra.mxu0 %v1251
      %v2375 = vpop.f32.mrf.mxu0
      %v2376 = vadd.f32 %v426, %v2375
      %v2377 = vpop.f32.mrf.mxu0
      %v2378 = vpop.f32.mrf.mxu0
      %v2379 = vadd.f32 %v426, %v2378
      %v2380 = vpop.f32.mrf.mxu0
      %2381 = vmatprep.mubr.bf16.mxu0 %v1254
      %2382 = vmatmul.mubr.bf16.gmra.mxu0 %v1253
      %v2383 = vpop.f32.mrf.mxu0
      %v2384 = vadd.f32 %v426, %v2383
      %v2385 = vpop.f32.mrf.mxu0
      %v2386 = vpop.f32.mrf.mxu0
      %v2387 = vadd.f32 %v426, %v2386
      %v2388 = vpop.f32.mrf.mxu0
      %2389 = vmatprep.mubr.bf16.mxu0 %v1256
      %2390 = vmatmul.mubr.bf16.gmra.mxu0 %v1255
      %v2391 = vpop.f32.mrf.mxu0
      %v2392 = vadd.f32 %v426, %v2391
      %v2393 = vpop.f32.mrf.mxu0
      %v2394 = vpop.f32.mrf.mxu0
      %v2395 = vadd.f32 %v426, %v2394
      %v2396 = vpop.f32.mrf.mxu0
      %2397 = vmatprep.mubr.bf16.mxu0 %v1258
      %2398 = vmatmul.mubr.bf16.gmra.mxu0 %v1257
      %v2399 = vpop.f32.mrf.mxu0
      %v2400 = vadd.f32 %v426, %v2399
      %v2401 = vpop.f32.mrf.mxu0
      %v2402 = vpop.f32.mrf.mxu0
      %v2403 = vadd.f32 %v426, %v2402
      %v2404 = vpop.f32.mrf.mxu0
      %2405 = vmatprep.mubr.bf16.mxu0 %v1260
      %2406 = vmatmul.mubr.bf16.gmra.mxu0 %v1259
      %v2407 = vpop.f32.mrf.mxu0
      %v2408 = vadd.f32 %v426, %v2407
      %v2409 = vpop.f32.mrf.mxu0
      %v2410 = vpop.f32.mrf.mxu0
      %v2411 = vadd.f32 %v426, %v2410
      %v2412 = vpop.f32.mrf.mxu0
      %2413 = vmatprep.mubr.bf16.mxu0 %v1262
      %2414 = vmatmul.mubr.bf16.gmra.mxu0 %v1261
      %v2415 = vpop.f32.mrf.mxu0
      %v2416 = vadd.f32 %v426, %v2415
      %v2417 = vpop.f32.mrf.mxu0
      %v2418 = vpop.f32.mrf.mxu0
      %v2419 = vadd.f32 %v426, %v2418
      %v2420 = vpop.f32.mrf.mxu0
      %2421 = vmatprep.mubr.bf16.mxu0 %v1264
      %2422 = vmatmul.mubr.bf16.gmra.mxu0 %v1263
      %v2423 = vpop.f32.mrf.mxu0
      %v2424 = vadd.f32 %v426, %v2423
      %v2425 = vpop.f32.mrf.mxu0
      %v2426 = vpop.f32.mrf.mxu0
      %v2427 = vadd.f32 %v426, %v2426
      %v2428 = vpop.f32.mrf.mxu0
      %2429 = vmatprep.mubr.bf16.mxu0 %v1266
      %2430 = vmatmul.mubr.bf16.gmra.mxu0 %v1265
      %v2431 = vpop.f32.mrf.mxu0
      %v2432 = vadd.f32 %v426, %v2431
      %v2433 = vpop.f32.mrf.mxu0
      %v2434 = vpop.f32.mrf.mxu0
      %v2435 = vadd.f32 %v426, %v2434
      %v2436 = vpop.f32.mrf.mxu0
      %2437 = vmatprep.mubr.bf16.mxu0 %v1268
      %2438 = vmatmul.mubr.bf16.gmra.mxu0 %v1267
      %v2439 = vpop.f32.mrf.mxu0
      %v2440 = vadd.f32 %v426, %v2439
      %v2441 = vpop.f32.mrf.mxu0
      %v2442 = vpop.f32.mrf.mxu0
      %v2443 = vadd.f32 %v426, %v2442
      %v2444 = vpop.f32.mrf.mxu0
      %2445 = vmatprep.mubr.bf16.mxu0 %v1270
      %2446 = vmatmul.mubr.bf16.gmra.mxu0 %v1269
      %v2447 = vpop.f32.mrf.mxu0
      %v2448 = vadd.f32 %v426, %v2447
      %v2449 = vpop.f32.mrf.mxu0
      %v2450 = vpop.f32.mrf.mxu0
      %v2451 = vadd.f32 %v426, %v2450
      %v2452 = vpop.f32.mrf.mxu0
      %2453 = vmatprep.mubr.bf16.mxu0 %v1272
      %2454 = vmatmul.mubr.bf16.gmra.mxu0 %v1271
      %v2455 = vpop.f32.mrf.mxu0
      %v2456 = vadd.f32 %v426, %v2455
      %v2457 = vpop.f32.mrf.mxu0
      %v2458 = vpop.f32.mrf.mxu0
      %v2459 = vpop.f32.mrf.mxu0
      %2460 = vdwg.mxu0
      %v2461 = vmax.f32 %v1616, 0.0
      %v2462 = vmax.f32 %v1619, 0.0
      %v2463 = vmax.f32 %v1624, 0.0
      %v2464 = vmax.f32 %v1627, 0.0
      %v2465 = vmax.f32 %v1632, 0.0
      %v2466 = vmax.f32 %v1635, 0.0
      %v2467 = vmax.f32 %v1640, 0.0
      %v2468 = vmax.f32 %v1643, 0.0
      %v2469 = vmax.f32 %v1648, 0.0
      %v2470 = vmax.f32 %v1651, 0.0
      %v2471 = vmax.f32 %v1656, 0.0
      %v2472 = vmax.f32 %v1659, 0.0
      %v2473 = vmax.f32 %v1664, 0.0
      %v2474 = vmax.f32 %v1667, 0.0
      %v2475 = vmax.f32 %v1672, 0.0
      %v2476 = vmax.f32 %v1675, 0.0
      %v2477 = vmax.f32 %v1680, 0.0
      %v2478 = vmax.f32 %v1683, 0.0
      %v2479 = vmax.f32 %v1688, 0.0
      %v2480 = vmax.f32 %v1691, 0.0
      %v2481 = vmax.f32 %v1696, 0.0
      %v2482 = vmax.f32 %v1699, 0.0
      %v2483 = vmax.f32 %v1704, 0.0
      %v2484 = vmax.f32 %v1707, 0.0
      %v2485 = vmax.f32 %v1712, 0.0
      %v2486 = vmax.f32 %v1715, 0.0
      %v2487 = vmax.f32 %v1720, 0.0
      %v2488 = vmax.f32 %v1723, 0.0
      %v2489 = vmax.f32 %v1728, 0.0
      %v2490 = vmax.f32 %v1731, 0.0
      %v2491 = vmax.f32 %v1736, 0.0
      %v2492 = vmax.f32 %v1739, 0.0
      %v2493 = vmax.f32 %v1744, 0.0
      %v2494 = vmax.f32 %v1747, 0.0
      %v2495 = vmax.f32 %v1752, 0.0
      %v2496 = vmax.f32 %v1755, 0.0
      %v2497 = vmax.f32 %v1760, 0.0
      %v2498 = vmax.f32 %v1763, 0.0
      %v2499 = vmax.f32 %v1768, 0.0
      %v2500 = vmax.f32 %v1771, 0.0
      %v2501 = vmax.f32 %v1776, 0.0
      %v2502 = vmax.f32 %v1779, 0.0
      %v2503 = vmax.f32 %v1784, 0.0
      %v2504 = vmax.f32 %v1787, 0.0
      %v2505 = vmax.f32 %v1792, 0.0
      %v2506 = vmax.f32 %v1795, 0.0
      %v2507 = vmax.f32 %v1800, 0.0
      %v2508 = vmax.f32 %v1803, 0.0
      %v2509 = vmax.f32 %v1808, 0.0
      %v2510 = vmax.f32 %v1811, 0.0
      %v2511 = vmax.f32 %v1816, 0.0
      %v2512 = vmax.f32 %v1819, 0.0
      %v2513 = vmax.f32 %v1824, 0.0
      %v2514 = vmax.f32 %v1827, 0.0
      %v2515 = vmax.f32 %v1832, 0.0
      %v2516 = vmax.f32 %v1835, 0.0
      %v2517 = vmax.f32 %v1840, 0.0
      %v2518 = vmax.f32 %v1843, 0.0
      %v2519 = vmax.f32 %v1848, 0.0
      %v2520 = vmax.f32 %v1851, 0.0
      %v2521 = vmax.f32 %v1856, 0.0
      %v2522 = vmax.f32 %v1859, 0.0
      %v2523 = vmax.f32 %v1864, 0.0
      %v2524 = vmax.f32 %v1867, 0.0
      %v2525 = vmax.f32 %v1872, 0.0
      %v2526 = vmax.f32 %v1875, 0.0
      %v2527 = vmax.f32 %v1880, 0.0
      %v2528 = vmax.f32 %v1883, 0.0
      %v2529 = vmax.f32 %v1888, 0.0
      %v2530 = vmax.f32 %v1891, 0.0
      %v2531 = vmax.f32 %v1896, 0.0
      %v2532 = vmax.f32 %v1899, 0.0
      %v2533 = vmax.f32 %v1904, 0.0
      %v2534 = vmax.f32 %v1907, 0.0
      %v2535 = vmax.f32 %v1912, 0.0
      %v2536 = vmax.f32 %v1915, 0.0
      %v2537 = vmax.f32 %v1920, 0.0
      %v2538 = vmax.f32 %v1923, 0.0
      %v2539 = vmax.f32 %v1928, 0.0
      %v2540 = vmax.f32 %v1931, 0.0
      %v2541 = vmax.f32 %v1936, 0.0
      %v2542 = vmax.f32 %v1939, 0.0
      %v2543 = vmax.f32 %v1944, 0.0
      %v2544 = vmax.f32 %v1947, 0.0
      %v2545 = vmax.f32 %v1952, 0.0
      %v2546 = vmax.f32 %v1955, 0.0
      %v2547 = vmax.f32 %v1960, 0.0
      %v2548 = vmax.f32 %v1963, 0.0
      %v2549 = vmax.f32 %v1968, 0.0
      %v2550 = vmax.f32 %v1971, 0.0
      %v2551 = vmax.f32 %v1976, 0.0
      %v2552 = vmax.f32 %v1979, 0.0
      %v2553 = vmax.f32 %v1984, 0.0
      %v2554 = vmax.f32 %v1987, 0.0
      %v2555 = vmax.f32 %v1992, 0.0
      %v2556 = vmax.f32 %v1995, 0.0
      %v2557 = vmax.f32 %v2000, 0.0
      %v2558 = vmax.f32 %v2003, 0.0
      %v2559 = vmax.f32 %v2008, 0.0
      %v2560 = vmax.f32 %v2011, 0.0
      %v2561 = vmax.f32 %v2016, 0.0
      %v2562 = vmax.f32 %v2019, 0.0
      %v2563 = vmax.f32 %v2024, 0.0
      %v2564 = vmax.f32 %v2027, 0.0
      %v2565 = vmax.f32 %v2032, 0.0
      %v2566 = vmax.f32 %v2035, 0.0
      %v2567 = vmax.f32 %v2040, 0.0
      %v2568 = vmax.f32 %v2043, 0.0
      %v2569 = vmax.f32 %v2048, 0.0
      %v2570 = vmax.f32 %v2051, 0.0
      %v2571 = vmax.f32 %v2056, 0.0
      %v2572 = vmax.f32 %v2059, 0.0
      %v2573 = vmax.f32 %v2064, 0.0
      %v2574 = vmax.f32 %v2067, 0.0
      %v2575 = vmax.f32 %v2072, 0.0
      %v2576 = vmax.f32 %v2075, 0.0
      %v2577 = vmax.f32 %v2080, 0.0
      %v2578 = vmax.f32 %v2083, 0.0
      %v2579 = vmax.f32 %v2088, 0.0
      %v2580 = vmax.f32 %v2091, 0.0
      %v2581 = vmax.f32 %v2096, 0.0
      %v2582 = vmax.f32 %v2099, 0.0
      %v2583 = vmax.f32 %v2104, 0.0
      %v2584 = vmax.f32 %v2107, 0.0
      %v2585 = vmax.f32 %v2112, 0.0
      %v2586 = vmax.f32 %v2115, 0.0
      %v2587 = vmax.f32 %v2120, 0.0
      %v2588 = vmax.f32 %v2123, 0.0
      %v2589 = vmax.f32 %v2128, 0.0
      %v2590 = vmax.f32 %v2131, 0.0
      %v2591 = vmax.f32 %v2136, 0.0
      %v2592 = vmax.f32 %v2139, 0.0
      %v2593 = vmax.f32 %v2144, 0.0
      %v2594 = vmax.f32 %v2147, 0.0
      %v2595 = vmax.f32 %v2152, 0.0
      %v2596 = vmax.f32 %v2155, 0.0
      %v2597 = vmax.f32 %v2160, 0.0
      %v2598 = vmax.f32 %v2163, 0.0
      %v2599 = vmax.f32 %v2168, 0.0
      %v2600 = vmax.f32 %v2171, 0.0
      %v2601 = vmax.f32 %v2176, 0.0
      %v2602 = vmax.f32 %v2179, 0.0
      %v2603 = vmax.f32 %v2184, 0.0
      %v2604 = vmax.f32 %v2187, 0.0
      %v2605 = vmax.f32 %v2192, 0.0
      %v2606 = vmax.f32 %v2195, 0.0
      %v2607 = vmax.f32 %v2200, 0.0
      %v2608 = vmax.f32 %v2203, 0.0
      %v2609 = vmax.f32 %v2208, 0.0
      %v2610 = vmax.f32 %v2211, 0.0
      %v2611 = vmax.f32 %v2216, 0.0
      %v2612 = vmax.f32 %v2219, 0.0
      %v2613 = vmax.f32 %v2224, 0.0
      %v2614 = vmax.f32 %v2227, 0.0
      %v2615 = vmax.f32 %v2232, 0.0
      %v2616 = vmax.f32 %v2235, 0.0
      %v2617 = vmax.f32 %v2240, 0.0
      %v2618 = vmax.f32 %v2243, 0.0
      %v2619 = vmax.f32 %v2248, 0.0
      %v2620 = vmax.f32 %v2251, 0.0
      %v2621 = vmax.f32 %v2256, 0.0
      %v2622 = vmax.f32 %v2259, 0.0
      %v2623 = vmax.f32 %v2264, 0.0
      %v2624 = vmax.f32 %v2267, 0.0
      %v2625 = vmax.f32 %v2272, 0.0
      %v2626 = vmax.f32 %v2275, 0.0
      %v2627 = vmax.f32 %v2280, 0.0
      %v2628 = vmax.f32 %v2283, 0.0
      %v2629 = vmax.f32 %v2288, 0.0
      %v2630 = vmax.f32 %v2291, 0.0
      %v2631 = vmax.f32 %v2296, 0.0
      %v2632 = vmax.f32 %v2299, 0.0
      %v2633 = vmax.f32 %v2304, 0.0
      %v2634 = vmax.f32 %v2307, 0.0
      %v2635 = vmax.f32 %v2312, 0.0
      %v2636 = vmax.f32 %v2315, 0.0
      %v2637 = vmax.f32 %v2320, 0.0
      %v2638 = vmax.f32 %v2323, 0.0
      %v2639 = vmax.f32 %v2328, 0.0
      %v2640 = vmax.f32 %v2331, 0.0
      %v2641 = vmax.f32 %v2336, 0.0
      %v2642 = vmax.f32 %v2339, 0.0
      %v2643 = vmax.f32 %v2344, 0.0
      %v2644 = vmax.f32 %v2347, 0.0
      %v2645 = vmax.f32 %v2352, 0.0
      %v2646 = vmax.f32 %v2355, 0.0
      %v2647 = vmax.f32 %v2360, 0.0
      %v2648 = vmax.f32 %v2363, 0.0
      %v2649 = vmax.f32 %v2368, 0.0
      %v2650 = vmax.f32 %v2371, 0.0
      %v2651 = vmax.f32 %v2376, 0.0
      %v2652 = vmax.f32 %v2379, 0.0
      %v2653 = vmax.f32 %v2384, 0.0
      %v2654 = vmax.f32 %v2387, 0.0
      %v2655 = vmax.f32 %v2392, 0.0
      %v2656 = vmax.f32 %v2395, 0.0
      %v2657 = vmax.f32 %v2400, 0.0
      %v2658 = vmax.f32 %v2403, 0.0
      %v2659 = vmax.f32 %v2408, 0.0
      %v2660 = vmax.f32 %v2411, 0.0
      %v2661 = vmax.f32 %v2416, 0.0
      %v2662 = vmax.f32 %v2419, 0.0
      %v2663 = vmax.f32 %v2424, 0.0
      %v2664 = vmax.f32 %v2427, 0.0
      %v2665 = vmax.f32 %v2432, 0.0
      %v2666 = vmax.f32 %v2435, 0.0
      %v2667 = vmax.f32 %v2440, 0.0
      %v2668 = vmax.f32 %v2443, 0.0
      %v2669 = vmax.f32 %v2448, 0.0
      %v2670 = vmax.f32 %v2451, 0.0
      %v2671 = vmax.f32 %v2456, 0.0
      %v2672 = vpack.c.bf16 %v2462, %v2461
      %v2673 = vpack.c.bf16 %v2464, %v2463
      %v2674 = vpack.c.bf16 %v2466, %v2465
      %v2675 = vpack.c.bf16 %v2468, %v2467
      %v2676 = vpack.c.bf16 %v2470, %v2469
      %v2677 = vpack.c.bf16 %v2472, %v2471
      %v2678 = vpack.c.bf16 %v2474, %v2473
      %v2679 = vpack.c.bf16 %v2476, %v2475
      %v2680 = vpack.c.bf16 %v2478, %v2477
      %v2681 = vpack.c.bf16 %v2480, %v2479
      %v2682 = vpack.c.bf16 %v2482, %v2481
      %v2683 = vpack.c.bf16 %v2484, %v2483
      %v2684 = vpack.c.bf16 %v2486, %v2485
      %v2685 = vpack.c.bf16 %v2488, %v2487
      %v2686 = vpack.c.bf16 %v2490, %v2489
      %v2687 = vpack.c.bf16 %v2492, %v2491
      %v2688 = vpack.c.bf16 %v2494, %v2493
      %v2689 = vpack.c.bf16 %v2496, %v2495
      %v2690 = vpack.c.bf16 %v2498, %v2497
      %v2691 = vpack.c.bf16 %v2500, %v2499
      %v2692 = vpack.c.bf16 %v2502, %v2501
      %v2693 = vpack.c.bf16 %v2504, %v2503
      %v2694 = vpack.c.bf16 %v2506, %v2505
      %v2695 = vpack.c.bf16 %v2508, %v2507
      %v2696 = vpack.c.bf16 %v2510, %v2509
      %v2697 = vpack.c.bf16 %v2512, %v2511
      %v2698 = vpack.c.bf16 %v2514, %v2513
      %v2699 = vpack.c.bf16 %v2516, %v2515
      %v2700 = vpack.c.bf16 %v2518, %v2517
      %v2701 = vpack.c.bf16 %v2520, %v2519
      %v2702 = vpack.c.bf16 %v2522, %v2521
      %v2703 = vpack.c.bf16 %v2524, %v2523
      %v2704 = vpack.c.bf16 %v2526, %v2525
      %v2705 = vpack.c.bf16 %v2528, %v2527
      %v2706 = vpack.c.bf16 %v2530, %v2529
      %v2707 = vpack.c.bf16 %v2532, %v2531
      %v2708 = vpack.c.bf16 %v2534, %v2533
      %v2709 = vpack.c.bf16 %v2536, %v2535
      %v2710 = vpack.c.bf16 %v2538, %v2537
      %v2711 = vpack.c.bf16 %v2540, %v2539
      %v2712 = vpack.c.bf16 %v2542, %v2541
      %v2713 = vpack.c.bf16 %v2544, %v2543
      %v2714 = vpack.c.bf16 %v2546, %v2545
      %v2715 = vpack.c.bf16 %v2548, %v2547
      %v2716 = vpack.c.bf16 %v2550, %v2549
      %v2717 = vpack.c.bf16 %v2552, %v2551
      %v2718 = vpack.c.bf16 %v2554, %v2553
      %v2719 = vpack.c.bf16 %v2556, %v2555
      %v2720 = vpack.c.bf16 %v2558, %v2557
      %v2721 = vpack.c.bf16 %v2560, %v2559
      %v2722 = vpack.c.bf16 %v2562, %v2561
      %v2723 = vpack.c.bf16 %v2564, %v2563
      %v2724 = vpack.c.bf16 %v2566, %v2565
      %v2725 = vpack.c.bf16 %v2568, %v2567
      %v2726 = vpack.c.bf16 %v2570, %v2569
      %v2727 = vpack.c.bf16 %v2572, %v2571
      %v2728 = vpack.c.bf16 %v2574, %v2573
      %v2729 = vpack.c.bf16 %v2576, %v2575
      %v2730 = vpack.c.bf16 %v2578, %v2577
      %v2731 = vpack.c.bf16 %v2580, %v2579
      %v2732 = vpack.c.bf16 %v2582, %v2581
      %v2733 = vpack.c.bf16 %v2584, %v2583
      %v2734 = vpack.c.bf16 %v2586, %v2585
      %v2735 = vpack.c.bf16 %v2588, %v2587
      %v2736 = vpack.c.bf16 %v2590, %v2589
      %v2737 = vpack.c.bf16 %v2592, %v2591
      %v2738 = vpack.c.bf16 %v2594, %v2593
      %v2739 = vpack.c.bf16 %v2596, %v2595
      %v2740 = vpack.c.bf16 %v2598, %v2597
      %v2741 = vpack.c.bf16 %v2600, %v2599
      %v2742 = vpack.c.bf16 %v2602, %v2601
      %v2743 = vpack.c.bf16 %v2604, %v2603
      %v2744 = vpack.c.bf16 %v2606, %v2605
      %v2745 = vpack.c.bf16 %v2608, %v2607
      %v2746 = vpack.c.bf16 %v2610, %v2609
      %v2747 = vpack.c.bf16 %v2612, %v2611
      %v2748 = vpack.c.bf16 %v2614, %v2613
      %v2749 = vpack.c.bf16 %v2616, %v2615
      %v2750 = vpack.c.bf16 %v2618, %v2617
      %v2751 = vpack.c.bf16 %v2620, %v2619
      %v2752 = vpack.c.bf16 %v2622, %v2621
      %v2753 = vpack.c.bf16 %v2624, %v2623
      %v2754 = vpack.c.bf16 %v2626, %v2625
      %v2755 = vpack.c.bf16 %v2628, %v2627
      %v2756 = vpack.c.bf16 %v2630, %v2629
      %v2757 = vpack.c.bf16 %v2632, %v2631
      %v2758 = vpack.c.bf16 %v2634, %v2633
      %v2759 = vpack.c.bf16 %v2636, %v2635
      %v2760 = vpack.c.bf16 %v2638, %v2637
      %v2761 = vpack.c.bf16 %v2640, %v2639
      %v2762 = vpack.c.bf16 %v2642, %v2641
      %v2763 = vpack.c.bf16 %v2644, %v2643
      %v2764 = vpack.c.bf16 %v2646, %v2645
      %v2765 = vpack.c.bf16 %v2648, %v2647
      %v2766 = vpack.c.bf16 %v2650, %v2649
      %v2767 = vpack.c.bf16 %v2652, %v2651
      %v2768 = vpack.c.bf16 %v2654, %v2653
      %v2769 = vpack.c.bf16 %v2656, %v2655
      %v2770 = vpack.c.bf16 %v2658, %v2657
      %v2771 = vpack.c.bf16 %v2660, %v2659
      %v2772 = vpack.c.bf16 %v2662, %v2661
      %v2773 = vpack.c.bf16 %v2664, %v2663
      %v2774 = vpack.c.bf16 %v2666, %v2665
      %v2775 = vpack.c.bf16 %v2668, %v2667
      %v2776 = vpack.c.bf16 %v2670, %v2669
      %v2777 = vpack.c.bf16 %v2671, %v2671
      %v2884 = vunpack.c.l.b16 %v2672
      %v2885 = vunpack.c.h.b16 %v2672
      %v2886 = vunpack.c.l.b16 %v2673
      %v2887 = vunpack.c.h.b16 %v2673
      %v2888 = vunpack.c.l.b16 %v2674
      %v2889 = vunpack.c.h.b16 %v2674
      %v2890 = vunpack.c.l.b16 %v2675
      %v2891 = vunpack.c.h.b16 %v2675
      %v2892 = vunpack.c.l.b16 %v2676
      %v2893 = vunpack.c.h.b16 %v2676
      %v2894 = vunpack.c.l.b16 %v2677
      %v2895 = vunpack.c.h.b16 %v2677
      %v2896 = vunpack.c.l.b16 %v2678
      %v2897 = vunpack.c.h.b16 %v2678
      %v2898 = vunpack.c.l.b16 %v2679
      %v2899 = vunpack.c.h.b16 %v2679
      %v2900 = vunpack.c.l.b16 %v2680
      %v2901 = vunpack.c.h.b16 %v2680
      %v2902 = vunpack.c.l.b16 %v2681
      %v2903 = vunpack.c.h.b16 %v2681
      %v2904 = vunpack.c.l.b16 %v2682
      %v2905 = vunpack.c.h.b16 %v2682
      %v2906 = vunpack.c.l.b16 %v2683
      %v2907 = vunpack.c.h.b16 %v2683
      %v2908 = vunpack.c.l.b16 %v2684
      %v2909 = vunpack.c.h.b16 %v2684
      %v2910 = vunpack.c.l.b16 %v2685
      %v2911 = vunpack.c.h.b16 %v2685
      %v2912 = vunpack.c.l.b16 %v2686
      %v2913 = vunpack.c.h.b16 %v2686
      %v2914 = vunpack.c.l.b16 %v2687
      %v2915 = vunpack.c.h.b16 %v2687
      %v2916 = vunpack.c.l.b16 %v2688
      %v2917 = vunpack.c.h.b16 %v2688
      %v2918 = vunpack.c.l.b16 %v2689
      %v2919 = vunpack.c.h.b16 %v2689
      %v2920 = vunpack.c.l.b16 %v2690
      %v2921 = vunpack.c.h.b16 %v2690
      %v2922 = vunpack.c.l.b16 %v2691
      %v2923 = vunpack.c.h.b16 %v2691
      %v2924 = vunpack.c.l.b16 %v2692
      %v2925 = vunpack.c.h.b16 %v2692
      %v2926 = vunpack.c.l.b16 %v2693
      %v2927 = vunpack.c.h.b16 %v2693
      %v2928 = vunpack.c.l.b16 %v2694
      %v2929 = vunpack.c.h.b16 %v2694
      %v2930 = vunpack.c.l.b16 %v2695
      %v2931 = vunpack.c.h.b16 %v2695
      %v2932 = vunpack.c.l.b16 %v2696
      %v2933 = vunpack.c.h.b16 %v2696
      %v2934 = vunpack.c.l.b16 %v2697
      %v2935 = vunpack.c.h.b16 %v2697
      %v2936 = vunpack.c.l.b16 %v2698
      %v2937 = vunpack.c.h.b16 %v2698
      %v2938 = vunpack.c.l.b16 %v2699
      %v2939 = vunpack.c.h.b16 %v2699
      %v2940 = vunpack.c.l.b16 %v2700
      %v2941 = vunpack.c.h.b16 %v2700
      %v2942 = vunpack.c.l.b16 %v2701
      %v2943 = vunpack.c.h.b16 %v2701
      %v2944 = vunpack.c.l.b16 %v2702
      %v2945 = vunpack.c.h.b16 %v2702
      %v2946 = vunpack.c.l.b16 %v2703
      %v2947 = vunpack.c.h.b16 %v2703
      %v2948 = vunpack.c.l.b16 %v2704
      %v2949 = vunpack.c.h.b16 %v2704
      %v2950 = vunpack.c.l.b16 %v2705
      %v2951 = vunpack.c.h.b16 %v2705
      %v2952 = vunpack.c.l.b16 %v2706
      %v2953 = vunpack.c.h.b16 %v2706
      %v2954 = vunpack.c.l.b16 %v2707
      %v2955 = vunpack.c.h.b16 %v2707
      %v2956 = vunpack.c.l.b16 %v2708
      %v2957 = vunpack.c.h.b16 %v2708
      %v2958 = vunpack.c.l.b16 %v2709
      %v2959 = vunpack.c.h.b16 %v2709
      %v2960 = vunpack.c.l.b16 %v2710
      %v2961 = vunpack.c.h.b16 %v2710
      %v2962 = vunpack.c.l.b16 %v2711
      %v2963 = vunpack.c.h.b16 %v2711
      %v2964 = vunpack.c.l.b16 %v2712
      %v2965 = vunpack.c.h.b16 %v2712
      %v2966 = vunpack.c.l.b16 %v2713
      %v2967 = vunpack.c.h.b16 %v2713
      %v2968 = vunpack.c.l.b16 %v2714
      %v2969 = vunpack.c.h.b16 %v2714
      %v2970 = vunpack.c.l.b16 %v2715
      %v2971 = vunpack.c.h.b16 %v2715
      %v2972 = vunpack.c.l.b16 %v2716
      %v2973 = vunpack.c.h.b16 %v2716
      %v2974 = vunpack.c.l.b16 %v2717
      %v2975 = vunpack.c.h.b16 %v2717
      %v2976 = vunpack.c.l.b16 %v2718
      %v2977 = vunpack.c.h.b16 %v2718
      %v2978 = vunpack.c.l.b16 %v2719
      %v2979 = vunpack.c.h.b16 %v2719
      %v2980 = vunpack.c.l.b16 %v2720
      %v2981 = vunpack.c.h.b16 %v2720
      %v2982 = vunpack.c.l.b16 %v2721
      %v2983 = vunpack.c.h.b16 %v2721
      %v2984 = vunpack.c.l.b16 %v2722
      %v2985 = vunpack.c.h.b16 %v2722
      %v2986 = vunpack.c.l.b16 %v2723
      %v2987 = vunpack.c.h.b16 %v2723
      %v2988 = vunpack.c.l.b16 %v2724
      %v2989 = vunpack.c.h.b16 %v2724
      %v2990 = vunpack.c.l.b16 %v2725
      %v2991 = vunpack.c.h.b16 %v2725
      %v2992 = vunpack.c.l.b16 %v2726
      %v2993 = vunpack.c.h.b16 %v2726
      %v2994 = vunpack.c.l.b16 %v2727
      %v2995 = vunpack.c.h.b16 %v2727
      %v2996 = vunpack.c.l.b16 %v2728
      %v2997 = vunpack.c.h.b16 %v2728
      %v2998 = vunpack.c.l.b16 %v2729
      %v2999 = vunpack.c.h.b16 %v2729
      %v3000 = vunpack.c.l.b16 %v2730
      %v3001 = vunpack.c.h.b16 %v2730
      %v3002 = vunpack.c.l.b16 %v2731
      %v3003 = vunpack.c.h.b16 %v2731
      %v3004 = vunpack.c.l.b16 %v2732
      %v3005 = vunpack.c.h.b16 %v2732
      %v3006 = vunpack.c.l.b16 %v2733
      %v3007 = vunpack.c.h.b16 %v2733
      %v3008 = vunpack.c.l.b16 %v2734
      %v3009 = vunpack.c.h.b16 %v2734
      %v3010 = vunpack.c.l.b16 %v2735
      %v3011 = vunpack.c.h.b16 %v2735
      %v3012 = vunpack.c.l.b16 %v2736
      %v3013 = vunpack.c.h.b16 %v2736
      %v3014 = vunpack.c.l.b16 %v2737
      %v3015 = vunpack.c.h.b16 %v2737
      %v3016 = vunpack.c.l.b16 %v2738
      %v3017 = vunpack.c.h.b16 %v2738
      %v3018 = vunpack.c.l.b16 %v2739
      %v3019 = vunpack.c.h.b16 %v2739
      %v3020 = vunpack.c.l.b16 %v2740
      %v3021 = vunpack.c.h.b16 %v2740
      %v3022 = vunpack.c.l.b16 %v2741
      %v3023 = vunpack.c.h.b16 %v2741
      %v3024 = vunpack.c.l.b16 %v2742
      %v3025 = vunpack.c.h.b16 %v2742
      %v3026 = vunpack.c.l.b16 %v2743
      %v3027 = vunpack.c.h.b16 %v2743
      %v3028 = vunpack.c.l.b16 %v2744
      %v3029 = vunpack.c.h.b16 %v2744
      %v3030 = vunpack.c.l.b16 %v2745
      %v3031 = vunpack.c.h.b16 %v2745
      %v3032 = vunpack.c.l.b16 %v2746
      %v3033 = vunpack.c.h.b16 %v2746
      %v3034 = vunpack.c.l.b16 %v2747
      %v3035 = vunpack.c.h.b16 %v2747
      %v3036 = vunpack.c.l.b16 %v2748
      %v3037 = vunpack.c.h.b16 %v2748
      %v3038 = vunpack.c.l.b16 %v2749
      %v3039 = vunpack.c.h.b16 %v2749
      %v3040 = vunpack.c.l.b16 %v2750
      %v3041 = vunpack.c.h.b16 %v2750
      %v3042 = vunpack.c.l.b16 %v2751
      %v3043 = vunpack.c.h.b16 %v2751
      %v3044 = vunpack.c.l.b16 %v2752
      %v3045 = vunpack.c.h.b16 %v2752
      %v3046 = vunpack.c.l.b16 %v2753
      %v3047 = vunpack.c.h.b16 %v2753
      %v3048 = vunpack.c.l.b16 %v2754
      %v3049 = vunpack.c.h.b16 %v2754
      %v3050 = vunpack.c.l.b16 %v2755
      %v3051 = vunpack.c.h.b16 %v2755
      %v3052 = vunpack.c.l.b16 %v2756
      %v3053 = vunpack.c.h.b16 %v2756
      %v3054 = vunpack.c.l.b16 %v2757
      %v3055 = vunpack.c.h.b16 %v2757
      %v3056 = vunpack.c.l.b16 %v2758
      %v3057 = vunpack.c.h.b16 %v2758
      %v3058 = vunpack.c.l.b16 %v2759
      %v3059 = vunpack.c.h.b16 %v2759
      %v3060 = vunpack.c.l.b16 %v2760
      %v3061 = vunpack.c.h.b16 %v2760
      %v3062 = vunpack.c.l.b16 %v2761
      %v3063 = vunpack.c.h.b16 %v2761
      %v3064 = vunpack.c.l.b16 %v2762
      %v3065 = vunpack.c.h.b16 %v2762
      %v3066 = vunpack.c.l.b16 %v2763
      %v3067 = vunpack.c.h.b16 %v2763
      %v3068 = vunpack.c.l.b16 %v2764
      %v3069 = vunpack.c.h.b16 %v2764
      %v3070 = vunpack.c.l.b16 %v2765
      %v3071 = vunpack.c.h.b16 %v2765
      %v3072 = vunpack.c.l.b16 %v2766
      %v3073 = vunpack.c.h.b16 %v2766
      %v3074 = vunpack.c.l.b16 %v2767
      %v3075 = vunpack.c.h.b16 %v2767
      %v3076 = vunpack.c.l.b16 %v2768
      %v3077 = vunpack.c.h.b16 %v2768
      %v3078 = vunpack.c.l.b16 %v2769
      %v3079 = vunpack.c.h.b16 %v2769
      %v3080 = vunpack.c.l.b16 %v2770
      %v3081 = vunpack.c.h.b16 %v2770
      %v3082 = vunpack.c.l.b16 %v2771
      %v3083 = vunpack.c.h.b16 %v2771
      %v3084 = vunpack.c.l.b16 %v2772
      %v3085 = vunpack.c.h.b16 %v2772
      %v3086 = vunpack.c.l.b16 %v2773
      %v3087 = vunpack.c.h.b16 %v2773
      %v3088 = vunpack.c.l.b16 %v2774
      %v3089 = vunpack.c.h.b16 %v2774
      %v3090 = vunpack.c.l.b16 %v2775
      %v3091 = vunpack.c.h.b16 %v2775
      %v3092 = vunpack.c.l.b16 %v2776
      %v3093 = vunpack.c.h.b16 %v2776
      %v3094 = vunpack.c.l.b16 %v2777
      %v3095 = vpack.c.b16 %v2884, %v2884
      %v3096 = vpack.c.b16 %v2885, %v2885
      %v3097 = vpack.c.b16 %v2886, %v2886
      %v3098 = vpack.c.b16 %v2887, %v2887
      %v3099 = vpack.c.b16 %v2888, %v2888
      %v3100 = vpack.c.b16 %v2889, %v2889
      %v3101 = vpack.c.b16 %v2890, %v2890
      %v3102 = vpack.c.b16 %v2891, %v2891
      %v3103 = vpack.c.b16 %v2892, %v2892
      %v3104 = vpack.c.b16 %v2893, %v2893
      %v3105 = vpack.c.b16 %v2894, %v2894
      %v3106 = vpack.c.b16 %v2895, %v2895
      %v3107 = vpack.c.b16 %v2896, %v2896
      %v3108 = vpack.c.b16 %v2897, %v2897
      %v3109 = vpack.c.b16 %v2898, %v2898
      %v3110 = vpack.c.b16 %v2899, %v2899
      %v3111 = vpack.c.b16 %v2900, %v2900
      %v3112 = vpack.c.b16 %v2901, %v2901
      %v3113 = vpack.c.b16 %v2902, %v2902
      %v3114 = vpack.c.b16 %v2903, %v2903
      %v3115 = vpack.c.b16 %v2904, %v2904
      %v3116 = vpack.c.b16 %v2905, %v2905
      %v3117 = vpack.c.b16 %v2906, %v2906
      %v3118 = vpack.c.b16 %v2907, %v2907
      %v3119 = vpack.c.b16 %v2908, %v2908
      %v3120 = vpack.c.b16 %v2909, %v2909
      %v3121 = vpack.c.b16 %v2910, %v2910
      %v3122 = vpack.c.b16 %v2911, %v2911
      %v3123 = vpack.c.b16 %v2912, %v2912
      %v3124 = vpack.c.b16 %v2913, %v2913
      %v3125 = vpack.c.b16 %v2914, %v2914
      %v3126 = vpack.c.b16 %v2915, %v2915
      %v3127 = vpack.c.b16 %v2916, %v2916
      %v3128 = vpack.c.b16 %v2917, %v2917
      %v3129 = vpack.c.b16 %v2918, %v2918
      %v3130 = vpack.c.b16 %v2919, %v2919
      %v3131 = vpack.c.b16 %v2920, %v2920
      %v3132 = vpack.c.b16 %v2921, %v2921
      %v3133 = vpack.c.b16 %v2922, %v2922
      %v3134 = vpack.c.b16 %v2923, %v2923
      %v3135 = vpack.c.b16 %v2924, %v2924
      %v3136 = vpack.c.b16 %v2925, %v2925
      %v3137 = vpack.c.b16 %v2926, %v2926
      %v3138 = vpack.c.b16 %v2927, %v2927
      %v3139 = vpack.c.b16 %v2928, %v2928
      %v3140 = vpack.c.b16 %v2929, %v2929
      %v3141 = vpack.c.b16 %v2930, %v2930
      %v3142 = vpack.c.b16 %v2931, %v2931
      %v3143 = vpack.c.b16 %v2932, %v2932
      %v3144 = vpack.c.b16 %v2933, %v2933
      %v3145 = vpack.c.b16 %v2934, %v2934
      %v3146 = vpack.c.b16 %v2935, %v2935
      %v3147 = vpack.c.b16 %v2936, %v2936
      %v3148 = vpack.c.b16 %v2937, %v2937
      %v3149 = vpack.c.b16 %v2938, %v2938
      %v3150 = vpack.c.b16 %v2939, %v2939
      %v3151 = vpack.c.b16 %v2940, %v2940
      %v3152 = vpack.c.b16 %v2941, %v2941
      %v3153 = vpack.c.b16 %v2942, %v2942
      %v3154 = vpack.c.b16 %v2943, %v2943
      %v3155 = vpack.c.b16 %v2944, %v2944
      %v3156 = vpack.c.b16 %v2945, %v2945
      %v3157 = vpack.c.b16 %v2946, %v2946
      %v3158 = vpack.c.b16 %v2947, %v2947
      %v3159 = vpack.c.b16 %v2948, %v2948
      %v3160 = vpack.c.b16 %v2949, %v2949
      %v3161 = vpack.c.b16 %v2950, %v2950
      %v3162 = vpack.c.b16 %v2951, %v2951
      %v3163 = vpack.c.b16 %v2952, %v2952
      %v3164 = vpack.c.b16 %v2953, %v2953
      %v3165 = vpack.c.b16 %v2954, %v2954
      %v3166 = vpack.c.b16 %v2955, %v2955
      %v3167 = vpack.c.b16 %v2956, %v2956
      %v3168 = vpack.c.b16 %v2957, %v2957
      %v3169 = vpack.c.b16 %v2958, %v2958
      %v3170 = vpack.c.b16 %v2959, %v2959
      %v3171 = vpack.c.b16 %v2960, %v2960
      %v3172 = vpack.c.b16 %v2961, %v2961
      %v3173 = vpack.c.b16 %v2962, %v2962
      %v3174 = vpack.c.b16 %v2963, %v2963
      %v3175 = vpack.c.b16 %v2964, %v2964
      %v3176 = vpack.c.b16 %v2965, %v2965
      %v3177 = vpack.c.b16 %v2966, %v2966
      %v3178 = vpack.c.b16 %v2967, %v2967
      %v3179 = vpack.c.b16 %v2968, %v2968
      %v3180 = vpack.c.b16 %v2969, %v2969
      %v3181 = vpack.c.b16 %v2970, %v2970
      %v3182 = vpack.c.b16 %v2971, %v2971
      %v3183 = vpack.c.b16 %v2972, %v2972
      %v3184 = vpack.c.b16 %v2973, %v2973
      %v3185 = vpack.c.b16 %v2974, %v2974
      %v3186 = vpack.c.b16 %v2975, %v2975
      %v3187 = vpack.c.b16 %v2976, %v2976
      %v3188 = vpack.c.b16 %v2977, %v2977
      %v3189 = vpack.c.b16 %v2978, %v2978
      %v3190 = vpack.c.b16 %v2979, %v2979
      %v3191 = vpack.c.b16 %v2980, %v2980
      %v3192 = vpack.c.b16 %v2981, %v2981
      %v3193 = vpack.c.b16 %v2982, %v2982
      %v3194 = vpack.c.b16 %v2983, %v2983
      %v3195 = vpack.c.b16 %v2984, %v2984
      %v3196 = vpack.c.b16 %v2985, %v2985
      %v3197 = vpack.c.b16 %v2986, %v2986
      %v3198 = vpack.c.b16 %v2987, %v2987
      %v3199 = vpack.c.b16 %v2988, %v2988
      %v3200 = vpack.c.b16 %v2989, %v2989
      %v3201 = vpack.c.b16 %v2990, %v2990
      %v3202 = vpack.c.b16 %v2991, %v2991
      %v3203 = vpack.c.b16 %v2992, %v2992
      %v3204 = vpack.c.b16 %v2993, %v2993
      %v3205 = vpack.c.b16 %v2994, %v2994
      %v3206 = vpack.c.b16 %v2995, %v2995
      %v3207 = vpack.c.b16 %v2996, %v2996
      %v3208 = vpack.c.b16 %v2997, %v2997
      %v3209 = vpack.c.b16 %v2998, %v2998
      %v3210 = vpack.c.b16 %v2999, %v2999
      %v3211 = vpack.c.b16 %v3000, %v3000
      %v3212 = vpack.c.b16 %v3001, %v3001
      %v3213 = vpack.c.b16 %v3002, %v3002
      %v3214 = vpack.c.b16 %v3003, %v3003
      %v3215 = vpack.c.b16 %v3004, %v3004
      %v3216 = vpack.c.b16 %v3005, %v3005
      %v3217 = vpack.c.b16 %v3006, %v3006
      %v3218 = vpack.c.b16 %v3007, %v3007
      %v3219 = vpack.c.b16 %v3008, %v3008
      %v3220 = vpack.c.b16 %v3009, %v3009
      %v3221 = vpack.c.b16 %v3010, %v3010
      %v3222 = vpack.c.b16 %v3011, %v3011
      %v3223 = vpack.c.b16 %v3012, %v3012
      %v3224 = vpack.c.b16 %v3013, %v3013
      %v3225 = vpack.c.b16 %v3014, %v3014
      %v3226 = vpack.c.b16 %v3015, %v3015
      %v3227 = vpack.c.b16 %v3016, %v3016
      %v3228 = vpack.c.b16 %v3017, %v3017
      %v3229 = vpack.c.b16 %v3018, %v3018
      %v3230 = vpack.c.b16 %v3019, %v3019
      %v3231 = vpack.c.b16 %v3020, %v3020
      %v3232 = vpack.c.b16 %v3021, %v3021
      %v3233 = vpack.c.b16 %v3022, %v3022
      %v3234 = vpack.c.b16 %v3023, %v3023
      %v3235 = vpack.c.b16 %v3024, %v3024
      %v3236 = vpack.c.b16 %v3025, %v3025
      %v3237 = vpack.c.b16 %v3026, %v3026
      %v3238 = vpack.c.b16 %v3027, %v3027
      %v3239 = vpack.c.b16 %v3028, %v3028
      %v3240 = vpack.c.b16 %v3029, %v3029
      %v3241 = vpack.c.b16 %v3030, %v3030
      %v3242 = vpack.c.b16 %v3031, %v3031
      %v3243 = vpack.c.b16 %v3032, %v3032
      %v3244 = vpack.c.b16 %v3033, %v3033
      %v3245 = vpack.c.b16 %v3034, %v3034
      %v3246 = vpack.c.b16 %v3035, %v3035
      %v3247 = vpack.c.b16 %v3036, %v3036
      %v3248 = vpack.c.b16 %v3037, %v3037
      %v3249 = vpack.c.b16 %v3038, %v3038
      %v3250 = vpack.c.b16 %v3039, %v3039
      %v3251 = vpack.c.b16 %v3040, %v3040
      %v3252 = vpack.c.b16 %v3041, %v3041
      %v3253 = vpack.c.b16 %v3042, %v3042
      %v3254 = vpack.c.b16 %v3043, %v3043
      %v3255 = vpack.c.b16 %v3044, %v3044
      %v3256 = vpack.c.b16 %v3045, %v3045
      %v3257 = vpack.c.b16 %v3046, %v3046
      %v3258 = vpack.c.b16 %v3047, %v3047
      %v3259 = vpack.c.b16 %v3048, %v3048
      %v3260 = vpack.c.b16 %v3049, %v3049
      %v3261 = vpack.c.b16 %v3050, %v3050
      %v3262 = vpack.c.b16 %v3051, %v3051
      %v3263 = vpack.c.b16 %v3052, %v3052
      %v3264 = vpack.c.b16 %v3053, %v3053
      %v3265 = vpack.c.b16 %v3054, %v3054
      %v3266 = vpack.c.b16 %v3055, %v3055
      %v3267 = vpack.c.b16 %v3056, %v3056
      %v3268 = vpack.c.b16 %v3057, %v3057
      %v3269 = vpack.c.b16 %v3058, %v3058
      %v3270 = vpack.c.b16 %v3059, %v3059
      %v3271 = vpack.c.b16 %v3060, %v3060
      %v3272 = vpack.c.b16 %v3061, %v3061
      %v3273 = vpack.c.b16 %v3062, %v3062
      %v3274 = vpack.c.b16 %v3063, %v3063
      %v3275 = vpack.c.b16 %v3064, %v3064
      %v3276 = vpack.c.b16 %v3065, %v3065
      %v3277 = vpack.c.b16 %v3066, %v3066
      %v3278 = vpack.c.b16 %v3067, %v3067
      %v3279 = vpack.c.b16 %v3068, %v3068
      %v3280 = vpack.c.b16 %v3069, %v3069
      %v3281 = vpack.c.b16 %v3070, %v3070
      %v3282 = vpack.c.b16 %v3071, %v3071
      %v3283 = vpack.c.b16 %v3072, %v3072
      %v3284 = vpack.c.b16 %v3073, %v3073
      %v3285 = vpack.c.b16 %v3074, %v3074
      %v3286 = vpack.c.b16 %v3075, %v3075
      %v3287 = vpack.c.b16 %v3076, %v3076
      %v3288 = vpack.c.b16 %v3077, %v3077
      %v3289 = vpack.c.b16 %v3078, %v3078
      %v3290 = vpack.c.b16 %v3079, %v3079
      %v3291 = vpack.c.b16 %v3080, %v3080
      %v3292 = vpack.c.b16 %v3081, %v3081
      %v3293 = vpack.c.b16 %v3082, %v3082
      %v3294 = vpack.c.b16 %v3083, %v3083
      %v3295 = vpack.c.b16 %v3084, %v3084
      %v3296 = vpack.c.b16 %v3085, %v3085
      %v3297 = vpack.c.b16 %v3086, %v3086
      %v3298 = vpack.c.b16 %v3087, %v3087
      %v3299 = vpack.c.b16 %v3088, %v3088
      %v3300 = vpack.c.b16 %v3089, %v3089
      %v3301 = vpack.c.b16 %v3090, %v3090
      %v3302 = vpack.c.b16 %v3091, %v3091
      %v3303 = vpack.c.b16 %v3092, %v3092
      %v3304 = vpack.c.b16 %v3093, %v3093
      %v3305 = vpack.c.b16 %v3094, %v3094
      %3517 = vst [vmem:[%s175] sm:$0xf] %v3095
      %3518 = vst [vmem:[%s175 + $0x4] sm:$0xf] %v3096
      %3519 = vst [vmem:[%s175 + $0x8] sm:$0xf] %v3097
      %3520 = vst [vmem:[%s175 + $0xc] sm:$0xf] %v3098
      %3521 = vst [vmem:[%s175 + $0x10] sm:$0xf] %v3099
      %3522 = vst [vmem:[%s175 + $0x14] sm:$0xf] %v3100
      %3523 = vst [vmem:[%s175 + $0x18] sm:$0xf] %v3101
      %3524 = vst [vmem:[%s175 + $0x1c] sm:$0xf] %v3102
      %3525 = vst [vmem:[%s175 + $0x20] sm:$0xf] %v3103
      %3526 = vst [vmem:[%s175 + $0x24] sm:$0xf] %v3104
      %3527 = vst [vmem:[%s175 + $0x28] sm:$0xf] %v3105
      %3528 = vst [vmem:[%s175 + $0x2c] sm:$0xf] %v3106
      %3529 = vst [vmem:[%s175 + $0x30] sm:$0xf] %v3107
      %3530 = vst [vmem:[%s175 + $0x34] sm:$0xf] %v3108
      %3531 = vst [vmem:[%s175 + $0x38] sm:$0xf] %v3109
      %3532 = vst [vmem:[%s175 + $0x3c] sm:$0xf] %v3110
      %3533 = vst [vmem:[%s175 + $0x40] sm:$0xf] %v3111
      %3534 = vst [vmem:[%s175 + $0x44] sm:$0xf] %v3112
      %3535 = vst [vmem:[%s175 + $0x48] sm:$0xf] %v3113
      %3536 = vst [vmem:[%s175 + $0x4c] sm:$0xf] %v3114
      %3537 = vst [vmem:[%s175 + $0x50] sm:$0xf] %v3115
      %3538 = vst [vmem:[%s175 + $0x54] sm:$0xf] %v3116
      %3539 = vst [vmem:[%s175 + $0x58] sm:$0xf] %v3117
      %3540 = vst [vmem:[%s175 + $0x5c] sm:$0xf] %v3118
      %3541 = vst [vmem:[%s175 + $0x60] sm:$0xf] %v3119
      %3542 = vst [vmem:[%s175 + $0x64] sm:$0xf] %v3120
      %3543 = vst [vmem:[%s175 + $0x68] sm:$0xf] %v3121
      %3544 = vst [vmem:[%s175 + $0x6c] sm:$0xf] %v3122
      %3545 = vst [vmem:[%s175 + $0x70] sm:$0xf] %v3123
      %3546 = vst [vmem:[%s175 + $0x74] sm:$0xf] %v3124
      %3547 = vst [vmem:[%s175 + $0x78] sm:$0xf] %v3125
      %3548 = vst [vmem:[%s175 + $0x7c] sm:$0xf] %v3126
      %3549 = vst [vmem:[%s175 + $0x80] sm:$0xf] %v3127
      %3550 = vst [vmem:[%s175 + $0x84] sm:$0xf] %v3128
      %3551 = vst [vmem:[%s175 + $0x88] sm:$0xf] %v3129
      %3552 = vst [vmem:[%s175 + $0x8c] sm:$0xf] %v3130
      %3553 = vst [vmem:[%s175 + $0x90] sm:$0xf] %v3131
      %3554 = vst [vmem:[%s175 + $0x94] sm:$0xf] %v3132
      %3555 = vst [vmem:[%s175 + $0x98] sm:$0xf] %v3133
      %3556 = vst [vmem:[%s175 + $0x9c] sm:$0xf] %v3134
      %3557 = vst [vmem:[%s175 + $0xa0] sm:$0xf] %v3135
      %3558 = vst [vmem:[%s175 + $0xa4] sm:$0xf] %v3136
      %3559 = vst [vmem:[%s175 + $0xa8] sm:$0xf] %v3137
      %3560 = vst [vmem:[%s175 + $0xac] sm:$0xf] %v3138
      %3561 = vst [vmem:[%s175 + $0xb0] sm:$0xf] %v3139
      %3562 = vst [vmem:[%s175 + $0xb4] sm:$0xf] %v3140
      %3563 = vst [vmem:[%s175 + $0xb8] sm:$0xf] %v3141
      %3564 = vst [vmem:[%s175 + $0xbc] sm:$0xf] %v3142
      %3565 = vst [vmem:[%s175 + $0xc0] sm:$0xf] %v3143
      %3566 = vst [vmem:[%s175 + $0xc4] sm:$0xf] %v3144
      %3567 = vst [vmem:[%s175 + $0xc8] sm:$0xf] %v3145
      %3568 = vst [vmem:[%s175 + $0xcc] sm:$0xf] %v3146
      %3569 = vst [vmem:[%s175 + $0xd0] sm:$0xf] %v3147
      %3570 = vst [vmem:[%s175 + $0xd4] sm:$0xf] %v3148
      %3571 = vst [vmem:[%s175 + $0xd8] sm:$0xf] %v3149
      %3572 = vst [vmem:[%s175 + $0xdc] sm:$0xf] %v3150
      %3573 = vst [vmem:[%s175 + $0xe0] sm:$0xf] %v3151
      %3574 = vst [vmem:[%s175 + $0xe4] sm:$0xf] %v3152
      %3575 = vst [vmem:[%s175 + $0xe8] sm:$0xf] %v3153
      %3576 = vst [vmem:[%s175 + $0xec] sm:$0xf] %v3154
      %3577 = vst [vmem:[%s175 + $0xf0] sm:$0xf] %v3155
      %3578 = vst [vmem:[%s175 + $0xf4] sm:$0xf] %v3156
      %3579 = vst [vmem:[%s175 + $0xf8] sm:$0xf] %v3157
      %3580 = vst [vmem:[%s175 + $0xfc] sm:$0xf] %v3158
      %3581 = vst [vmem:[%s175 + $0x100] sm:$0xf] %v3159
      %3582 = vst [vmem:[%s175 + $0x104] sm:$0xf] %v3160
      %3583 = vst [vmem:[%s175 + $0x108] sm:$0xf] %v3161
      %3584 = vst [vmem:[%s175 + $0x10c] sm:$0xf] %v3162
      %3585 = vst [vmem:[%s175 + $0x110] sm:$0xf] %v3163
      %3586 = vst [vmem:[%s175 + $0x114] sm:$0xf] %v3164
      %3587 = vst [vmem:[%s175 + $0x118] sm:$0xf] %v3165
      %3588 = vst [vmem:[%s175 + $0x11c] sm:$0xf] %v3166
      %3589 = vst [vmem:[%s175 + $0x120] sm:$0xf] %v3167
      %3590 = vst [vmem:[%s175 + $0x124] sm:$0xf] %v3168
      %3591 = vst [vmem:[%s175 + $0x128] sm:$0xf] %v3169
      %3592 = vst [vmem:[%s175 + $0x12c] sm:$0xf] %v3170
      %3593 = vst [vmem:[%s175 + $0x130] sm:$0xf] %v3171
      %3594 = vst [vmem:[%s175 + $0x134] sm:$0xf] %v3172
      %3595 = vst [vmem:[%s175 + $0x138] sm:$0xf] %v3173
      %3596 = vst [vmem:[%s175 + $0x13c] sm:$0xf] %v3174
      %3597 = vst [vmem:[%s175 + $0x140] sm:$0xf] %v3175
      %3598 = vst [vmem:[%s175 + $0x144] sm:$0xf] %v3176
      %3599 = vst [vmem:[%s175 + $0x148] sm:$0xf] %v3177
      %3600 = vst [vmem:[%s175 + $0x14c] sm:$0xf] %v3178
      %3601 = vst [vmem:[%s175 + $0x150] sm:$0xf] %v3179
      %3602 = vst [vmem:[%s175 + $0x154] sm:$0xf] %v3180
      %3603 = vst [vmem:[%s175 + $0x158] sm:$0xf] %v3181
      %3604 = vst [vmem:[%s175 + $0x15c] sm:$0xf] %v3182
      %3605 = vst [vmem:[%s175 + $0x160] sm:$0xf] %v3183
      %3606 = vst [vmem:[%s175 + $0x164] sm:$0xf] %v3184
      %3607 = vst [vmem:[%s175 + $0x168] sm:$0xf] %v3185
      %3608 = vst [vmem:[%s175 + $0x16c] sm:$0xf] %v3186
      %3609 = vst [vmem:[%s175 + $0x170] sm:$0xf] %v3187
      %3610 = vst [vmem:[%s175 + $0x174] sm:$0xf] %v3188
      %3611 = vst [vmem:[%s175 + $0x178] sm:$0xf] %v3189
      %3612 = vst [vmem:[%s175 + $0x17c] sm:$0xf] %v3190
      %3613 = vst [vmem:[%s175 + $0x180] sm:$0xf] %v3191
      %3614 = vst [vmem:[%s175 + $0x184] sm:$0xf] %v3192
      %3615 = vst [vmem:[%s175 + $0x188] sm:$0xf] %v3193
      %3616 = vst [vmem:[%s175 + $0x18c] sm:$0xf] %v3194
      %3617 = vst [vmem:[%s175 + $0x190] sm:$0xf] %v3195
      %3618 = vst [vmem:[%s175 + $0x194] sm:$0xf] %v3196
      %3619 = vst [vmem:[%s175 + $0x198] sm:$0xf] %v3197
      %3620 = vst [vmem:[%s175 + $0x19c] sm:$0xf] %v3198
      %3621 = vst [vmem:[%s175 + $0x1a0] sm:$0xf] %v3199
      %3622 = vst [vmem:[%s175 + $0x1a4] sm:$0xf] %v3200
      %3623 = vst [vmem:[%s175 + $0x1a8] sm:$0xf] %v3201
      %3624 = vst [vmem:[%s175 + $0x1ac] sm:$0xf] %v3202
      %3625 = vst [vmem:[%s175 + $0x1b0] sm:$0xf] %v3203
      %3626 = vst [vmem:[%s175 + $0x1b4] sm:$0xf] %v3204
      %3627 = vst [vmem:[%s175 + $0x1b8] sm:$0xf] %v3205
      %3628 = vst [vmem:[%s175 + $0x1bc] sm:$0xf] %v3206
      %3629 = vst [vmem:[%s175 + $0x1c0] sm:$0xf] %v3207
      %3630 = vst [vmem:[%s175 + $0x1c4] sm:$0xf] %v3208
      %3631 = vst [vmem:[%s175 + $0x1c8] sm:$0xf] %v3209
      %3632 = vst [vmem:[%s175 + $0x1cc] sm:$0xf] %v3210
      %3633 = vst [vmem:[%s175 + $0x1d0] sm:$0xf] %v3211
      %3634 = vst [vmem:[%s175 + $0x1d4] sm:$0xf] %v3212
      %3635 = vst [vmem:[%s175 + $0x1d8] sm:$0xf] %v3213
      %3636 = vst [vmem:[%s175 + $0x1dc] sm:$0xf] %v3214
      %3637 = vst [vmem:[%s175 + $0x1e0] sm:$0xf] %v3215
      %3638 = vst [vmem:[%s175 + $0x1e4] sm:$0xf] %v3216
      %3639 = vst [vmem:[%s175 + $0x1e8] sm:$0xf] %v3217
      %3640 = vst [vmem:[%s175 + $0x1ec] sm:$0xf] %v3218
      %3641 = vst [vmem:[%s175 + $0x1f0] sm:$0xf] %v3219
      %3642 = vst [vmem:[%s175 + $0x1f4] sm:$0xf] %v3220
      %3643 = vst [vmem:[%s175 + $0x1f8] sm:$0xf] %v3221
      %3644 = vst [vmem:[%s175 + $0x1fc] sm:$0xf] %v3222
      %3645 = vst [vmem:[%s175 + $0x200] sm:$0xf] %v3223
      %3646 = vst [vmem:[%s175 + $0x204] sm:$0xf] %v3224
      %3647 = vst [vmem:[%s175 + $0x208] sm:$0xf] %v3225
      %3648 = vst [vmem:[%s175 + $0x20c] sm:$0xf] %v3226
      %3649 = vst [vmem:[%s175 + $0x210] sm:$0xf] %v3227
      %3650 = vst [vmem:[%s175 + $0x214] sm:$0xf] %v3228
      %3651 = vst [vmem:[%s175 + $0x218] sm:$0xf] %v3229
      %3652 = vst [vmem:[%s175 + $0x21c] sm:$0xf] %v3230
      %3653 = vst [vmem:[%s175 + $0x220] sm:$0xf] %v3231
      %3654 = vst [vmem:[%s175 + $0x224] sm:$0xf] %v3232
      %3655 = vst [vmem:[%s175 + $0x228] sm:$0xf] %v3233
      %3656 = vst [vmem:[%s175 + $0x22c] sm:$0xf] %v3234
      %3657 = vst [vmem:[%s175 + $0x230] sm:$0xf] %v3235
      %3658 = vst [vmem:[%s175 + $0x234] sm:$0xf] %v3236
      %3659 = vst [vmem:[%s175 + $0x238] sm:$0xf] %v3237
      %3660 = vst [vmem:[%s175 + $0x23c] sm:$0xf] %v3238
      %3661 = vst [vmem:[%s175 + $0x240] sm:$0xf] %v3239
      %3662 = vst [vmem:[%s175 + $0x244] sm:$0xf] %v3240
      %3663 = vst [vmem:[%s175 + $0x248] sm:$0xf] %v3241
      %3664 = vst [vmem:[%s175 + $0x24c] sm:$0xf] %v3242
      %3665 = vst [vmem:[%s175 + $0x250] sm:$0xf] %v3243
      %3666 = vst [vmem:[%s175 + $0x254] sm:$0xf] %v3244
      %3667 = vst [vmem:[%s175 + $0x258] sm:$0xf] %v3245
      %3668 = vst [vmem:[%s175 + $0x25c] sm:$0xf] %v3246
      %3669 = vst [vmem:[%s175 + $0x260] sm:$0xf] %v3247
      %3670 = vst [vmem:[%s175 + $0x264] sm:$0xf] %v3248
      %3671 = vst [vmem:[%s175 + $0x268] sm:$0xf] %v3249
      %3672 = vst [vmem:[%s175 + $0x26c] sm:$0xf] %v3250
      %3673 = vst [vmem:[%s175 + $0x270] sm:$0xf] %v3251
      %3674 = vst [vmem:[%s175 + $0x274] sm:$0xf] %v3252
      %3675 = vst [vmem:[%s175 + $0x278] sm:$0xf] %v3253
      %3676 = vst [vmem:[%s175 + $0x27c] sm:$0xf] %v3254
      %3677 = vst [vmem:[%s175 + $0x280] sm:$0xf] %v3255
      %3678 = vst [vmem:[%s175 + $0x284] sm:$0xf] %v3256
      %3679 = vst [vmem:[%s175 + $0x288] sm:$0xf] %v3257
      %3680 = vst [vmem:[%s175 + $0x28c] sm:$0xf] %v3258
      %3681 = vst [vmem:[%s175 + $0x290] sm:$0xf] %v3259
      %3682 = vst [vmem:[%s175 + $0x294] sm:$0xf] %v3260
      %3683 = vst [vmem:[%s175 + $0x298] sm:$0xf] %v3261
      %3684 = vst [vmem:[%s175 + $0x29c] sm:$0xf] %v3262
      %3685 = vst [vmem:[%s175 + $0x2a0] sm:$0xf] %v3263
      %3686 = vst [vmem:[%s175 + $0x2a4] sm:$0xf] %v3264
      %3687 = vst [vmem:[%s175 + $0x2a8] sm:$0xf] %v3265
      %3688 = vst [vmem:[%s175 + $0x2ac] sm:$0xf] %v3266
      %3689 = vst [vmem:[%s175 + $0x2b0] sm:$0xf] %v3267
      %3690 = vst [vmem:[%s175 + $0x2b4] sm:$0xf] %v3268
      %3691 = vst [vmem:[%s175 + $0x2b8] sm:$0xf] %v3269
      %3692 = vst [vmem:[%s175 + $0x2bc] sm:$0xf] %v3270
      %3693 = vst [vmem:[%s175 + $0x2c0] sm:$0xf] %v3271
      %3694 = vst [vmem:[%s175 + $0x2c4] sm:$0xf] %v3272
      %3695 = vst [vmem:[%s175 + $0x2c8] sm:$0xf] %v3273
      %3696 = vst [vmem:[%s175 + $0x2cc] sm:$0xf] %v3274
      %3697 = vst [vmem:[%s175 + $0x2d0] sm:$0xf] %v3275
      %3698 = vst [vmem:[%s175 + $0x2d4] sm:$0xf] %v3276
      %3699 = vst [vmem:[%s175 + $0x2d8] sm:$0xf] %v3277
      %3700 = vst [vmem:[%s175 + $0x2dc] sm:$0xf] %v3278
      %3701 = vst [vmem:[%s175 + $0x2e0] sm:$0xf] %v3279
      %3702 = vst [vmem:[%s175 + $0x2e4] sm:$0xf] %v3280
      %3703 = vst [vmem:[%s175 + $0x2e8] sm:$0xf] %v3281
      %3704 = vst [vmem:[%s175 + $0x2ec] sm:$0xf] %v3282
      %3705 = vst [vmem:[%s175 + $0x2f0] sm:$0xf] %v3283
      %3706 = vst [vmem:[%s175 + $0x2f4] sm:$0xf] %v3284
      %3707 = vst [vmem:[%s175 + $0x2f8] sm:$0xf] %v3285
      %3708 = vst [vmem:[%s175 + $0x2fc] sm:$0xf] %v3286
      %3709 = vst [vmem:[%s175 + $0x300] sm:$0xf] %v3287
      %3710 = vst [vmem:[%s175 + $0x304] sm:$0xf] %v3288
      %3711 = vst [vmem:[%s175 + $0x308] sm:$0xf] %v3289
      %3712 = vst [vmem:[%s175 + $0x30c] sm:$0xf] %v3290
      %3713 = vst [vmem:[%s175 + $0x310] sm:$0xf] %v3291
      %3714 = vst [vmem:[%s175 + $0x314] sm:$0xf] %v3292
      %3715 = vst [vmem:[%s175 + $0x318] sm:$0xf] %v3293
      %3716 = vst [vmem:[%s175 + $0x31c] sm:$0xf] %v3294
      %3717 = vst [vmem:[%s175 + $0x320] sm:$0xf] %v3295
      %3718 = vst [vmem:[%s175 + $0x324] sm:$0xf] %v3296
      %3719 = vst [vmem:[%s175 + $0x328] sm:$0xf] %v3297
      %3720 = vst [vmem:[%s175 + $0x32c] sm:$0xf] %v3298
      %3721 = vst [vmem:[%s175 + $0x330] sm:$0xf] %v3299
      %3722 = vst [vmem:[%s175 + $0x334] sm:$0xf] %v3300
      %3723 = vst [vmem:[%s175 + $0x338] sm:$0xf] %v3301
      %3724 = vst [vmem:[%s175 + $0x33c] sm:$0xf] %v3302
      %3725 = vst [vmem:[%s175 + $0x340] sm:$0xf] %v3303
      %3726 = vst [vmem:[%s175 + $0x344] sm:$0xf] %v3304
      %3727 = vst [vmem:[%s175 + $0x348] sm:$0xf] %v3305
      %s3728 = smul.u32 211, %s14
      %p3729 = scmp.lt.s32.totalorder %s3728, 421
      %s3730 = scalar_select %p3729, %s3728, 421
      %s3731 = smul.addr %s3730, 4
      %s3732 = scalar_lea.vmem %s3, %s3731
      // Predicated region
      $region33: #{mrinet_forward.3} parent=31 // pred_check
        %p3733 = pneg %p100
      $region34: #{mrinet_forward.3} parent=31 // pred_check_branch
        %3735 = sbr.rel (%p3733) target = $region36
      $region35: #{mrinet_forward.3} parent=31 // pred_region
        %s3736 = smul.u32 211, %s14
      $region36: #{mrinet_forward.3} parent=31 // pred_fallthru
        _
    $region32: #{mrinet_forward.3} parent=5 // pred_fallthru
      _
    %p3737 = scmp.le.s32.totalorder 2, %s9
    // Predicated region
    $region37: #{mrinet_forward.3} parent=5 // pred_check
      %p3738 = pneg %p3737
    $region38: #{mrinet_forward.3} parent=5 // pred_check_branch
      %3740 = sbr.rel (%p3738) target = $region40
    $region39: #{mrinet_forward.3} parent=5 // pred_region
      %s3741 = ssub.s32 %s9, 2
      // Predicated region
      $region41: #{mrinet_forward.3} parent=39 // pred_check
        %p3742 = pneg %p106
      $region42: #{mrinet_forward.3} parent=39 // pred_check_branch
        %3744 = sbr.rel (%p3742) target = $region44
      $region43: #{mrinet_forward.3} parent=39 // pred_region
        %s3745 = smul.u32 211, %s15
        %p3746 = scmp.lt.s32.totalorder %s3745, 421
        %s3747 = scalar_select %p3746, %s3745, 421
        %s3748 = smul.addr %s3747, 4
        %s3749 = scalar_lea.vmem %s3, %s3748
      $region44: #{mrinet_forward.3} parent=39 // pred_fallthru
        _
    $region40: #{mrinet_forward.3} parent=5 // pred_fallthru
      _
  $region6: #{mrinet_forward.3} parent=0 // loop_footer
    %s13 = sadd.s32 1, %s9
  $region7: #{mrinet_forward.3} parent=0 // loop_footer_branch
    %8 = sbr.rel target = $region3
  $region8: #{mrinet_forward.3} parent=0 // loop_exit
    _

// kernel: mrinet_forward.4
$region0: #{mrinet_forward.4}
  #allocation0 [shape = 'u32[]', space=smem, size = 0x4, offset = 0x4, fixed_abs, tag = 'smem constant byte address 0x4 - core index']
  #allocation1 [shape = 'u32[144,128]{1,0:T(1,128)}', space=vmem, size = 0x12000, scoped, tag = 'internal scratch']
  %s0 = inlined_call_operand.vmem [shape: bf16[27,125,128], index: 0, kind: input, shape index: {}]
  %s1 = inlined_call_operand.vmem [shape: bf16[125,128], index: 1, kind: output, shape index: {}]
  %s2 = sld [smem:[#allocation0]]
  $region14: #{mrinet_forward.4} parent=0
    _
  %s4 = ssub.s32 1, %s2
  %s5 = scalar_select 0, %s4, %s2
  // Predicated region
  $region2: #{mrinet_forward.4} parent=0 // pred_check
    _
  $region3: #{mrinet_forward.4} parent=0 // pred_check_branch
    %7 = sbr.rel (0) target = $region5
  $region4: #{mrinet_forward.4} parent=0 // pred_region
    _
  $region5: #{mrinet_forward.4} parent=0 // pred_fallthru
    _
  %v8 = vld [vmem:[%s0] sm:$0xf]
  %v9 = vld [vmem:[%s0 + $0x4] sm:$0xf]
  %v10 = vld [vmem:[%s0 + $0x8] sm:$0xf]
  %v11 = vld [vmem:[%s0 + $0xc] sm:$0xf]
  %v12 = vld [vmem:[%s0 + $0x10] sm:$0xf]
  %v13 = vld [vmem:[%s0 + $0x14] sm:$0xf]
  %v14 = vld [vmem:[%s0 + $0x18] sm:$0xf]
  %v15 = vld [vmem:[%s0 + $0x1c] sm:$0xf]
  %v16 = vld [vmem:[%s0 + $0x20] sm:$0xf]
  %v17 = vld [vmem:[%s0 + $0x24] sm:$0xf]
  %v18 = vld [vmem:[%s0 + $0x28] sm:$0xf]
  %v19 = vld [vmem:[%s0 + $0x2c] sm:$0xf]
  %v20 = vld [vmem:[%s0 + $0x30] sm:$0xf]
  %v21 = vld [vmem:[%s0 + $0x34] sm:$0xf]
  %v22 = vld [vmem:[%s0 + $0x38] sm:$0xf]
  %v23 = vld [vmem:[%s0 + $0x3c] sm:$0x7]
  %s24 = scalar_lea.vmem %s0, 64
  %v25 = vld [vmem:[%s24] sm:$0xf]
  %v26 = vld [vmem:[%s24 + $0x4] sm:$0xf]
  %v27 = vld [vmem:[%s24 + $0x8] sm:$0xf]
  %v28 = vld [vmem:[%s24 + $0xc] sm:$0xf]
  %v29 = vld [vmem:[%s24 + $0x10] sm:$0xf]
  %v30 = vld [vmem:[%s24 + $0x14] sm:$0xf]
  %v31 = vld [vmem:[%s24 + $0x18] sm:$0xf]
  %v32 = vld [vmem:[%s24 + $0x1c] sm:$0xf]
  %v33 = vld [vmem:[%s24 + $0x20] sm:$0xf]
  %v34 = vld [vmem:[%s24 + $0x24] sm:$0xf]
  %v35 = vld [vmem:[%s24 + $0x28] sm:$0xf]
  %v36 = vld [vmem:[%s24 + $0x2c] sm:$0xf]
  %v37 = vld [vmem:[%s24 + $0x30] sm:$0xf]
  %v38 = vld [vmem:[%s24 + $0x34] sm:$0xf]
  %v39 = vld [vmem:[%s24 + $0x38] sm:$0xf]
  %v40 = vld [vmem:[%s24 + $0x3c] sm:$0x7]
  %v41 = vmax.bf16 %v8, %v25
  %v42 = vmax.bf16 %v9, %v26
  %v43 = vmax.bf16 %v10, %v27
  %v44 = vmax.bf16 %v11, %v28
  %v45 = vmax.bf16 %v12, %v29
  %v46 = vmax.bf16 %v13, %v30
  %v47 = vmax.bf16 %v14, %v31
  %v48 = vmax.bf16 %v15, %v32
  %v49 = vmax.bf16 %v16, %v33
  %v50 = vmax.bf16 %v17, %v34
  %v51 = vmax.bf16 %v18, %v35
  %v52 = vmax.bf16 %v19, %v36
  %v53 = vmax.bf16 %v20, %v37
  %v54 = vmax.bf16 %v21, %v38
  %v55 = vmax.bf16 %v22, %v39
  %v56 = vmax.bf16 %v23, %v40
  %s57 = scalar_lea.vmem %s0, 128
  %v58 = vld [vmem:[%s57] sm:$0xf]
  %v59 = vld [vmem:[%s57 + $0x4] sm:$0xf]
  %v60 = vld [vmem:[%s57 + $0x8] sm:$0xf]
  %v61 = vld [vmem:[%s57 + $0xc] sm:$0xf]
  %v62 = vld [vmem:[%s57 + $0x10] sm:$0xf]
  %v63 = vld [vmem:[%s57 + $0x14] sm:$0xf]
  %v64 = vld [vmem:[%s57 + $0x18] sm:$0xf]
  %v65 = vld [vmem:[%s57 + $0x1c] sm:$0xf]
  %v66 = vld [vmem:[%s57 + $0x20] sm:$0xf]
  %v67 = vld [vmem:[%s57 + $0x24] sm:$0xf]
  %v68 = vld [vmem:[%s57 + $0x28] sm:$0xf]
  %v69 = vld [vmem:[%s57 + $0x2c] sm:$0xf]
  %v70 = vld [vmem:[%s57 + $0x30] sm:$0xf]
  %v71 = vld [vmem:[%s57 + $0x34] sm:$0xf]
  %v72 = vld [vmem:[%s57 + $0x38] sm:$0xf]
  %v73 = vld [vmem:[%s57 + $0x3c] sm:$0x7]
  %v74 = vmax.bf16 %v41, %v58
  %v75 = vmax.bf16 %v42, %v59
  %v76 = vmax.bf16 %v43, %v60
  %v77 = vmax.bf16 %v44, %v61
  %v78 = vmax.bf16 %v45, %v62
  %v79 = vmax.bf16 %v46, %v63
  %v80 = vmax.bf16 %v47, %v64
  %v81 = vmax.bf16 %v48, %v65
  %v82 = vmax.bf16 %v49, %v66
  %v83 = vmax.bf16 %v50, %v67
  %v84 = vmax.bf16 %v51, %v68
  %v85 = vmax.bf16 %v52, %v69
  %v86 = vmax.bf16 %v53, %v70
  %v87 = vmax.bf16 %v54, %v71
  %v88 = vmax.bf16 %v55, %v72
  %v89 = vmax.bf16 %v56, %v73
  %s90 = scalar_lea.vmem %s0, 192
  %v91 = vld [vmem:[%s90] sm:$0xf]
  %v92 = vld [vmem:[%s90 + $0x4] sm:$0xf]
  %v93 = vld [vmem:[%s90 + $0x8] sm:$0xf]
  %v94 = vld [vmem:[%s90 + $0xc] sm:$0xf]
  %v95 = vld [vmem:[%s90 + $0x10] sm:$0xf]
  %v96 = vld [vmem:[%s90 + $0x14] sm:$0xf]
  %v97 = vld [vmem:[%s90 + $0x18] sm:$0xf]
  %v98 = vld [vmem:[%s90 + $0x1c] sm:$0xf]
  %v99 = vld [vmem:[%s90 + $0x20] sm:$0xf]
  %v100 = vld [vmem:[%s90 + $0x24] sm:$0xf]
  %v101 = vld [vmem:[%s90 + $0x28] sm:$0xf]
  %v102 = vld [vmem:[%s90 + $0x2c] sm:$0xf]
  %v103 = vld [vmem:[%s90 + $0x30] sm:$0xf]
  %v104 = vld [vmem:[%s90 + $0x34] sm:$0xf]
  %v105 = vld [vmem:[%s90 + $0x38] sm:$0xf]
  %v106 = vld [vmem:[%s90 + $0x3c] sm:$0x7]
  %v107 = vmax.bf16 %v74, %v91
  %v108 = vmax.bf16 %v75, %v92
  %v109 = vmax.bf16 %v76, %v93
  %v110 = vmax.bf16 %v77, %v94
  %v111 = vmax.bf16 %v78, %v95
  %v112 = vmax.bf16 %v79, %v96
  %v113 = vmax.bf16 %v80, %v97
  %v114 = vmax.bf16 %v81, %v98
  %v115 = vmax.bf16 %v82, %v99
  %v116 = vmax.bf16 %v83, %v100
  %v117 = vmax.bf16 %v84, %v101
  %v118 = vmax.bf16 %v85, %v102
  %v119 = vmax.bf16 %v86, %v103
  %v120 = vmax.bf16 %v87, %v104
  %v121 = vmax.bf16 %v88, %v105
  %v122 = vmax.bf16 %v89, %v106
  %s123 = scalar_lea.vmem %s0, 256
  %v124 = vld [vmem:[%s123] sm:$0xf]
  %v125 = vld [vmem:[%s123 + $0x4] sm:$0xf]
  %v126 = vld [vmem:[%s123 + $0x8] sm:$0xf]
  %v127 = vld [vmem:[%s123 + $0xc] sm:$0xf]
  %v128 = vld [vmem:[%s123 + $0x10] sm:$0xf]
  %v129 = vld [vmem:[%s123 + $0x14] sm:$0xf]
  %v130 = vld [vmem:[%s123 + $0x18] sm:$0xf]
  %v131 = vld [vmem:[%s123 + $0x1c] sm:$0xf]
  %v132 = vld [vmem:[%s123 + $0x20] sm:$0xf]
  %v133 = vld [vmem:[%s123 + $0x24] sm:$0xf]
  %v134 = vld [vmem:[%s123 + $0x28] sm:$0xf]
  %v135 = vld [vmem:[%s123 + $0x2c] sm:$0xf]
  %v136 = vld [vmem:[%s123 + $0x30] sm:$0xf]
  %v137 = vld [vmem:[%s123 + $0x34] sm:$0xf]
  %v138 = vld [vmem:[%s123 + $0x38] sm:$0xf]
  %v139 = vld [vmem:[%s123 + $0x3c] sm:$0x7]
  %v140 = vmax.bf16 %v107, %v124
  %v141 = vmax.bf16 %v108, %v125
  %v142 = vmax.bf16 %v109, %v126
  %v143 = vmax.bf16 %v110, %v127
  %v144 = vmax.bf16 %v111, %v128
  %v145 = vmax.bf16 %v112, %v129
  %v146 = vmax.bf16 %v113, %v130
  %v147 = vmax.bf16 %v114, %v131
  %v148 = vmax.bf16 %v115, %v132
  %v149 = vmax.bf16 %v116, %v133
  %v150 = vmax.bf16 %v117, %v134
  %v151 = vmax.bf16 %v118, %v135
  %v152 = vmax.bf16 %v119, %v136
  %v153 = vmax.bf16 %v120, %v137
  %v154 = vmax.bf16 %v121, %v138
  %v155 = vmax.bf16 %v122, %v139
  %s156 = scalar_lea.vmem %s0, 320
  %v157 = vld [vmem:[%s156] sm:$0xf]
  %v158 = vld [vmem:[%s156 + $0x4] sm:$0xf]
  %v159 = vld [vmem:[%s156 + $0x8] sm:$0xf]
  %v160 = vld [vmem:[%s156 + $0xc] sm:$0xf]
  %v161 = vld [vmem:[%s156 + $0x10] sm:$0xf]
  %v162 = vld [vmem:[%s156 + $0x14] sm:$0xf]
  %v163 = vld [vmem:[%s156 + $0x18] sm:$0xf]
  %v164 = vld [vmem:[%s156 + $0x1c] sm:$0xf]
  %v165 = vld [vmem:[%s156 + $0x20] sm:$0xf]
  %v166 = vld [vmem:[%s156 + $0x24] sm:$0xf]
  %v167 = vld [vmem:[%s156 + $0x28] sm:$0xf]
  %v168 = vld [vmem:[%s156 + $0x2c] sm:$0xf]
  %v169 = vld [vmem:[%s156 + $0x30] sm:$0xf]
  %v170 = vld [vmem:[%s156 + $0x34] sm:$0xf]
  %v171 = vld [vmem:[%s156 + $0x38] sm:$0xf]
  %v172 = vld [vmem:[%s156 + $0x3c] sm:$0x7]
  %v173 = vmax.bf16 %v140, %v157
  %v174 = vmax.bf16 %v141, %v158
  %v175 = vmax.bf16 %v142, %v159
  %v176 = vmax.bf16 %v143, %v160
  %v177 = vmax.bf16 %v144, %v161
  %v178 = vmax.bf16 %v145, %v162
  %v179 = vmax.bf16 %v146, %v163
  %v180 = vmax.bf16 %v147, %v164
  %v181 = vmax.bf16 %v148, %v165
  %v182 = vmax.bf16 %v149, %v166
  %v183 = vmax.bf16 %v150, %v167
  %v184 = vmax.bf16 %v151, %v168
  %v185 = vmax.bf16 %v152, %v169
  %v186 = vmax.bf16 %v153, %v170
  %v187 = vmax.bf16 %v154, %v171
  %v188 = vmax.bf16 %v155, %v172
  %s189 = scalar_lea.vmem %s0, 384
  %v190 = vld [vmem:[%s189] sm:$0xf]
  %v191 = vld [vmem:[%s189 + $0x4] sm:$0xf]
  %v192 = vld [vmem:[%s189 + $0x8] sm:$0xf]
  %v193 = vld [vmem:[%s189 + $0xc] sm:$0xf]
  %v194 = vld [vmem:[%s189 + $0x10] sm:$0xf]
  %v195 = vld [vmem:[%s189 + $0x14] sm:$0xf]
  %v196 = vld [vmem:[%s189 + $0x18] sm:$0xf]
  %v197 = vld [vmem:[%s189 + $0x1c] sm:$0xf]
  %v198 = vld [vmem:[%s189 + $0x20] sm:$0xf]
  %v199 = vld [vmem:[%s189 + $0x24] sm:$0xf]
  %v200 = vld [vmem:[%s189 + $0x28] sm:$0xf]
  %v201 = vld [vmem:[%s189 + $0x2c] sm:$0xf]
  %v202 = vld [vmem:[%s189 + $0x30] sm:$0xf]
  %v203 = vld [vmem:[%s189 + $0x34] sm:$0xf]
  %v204 = vld [vmem:[%s189 + $0x38] sm:$0xf]
  %v205 = vld [vmem:[%s189 + $0x3c] sm:$0x7]
  %v206 = vmax.bf16 %v173, %v190
  %v207 = vmax.bf16 %v174, %v191
  %v208 = vmax.bf16 %v175, %v192
  %v209 = vmax.bf16 %v176, %v193
  %v210 = vmax.bf16 %v177, %v194
  %v211 = vmax.bf16 %v178, %v195
  %v212 = vmax.bf16 %v179, %v196
  %v213 = vmax.bf16 %v180, %v197
  %v214 = vmax.bf16 %v181, %v198
  %v215 = vmax.bf16 %v182, %v199
  %v216 = vmax.bf16 %v183, %v200
  %v217 = vmax.bf16 %v184, %v201
  %v218 = vmax.bf16 %v185, %v202
  %v219 = vmax.bf16 %v186, %v203
  %v220 = vmax.bf16 %v187, %v204
  %v221 = vmax.bf16 %v188, %v205
  %s222 = scalar_lea.vmem %s0, 448
  %v223 = vld [vmem:[%s222] sm:$0xf]
  %v224 = vld [vmem:[%s222 + $0x4] sm:$0xf]
  %v225 = vld [vmem:[%s222 + $0x8] sm:$0xf]
  %v226 = vld [vmem:[%s222 + $0xc] sm:$0xf]
  %v227 = vld [vmem:[%s222 + $0x10] sm:$0xf]
  %v228 = vld [vmem:[%s222 + $0x14] sm:$0xf]
  %v229 = vld [vmem:[%s222 + $0x18] sm:$0xf]
  %v230 = vld [vmem:[%s222 + $0x1c] sm:$0xf]
  %v231 = vld [vmem:[%s222 + $0x20] sm:$0xf]
  %v232 = vld [vmem:[%s222 + $0x24] sm:$0xf]
  %v233 = vld [vmem:[%s222 + $0x28] sm:$0xf]
  %v234 = vld [vmem:[%s222 + $0x2c] sm:$0xf]
  %v235 = vld [vmem:[%s222 + $0x30] sm:$0xf]
  %v236 = vld [vmem:[%s222 + $0x34] sm:$0xf]
  %v237 = vld [vmem:[%s222 + $0x38] sm:$0xf]
  %v238 = vld [vmem:[%s222 + $0x3c] sm:$0x7]
  %v239 = vmax.bf16 %v206, %v223
  %v240 = vmax.bf16 %v207, %v224
  %v241 = vmax.bf16 %v208, %v225
  %v242 = vmax.bf16 %v209, %v226
  %v243 = vmax.bf16 %v210, %v227
  %v244 = vmax.bf16 %v211, %v228
  %v245 = vmax.bf16 %v212, %v229
  %v246 = vmax.bf16 %v213, %v230
  %v247 = vmax.bf16 %v214, %v231
  %v248 = vmax.bf16 %v215, %v232
  %v249 = vmax.bf16 %v216, %v233
  %v250 = vmax.bf16 %v217, %v234
  %v251 = vmax.bf16 %v218, %v235
  %v252 = vmax.bf16 %v219, %v236
  %v253 = vmax.bf16 %v220, %v237
  %v254 = vmax.bf16 %v221, %v238
  %s255 = scalar_lea.vmem %s0, 512
  %v256 = vld [vmem:[%s255] sm:$0xf]
  %v257 = vld [vmem:[%s255 + $0x4] sm:$0xf]
  %v258 = vld [vmem:[%s255 + $0x8] sm:$0xf]
  %v259 = vld [vmem:[%s255 + $0xc] sm:$0xf]
  %v260 = vld [vmem:[%s255 + $0x10] sm:$0xf]
  %v261 = vld [vmem:[%s255 + $0x14] sm:$0xf]
  %v262 = vld [vmem:[%s255 + $0x18] sm:$0xf]
  %v263 = vld [vmem:[%s255 + $0x1c] sm:$0xf]
  %v264 = vld [vmem:[%s255 + $0x20] sm:$0xf]
  %v265 = vld [vmem:[%s255 + $0x24] sm:$0xf]
  %v266 = vld [vmem:[%s255 + $0x28] sm:$0xf]
  %v267 = vld [vmem:[%s255 + $0x2c] sm:$0xf]
  %v268 = vld [vmem:[%s255 + $0x30] sm:$0xf]
  %v269 = vld [vmem:[%s255 + $0x34] sm:$0xf]
  %v270 = vld [vmem:[%s255 + $0x38] sm:$0xf]
  %v271 = vld [vmem:[%s255 + $0x3c] sm:$0x7]
  %v272 = vmax.bf16 %v239, %v256
  %v273 = vmax.bf16 %v240, %v257
  %v274 = vmax.bf16 %v241, %v258
  %v275 = vmax.bf16 %v242, %v259
  %v276 = vmax.bf16 %v243, %v260
  %v277 = vmax.bf16 %v244, %v261
  %v278 = vmax.bf16 %v245, %v262
  %v279 = vmax.bf16 %v246, %v263
  %v280 = vmax.bf16 %v247, %v264
  %v281 = vmax.bf16 %v248, %v265
  %v282 = vmax.bf16 %v249, %v266
  %v283 = vmax.bf16 %v250, %v267
  %v284 = vmax.bf16 %v251, %v268
  %v285 = vmax.bf16 %v252, %v269
  %v286 = vmax.bf16 %v253, %v270
  %v287 = vmax.bf16 %v254, %v271
  %s288 = scalar_lea.vmem %s0, 576
  %v289 = vld [vmem:[%s288] sm:$0xf]
  %v290 = vld [vmem:[%s288 + $0x4] sm:$0xf]
  %v291 = vld [vmem:[%s288 + $0x8] sm:$0xf]
  %v292 = vld [vmem:[%s288 + $0xc] sm:$0xf]
  %v293 = vld [vmem:[%s288 + $0x10] sm:$0xf]
  %v294 = vld [vmem:[%s288 + $0x14] sm:$0xf]
  %v295 = vld [vmem:[%s288 + $0x18] sm:$0xf]
  %v296 = vld [vmem:[%s288 + $0x1c] sm:$0xf]
  %v297 = vld [vmem:[%s288 + $0x20] sm:$0xf]
  %v298 = vld [vmem:[%s288 + $0x24] sm:$0xf]
  %v299 = vld [vmem:[%s288 + $0x28] sm:$0xf]
  %v300 = vld [vmem:[%s288 + $0x2c] sm:$0xf]
  %v301 = vld [vmem:[%s288 + $0x30] sm:$0xf]
  %v302 = vld [vmem:[%s288 + $0x34] sm:$0xf]
  %v303 = vld [vmem:[%s288 + $0x38] sm:$0xf]
  %v304 = vld [vmem:[%s288 + $0x3c] sm:$0x7]
  %v305 = vmax.bf16 %v272, %v289
  %v306 = vmax.bf16 %v273, %v290
  %v307 = vmax.bf16 %v274, %v291
  %v308 = vmax.bf16 %v275, %v292
  %v309 = vmax.bf16 %v276, %v293
  %v310 = vmax.bf16 %v277, %v294
  %v311 = vmax.bf16 %v278, %v295
  %v312 = vmax.bf16 %v279, %v296
  %v313 = vmax.bf16 %v280, %v297
  %v314 = vmax.bf16 %v281, %v298
  %v315 = vmax.bf16 %v282, %v299
  %v316 = vmax.bf16 %v283, %v300
  %v317 = vmax.bf16 %v284, %v301
  %v318 = vmax.bf16 %v285, %v302
  %v319 = vmax.bf16 %v286, %v303
  %v320 = vmax.bf16 %v287, %v304
  %s321 = scalar_lea.vmem %s0, 640
  %v322 = vld [vmem:[%s321] sm:$0xf]
  %v323 = vld [vmem:[%s321 + $0x4] sm:$0xf]
  %v324 = vld [vmem:[%s321 + $0x8] sm:$0xf]
  %v325 = vld [vmem:[%s321 + $0xc] sm:$0xf]
  %v326 = vld [vmem:[%s321 + $0x10] sm:$0xf]
  %v327 = vld [vmem:[%s321 + $0x14] sm:$0xf]
  %v328 = vld [vmem:[%s321 + $0x18] sm:$0xf]
  %v329 = vld [vmem:[%s321 + $0x1c] sm:$0xf]
  %v330 = vld [vmem:[%s321 + $0x20] sm:$0xf]
  %v331 = vld [vmem:[%s321 + $0x24] sm:$0xf]
  %v332 = vld [vmem:[%s321 + $0x28] sm:$0xf]
  %v333 = vld [vmem:[%s321 + $0x2c] sm:$0xf]
  %v334 = vld [vmem:[%s321 + $0x30] sm:$0xf]
  %v335 = vld [vmem:[%s321 + $0x34] sm:$0xf]
  %v336 = vld [vmem:[%s321 + $0x38] sm:$0xf]
  %v337 = vld [vmem:[%s321 + $0x3c] sm:$0x7]
  %v338 = vmax.bf16 %v305, %v322
  %v339 = vmax.bf16 %v306, %v323
  %v340 = vmax.bf16 %v307, %v324
  %v341 = vmax.bf16 %v308, %v325
  %v342 = vmax.bf16 %v309, %v326
  %v343 = vmax.bf16 %v310, %v327
  %v344 = vmax.bf16 %v311, %v328
  %v345 = vmax.bf16 %v312, %v329
  %v346 = vmax.bf16 %v313, %v330
  %v347 = vmax.bf16 %v314, %v331
  %v348 = vmax.bf16 %v315, %v332
  %v349 = vmax.bf16 %v316, %v333
  %v350 = vmax.bf16 %v317, %v334
  %v351 = vmax.bf16 %v318, %v335
  %v352 = vmax.bf16 %v319, %v336
  %v353 = vmax.bf16 %v320, %v337
  %s354 = scalar_lea.vmem %s0, 704
  %v355 = vld [vmem:[%s354] sm:$0xf]
  %v356 = vld [vmem:[%s354 + $0x4] sm:$0xf]
  %v357 = vld [vmem:[%s354 + $0x8] sm:$0xf]
  %v358 = vld [vmem:[%s354 + $0xc] sm:$0xf]
  %v359 = vld [vmem:[%s354 + $0x10] sm:$0xf]
  %v360 = vld [vmem:[%s354 + $0x14] sm:$0xf]
  %v361 = vld [vmem:[%s354 + $0x18] sm:$0xf]
  %v362 = vld [vmem:[%s354 + $0x1c] sm:$0xf]
  %v363 = vld [vmem:[%s354 + $0x20] sm:$0xf]
  %v364 = vld [vmem:[%s354 + $0x24] sm:$0xf]
  %v365 = vld [vmem:[%s354 + $0x28] sm:$0xf]
  %v366 = vld [vmem:[%s354 + $0x2c] sm:$0xf]
  %v367 = vld [vmem:[%s354 + $0x30] sm:$0xf]
  %v368 = vld [vmem:[%s354 + $0x34] sm:$0xf]
  %v369 = vld [vmem:[%s354 + $0x38] sm:$0xf]
  %v370 = vld [vmem:[%s354 + $0x3c] sm:$0x7]
  %v371 = vmax.bf16 %v338, %v355
  %v372 = vmax.bf16 %v339, %v356
  %v373 = vmax.bf16 %v340, %v357
  %v374 = vmax.bf16 %v341, %v358
  %v375 = vmax.bf16 %v342, %v359
  %v376 = vmax.bf16 %v343, %v360
  %v377 = vmax.bf16 %v344, %v361
  %v378 = vmax.bf16 %v345, %v362
  %v379 = vmax.bf16 %v346, %v363
  %v380 = vmax.bf16 %v347, %v364
  %v381 = vmax.bf16 %v348, %v365
  %v382 = vmax.bf16 %v349, %v366
  %v383 = vmax.bf16 %v350, %v367
  %v384 = vmax.bf16 %v351, %v368
  %v385 = vmax.bf16 %v352, %v369
  %v386 = vmax.bf16 %v353, %v370
  %s387 = scalar_lea.vmem %s0, 768
  %v388 = vld [vmem:[%s387] sm:$0xf]
  %v389 = vld [vmem:[%s387 + $0x4] sm:$0xf]
  %v390 = vld [vmem:[%s387 + $0x8] sm:$0xf]
  %v391 = vld [vmem:[%s387 + $0xc] sm:$0xf]
  %v392 = vld [vmem:[%s387 + $0x10] sm:$0xf]
  %v393 = vld [vmem:[%s387 + $0x14] sm:$0xf]
  %v394 = vld [vmem:[%s387 + $0x18] sm:$0xf]
  %v395 = vld [vmem:[%s387 + $0x1c] sm:$0xf]
  %v396 = vld [vmem:[%s387 + $0x20] sm:$0xf]
  %v397 = vld [vmem:[%s387 + $0x24] sm:$0xf]
  %v398 = vld [vmem:[%s387 + $0x28] sm:$0xf]
  %v399 = vld [vmem:[%s387 + $0x2c] sm:$0xf]
  %v400 = vld [vmem:[%s387 + $0x30] sm:$0xf]
  %v401 = vld [vmem:[%s387 + $0x34] sm:$0xf]
  %v402 = vld [vmem:[%s387 + $0x38] sm:$0xf]
  %v403 = vld [vmem:[%s387 + $0x3c] sm:$0x7]
  %v404 = vmax.bf16 %v371, %v388
  %v405 = vmax.bf16 %v372, %v389
  %v406 = vmax.bf16 %v373, %v390
  %v407 = vmax.bf16 %v374, %v391
  %v408 = vmax.bf16 %v375, %v392
  %v409 = vmax.bf16 %v376, %v393
  %v410 = vmax.bf16 %v377, %v394
  %v411 = vmax.bf16 %v378, %v395
  %v412 = vmax.bf16 %v379, %v396
  %v413 = vmax.bf16 %v380, %v397
  %v414 = vmax.bf16 %v381, %v398
  %v415 = vmax.bf16 %v382, %v399
  %v416 = vmax.bf16 %v383, %v400
  %v417 = vmax.bf16 %v384, %v401
  %v418 = vmax.bf16 %v385, %v402
  %v419 = vmax.bf16 %v386, %v403
  %s420 = scalar_lea.vmem %s0, 832
  %v421 = vld [vmem:[%s420] sm:$0xf]
  %v422 = vld [vmem:[%s420 + $0x4] sm:$0xf]
  %v423 = vld [vmem:[%s420 + $0x8] sm:$0xf]
  %v424 = vld [vmem:[%s420 + $0xc] sm:$0xf]
  %v425 = vld [vmem:[%s420 + $0x10] sm:$0xf]
  %v426 = vld [vmem:[%s420 + $0x14] sm:$0xf]
  %v427 = vld [vmem:[%s420 + $0x18] sm:$0xf]
  %v428 = vld [vmem:[%s420 + $0x1c] sm:$0xf]
  %v429 = vld [vmem:[%s420 + $0x20] sm:$0xf]
  %v430 = vld [vmem:[%s420 + $0x24] sm:$0xf]
  %v431 = vld [vmem:[%s420 + $0x28] sm:$0xf]
  %v432 = vld [vmem:[%s420 + $0x2c] sm:$0xf]
  %v433 = vld [vmem:[%s420 + $0x30] sm:$0xf]
  %v434 = vld [vmem:[%s420 + $0x34] sm:$0xf]
  %v435 = vld [vmem:[%s420 + $0x38] sm:$0xf]
  %v436 = vld [vmem:[%s420 + $0x3c] sm:$0x7]
  %v437 = vmax.bf16 %v404, %v421
  %v438 = vmax.bf16 %v405, %v422
  %v439 = vmax.bf16 %v406, %v423
  %v440 = vmax.bf16 %v407, %v424
  %v441 = vmax.bf16 %v408, %v425
  %v442 = vmax.bf16 %v409, %v426
  %v443 = vmax.bf16 %v410, %v427
  %v444 = vmax.bf16 %v411, %v428
  %v445 = vmax.bf16 %v412, %v429
  %v446 = vmax.bf16 %v413, %v430
  %v447 = vmax.bf16 %v414, %v431
  %v448 = vmax.bf16 %v415, %v432
  %v449 = vmax.bf16 %v416, %v433
  %v450 = vmax.bf16 %v417, %v434
  %v451 = vmax.bf16 %v418, %v435
  %v452 = vmax.bf16 %v419, %v436
  %s453 = scalar_lea.vmem %s0, 896
  %v454 = vld [vmem:[%s453] sm:$0xf]
  %v455 = vld [vmem:[%s453 + $0x4] sm:$0xf]
  %v456 = vld [vmem:[%s453 + $0x8] sm:$0xf]
  %v457 = vld [vmem:[%s453 + $0xc] sm:$0xf]
  %v458 = vld [vmem:[%s453 + $0x10] sm:$0xf]
  %v459 = vld [vmem:[%s453 + $0x14] sm:$0xf]
  %v460 = vld [vmem:[%s453 + $0x18] sm:$0xf]
  %v461 = vld [vmem:[%s453 + $0x1c] sm:$0xf]
  %v462 = vld [vmem:[%s453 + $0x20] sm:$0xf]
  %v463 = vld [vmem:[%s453 + $0x24] sm:$0xf]
  %v464 = vld [vmem:[%s453 + $0x28] sm:$0xf]
  %v465 = vld [vmem:[%s453 + $0x2c] sm:$0xf]
  %v466 = vld [vmem:[%s453 + $0x30] sm:$0xf]
  %v467 = vld [vmem:[%s453 + $0x34] sm:$0xf]
  %v468 = vld [vmem:[%s453 + $0x38] sm:$0xf]
  %v469 = vld [vmem:[%s453 + $0x3c] sm:$0x7]
  %v470 = vmax.bf16 %v437, %v454
  %v471 = vmax.bf16 %v438, %v455
  %v472 = vmax.bf16 %v439, %v456
  %v473 = vmax.bf16 %v440, %v457
  %v474 = vmax.bf16 %v441, %v458
  %v475 = vmax.bf16 %v442, %v459
  %v476 = vmax.bf16 %v443, %v460
  %v477 = vmax.bf16 %v444, %v461
  %v478 = vmax.bf16 %v445, %v462
  %v479 = vmax.bf16 %v446, %v463
  %v480 = vmax.bf16 %v447, %v464
  %v481 = vmax.bf16 %v448, %v465
  %v482 = vmax.bf16 %v449, %v466
  %v483 = vmax.bf16 %v450, %v467
  %v484 = vmax.bf16 %v451, %v468
  %v485 = vmax.bf16 %v452, %v469
  %s486 = scalar_lea.vmem %s0, 960
  %v487 = vld [vmem:[%s486] sm:$0xf]
  %v488 = vld [vmem:[%s486 + $0x4] sm:$0xf]
  %v489 = vld [vmem:[%s486 + $0x8] sm:$0xf]
  %v490 = vld [vmem:[%s486 + $0xc] sm:$0xf]
  %v491 = vld [vmem:[%s486 + $0x10] sm:$0xf]
  %v492 = vld [vmem:[%s486 + $0x14] sm:$0xf]
  %v493 = vld [vmem:[%s486 + $0x18] sm:$0xf]
  %v494 = vld [vmem:[%s486 + $0x1c] sm:$0xf]
  %v495 = vld [vmem:[%s486 + $0x20] sm:$0xf]
  %v496 = vld [vmem:[%s486 + $0x24] sm:$0xf]
  %v497 = vld [vmem:[%s486 + $0x28] sm:$0xf]
  %v498 = vld [vmem:[%s486 + $0x2c] sm:$0xf]
  %v499 = vld [vmem:[%s486 + $0x30] sm:$0xf]
  %v500 = vld [vmem:[%s486 + $0x34] sm:$0xf]
  %v501 = vld [vmem:[%s486 + $0x38] sm:$0xf]
  %v502 = vld [vmem:[%s486 + $0x3c] sm:$0x7]
  %v503 = vmax.bf16 %v470, %v487
  %v504 = vmax.bf16 %v471, %v488
  %v505 = vmax.bf16 %v472, %v489
  %v506 = vmax.bf16 %v473, %v490
  %v507 = vmax.bf16 %v474, %v491
  %v508 = vmax.bf16 %v475, %v492
  %v509 = vmax.bf16 %v476, %v493
  %v510 = vmax.bf16 %v477, %v494
  %v511 = vmax.bf16 %v478, %v495
  %v512 = vmax.bf16 %v479, %v496
  %v513 = vmax.bf16 %v480, %v497
  %v514 = vmax.bf16 %v481, %v498
  %v515 = vmax.bf16 %v482, %v499
  %v516 = vmax.bf16 %v483, %v500
  %v517 = vmax.bf16 %v484, %v501
  %v518 = vmax.bf16 %v485, %v502
  %s519 = scalar_lea.vmem %s0, 1024
  %v520 = vld [vmem:[%s519] sm:$0xf]
  %v521 = vld [vmem:[%s519 + $0x4] sm:$0xf]
  %v522 = vld [vmem:[%s519 + $0x8] sm:$0xf]
  %v523 = vld [vmem:[%s519 + $0xc] sm:$0xf]
  %v524 = vld [vmem:[%s519 + $0x10] sm:$0xf]
  %v525 = vld [vmem:[%s519 + $0x14] sm:$0xf]
  %v526 = vld [vmem:[%s519 + $0x18] sm:$0xf]
  %v527 = vld [vmem:[%s519 + $0x1c] sm:$0xf]
  %v528 = vld [vmem:[%s519 + $0x20] sm:$0xf]
  %v529 = vld [vmem:[%s519 + $0x24] sm:$0xf]
  %v530 = vld [vmem:[%s519 + $0x28] sm:$0xf]
  %v531 = vld [vmem:[%s519 + $0x2c] sm:$0xf]
  %v532 = vld [vmem:[%s519 + $0x30] sm:$0xf]
  %v533 = vld [vmem:[%s519 + $0x34] sm:$0xf]
  %v534 = vld [vmem:[%s519 + $0x38] sm:$0xf]
  %v535 = vld [vmem:[%s519 + $0x3c] sm:$0x7]
  %v536 = vmax.bf16 %v503, %v520
  %v537 = vmax.bf16 %v504, %v521
  %v538 = vmax.bf16 %v505, %v522
  %v539 = vmax.bf16 %v506, %v523
  %v540 = vmax.bf16 %v507, %v524
  %v541 = vmax.bf16 %v508, %v525
  %v542 = vmax.bf16 %v509, %v526
  %v543 = vmax.bf16 %v510, %v527
  %v544 = vmax.bf16 %v511, %v528
  %v545 = vmax.bf16 %v512, %v529
  %v546 = vmax.bf16 %v513, %v530
  %v547 = vmax.bf16 %v514, %v531
  %v548 = vmax.bf16 %v515, %v532
  %v549 = vmax.bf16 %v516, %v533
  %v550 = vmax.bf16 %v517, %v534
  %v551 = vmax.bf16 %v518, %v535
  %s552 = scalar_lea.vmem %s0, 1088
  %v553 = vld [vmem:[%s552] sm:$0xf]
  %v554 = vld [vmem:[%s552 + $0x4] sm:$0xf]
  %v555 = vld [vmem:[%s552 + $0x8] sm:$0xf]
  %v556 = vld [vmem:[%s552 + $0xc] sm:$0xf]
  %v557 = vld [vmem:[%s552 + $0x10] sm:$0xf]
  %v558 = vld [vmem:[%s552 + $0x14] sm:$0xf]
  %v559 = vld [vmem:[%s552 + $0x18] sm:$0xf]
  %v560 = vld [vmem:[%s552 + $0x1c] sm:$0xf]
  %v561 = vld [vmem:[%s552 + $0x20] sm:$0xf]
  %v562 = vld [vmem:[%s552 + $0x24] sm:$0xf]
  %v563 = vld [vmem:[%s552 + $0x28] sm:$0xf]
  %v564 = vld [vmem:[%s552 + $0x2c] sm:$0xf]
  %v565 = vld [vmem:[%s552 + $0x30] sm:$0xf]
  %v566 = vld [vmem:[%s552 + $0x34] sm:$0xf]
  %v567 = vld [vmem:[%s552 + $0x38] sm:$0xf]
  %v568 = vld [vmem:[%s552 + $0x3c] sm:$0x7]
  %v569 = vmax.bf16 %v536, %v553
  %v570 = vmax.bf16 %v537, %v554
  %v571 = vmax.bf16 %v538, %v555
  %v572 = vmax.bf16 %v539, %v556
  %v573 = vmax.bf16 %v540, %v557
  %v574 = vmax.bf16 %v541, %v558
  %v575 = vmax.bf16 %v542, %v559
  %v576 = vmax.bf16 %v543, %v560
  %v577 = vmax.bf16 %v544, %v561
  %v578 = vmax.bf16 %v545, %v562
  %v579 = vmax.bf16 %v546, %v563
  %v580 = vmax.bf16 %v547, %v564
  %v581 = vmax.bf16 %v548, %v565
  %v582 = vmax.bf16 %v549, %v566
  %v583 = vmax.bf16 %v550, %v567
  %v584 = vmax.bf16 %v551, %v568
  %s585 = scalar_lea.vmem %s0, 1152
  %v586 = vld [vmem:[%s585] sm:$0xf]
  %v587 = vld [vmem:[%s585 + $0x4] sm:$0xf]
  %v588 = vld [vmem:[%s585 + $0x8] sm:$0xf]
  %v589 = vld [vmem:[%s585 + $0xc] sm:$0xf]
  %v590 = vld [vmem:[%s585 + $0x10] sm:$0xf]
  %v591 = vld [vmem:[%s585 + $0x14] sm:$0xf]
  %v592 = vld [vmem:[%s585 + $0x18] sm:$0xf]
  %v593 = vld [vmem:[%s585 + $0x1c] sm:$0xf]
  %v594 = vld [vmem:[%s585 + $0x20] sm:$0xf]
  %v595 = vld [vmem:[%s585 + $0x24] sm:$0xf]
  %v596 = vld [vmem:[%s585 + $0x28] sm:$0xf]
  %v597 = vld [vmem:[%s585 + $0x2c] sm:$0xf]
  %v598 = vld [vmem:[%s585 + $0x30] sm:$0xf]
  %v599 = vld [vmem:[%s585 + $0x34] sm:$0xf]
  %v600 = vld [vmem:[%s585 + $0x38] sm:$0xf]
  %v601 = vld [vmem:[%s585 + $0x3c] sm:$0x7]
  %v602 = vmax.bf16 %v569, %v586
  %v603 = vmax.bf16 %v570, %v587
  %v604 = vmax.bf16 %v571, %v588
  %v605 = vmax.bf16 %v572, %v589
  %v606 = vmax.bf16 %v573, %v590
  %v607 = vmax.bf16 %v574, %v591
  %v608 = vmax.bf16 %v575, %v592
  %v609 = vmax.bf16 %v576, %v593
  %v610 = vmax.bf16 %v577, %v594
  %v611 = vmax.bf16 %v578, %v595
  %v612 = vmax.bf16 %v579, %v596
  %v613 = vmax.bf16 %v580, %v597
  %v614 = vmax.bf16 %v581, %v598
  %v615 = vmax.bf16 %v582, %v599
  %v616 = vmax.bf16 %v583, %v600
  %v617 = vmax.bf16 %v584, %v601
  %s618 = scalar_lea.vmem %s0, 1216
  %v619 = vld [vmem:[%s618] sm:$0xf]
  %v620 = vld [vmem:[%s618 + $0x4] sm:$0xf]
  %v621 = vld [vmem:[%s618 + $0x8] sm:$0xf]
  %v622 = vld [vmem:[%s618 + $0xc] sm:$0xf]
  %v623 = vld [vmem:[%s618 + $0x10] sm:$0xf]
  %v624 = vld [vmem:[%s618 + $0x14] sm:$0xf]
  %v625 = vld [vmem:[%s618 + $0x18] sm:$0xf]
  %v626 = vld [vmem:[%s618 + $0x1c] sm:$0xf]
  %v627 = vld [vmem:[%s618 + $0x20] sm:$0xf]
  %v628 = vld [vmem:[%s618 + $0x24] sm:$0xf]
  %v629 = vld [vmem:[%s618 + $0x28] sm:$0xf]
  %v630 = vld [vmem:[%s618 + $0x2c] sm:$0xf]
  %v631 = vld [vmem:[%s618 + $0x30] sm:$0xf]
  %v632 = vld [vmem:[%s618 + $0x34] sm:$0xf]
  %v633 = vld [vmem:[%s618 + $0x38] sm:$0xf]
  %v634 = vld [vmem:[%s618 + $0x3c] sm:$0x7]
  %v635 = vmax.bf16 %v602, %v619
  %v636 = vmax.bf16 %v603, %v620
  %v637 = vmax.bf16 %v604, %v621
  %v638 = vmax.bf16 %v605, %v622
  %v639 = vmax.bf16 %v606, %v623
  %v640 = vmax.bf16 %v607, %v624
  %v641 = vmax.bf16 %v608, %v625
  %v642 = vmax.bf16 %v609, %v626
  %v643 = vmax.bf16 %v610, %v627
  %v644 = vmax.bf16 %v611, %v628
  %v645 = vmax.bf16 %v612, %v629
  %v646 = vmax.bf16 %v613, %v630
  %v647 = vmax.bf16 %v614, %v631
  %v648 = vmax.bf16 %v615, %v632
  %v649 = vmax.bf16 %v616, %v633
  %v650 = vmax.bf16 %v617, %v634
  %s651 = scalar_lea.vmem %s0, 1280
  %v652 = vld [vmem:[%s651] sm:$0xf]
  %v653 = vld [vmem:[%s651 + $0x4] sm:$0xf]
  %v654 = vld [vmem:[%s651 + $0x8] sm:$0xf]
  %v655 = vld [vmem:[%s651 + $0xc] sm:$0xf]
  %v656 = vld [vmem:[%s651 + $0x10] sm:$0xf]
  %v657 = vld [vmem:[%s651 + $0x14] sm:$0xf]
  %v658 = vld [vmem:[%s651 + $0x18] sm:$0xf]
  %v659 = vld [vmem:[%s651 + $0x1c] sm:$0xf]
  %v660 = vld [vmem:[%s651 + $0x20] sm:$0xf]
  %v661 = vld [vmem:[%s651 + $0x24] sm:$0xf]
  %v662 = vld [vmem:[%s651 + $0x28] sm:$0xf]
  %v663 = vld [vmem:[%s651 + $0x2c] sm:$0xf]
  %v664 = vld [vmem:[%s651 + $0x30] sm:$0xf]
  %v665 = vld [vmem:[%s651 + $0x34] sm:$0xf]
  %v666 = vld [vmem:[%s651 + $0x38] sm:$0xf]
  %v667 = vld [vmem:[%s651 + $0x3c] sm:$0x7]
  %v668 = vmax.bf16 %v635, %v652
  %v669 = vmax.bf16 %v636, %v653
  %v670 = vmax.bf16 %v637, %v654
  %v671 = vmax.bf16 %v638, %v655
  %v672 = vmax.bf16 %v639, %v656
  %v673 = vmax.bf16 %v640, %v657
  %v674 = vmax.bf16 %v641, %v658
  %v675 = vmax.bf16 %v642, %v659
  %v676 = vmax.bf16 %v643, %v660
  %v677 = vmax.bf16 %v644, %v661
  %v678 = vmax.bf16 %v645, %v662
  %v679 = vmax.bf16 %v646, %v663
  %v680 = vmax.bf16 %v647, %v664
  %v681 = vmax.bf16 %v648, %v665
  %v682 = vmax.bf16 %v649, %v666
  %v683 = vmax.bf16 %v650, %v667
  %s684 = scalar_lea.vmem %s0, 1344
  %v685 = vld [vmem:[%s684] sm:$0xf]
  %v686 = vld [vmem:[%s684 + $0x4] sm:$0xf]
  %v687 = vld [vmem:[%s684 + $0x8] sm:$0xf]
  %v688 = vld [vmem:[%s684 + $0xc] sm:$0xf]
  %v689 = vld [vmem:[%s684 + $0x10] sm:$0xf]
  %v690 = vld [vmem:[%s684 + $0x14] sm:$0xf]
  %v691 = vld [vmem:[%s684 + $0x18] sm:$0xf]
  %v692 = vld [vmem:[%s684 + $0x1c] sm:$0xf]
  %v693 = vld [vmem:[%s684 + $0x20] sm:$0xf]
  %v694 = vld [vmem:[%s684 + $0x24] sm:$0xf]
  %v695 = vld [vmem:[%s684 + $0x28] sm:$0xf]
  %v696 = vld [vmem:[%s684 + $0x2c] sm:$0xf]
  %v697 = vld [vmem:[%s684 + $0x30] sm:$0xf]
  %v698 = vld [vmem:[%s684 + $0x34] sm:$0xf]
  %v699 = vld [vmem:[%s684 + $0x38] sm:$0xf]
  %v700 = vld [vmem:[%s684 + $0x3c] sm:$0x7]
  %v701 = vmax.bf16 %v668, %v685
  %v702 = vmax.bf16 %v669, %v686
  %v703 = vmax.bf16 %v670, %v687
  %v704 = vmax.bf16 %v671, %v688
  %v705 = vmax.bf16 %v672, %v689
  %v706 = vmax.bf16 %v673, %v690
  %v707 = vmax.bf16 %v674, %v691
  %v708 = vmax.bf16 %v675, %v692
  %v709 = vmax.bf16 %v676, %v693
  %v710 = vmax.bf16 %v677, %v694
  %v711 = vmax.bf16 %v678, %v695
  %v712 = vmax.bf16 %v679, %v696
  %v713 = vmax.bf16 %v680, %v697
  %v714 = vmax.bf16 %v681, %v698
  %v715 = vmax.bf16 %v682, %v699
  %v716 = vmax.bf16 %v683, %v700
  %s717 = scalar_lea.vmem %s0, 1408
  %v718 = vld [vmem:[%s717] sm:$0xf]
  %v719 = vld [vmem:[%s717 + $0x4] sm:$0xf]
  %v720 = vld [vmem:[%s717 + $0x8] sm:$0xf]
  %v721 = vld [vmem:[%s717 + $0xc] sm:$0xf]
  %v722 = vld [vmem:[%s717 + $0x10] sm:$0xf]
  %v723 = vld [vmem:[%s717 + $0x14] sm:$0xf]
  %v724 = vld [vmem:[%s717 + $0x18] sm:$0xf]
  %v725 = vld [vmem:[%s717 + $0x1c] sm:$0xf]
  %v726 = vld [vmem:[%s717 + $0x20] sm:$0xf]
  %v727 = vld [vmem:[%s717 + $0x24] sm:$0xf]
  %v728 = vld [vmem:[%s717 + $0x28] sm:$0xf]
  %v729 = vld [vmem:[%s717 + $0x2c] sm:$0xf]
  %v730 = vld [vmem:[%s717 + $0x30] sm:$0xf]
  %v731 = vld [vmem:[%s717 + $0x34] sm:$0xf]
  %v732 = vld [vmem:[%s717 + $0x38] sm:$0xf]
  %v733 = vld [vmem:[%s717 + $0x3c] sm:$0x7]
  %v734 = vmax.bf16 %v701, %v718
  %v735 = vmax.bf16 %v702, %v719
  %v736 = vmax.bf16 %v703, %v720
  %v737 = vmax.bf16 %v704, %v721
  %v738 = vmax.bf16 %v705, %v722
  %v739 = vmax.bf16 %v706, %v723
  %v740 = vmax.bf16 %v707, %v724
  %v741 = vmax.bf16 %v708, %v725
  %v742 = vmax.bf16 %v709, %v726
  %v743 = vmax.bf16 %v710, %v727
  %v744 = vmax.bf16 %v711, %v728
  %v745 = vmax.bf16 %v712, %v729
  %v746 = vmax.bf16 %v713, %v730
  %v747 = vmax.bf16 %v714, %v731
  %v748 = vmax.bf16 %v715, %v732
  %v749 = vmax.bf16 %v716, %v733
  %s750 = scalar_lea.vmem %s0, 1472
  %v751 = vld [vmem:[%s750] sm:$0xf]
  %v752 = vld [vmem:[%s750 + $0x4] sm:$0xf]
  %v753 = vld [vmem:[%s750 + $0x8] sm:$0xf]
  %v754 = vld [vmem:[%s750 + $0xc] sm:$0xf]
  %v755 = vld [vmem:[%s750 + $0x10] sm:$0xf]
  %v756 = vld [vmem:[%s750 + $0x14] sm:$0xf]
  %v757 = vld [vmem:[%s750 + $0x18] sm:$0xf]
  %v758 = vld [vmem:[%s750 + $0x1c] sm:$0xf]
  %v759 = vld [vmem:[%s750 + $0x20] sm:$0xf]
  %v760 = vld [vmem:[%s750 + $0x24] sm:$0xf]
  %v761 = vld [vmem:[%s750 + $0x28] sm:$0xf]
  %v762 = vld [vmem:[%s750 + $0x2c] sm:$0xf]
  %v763 = vld [vmem:[%s750 + $0x30] sm:$0xf]
  %v764 = vld [vmem:[%s750 + $0x34] sm:$0xf]
  %v765 = vld [vmem:[%s750 + $0x38] sm:$0xf]
  %v766 = vld [vmem:[%s750 + $0x3c] sm:$0x7]
  %v767 = vmax.bf16 %v734, %v751
  %v768 = vmax.bf16 %v735, %v752
  %v769 = vmax.bf16 %v736, %v753
  %v770 = vmax.bf16 %v737, %v754
  %v771 = vmax.bf16 %v738, %v755
  %v772 = vmax.bf16 %v739, %v756
  %v773 = vmax.bf16 %v740, %v757
  %v774 = vmax.bf16 %v741, %v758
  %v775 = vmax.bf16 %v742, %v759
  %v776 = vmax.bf16 %v743, %v760
  %v777 = vmax.bf16 %v744, %v761
  %v778 = vmax.bf16 %v745, %v762
  %v779 = vmax.bf16 %v746, %v763
  %v780 = vmax.bf16 %v747, %v764
  %v781 = vmax.bf16 %v748, %v765
  %v782 = vmax.bf16 %v749, %v766
  %s783 = scalar_lea.vmem %s0, 1536
  %v784 = vld [vmem:[%s783] sm:$0xf]
  %v785 = vld [vmem:[%s783 + $0x4] sm:$0xf]
  %v786 = vld [vmem:[%s783 + $0x8] sm:$0xf]
  %v787 = vld [vmem:[%s783 + $0xc] sm:$0xf]
  %v788 = vld [vmem:[%s783 + $0x10] sm:$0xf]
  %v789 = vld [vmem:[%s783 + $0x14] sm:$0xf]
  %v790 = vld [vmem:[%s783 + $0x18] sm:$0xf]
  %v791 = vld [vmem:[%s783 + $0x1c] sm:$0xf]
  %v792 = vld [vmem:[%s783 + $0x20] sm:$0xf]
  %v793 = vld [vmem:[%s783 + $0x24] sm:$0xf]
  %v794 = vld [vmem:[%s783 + $0x28] sm:$0xf]
  %v795 = vld [vmem:[%s783 + $0x2c] sm:$0xf]
  %v796 = vld [vmem:[%s783 + $0x30] sm:$0xf]
  %v797 = vld [vmem:[%s783 + $0x34] sm:$0xf]
  %v798 = vld [vmem:[%s783 + $0x38] sm:$0xf]
  %v799 = vld [vmem:[%s783 + $0x3c] sm:$0x7]
  %v800 = vmax.bf16 %v767, %v784
  %v801 = vmax.bf16 %v768, %v785
  %v802 = vmax.bf16 %v769, %v786
  %v803 = vmax.bf16 %v770, %v787
  %v804 = vmax.bf16 %v771, %v788
  %v805 = vmax.bf16 %v772, %v789
  %v806 = vmax.bf16 %v773, %v790
  %v807 = vmax.bf16 %v774, %v791
  %v808 = vmax.bf16 %v775, %v792
  %v809 = vmax.bf16 %v776, %v793
  %v810 = vmax.bf16 %v777, %v794
  %v811 = vmax.bf16 %v778, %v795
  %v812 = vmax.bf16 %v779, %v796
  %v813 = vmax.bf16 %v780, %v797
  %v814 = vmax.bf16 %v781, %v798
  %v815 = vmax.bf16 %v782, %v799
  %s816 = scalar_lea.vmem %s0, 1600
  %v817 = vld [vmem:[%s816] sm:$0xf]
  %v818 = vld [vmem:[%s816 + $0x4] sm:$0xf]
  %v819 = vld [vmem:[%s816 + $0x8] sm:$0xf]
  %v820 = vld [vmem:[%s816 + $0xc] sm:$0xf]
  %v821 = vld [vmem:[%s816 + $0x10] sm:$0xf]
  %v822 = vld [vmem:[%s816 + $0x14] sm:$0xf]
  %v823 = vld [vmem:[%s816 + $0x18] sm:$0xf]
  %v824 = vld [vmem:[%s816 + $0x1c] sm:$0xf]
  %v825 = vld [vmem:[%s816 + $0x20] sm:$0xf]
  %v826 = vld [vmem:[%s816 + $0x24] sm:$0xf]
  %v827 = vld [vmem:[%s816 + $0x28] sm:$0xf]
  %v828 = vld [vmem:[%s816 + $0x2c] sm:$0xf]
  %v829 = vld [vmem:[%s816 + $0x30] sm:$0xf]
  %v830 = vld [vmem:[%s816 + $0x34] sm:$0xf]
  %v831 = vld [vmem:[%s816 + $0x38] sm:$0xf]
  %v832 = vld [vmem:[%s816 + $0x3c] sm:$0x7]
  %v833 = vmax.bf16 %v800, %v817
  %v834 = vmax.bf16 %v801, %v818
  %v835 = vmax.bf16 %v802, %v819
  %v836 = vmax.bf16 %v803, %v820
  %v837 = vmax.bf16 %v804, %v821
  %v838 = vmax.bf16 %v805, %v822
  %v839 = vmax.bf16 %v806, %v823
  %v840 = vmax.bf16 %v807, %v824
  %v841 = vmax.bf16 %v808, %v825
  %v842 = vmax.bf16 %v809, %v826
  %v843 = vmax.bf16 %v810, %v827
  %v844 = vmax.bf16 %v811, %v828
  %v845 = vmax.bf16 %v812, %v829
  %v846 = vmax.bf16 %v813, %v830
  %v847 = vmax.bf16 %v814, %v831
  %v848 = vmax.bf16 %v815, %v832
  %s849 = scalar_lea.vmem %s0, 1664
  %v850 = vld [vmem:[%s849] sm:$0xf]
  %v851 = vld [vmem:[%s849 + $0x4] sm:$0xf]
  %v852 = vld [vmem:[%s849 + $0x8] sm:$0xf]
  %v853 = vld [vmem:[%s849 + $0xc] sm:$0xf]
  %v854 = vld [vmem:[%s849 + $0x10] sm:$0xf]
  %v855 = vld [vmem:[%s849 + $0x14] sm:$0xf]
  %v856 = vld [vmem:[%s849 + $0x18] sm:$0xf]
  %v857 = vld [vmem:[%s849 + $0x1c] sm:$0xf]
  %v858 = vld [vmem:[%s849 + $0x20] sm:$0xf]
  %v859 = vld [vmem:[%s849 + $0x24] sm:$0xf]
  %v860 = vld [vmem:[%s849 + $0x28] sm:$0xf]
  %v861 = vld [vmem:[%s849 + $0x2c] sm:$0xf]
  %v862 = vld [vmem:[%s849 + $0x30] sm:$0xf]
  %v863 = vld [vmem:[%s849 + $0x34] sm:$0xf]
  %v864 = vld [vmem:[%s849 + $0x38] sm:$0xf]
  %v865 = vld [vmem:[%s849 + $0x3c] sm:$0x7]
  %v866 = vmax.bf16 %v833, %v850
  %v867 = vmax.bf16 %v834, %v851
  %v868 = vmax.bf16 %v835, %v852
  %v869 = vmax.bf16 %v836, %v853
  %v870 = vmax.bf16 %v837, %v854
  %v871 = vmax.bf16 %v838, %v855
  %v872 = vmax.bf16 %v839, %v856
  %v873 = vmax.bf16 %v840, %v857
  %v874 = vmax.bf16 %v841, %v858
  %v875 = vmax.bf16 %v842, %v859
  %v876 = vmax.bf16 %v843, %v860
  %v877 = vmax.bf16 %v844, %v861
  %v878 = vmax.bf16 %v845, %v862
  %v879 = vmax.bf16 %v846, %v863
  %v880 = vmax.bf16 %v847, %v864
  %v881 = vmax.bf16 %v848, %v865
  %882 = vst [vmem:[%s1] sm:$0xf] %v866
  %883 = vst [vmem:[%s1 + $0x4] sm:$0xf] %v867
  %884 = vst [vmem:[%s1 + $0x8] sm:$0xf] %v868
  %885 = vst [vmem:[%s1 + $0xc] sm:$0xf] %v869
  %886 = vst [vmem:[%s1 + $0x10] sm:$0xf] %v870
  %887 = vst [vmem:[%s1 + $0x14] sm:$0xf] %v871
  %888 = vst [vmem:[%s1 + $0x18] sm:$0xf] %v872
  %889 = vst [vmem:[%s1 + $0x1c] sm:$0xf] %v873
  %890 = vst [vmem:[%s1 + $0x20] sm:$0xf] %v874
  %891 = vst [vmem:[%s1 + $0x24] sm:$0xf] %v875
  %892 = vst [vmem:[%s1 + $0x28] sm:$0xf] %v876
  %893 = vst [vmem:[%s1 + $0x2c] sm:$0xf] %v877
  %894 = vst [vmem:[%s1 + $0x30] sm:$0xf] %v878
  %895 = vst [vmem:[%s1 + $0x34] sm:$0xf] %v879
  %896 = vst [vmem:[%s1 + $0x38] sm:$0xf] %v880
  %vm897 = vcmask 1042432
  %vm898 = vsmask.f32 2304
  %vm899 = vmand %vm897, %vm898
  %v900 = vld [vmem:[%s1 + $0x3c] sm:$0x7]
  %v901 = vsel %vm899, %v881, %v900
  %902 = vst [vmem:[%s1 + $0x3c] sm:$0x7] %v901
  // Predicated region
  $region6: #{mrinet_forward.4} parent=0 // pred_check
    _
  $region7: #{mrinet_forward.4} parent=0 // pred_check_branch
    %904 = sbr.rel (0) target = $region9
  $region8: #{mrinet_forward.4} parent=0 // pred_region
    _
  $region9: #{mrinet_forward.4} parent=0 // pred_fallthru
    _
  // Predicated region
  $region10: #{mrinet_forward.4} parent=0 // pred_check
    _
  $region11: #{mrinet_forward.4} parent=0 // pred_check_branch
    %906 = sbr.rel (0) target = $region13
  $region12: #{mrinet_forward.4} parent=0 // pred_region
    _
  $region13: #{mrinet_forward.4} parent=0 // pred_fallthru
    _

// kernel: mrinet_forward.5
$region0: #{mrinet_forward.5}
  #allocation0 [shape = 'u32[]', space=smem, size = 0x4, offset = 0x4, fixed_abs, tag = 'smem constant byte address 0x4 - core index']
  #allocation1 [shape = 'u32[144,128]{1,0:T(1,128)}', space=vmem, size = 0x12000, scoped, tag = 'internal scratch']
  #allocation2 [shape = 'f32[8,128]{1,0:T(8,128)}', space=vmem, size = 0x1000, scoped, tag = 'scratch operand']
  %s0 = inlined_call_operand.vmem [shape: bf16[54,1728], index: 0, kind: input, shape index: {}]
  %s1 = inlined_call_operand.vmem [shape: bf16[1728,128], index: 1, kind: input, shape index: {}]
  %s2 = inlined_call_operand.vmem [shape: f32[1,128], index: 2, kind: input, shape index: {}]
  %s3 = inlined_call_operand.vmem [shape: bf16[128,192], index: 3, kind: input, shape index: {}]
  %s4 = inlined_call_operand.vmem [shape: f32[1,192], index: 4, kind: input, shape index: {}]
  %s5 = inlined_call_operand.vmem [shape: bf16[192,192], index: 5, kind: input, shape index: {}]
  %s6 = inlined_call_operand.vmem [shape: f32[1,192], index: 6, kind: input, shape index: {}]
  %s7 = inlined_call_operand.vmem [shape: bf16[192,128], index: 7, kind: input, shape index: {}]
  %s8 = inlined_call_operand.vmem [shape: f32[1,128], index: 8, kind: input, shape index: {}]
  %s9 = inlined_call_operand.vmem [shape: bf16[128,64], index: 9, kind: input, shape index: {}]
  %s10 = inlined_call_operand.vmem [shape: f32[1,64], index: 10, kind: input, shape index: {}]
  %s11 = inlined_call_operand.vmem [shape: bf16[64,2], index: 11, kind: input, shape index: {}]
  %s12 = inlined_call_operand.vmem [shape: f32[1,2], index: 12, kind: input, shape index: {}]
  %s13 = inlined_call_operand.hbm [shape: f32[2,2], index: 13, kind: output, shape index: {}]
  %s14 = sld [smem:[#allocation0]]
  $region62: #{mrinet_forward.5} parent=0
    _
  %s16 = ssub.s32 1, %s14
  %s17 = scalar_select 0, %s16, %s14
  $region1: #{mrinet_forward.5} parent=0
    #allocation3 [shape = 'u8[1024]{0}', space=vmem, size = 0x400, scoped, tag = 'output window, operand 0, single buffered']
    #allocation4 [shape = 's32[1]{0}', space=sflag, size = 0x4, scoped, tag = 'scoped memory for mrinet_forward.5']
    %18 = vsyncpa [#allocation4], 0
    // Predicated region
    $region2: #{mrinet_forward.5} parent=1 // pred_check
      _
    $region3: #{mrinet_forward.5} parent=1 // pred_check_branch
      %20 = sbr.rel (0) target = $region5
    $region4: #{mrinet_forward.5} parent=1 // pred_region
      _
    $region5: #{mrinet_forward.5} parent=1 // pred_fallthru
      _
    // Predicated region
    $region6: #{mrinet_forward.5} parent=1 // pred_check
      _
    $region7: #{mrinet_forward.5} parent=1 // pred_check_branch
      %22 = sbr.rel (0) target = $region9
    $region8: #{mrinet_forward.5} parent=1 // pred_region
      _
    $region9: #{mrinet_forward.5} parent=1 // pred_fallthru
      _
    // Predicated region
    $region10: #{mrinet_forward.5} parent=1 // pred_check
      _
    $region11: #{mrinet_forward.5} parent=1 // pred_check_branch
      %24 = sbr.rel (0) target = $region13
    $region12: #{mrinet_forward.5} parent=1 // pred_region
      _
    $region13: #{mrinet_forward.5} parent=1 // pred_fallthru
      _
    // Predicated region
    $region14: #{mrinet_forward.5} parent=1 // pred_check
      _
    $region15: #{mrinet_forward.5} parent=1 // pred_check_branch
      %26 = sbr.rel (0) target = $region17
    $region16: #{mrinet_forward.5} parent=1 // pred_region
      _
    $region17: #{mrinet_forward.5} parent=1 // pred_fallthru
      _
    // Predicated region
    $region18: #{mrinet_forward.5} parent=1 // pred_check
      _
    $region19: #{mrinet_forward.5} parent=1 // pred_check_branch
      %28 = sbr.rel (0) target = $region21
    $region20: #{mrinet_forward.5} parent=1 // pred_region
      _
    $region21: #{mrinet_forward.5} parent=1 // pred_fallthru
      _
    // Predicated region
    $region22: #{mrinet_forward.5} parent=1 // pred_check
      _
    $region23: #{mrinet_forward.5} parent=1 // pred_check_branch
      %30 = sbr.rel (0) target = $region25
    $region24: #{mrinet_forward.5} parent=1 // pred_region
      _
    $region25: #{mrinet_forward.5} parent=1 // pred_fallthru
      _
    // Predicated region
    $region26: #{mrinet_forward.5} parent=1 // pred_check
      _
    $region27: #{mrinet_forward.5} parent=1 // pred_check_branch
      %32 = sbr.rel (0) target = $region29
    $region28: #{mrinet_forward.5} parent=1 // pred_region
      _
    $region29: #{mrinet_forward.5} parent=1 // pred_fallthru
      _
    // Predicated region
    $region30: #{mrinet_forward.5} parent=1 // pred_check
      _
    $region31: #{mrinet_forward.5} parent=1 // pred_check_branch
      %34 = sbr.rel (0) target = $region33
    $region32: #{mrinet_forward.5} parent=1 // pred_region
      _
    $region33: #{mrinet_forward.5} parent=1 // pred_fallthru
      _
    // Predicated region
    $region34: #{mrinet_forward.5} parent=1 // pred_check
      _
    $region35: #{mrinet_forward.5} parent=1 // pred_check_branch
      %36 = sbr.rel (0) target = $region37
    $region36: #{mrinet_forward.5} parent=1 // pred_region
      _
    $region37: #{mrinet_forward.5} parent=1 // pred_fallthru
      _
    // Predicated region
    $region38: #{mrinet_forward.5} parent=1 // pred_check
      _
    $region39: #{mrinet_forward.5} parent=1 // pred_check_branch
      %38 = sbr.rel (0) target = $region41
    $region40: #{mrinet_forward.5} parent=1 // pred_region
      _
    $region41: #{mrinet_forward.5} parent=1 // pred_fallthru
      _
    // Predicated region
    $region42: #{mrinet_forward.5} parent=1 // pred_check
      _
    $region43: #{mrinet_forward.5} parent=1 // pred_check_branch
      %40 = sbr.rel (0) target = $region45
    $region44: #{mrinet_forward.5} parent=1 // pred_region
      _
    $region45: #{mrinet_forward.5} parent=1 // pred_fallthru
      _
    // Predicated region
    $region46: #{mrinet_forward.5} parent=1 // pred_check
      _
    $region47: #{mrinet_forward.5} parent=1 // pred_check_branch
      %42 = sbr.rel (0) target = $region49
    $region48: #{mrinet_forward.5} parent=1 // pred_region
      _
    $region49: #{mrinet_forward.5} parent=1 // pred_fallthru
      _
    // Predicated region
    $region50: #{mrinet_forward.5} parent=1 // pred_check
      _
    $region51: #{mrinet_forward.5} parent=1 // pred_check_branch
      %44 = sbr.rel (0) target = $region53
    $region52: #{mrinet_forward.5} parent=1 // pred_region
      _
    $region53: #{mrinet_forward.5} parent=1 // pred_fallthru
      _
    %v46 = vld [vmem:[%s0] sm:$0xff]
    %v47 = vld [vmem:[%s0 + $0x8] sm:$0xff]
    %v48 = vld [vmem:[%s0 + $0x10] sm:$0xff]
    %v49 = vld [vmem:[%s0 + $0x18] sm:$0xff]
    %v50 = vld [vmem:[%s0 + $0x20] sm:$0xff]
    %v51 = vld [vmem:[%s0 + $0x28] sm:$0xff]
    %v52 = vld [vmem:[%s0 + $0x30] sm:$0xff]
    %v53 = vld [vmem:[%s0 + $0x38] sm:$0xff]
    %v54 = vld [vmem:[%s0 + $0x40] sm:$0xff]
    %v55 = vld [vmem:[%s0 + $0x48] sm:$0xff]
    %v56 = vld [vmem:[%s0 + $0x50] sm:$0xff]
    %v57 = vld [vmem:[%s0 + $0x58] sm:$0xff]
    %v58 = vld [vmem:[%s0 + $0x60] sm:$0xff]
    %v59 = vld [vmem:[%s0 + $0x68] sm:$0xff]
    %v60 = vld [vmem:[%s0 + $0x70] sm:$0xff]
    %v61 = vld [vmem:[%s0 + $0x78] sm:$0xff]
    %v62 = vld [vmem:[%s0 + $0x80] sm:$0xff]
    %v63 = vld [vmem:[%s0 + $0x88] sm:$0xff]
    %v64 = vld [vmem:[%s0 + $0x90] sm:$0xff]
    %v65 = vld [vmem:[%s0 + $0x98] sm:$0xff]
    %v66 = vld [vmem:[%s0 + $0xa0] sm:$0xff]
    %v67 = vld [vmem:[%s0 + $0xa8] sm:$0xff]
    %v68 = vld [vmem:[%s0 + $0xb0] sm:$0xff]
    %v69 = vld [vmem:[%s0 + $0xb8] sm:$0xff]
    %v70 = vld [vmem:[%s0 + $0xc0] sm:$0xff]
    %v71 = vld [vmem:[%s0 + $0xc8] sm:$0xff]
    %v72 = vld [vmem:[%s0 + $0xd0] sm:$0xff]
    %v73 = vld [vmem:[%s0 + $0xd8] sm:$0xff]
    %v74 = vld [vmem:[%s0 + $0xe0] sm:$0xff]
    %v75 = vld [vmem:[%s0 + $0xe8] sm:$0xff]
    %v76 = vld [vmem:[%s0 + $0xf0] sm:$0xff]
    %v77 = vld [vmem:[%s0 + $0xf8] sm:$0xff]
    %v78 = vld [vmem:[%s0 + $0x100] sm:$0xff]
    %v79 = vld [vmem:[%s0 + $0x108] sm:$0xff]
    %v80 = vld [vmem:[%s0 + $0x110] sm:$0xff]
    %v81 = vld [vmem:[%s0 + $0x118] sm:$0xff]
    %v82 = vld [vmem:[%s0 + $0x120] sm:$0xff]
    %v83 = vld [vmem:[%s0 + $0x128] sm:$0xff]
    %v84 = vld [vmem:[%s0 + $0x130] sm:$0xff]
    %v85 = vld [vmem:[%s0 + $0x138] sm:$0xff]
    %v86 = vld [vmem:[%s0 + $0x140] sm:$0xff]
    %v87 = vld [vmem:[%s0 + $0x148] sm:$0xff]
    %v88 = vld [vmem:[%s0 + $0x150] sm:$0x77]
    %v89 = vld [vmem:[%s0 + $0x158] sm:$0x77]
    %v90 = vld [vmem:[%s0 + $0x160] sm:$0x77]
    %v91 = vld [vmem:[%s0 + $0x168] sm:$0x77]
    %v92 = vld [vmem:[%s0 + $0x170] sm:$0x77]
    %v93 = vld [vmem:[%s0 + $0x178] sm:$0x77]
    %v94 = vld [vmem:[%s0 + $0x180] sm:$0x77]
    %v95 = vld [vmem:[%s1] sm:$0xf]
    %v96 = vld [vmem:[%s1 + $0x4] sm:$0xf]
    %v97 = vld [vmem:[%s1 + $0x8] sm:$0xf]
    %v98 = vld [vmem:[%s1 + $0xc] sm:$0xf]
    %v99 = vld [vmem:[%s1 + $0x10] sm:$0xf]
    %v100 = vld [vmem:[%s1 + $0x14] sm:$0xf]
    %v101 = vld [vmem:[%s1 + $0x18] sm:$0xf]
    %v102 = vld [vmem:[%s1 + $0x1c] sm:$0xf]
    %v103 = vld [vmem:[%s1 + $0x20] sm:$0xf]
    %v104 = vld [vmem:[%s1 + $0x24] sm:$0xf]
    %v105 = vld [vmem:[%s1 + $0x28] sm:$0xf]
    %v106 = vld [vmem:[%s1 + $0x2c] sm:$0xf]
    %v107 = vld [vmem:[%s1 + $0x30] sm:$0xf]
    %v108 = vld [vmem:[%s1 + $0x34] sm:$0xf]
    %v109 = vld [vmem:[%s1 + $0x38] sm:$0xf]
    %v110 = vld [vmem:[%s1 + $0x3c] sm:$0xf]
    %v111 = vld [vmem:[%s1 + $0x40] sm:$0xf]
    %v112 = vld [vmem:[%s1 + $0x44] sm:$0xf]
    %v113 = vld [vmem:[%s1 + $0x48] sm:$0xf]
    %v114 = vld [vmem:[%s1 + $0x4c] sm:$0xf]
    %v115 = vld [vmem:[%s1 + $0x50] sm:$0xf]
    %v116 = vld [vmem:[%s1 + $0x54] sm:$0xf]
    %v117 = vld [vmem:[%s1 + $0x58] sm:$0xf]
    %v118 = vld [vmem:[%s1 + $0x5c] sm:$0xf]
    %v119 = vld [vmem:[%s1 + $0x60] sm:$0xf]
    %v120 = vld [vmem:[%s1 + $0x64] sm:$0xf]
    %v121 = vld [vmem:[%s1 + $0x68] sm:$0xf]
    %v122 = vld [vmem:[%s1 + $0x6c] sm:$0xf]
    %v123 = vld [vmem:[%s1 + $0x70] sm:$0xf]
    %v124 = vld [vmem:[%s1 + $0x74] sm:$0xf]
    %v125 = vld [vmem:[%s1 + $0x78] sm:$0xf]
    %v126 = vld [vmem:[%s1 + $0x7c] sm:$0xf]
    %v127 = vld [vmem:[%s1 + $0x80] sm:$0xf]
    %v128 = vld [vmem:[%s1 + $0x84] sm:$0xf]
    %v129 = vld [vmem:[%s1 + $0x88] sm:$0xf]
    %v130 = vld [vmem:[%s1 + $0x8c] sm:$0xf]
    %v131 = vld [vmem:[%s1 + $0x90] sm:$0xf]
    %v132 = vld [vmem:[%s1 + $0x94] sm:$0xf]
    %v133 = vld [vmem:[%s1 + $0x98] sm:$0xf]
    %v134 = vld [vmem:[%s1 + $0x9c] sm:$0xf]
    %v135 = vld [vmem:[%s1 + $0xa0] sm:$0xf]
    %v136 = vld [vmem:[%s1 + $0xa4] sm:$0xf]
    %v137 = vld [vmem:[%s1 + $0xa8] sm:$0xf]
    %v138 = vld [vmem:[%s1 + $0xac] sm:$0xf]
    %v139 = vld [vmem:[%s1 + $0xb0] sm:$0xf]
    %v140 = vld [vmem:[%s1 + $0xb4] sm:$0xf]
    %v141 = vld [vmem:[%s1 + $0xb8] sm:$0xf]
    %v142 = vld [vmem:[%s1 + $0xbc] sm:$0xf]
    %v143 = vld [vmem:[%s1 + $0xc0] sm:$0xf]
    %v144 = vld [vmem:[%s1 + $0xc4] sm:$0xf]
    %v145 = vld [vmem:[%s1 + $0xc8] sm:$0xf]
    %v146 = vld [vmem:[%s1 + $0xcc] sm:$0xf]
    %v147 = vld [vmem:[%s1 + $0xd0] sm:$0xf]
    %v148 = vld [vmem:[%s1 + $0xd4] sm:$0xf]
    %v149 = vld [vmem:[%s1 + $0xd8] sm:$0xf]
    %v150 = vld [vmem:[%s1 + $0xdc] sm:$0xf]
    %v151 = vld [vmem:[%s1 + $0xe0] sm:$0xf]
    %v152 = vld [vmem:[%s1 + $0xe4] sm:$0xf]
    %v153 = vld [vmem:[%s1 + $0xe8] sm:$0xf]
    %v154 = vld [vmem:[%s1 + $0xec] sm:$0xf]
    %v155 = vld [vmem:[%s1 + $0xf0] sm:$0xf]
    %v156 = vld [vmem:[%s1 + $0xf4] sm:$0xf]
    %v157 = vld [vmem:[%s1 + $0xf8] sm:$0xf]
    %v158 = vld [vmem:[%s1 + $0xfc] sm:$0xf]
    %v159 = vld [vmem:[%s1 + $0x100] sm:$0xf]
    %v160 = vld [vmem:[%s1 + $0x104] sm:$0xf]
    %v161 = vld [vmem:[%s1 + $0x108] sm:$0xf]
    %v162 = vld [vmem:[%s1 + $0x10c] sm:$0xf]
    %v163 = vld [vmem:[%s1 + $0x110] sm:$0xf]
    %v164 = vld [vmem:[%s1 + $0x114] sm:$0xf]
    %v165 = vld [vmem:[%s1 + $0x118] sm:$0xf]
    %v166 = vld [vmem:[%s1 + $0x11c] sm:$0xf]
    %v167 = vld [vmem:[%s1 + $0x120] sm:$0xf]
    %v168 = vld [vmem:[%s1 + $0x124] sm:$0xf]
    %v169 = vld [vmem:[%s1 + $0x128] sm:$0xf]
    %v170 = vld [vmem:[%s1 + $0x12c] sm:$0xf]
    %v171 = vld [vmem:[%s1 + $0x130] sm:$0xf]
    %v172 = vld [vmem:[%s1 + $0x134] sm:$0xf]
    %v173 = vld [vmem:[%s1 + $0x138] sm:$0xf]
    %v174 = vld [vmem:[%s1 + $0x13c] sm:$0xf]
    %v175 = vld [vmem:[%s1 + $0x140] sm:$0xf]
    %v176 = vld [vmem:[%s1 + $0x144] sm:$0xf]
    %v177 = vld [vmem:[%s1 + $0x148] sm:$0xf]
    %v178 = vld [vmem:[%s1 + $0x14c] sm:$0xf]
    %v179 = vld [vmem:[%s1 + $0x150] sm:$0xf]
    %v180 = vld [vmem:[%s1 + $0x154] sm:$0xf]
    %v181 = vld [vmem:[%s1 + $0x158] sm:$0xf]
    %v182 = vld [vmem:[%s1 + $0x15c] sm:$0xf]
    %v183 = vld [vmem:[%s1 + $0x160] sm:$0xf]
    %v184 = vld [vmem:[%s1 + $0x164] sm:$0xf]
    %v185 = vld [vmem:[%s1 + $0x168] sm:$0xf]
    %v186 = vld [vmem:[%s1 + $0x16c] sm:$0xf]
    %v187 = vld [vmem:[%s1 + $0x170] sm:$0xf]
    %v188 = vld [vmem:[%s1 + $0x174] sm:$0xf]
    %v189 = vld [vmem:[%s1 + $0x178] sm:$0xf]
    %v190 = vld [vmem:[%s1 + $0x17c] sm:$0xf]
    %v191 = vld [vmem:[%s1 + $0x180] sm:$0xf]
    %v192 = vld [vmem:[%s1 + $0x184] sm:$0xf]
    %v193 = vld [vmem:[%s1 + $0x188] sm:$0xf]
    %v194 = vld [vmem:[%s1 + $0x18c] sm:$0xf]
    %v195 = vld [vmem:[%s1 + $0x190] sm:$0xf]
    %v196 = vld [vmem:[%s1 + $0x194] sm:$0xf]
    %v197 = vld [vmem:[%s1 + $0x198] sm:$0xf]
    %v198 = vld [vmem:[%s1 + $0x19c] sm:$0xf]
    %v199 = vld [vmem:[%s1 + $0x1a0] sm:$0xf]
    %v200 = vld [vmem:[%s1 + $0x1a4] sm:$0xf]
    %v201 = vld [vmem:[%s1 + $0x1a8] sm:$0xf]
    %v202 = vld [vmem:[%s1 + $0x1ac] sm:$0xf]
    %v203 = vld [vmem:[%s1 + $0x1b0] sm:$0xf]
    %v204 = vld [vmem:[%s1 + $0x1b4] sm:$0xf]
    %v205 = vld [vmem:[%s1 + $0x1b8] sm:$0xf]
    %v206 = vld [vmem:[%s1 + $0x1bc] sm:$0xf]
    %v207 = vld [vmem:[%s1 + $0x1c0] sm:$0xf]
    %v208 = vld [vmem:[%s1 + $0x1c4] sm:$0xf]
    %v209 = vld [vmem:[%s1 + $0x1c8] sm:$0xf]
    %v210 = vld [vmem:[%s1 + $0x1cc] sm:$0xf]
    %v211 = vld [vmem:[%s1 + $0x1d0] sm:$0xf]
    %v212 = vld [vmem:[%s1 + $0x1d4] sm:$0xf]
    %v213 = vld [vmem:[%s1 + $0x1d8] sm:$0xf]
    %v214 = vld [vmem:[%s1 + $0x1dc] sm:$0xf]
    %v215 = vld [vmem:[%s1 + $0x1e0] sm:$0xf]
    %v216 = vld [vmem:[%s1 + $0x1e4] sm:$0xf]
    %v217 = vld [vmem:[%s1 + $0x1e8] sm:$0xf]
    %v218 = vld [vmem:[%s1 + $0x1ec] sm:$0xf]
    %v219 = vld [vmem:[%s1 + $0x1f0] sm:$0xf]
    %v220 = vld [vmem:[%s1 + $0x1f4] sm:$0xf]
    %v221 = vld [vmem:[%s1 + $0x1f8] sm:$0xf]
    %v222 = vld [vmem:[%s1 + $0x1fc] sm:$0xf]
    %v223 = vld [vmem:[%s1 + $0x200] sm:$0xf]
    %v224 = vld [vmem:[%s1 + $0x204] sm:$0xf]
    %v225 = vld [vmem:[%s1 + $0x208] sm:$0xf]
    %v226 = vld [vmem:[%s1 + $0x20c] sm:$0xf]
    %v227 = vld [vmem:[%s1 + $0x210] sm:$0xf]
    %v228 = vld [vmem:[%s1 + $0x214] sm:$0xf]
    %v229 = vld [vmem:[%s1 + $0x218] sm:$0xf]
    %v230 = vld [vmem:[%s1 + $0x21c] sm:$0xf]
    %v231 = vld [vmem:[%s1 + $0x220] sm:$0xf]
    %v232 = vld [vmem:[%s1 + $0x224] sm:$0xf]
    %v233 = vld [vmem:[%s1 + $0x228] sm:$0xf]
    %v234 = vld [vmem:[%s1 + $0x22c] sm:$0xf]
    %v235 = vld [vmem:[%s1 + $0x230] sm:$0xf]
    %v236 = vld [vmem:[%s1 + $0x234] sm:$0xf]
    %v237 = vld [vmem:[%s1 + $0x238] sm:$0xf]
    %v238 = vld [vmem:[%s1 + $0x23c] sm:$0xf]
    %v239 = vld [vmem:[%s1 + $0x240] sm:$0xf]
    %v240 = vld [vmem:[%s1 + $0x244] sm:$0xf]
    %v241 = vld [vmem:[%s1 + $0x248] sm:$0xf]
    %v242 = vld [vmem:[%s1 + $0x24c] sm:$0xf]
    %v243 = vld [vmem:[%s1 + $0x250] sm:$0xf]
    %v244 = vld [vmem:[%s1 + $0x254] sm:$0xf]
    %v245 = vld [vmem:[%s1 + $0x258] sm:$0xf]
    %v246 = vld [vmem:[%s1 + $0x25c] sm:$0xf]
    %v247 = vld [vmem:[%s1 + $0x260] sm:$0xf]
    %v248 = vld [vmem:[%s1 + $0x264] sm:$0xf]
    %v249 = vld [vmem:[%s1 + $0x268] sm:$0xf]
    %v250 = vld [vmem:[%s1 + $0x26c] sm:$0xf]
    %v251 = vld [vmem:[%s1 + $0x270] sm:$0xf]
    %v252 = vld [vmem:[%s1 + $0x274] sm:$0xf]
    %v253 = vld [vmem:[%s1 + $0x278] sm:$0xf]
    %v254 = vld [vmem:[%s1 + $0x27c] sm:$0xf]
    %v255 = vld [vmem:[%s1 + $0x280] sm:$0xf]
    %v256 = vld [vmem:[%s1 + $0x284] sm:$0xf]
    %v257 = vld [vmem:[%s1 + $0x288] sm:$0xf]
    %v258 = vld [vmem:[%s1 + $0x28c] sm:$0xf]
    %v259 = vld [vmem:[%s1 + $0x290] sm:$0xf]
    %v260 = vld [vmem:[%s1 + $0x294] sm:$0xf]
    %v261 = vld [vmem:[%s1 + $0x298] sm:$0xf]
    %v262 = vld [vmem:[%s1 + $0x29c] sm:$0xf]
    %v263 = vld [vmem:[%s1 + $0x2a0] sm:$0xf]
    %v264 = vld [vmem:[%s1 + $0x2a4] sm:$0xf]
    %v265 = vld [vmem:[%s1 + $0x2a8] sm:$0xf]
    %v266 = vld [vmem:[%s1 + $0x2ac] sm:$0xf]
    %v267 = vld [vmem:[%s1 + $0x2b0] sm:$0xf]
    %v268 = vld [vmem:[%s1 + $0x2b4] sm:$0xf]
    %v269 = vld [vmem:[%s1 + $0x2b8] sm:$0xf]
    %v270 = vld [vmem:[%s1 + $0x2bc] sm:$0xf]
    %v271 = vld [vmem:[%s1 + $0x2c0] sm:$0xf]
    %v272 = vld [vmem:[%s1 + $0x2c4] sm:$0xf]
    %v273 = vld [vmem:[%s1 + $0x2c8] sm:$0xf]
    %v274 = vld [vmem:[%s1 + $0x2cc] sm:$0xf]
    %v275 = vld [vmem:[%s1 + $0x2d0] sm:$0xf]
    %v276 = vld [vmem:[%s1 + $0x2d4] sm:$0xf]
    %v277 = vld [vmem:[%s1 + $0x2d8] sm:$0xf]
    %v278 = vld [vmem:[%s1 + $0x2dc] sm:$0xf]
    %v279 = vld [vmem:[%s1 + $0x2e0] sm:$0xf]
    %v280 = vld [vmem:[%s1 + $0x2e4] sm:$0xf]
    %v281 = vld [vmem:[%s1 + $0x2e8] sm:$0xf]
    %v282 = vld [vmem:[%s1 + $0x2ec] sm:$0xf]
    %v283 = vld [vmem:[%s1 + $0x2f0] sm:$0xf]
    %v284 = vld [vmem:[%s1 + $0x2f4] sm:$0xf]
    %v285 = vld [vmem:[%s1 + $0x2f8] sm:$0xf]
    %v286 = vld [vmem:[%s1 + $0x2fc] sm:$0xf]
    %v287 = vld [vmem:[%s1 + $0x300] sm:$0xf]
    %v288 = vld [vmem:[%s1 + $0x304] sm:$0xf]
    %v289 = vld [vmem:[%s1 + $0x308] sm:$0xf]
    %v290 = vld [vmem:[%s1 + $0x30c] sm:$0xf]
    %v291 = vld [vmem:[%s1 + $0x310] sm:$0xf]
    %v292 = vld [vmem:[%s1 + $0x314] sm:$0xf]
    %v293 = vld [vmem:[%s1 + $0x318] sm:$0xf]
    %v294 = vld [vmem:[%s1 + $0x31c] sm:$0xf]
    %v295 = vld [vmem:[%s1 + $0x320] sm:$0xf]
    %v296 = vld [vmem:[%s1 + $0x324] sm:$0xf]
    %v297 = vld [vmem:[%s1 + $0x328] sm:$0xf]
    %v298 = vld [vmem:[%s1 + $0x32c] sm:$0xf]
    %v299 = vld [vmem:[%s1 + $0x330] sm:$0xf]
    %v300 = vld [vmem:[%s1 + $0x334] sm:$0xf]
    %v301 = vld [vmem:[%s1 + $0x338] sm:$0xf]
    %v302 = vld [vmem:[%s1 + $0x33c] sm:$0xf]
    %v303 = vld [vmem:[%s1 + $0x340] sm:$0xf]
    %v304 = vld [vmem:[%s1 + $0x344] sm:$0xf]
    %v305 = vld [vmem:[%s1 + $0x348] sm:$0xf]
    %v306 = vld [vmem:[%s1 + $0x34c] sm:$0xf]
    %v307 = vld [vmem:[%s1 + $0x350] sm:$0xf]
    %v308 = vld [vmem:[%s1 + $0x354] sm:$0xf]
    %v309 = vld [vmem:[%s1 + $0x358] sm:$0xf]
    %v310 = vld [vmem:[%s1 + $0x35c] sm:$0xf]
    %v311 = vld [vmem:[%s2] sm:$0x1]
    %v313 = vlaneseq
    %v314 = vshrl.u32 %v313, 7
    %v315 = vsub.s32 0, %v314
    %v316 = vrot.slane %v311, %v315
    %v367 = vunpack.c.l.b16 %v46
    %v368 = vunpack.c.h.b16 %v46
    %v369 = vunpack.c.l.b16 %v47
    %v370 = vunpack.c.h.b16 %v47
    %v371 = vunpack.c.l.b16 %v48
    %v372 = vunpack.c.h.b16 %v48
    %v373 = vunpack.c.l.b16 %v49
    %v374 = vunpack.c.h.b16 %v49
    %v375 = vunpack.c.l.b16 %v50
    %v376 = vunpack.c.h.b16 %v50
    %v377 = vunpack.c.l.b16 %v51
    %v378 = vunpack.c.h.b16 %v51
    %v379 = vunpack.c.l.b16 %v52
    %v380 = vunpack.c.h.b16 %v52
    %v381 = vunpack.c.l.b16 %v53
    %v382 = vunpack.c.h.b16 %v53
    %v383 = vunpack.c.l.b16 %v54
    %v384 = vunpack.c.h.b16 %v54
    %v385 = vunpack.c.l.b16 %v55
    %v386 = vunpack.c.h.b16 %v55
    %v387 = vunpack.c.l.b16 %v56
    %v388 = vunpack.c.h.b16 %v56
    %v389 = vunpack.c.l.b16 %v57
    %v390 = vunpack.c.h.b16 %v57
    %v391 = vunpack.c.l.b16 %v58
    %v392 = vunpack.c.h.b16 %v58
    %v393 = vunpack.c.l.b16 %v59
    %v394 = vunpack.c.h.b16 %v59
    %v395 = vunpack.c.l.b16 %v60
    %v396 = vunpack.c.h.b16 %v60
    %v397 = vunpack.c.l.b16 %v61
    %v398 = vunpack.c.h.b16 %v61
    %v399 = vunpack.c.l.b16 %v62
    %v400 = vunpack.c.h.b16 %v62
    %v401 = vunpack.c.l.b16 %v63
    %v402 = vunpack.c.h.b16 %v63
    %v403 = vunpack.c.l.b16 %v64
    %v404 = vunpack.c.h.b16 %v64
    %v405 = vunpack.c.l.b16 %v65
    %v406 = vunpack.c.h.b16 %v65
    %v407 = vunpack.c.l.b16 %v66
    %v408 = vunpack.c.h.b16 %v66
    %v409 = vunpack.c.l.b16 %v67
    %v410 = vunpack.c.h.b16 %v67
    %v411 = vunpack.c.l.b16 %v68
    %v412 = vunpack.c.h.b16 %v68
    %v413 = vunpack.c.l.b16 %v69
    %v414 = vunpack.c.h.b16 %v69
    %v415 = vunpack.c.l.b16 %v70
    %v416 = vunpack.c.h.b16 %v70
    %v417 = vunpack.c.l.b16 %v71
    %v418 = vunpack.c.h.b16 %v71
    %v419 = vunpack.c.l.b16 %v72
    %v420 = vunpack.c.h.b16 %v72
    %v421 = vunpack.c.l.b16 %v73
    %v422 = vunpack.c.h.b16 %v73
    %v423 = vunpack.c.l.b16 %v74
    %v424 = vunpack.c.h.b16 %v74
    %v425 = vunpack.c.l.b16 %v75
    %v426 = vunpack.c.h.b16 %v75
    %v427 = vunpack.c.l.b16 %v76
    %v428 = vunpack.c.h.b16 %v76
    %v429 = vunpack.c.l.b16 %v77
    %v430 = vunpack.c.h.b16 %v77
    %v431 = vunpack.c.l.b16 %v78
    %v432 = vunpack.c.h.b16 %v78
    %v433 = vunpack.c.l.b16 %v79
    %v434 = vunpack.c.h.b16 %v79
    %v435 = vunpack.c.l.b16 %v80
    %v436 = vunpack.c.h.b16 %v80
    %v437 = vunpack.c.l.b16 %v81
    %v438 = vunpack.c.h.b16 %v81
    %v439 = vunpack.c.l.b16 %v82
    %v440 = vunpack.c.h.b16 %v82
    %v441 = vunpack.c.l.b16 %v83
    %v442 = vunpack.c.h.b16 %v83
    %v443 = vunpack.c.l.b16 %v84
    %v444 = vunpack.c.h.b16 %v84
    %v445 = vunpack.c.l.b16 %v85
    %v446 = vunpack.c.h.b16 %v85
    %v447 = vunpack.c.l.b16 %v86
    %v448 = vunpack.c.h.b16 %v86
    %v449 = vunpack.c.l.b16 %v87
    %v450 = vunpack.c.h.b16 %v87
    %v451 = vunpack.c.l.b16 %v88
    %v452 = vunpack.c.h.b16 %v88
    %v453 = vunpack.c.l.b16 %v89
    %v454 = vunpack.c.h.b16 %v89
    %v455 = vunpack.c.l.b16 %v90
    %v456 = vunpack.c.h.b16 %v90
    %v457 = vunpack.c.l.b16 %v91
    %v458 = vunpack.c.h.b16 %v91
    %v459 = vunpack.c.l.b16 %v92
    %v460 = vunpack.c.h.b16 %v92
    %v461 = vunpack.c.l.b16 %v93
    %v462 = vunpack.c.h.b16 %v93
    %v463 = vunpack.c.l.b16 %v94
    %v464 = vunpack.c.h.b16 %v94
    %v465 = vpack.c.b16 %v381, %v367
    %v466 = vpack.c.b16 %v382, %v368
    %v467 = vpack.c.b16 %v383, %v369
    %v468 = vpack.c.b16 %v384, %v370
    %v469 = vpack.c.b16 %v385, %v371
    %v470 = vpack.c.b16 %v386, %v372
    %v471 = vpack.c.b16 %v387, %v373
    %v472 = vpack.c.b16 %v388, %v374
    %v473 = vpack.c.b16 %v389, %v375
    %v474 = vpack.c.b16 %v390, %v376
    %v475 = vpack.c.b16 %v391, %v377
    %v476 = vpack.c.b16 %v392, %v378
    %v477 = vpack.c.b16 %v393, %v379
    %v478 = vpack.c.b16 %v394, %v380
    %v479 = vpack.c.b16 %v409, %v395
    %v480 = vpack.c.b16 %v410, %v396
    %v481 = vpack.c.b16 %v411, %v397
    %v482 = vpack.c.b16 %v412, %v398
    %v483 = vpack.c.b16 %v413, %v399
    %v484 = vpack.c.b16 %v414, %v400
    %v485 = vpack.c.b16 %v415, %v401
    %v486 = vpack.c.b16 %v416, %v402
    %v487 = vpack.c.b16 %v417, %v403
    %v488 = vpack.c.b16 %v418, %v404
    %v489 = vpack.c.b16 %v419, %v405
    %v490 = vpack.c.b16 %v420, %v406
    %v491 = vpack.c.b16 %v421, %v407
    %v492 = vpack.c.b16 %v422, %v408
    %v493 = vpack.c.b16 %v437, %v423
    %v494 = vpack.c.b16 %v438, %v424
    %v495 = vpack.c.b16 %v439, %v425
    %v496 = vpack.c.b16 %v440, %v426
    %v497 = vpack.c.b16 %v441, %v427
    %v498 = vpack.c.b16 %v442, %v428
    %v499 = vpack.c.b16 %v443, %v429
    %v500 = vpack.c.b16 %v444, %v430
    %v501 = vpack.c.b16 %v445, %v431
    %v502 = vpack.c.b16 %v446, %v432
    %v503 = vpack.c.b16 %v447, %v433
    %v504 = vpack.c.b16 %v448, %v434
    %v505 = vpack.c.b16 %v449, %v435
    %v506 = vpack.c.b16 %v450, %v436
    %v507 = vpack.c.b16 %v451, %v451
    %v508 = vpack.c.b16 %v452, %v452
    %v509 = vpack.c.b16 %v453, %v453
    %v510 = vpack.c.b16 %v454, %v454
    %v511 = vpack.c.b16 %v455, %v455
    %v512 = vpack.c.b16 %v456, %v456
    %v513 = vpack.c.b16 %v457, %v457
    %v514 = vpack.c.b16 %v458, %v458
    %v515 = vpack.c.b16 %v459, %v459
    %v516 = vpack.c.b16 %v460, %v460
    %v517 = vpack.c.b16 %v461, %v461
    %v518 = vpack.c.b16 %v462, %v462
    %v519 = vpack.c.b16 %v463, %v463
    %v520 = vpack.c.b16 %v464, %v464
    %v789 = vunpack.c.l.b16 %v95
    %v790 = vunpack.c.l.b16 %v96
    %v791 = vunpack.c.l.b16 %v97
    %v792 = vunpack.c.l.b16 %v98
    %v793 = vunpack.c.l.b16 %v99
    %v794 = vunpack.c.l.b16 %v100
    %v795 = vunpack.c.l.b16 %v101
    %v796 = vunpack.c.l.b16 %v102
    %v797 = vunpack.c.l.b16 %v103
    %v798 = vunpack.c.l.b16 %v104
    %v799 = vunpack.c.l.b16 %v105
    %v800 = vunpack.c.l.b16 %v106
    %v801 = vunpack.c.l.b16 %v107
    %v802 = vunpack.c.l.b16 %v108
    %v803 = vunpack.c.l.b16 %v109
    %v804 = vunpack.c.l.b16 %v110
    %v805 = vunpack.c.l.b16 %v111
    %v806 = vunpack.c.l.b16 %v112
    %v807 = vunpack.c.l.b16 %v113
    %v808 = vunpack.c.l.b16 %v114
    %v809 = vunpack.c.l.b16 %v115
    %v810 = vunpack.c.l.b16 %v116
    %v811 = vunpack.c.l.b16 %v117
    %v812 = vunpack.c.l.b16 %v118
    %v813 = vunpack.c.l.b16 %v119
    %v814 = vunpack.c.l.b16 %v120
    %v815 = vunpack.c.l.b16 %v121
    %v816 = vunpack.c.l.b16 %v122
    %v817 = vunpack.c.l.b16 %v123
    %v818 = vunpack.c.l.b16 %v124
    %v819 = vunpack.c.l.b16 %v125
    %v820 = vunpack.c.l.b16 %v126
    %v821 = vunpack.c.l.b16 %v127
    %v822 = vunpack.c.l.b16 %v128
    %v823 = vunpack.c.l.b16 %v129
    %v824 = vunpack.c.l.b16 %v130
    %v825 = vunpack.c.l.b16 %v131
    %v826 = vunpack.c.l.b16 %v132
    %v827 = vunpack.c.l.b16 %v133
    %v828 = vunpack.c.l.b16 %v134
    %v829 = vunpack.c.l.b16 %v135
    %v830 = vunpack.c.l.b16 %v136
    %v831 = vunpack.c.l.b16 %v137
    %v832 = vunpack.c.l.b16 %v138
    %v833 = vunpack.c.l.b16 %v139
    %v834 = vunpack.c.l.b16 %v140
    %v835 = vunpack.c.l.b16 %v141
    %v836 = vunpack.c.l.b16 %v142
    %v837 = vunpack.c.l.b16 %v143
    %v838 = vunpack.c.l.b16 %v144
    %v839 = vunpack.c.l.b16 %v145
    %v840 = vunpack.c.l.b16 %v146
    %v841 = vunpack.c.l.b16 %v147
    %v842 = vunpack.c.l.b16 %v148
    %v843 = vunpack.c.l.b16 %v149
    %v844 = vunpack.c.l.b16 %v150
    %v845 = vunpack.c.l.b16 %v151
    %v846 = vunpack.c.l.b16 %v152
    %v847 = vunpack.c.l.b16 %v153
    %v848 = vunpack.c.l.b16 %v154
    %v849 = vunpack.c.l.b16 %v155
    %v850 = vunpack.c.l.b16 %v156
    %v851 = vunpack.c.l.b16 %v157
    %v852 = vunpack.c.l.b16 %v158
    %v853 = vunpack.c.l.b16 %v159
    %v854 = vunpack.c.l.b16 %v160
    %v855 = vunpack.c.l.b16 %v161
    %v856 = vunpack.c.l.b16 %v162
    %v857 = vunpack.c.l.b16 %v163
    %v858 = vunpack.c.l.b16 %v164
    %v859 = vunpack.c.l.b16 %v165
    %v860 = vunpack.c.l.b16 %v166
    %v861 = vunpack.c.l.b16 %v167
    %v862 = vunpack.c.l.b16 %v168
    %v863 = vunpack.c.l.b16 %v169
    %v864 = vunpack.c.l.b16 %v170
    %v865 = vunpack.c.l.b16 %v171
    %v866 = vunpack.c.l.b16 %v172
    %v867 = vunpack.c.l.b16 %v173
    %v868 = vunpack.c.l.b16 %v174
    %v869 = vunpack.c.l.b16 %v175
    %v870 = vunpack.c.l.b16 %v176
    %v871 = vunpack.c.l.b16 %v177
    %v872 = vunpack.c.l.b16 %v178
    %v873 = vunpack.c.l.b16 %v179
    %v874 = vunpack.c.l.b16 %v180
    %v875 = vunpack.c.l.b16 %v181
    %v876 = vunpack.c.l.b16 %v182
    %v877 = vunpack.c.l.b16 %v183
    %v878 = vunpack.c.l.b16 %v184
    %v879 = vunpack.c.l.b16 %v185
    %v880 = vunpack.c.l.b16 %v186
    %v881 = vunpack.c.l.b16 %v187
    %v882 = vunpack.c.l.b16 %v188
    %v883 = vunpack.c.l.b16 %v189
    %v884 = vunpack.c.l.b16 %v190
    %v885 = vunpack.c.l.b16 %v191
    %v886 = vunpack.c.l.b16 %v192
    %v887 = vunpack.c.l.b16 %v193
    %v888 = vunpack.c.l.b16 %v194
    %v889 = vunpack.c.l.b16 %v195
    %v890 = vunpack.c.l.b16 %v196
    %v891 = vunpack.c.l.b16 %v197
    %v892 = vunpack.c.l.b16 %v198
    %v893 = vunpack.c.l.b16 %v199
    %v894 = vunpack.c.l.b16 %v200
    %v895 = vunpack.c.l.b16 %v201
    %v896 = vunpack.c.l.b16 %v202
    %v897 = vunpack.c.l.b16 %v203
    %v898 = vunpack.c.l.b16 %v204
    %v899 = vunpack.c.l.b16 %v205
    %v900 = vunpack.c.l.b16 %v206
    %v901 = vunpack.c.l.b16 %v207
    %v902 = vunpack.c.l.b16 %v208
    %v903 = vunpack.c.l.b16 %v209
    %v904 = vunpack.c.l.b16 %v210
    %v905 = vunpack.c.l.b16 %v211
    %v906 = vunpack.c.l.b16 %v212
    %v907 = vunpack.c.l.b16 %v213
    %v908 = vunpack.c.l.b16 %v214
    %v909 = vunpack.c.l.b16 %v215
    %v910 = vunpack.c.l.b16 %v216
    %v911 = vunpack.c.l.b16 %v217
    %v912 = vunpack.c.l.b16 %v218
    %v913 = vunpack.c.l.b16 %v219
    %v914 = vunpack.c.l.b16 %v220
    %v915 = vunpack.c.l.b16 %v221
    %v916 = vunpack.c.l.b16 %v222
    %v917 = vunpack.c.l.b16 %v223
    %v918 = vunpack.c.l.b16 %v224
    %v919 = vunpack.c.l.b16 %v225
    %v920 = vunpack.c.l.b16 %v226
    %v921 = vunpack.c.l.b16 %v227
    %v922 = vunpack.c.l.b16 %v228
    %v923 = vunpack.c.l.b16 %v229
    %v924 = vunpack.c.l.b16 %v230
    %v925 = vunpack.c.l.b16 %v231
    %v926 = vunpack.c.l.b16 %v232
    %v927 = vunpack.c.l.b16 %v233
    %v928 = vunpack.c.l.b16 %v234
    %v929 = vunpack.c.l.b16 %v235
    %v930 = vunpack.c.l.b16 %v236
    %v931 = vunpack.c.l.b16 %v237
    %v932 = vunpack.c.l.b16 %v238
    %v933 = vunpack.c.l.b16 %v239
    %v934 = vunpack.c.l.b16 %v240
    %v935 = vunpack.c.l.b16 %v241
    %v936 = vunpack.c.l.b16 %v242
    %v937 = vunpack.c.l.b16 %v243
    %v938 = vunpack.c.l.b16 %v244
    %v939 = vunpack.c.l.b16 %v245
    %v940 = vunpack.c.l.b16 %v246
    %v941 = vunpack.c.l.b16 %v247
    %v942 = vunpack.c.l.b16 %v248
    %v943 = vunpack.c.l.b16 %v249
    %v944 = vunpack.c.l.b16 %v250
    %v945 = vunpack.c.l.b16 %v251
    %v946 = vunpack.c.l.b16 %v252
    %v947 = vunpack.c.l.b16 %v253
    %v948 = vunpack.c.l.b16 %v254
    %v949 = vunpack.c.l.b16 %v255
    %v950 = vunpack.c.l.b16 %v256
    %v951 = vunpack.c.l.b16 %v257
    %v952 = vunpack.c.l.b16 %v258
    %v953 = vunpack.c.l.b16 %v259
    %v954 = vunpack.c.l.b16 %v260
    %v955 = vunpack.c.l.b16 %v261
    %v956 = vunpack.c.l.b16 %v262
    %v957 = vunpack.c.l.b16 %v263
    %v958 = vunpack.c.l.b16 %v264
    %v959 = vunpack.c.l.b16 %v265
    %v960 = vunpack.c.l.b16 %v266
    %v961 = vunpack.c.l.b16 %v267
    %v962 = vunpack.c.l.b16 %v268
    %v963 = vunpack.c.l.b16 %v269
    %v964 = vunpack.c.l.b16 %v270
    %v965 = vunpack.c.l.b16 %v271
    %v966 = vunpack.c.l.b16 %v272
    %v967 = vunpack.c.l.b16 %v273
    %v968 = vunpack.c.l.b16 %v274
    %v969 = vunpack.c.l.b16 %v275
    %v970 = vunpack.c.l.b16 %v276
    %v971 = vunpack.c.l.b16 %v277
    %v972 = vunpack.c.l.b16 %v278
    %v973 = vunpack.c.l.b16 %v279
    %v974 = vunpack.c.l.b16 %v280
    %v975 = vunpack.c.l.b16 %v281
    %v976 = vunpack.c.l.b16 %v282
    %v977 = vunpack.c.l.b16 %v283
    %v978 = vunpack.c.l.b16 %v284
    %v979 = vunpack.c.l.b16 %v285
    %v980 = vunpack.c.l.b16 %v286
    %v981 = vunpack.c.l.b16 %v287
    %v982 = vunpack.c.l.b16 %v288
    %v983 = vunpack.c.l.b16 %v289
    %v984 = vunpack.c.l.b16 %v290
    %v985 = vunpack.c.l.b16 %v291
    %v986 = vunpack.c.l.b16 %v292
    %v987 = vunpack.c.l.b16 %v293
    %v988 = vunpack.c.l.b16 %v294
    %v989 = vunpack.c.l.b16 %v295
    %v990 = vunpack.c.l.b16 %v296
    %v991 = vunpack.c.l.b16 %v297
    %v992 = vunpack.c.l.b16 %v298
    %v993 = vunpack.c.l.b16 %v299
    %v994 = vunpack.c.l.b16 %v300
    %v995 = vunpack.c.l.b16 %v301
    %v996 = vunpack.c.l.b16 %v302
    %v997 = vunpack.c.l.b16 %v303
    %v998 = vunpack.c.l.b16 %v304
    %v999 = vunpack.c.l.b16 %v305
    %v1000 = vunpack.c.l.b16 %v306
    %v1001 = vunpack.c.l.b16 %v307
    %v1002 = vunpack.c.l.b16 %v308
    %v1003 = vunpack.c.l.b16 %v309
    %v1004 = vunpack.c.l.b16 %v310
    %v1005 = vpack.c.b16 %v790, %v789
    %v1006 = vpack.c.b16 %v792, %v791
    %v1007 = vpack.c.b16 %v794, %v793
    %v1008 = vpack.c.b16 %v796, %v795
    %v1009 = vpack.c.b16 %v798, %v797
    %v1010 = vpack.c.b16 %v800, %v799
    %v1011 = vpack.c.b16 %v802, %v801
    %v1012 = vpack.c.b16 %v804, %v803
    %v1013 = vpack.c.b16 %v806, %v805
    %v1014 = vpack.c.b16 %v808, %v807
    %v1015 = vpack.c.b16 %v810, %v809
    %v1016 = vpack.c.b16 %v812, %v811
    %v1017 = vpack.c.b16 %v814, %v813
    %v1018 = vpack.c.b16 %v816, %v815
    %v1019 = vpack.c.b16 %v818, %v817
    %v1020 = vpack.c.b16 %v820, %v819
    %v1021 = vpack.c.b16 %v822, %v821
    %v1022 = vpack.c.b16 %v824, %v823
    %v1023 = vpack.c.b16 %v826, %v825
    %v1024 = vpack.c.b16 %v828, %v827
    %v1025 = vpack.c.b16 %v830, %v829
    %v1026 = vpack.c.b16 %v832, %v831
    %v1027 = vpack.c.b16 %v834, %v833
    %v1028 = vpack.c.b16 %v836, %v835
    %v1029 = vpack.c.b16 %v838, %v837
    %v1030 = vpack.c.b16 %v840, %v839
    %v1031 = vpack.c.b16 %v842, %v841
    %v1032 = vpack.c.b16 %v844, %v843
    %v1033 = vpack.c.b16 %v846, %v845
    %v1034 = vpack.c.b16 %v848, %v847
    %v1035 = vpack.c.b16 %v850, %v849
    %v1036 = vpack.c.b16 %v852, %v851
    %v1037 = vpack.c.b16 %v854, %v853
    %v1038 = vpack.c.b16 %v856, %v855
    %v1039 = vpack.c.b16 %v858, %v857
    %v1040 = vpack.c.b16 %v860, %v859
    %v1041 = vpack.c.b16 %v862, %v861
    %v1042 = vpack.c.b16 %v864, %v863
    %v1043 = vpack.c.b16 %v866, %v865
    %v1044 = vpack.c.b16 %v868, %v867
    %v1045 = vpack.c.b16 %v870, %v869
    %v1046 = vpack.c.b16 %v872, %v871
    %v1047 = vpack.c.b16 %v874, %v873
    %v1048 = vpack.c.b16 %v876, %v875
    %v1049 = vpack.c.b16 %v878, %v877
    %v1050 = vpack.c.b16 %v880, %v879
    %v1051 = vpack.c.b16 %v882, %v881
    %v1052 = vpack.c.b16 %v884, %v883
    %v1053 = vpack.c.b16 %v886, %v885
    %v1054 = vpack.c.b16 %v888, %v887
    %v1055 = vpack.c.b16 %v890, %v889
    %v1056 = vpack.c.b16 %v892, %v891
    %v1057 = vpack.c.b16 %v894, %v893
    %v1058 = vpack.c.b16 %v896, %v895
    %v1059 = vpack.c.b16 %v898, %v897
    %v1060 = vpack.c.b16 %v900, %v899
    %v1061 = vpack.c.b16 %v902, %v901
    %v1062 = vpack.c.b16 %v904, %v903
    %v1063 = vpack.c.b16 %v906, %v905
    %v1064 = vpack.c.b16 %v908, %v907
    %v1065 = vpack.c.b16 %v910, %v909
    %v1066 = vpack.c.b16 %v912, %v911
    %v1067 = vpack.c.b16 %v914, %v913
    %v1068 = vpack.c.b16 %v916, %v915
    %v1069 = vpack.c.b16 %v918, %v917
    %v1070 = vpack.c.b16 %v920, %v919
    %v1071 = vpack.c.b16 %v922, %v921
    %v1072 = vpack.c.b16 %v924, %v923
    %v1073 = vpack.c.b16 %v926, %v925
    %v1074 = vpack.c.b16 %v928, %v927
    %v1075 = vpack.c.b16 %v930, %v929
    %v1076 = vpack.c.b16 %v932, %v931
    %v1077 = vpack.c.b16 %v934, %v933
    %v1078 = vpack.c.b16 %v936, %v935
    %v1079 = vpack.c.b16 %v938, %v937
    %v1080 = vpack.c.b16 %v940, %v939
    %v1081 = vpack.c.b16 %v942, %v941
    %v1082 = vpack.c.b16 %v944, %v943
    %v1083 = vpack.c.b16 %v946, %v945
    %v1084 = vpack.c.b16 %v948, %v947
    %v1085 = vpack.c.b16 %v950, %v949
    %v1086 = vpack.c.b16 %v952, %v951
    %v1087 = vpack.c.b16 %v954, %v953
    %v1088 = vpack.c.b16 %v956, %v955
    %v1089 = vpack.c.b16 %v958, %v957
    %v1090 = vpack.c.b16 %v960, %v959
    %v1091 = vpack.c.b16 %v962, %v961
    %v1092 = vpack.c.b16 %v964, %v963
    %v1093 = vpack.c.b16 %v966, %v965
    %v1094 = vpack.c.b16 %v968, %v967
    %v1095 = vpack.c.b16 %v970, %v969
    %v1096 = vpack.c.b16 %v972, %v971
    %v1097 = vpack.c.b16 %v974, %v973
    %v1098 = vpack.c.b16 %v976, %v975
    %v1099 = vpack.c.b16 %v978, %v977
    %v1100 = vpack.c.b16 %v980, %v979
    %v1101 = vpack.c.b16 %v982, %v981
    %v1102 = vpack.c.b16 %v984, %v983
    %v1103 = vpack.c.b16 %v986, %v985
    %v1104 = vpack.c.b16 %v988, %v987
    %v1105 = vpack.c.b16 %v990, %v989
    %v1106 = vpack.c.b16 %v992, %v991
    %v1107 = vpack.c.b16 %v994, %v993
    %v1108 = vpack.c.b16 %v996, %v995
    %v1109 = vpack.c.b16 %v998, %v997
    %v1110 = vpack.c.b16 %v1000, %v999
    %v1111 = vpack.c.b16 %v1002, %v1001
    %v1112 = vpack.c.b16 %v1004, %v1003
    %vm1221 = vcmask 523264
    %v1223 = vsel %vm1221, %v478, 0
    %v1226 = vsel %vm1221, %v492, 0
    %v1229 = vsel %vm1221, %v506, 0
    %v1232 = vsel %vm1221, %v520, 0
    %1234 = vmatprep.subr.bf16.mxu0 0
    %1235 = vmatpush1.bf16.msra.mxu0 %v1012
    %1236 = vmatprep.subr.bf16.mxu0 0
    %1237 = vmatpush1.bf16.msra.mxu0 %v1011
    %1238 = vmatprep.subr.bf16.mxu0 0
    %1239 = vmatpush1.bf16.msra.mxu0 %v1010
    %1240 = vmatprep.subr.bf16.mxu0 0
    %1241 = vmatpush1.bf16.msra.mxu0 %v1009
    %1242 = vmatprep.subr.bf16.mxu0 0
    %1243 = vmatpush1.bf16.msra.mxu0 %v1008
    %1244 = vmatprep.subr.bf16.mxu0 0
    %1245 = vmatpush1.bf16.msra.mxu0 %v1007
    %1246 = vmatprep.subr.bf16.mxu0 0
    %1247 = vmatpush1.bf16.msra.mxu0 %v1006
    %1248 = vmatprep.subr.bf16.mxu0 0
    %1249 = vmatpush1.bf16.msra.mxu0 %v1005
    %1250 = vmatprep.subr.bf16.mxu0 0
    %1251 = vmatpush2.bf16.msra.mxu0 %v1020
    %1252 = vmatprep.subr.bf16.mxu0 0
    %1253 = vmatpush2.bf16.msra.mxu0 %v1019
    %1254 = vmatprep.subr.bf16.mxu0 0
    %1255 = vmatpush2.bf16.msra.mxu0 %v1018
    %1256 = vmatprep.subr.bf16.mxu0 0
    %1257 = vmatpush2.bf16.msra.mxu0 %v1017
    %1258 = vmatprep.subr.bf16.mxu0 0
    %1259 = vmatpush2.bf16.msra.mxu0 %v1016
    %1260 = vmatprep.subr.bf16.mxu0 0
    %1261 = vmatpush2.bf16.msra.mxu0 %v1015
    %1262 = vmatprep.subr.bf16.mxu0 0
    %1263 = vmatpush2.bf16.msra.mxu0 %v1014
    %1264 = vmatprep.subr.bf16.mxu0 0
    %1265 = vmatpush2.bf16.msra.mxu0 %v1013
    %1266 = vmatprep.mubr.bf16.mxu0 %v466
    %1267 = vmatmul.mubr.bf16.gmra.mxu0 %v465
    %v1268 = vpop.f32.mrf.mxu0
    %v1269 = vadd.f32 %v316, %v1268
    %v1270 = vpop.f32.mrf.mxu0
    %v1271 = vpop.f32.mrf.mxu0
    %v1272 = vadd.f32 %v316, %v1271
    %v1273 = vpop.f32.mrf.mxu0
    %1274 = vmatprep.mubr.bf16.mxu0 %v480
    %1275 = vmatmul.mubr.bf16.gmra.mxu0 %v479
    %v1276 = vpop.f32.mrf.mxu0
    %v1277 = vadd.f32 %v316, %v1276
    %v1278 = vpop.f32.mrf.mxu0
    %v1279 = vpop.f32.mrf.mxu0
    %v1280 = vadd.f32 %v316, %v1279
    %v1281 = vpop.f32.mrf.mxu0
    %1282 = vmatprep.mubr.bf16.mxu0 %v494
    %1283 = vmatmul.mubr.bf16.gmra.mxu0 %v493
    %v1284 = vpop.f32.mrf.mxu0
    %v1285 = vadd.f32 %v316, %v1284
    %v1286 = vpop.f32.mrf.mxu0
    %v1287 = vpop.f32.mrf.mxu0
    %v1288 = vadd.f32 %v316, %v1287
    %v1289 = vpop.f32.mrf.mxu0
    %1290 = vmatprep.mubr.bf16.mxu0 %v508
    %1291 = vmatmul.mubr.bf16.gmra.mxu0 %v507
    %v1292 = vpop.f32.mrf.mxu0
    %v1293 = vadd.f32 %v316, %v1292
    %v1294 = vpop.f32.mrf.mxu0
    %v1295 = vpop.f32.mrf.mxu0
    %v1296 = vpop.f32.mrf.mxu0
    %1297 = vdwg.mxu0
    %1298 = vmatprep.subr.bf16.mxu0 0
    %1299 = vmatpush1.bf16.msra.mxu0 %v1028
    %1300 = vmatprep.subr.bf16.mxu0 0
    %1301 = vmatpush1.bf16.msra.mxu0 %v1027
    %1302 = vmatprep.subr.bf16.mxu0 0
    %1303 = vmatpush1.bf16.msra.mxu0 %v1026
    %1304 = vmatprep.subr.bf16.mxu0 0
    %1305 = vmatpush1.bf16.msra.mxu0 %v1025
    %1306 = vmatprep.subr.bf16.mxu0 0
    %1307 = vmatpush1.bf16.msra.mxu0 %v1024
    %1308 = vmatprep.subr.bf16.mxu0 0
    %1309 = vmatpush1.bf16.msra.mxu0 %v1023
    %1310 = vmatprep.subr.bf16.mxu0 0
    %1311 = vmatpush1.bf16.msra.mxu0 %v1022
    %1312 = vmatprep.subr.bf16.mxu0 0
    %1313 = vmatpush1.bf16.msra.mxu0 %v1021
    %1314 = vmatprep.subr.bf16.mxu0 0
    %1315 = vmatpush2.bf16.msra.mxu0 %v1036
    %1316 = vmatprep.subr.bf16.mxu0 0
    %1317 = vmatpush2.bf16.msra.mxu0 %v1035
    %1318 = vmatprep.subr.bf16.mxu0 0
    %1319 = vmatpush2.bf16.msra.mxu0 %v1034
    %1320 = vmatprep.subr.bf16.mxu0 0
    %1321 = vmatpush2.bf16.msra.mxu0 %v1033
    %1322 = vmatprep.subr.bf16.mxu0 0
    %1323 = vmatpush2.bf16.msra.mxu0 %v1032
    %1324 = vmatprep.subr.bf16.mxu0 0
    %1325 = vmatpush2.bf16.msra.mxu0 %v1031
    %1326 = vmatprep.subr.bf16.mxu0 0
    %1327 = vmatpush2.bf16.msra.mxu0 %v1030
    %1328 = vmatprep.subr.bf16.mxu0 0
    %1329 = vmatpush2.bf16.msra.mxu0 %v1029
    %1330 = vmatprep.mubr.bf16.mxu0 %v468
    %1331 = vmatmul.mubr.bf16.gmra.mxu0 %v467
    %v1332 = vpop.f32.mrf.mxu0
    %v1333 = vadd.f32 %v1269, %v1332
    %v1334 = vpop.f32.mrf.mxu0
    %v1335 = vpop.f32.mrf.mxu0
    %v1336 = vadd.f32 %v1272, %v1335
    %v1337 = vpop.f32.mrf.mxu0
    %1338 = vmatprep.mubr.bf16.mxu0 %v482
    %1339 = vmatmul.mubr.bf16.gmra.mxu0 %v481
    %v1340 = vpop.f32.mrf.mxu0
    %v1341 = vadd.f32 %v1277, %v1340
    %v1342 = vpop.f32.mrf.mxu0
    %v1343 = vpop.f32.mrf.mxu0
    %v1344 = vadd.f32 %v1280, %v1343
    %v1345 = vpop.f32.mrf.mxu0
    %1346 = vmatprep.mubr.bf16.mxu0 %v496
    %1347 = vmatmul.mubr.bf16.gmra.mxu0 %v495
    %v1348 = vpop.f32.mrf.mxu0
    %v1349 = vadd.f32 %v1285, %v1348
    %v1350 = vpop.f32.mrf.mxu0
    %v1351 = vpop.f32.mrf.mxu0
    %v1352 = vadd.f32 %v1288, %v1351
    %v1353 = vpop.f32.mrf.mxu0
    %1354 = vmatprep.mubr.bf16.mxu0 %v510
    %1355 = vmatmul.mubr.bf16.gmra.mxu0 %v509
    %v1356 = vpop.f32.mrf.mxu0
    %v1357 = vadd.f32 %v1293, %v1356
    %v1358 = vpop.f32.mrf.mxu0
    %v1359 = vpop.f32.mrf.mxu0
    %v1360 = vpop.f32.mrf.mxu0
    %1361 = vdwg.mxu0
    %1362 = vmatprep.subr.bf16.mxu0 0
    %1363 = vmatpush1.bf16.msra.mxu0 %v1044
    %1364 = vmatprep.subr.bf16.mxu0 0
    %1365 = vmatpush1.bf16.msra.mxu0 %v1043
    %1366 = vmatprep.subr.bf16.mxu0 0
    %1367 = vmatpush1.bf16.msra.mxu0 %v1042
    %1368 = vmatprep.subr.bf16.mxu0 0
    %1369 = vmatpush1.bf16.msra.mxu0 %v1041
    %1370 = vmatprep.subr.bf16.mxu0 0
    %1371 = vmatpush1.bf16.msra.mxu0 %v1040
    %1372 = vmatprep.subr.bf16.mxu0 0
    %1373 = vmatpush1.bf16.msra.mxu0 %v1039
    %1374 = vmatprep.subr.bf16.mxu0 0
    %1375 = vmatpush1.bf16.msra.mxu0 %v1038
    %1376 = vmatprep.subr.bf16.mxu0 0
    %1377 = vmatpush1.bf16.msra.mxu0 %v1037
    %1378 = vmatprep.subr.bf16.mxu0 0
    %1379 = vmatpush2.bf16.msra.mxu0 %v1052
    %1380 = vmatprep.subr.bf16.mxu0 0
    %1381 = vmatpush2.bf16.msra.mxu0 %v1051
    %1382 = vmatprep.subr.bf16.mxu0 0
    %1383 = vmatpush2.bf16.msra.mxu0 %v1050
    %1384 = vmatprep.subr.bf16.mxu0 0
    %1385 = vmatpush2.bf16.msra.mxu0 %v1049
    %1386 = vmatprep.subr.bf16.mxu0 0
    %1387 = vmatpush2.bf16.msra.mxu0 %v1048
    %1388 = vmatprep.subr.bf16.mxu0 0
    %1389 = vmatpush2.bf16.msra.mxu0 %v1047
    %1390 = vmatprep.subr.bf16.mxu0 0
    %1391 = vmatpush2.bf16.msra.mxu0 %v1046
    %1392 = vmatprep.subr.bf16.mxu0 0
    %1393 = vmatpush2.bf16.msra.mxu0 %v1045
    %1394 = vmatprep.mubr.bf16.mxu0 %v470
    %1395 = vmatmul.mubr.bf16.gmra.mxu0 %v469
    %v1396 = vpop.f32.mrf.mxu0
    %v1397 = vadd.f32 %v1333, %v1396
    %v1398 = vpop.f32.mrf.mxu0
    %v1399 = vpop.f32.mrf.mxu0
    %v1400 = vadd.f32 %v1336, %v1399
    %v1401 = vpop.f32.mrf.mxu0
    %1402 = vmatprep.mubr.bf16.mxu0 %v484
    %1403 = vmatmul.mubr.bf16.gmra.mxu0 %v483
    %v1404 = vpop.f32.mrf.mxu0
    %v1405 = vadd.f32 %v1341, %v1404
    %v1406 = vpop.f32.mrf.mxu0
    %v1407 = vpop.f32.mrf.mxu0
    %v1408 = vadd.f32 %v1344, %v1407
    %v1409 = vpop.f32.mrf.mxu0
    %1410 = vmatprep.mubr.bf16.mxu0 %v498
    %1411 = vmatmul.mubr.bf16.gmra.mxu0 %v497
    %v1412 = vpop.f32.mrf.mxu0
    %v1413 = vadd.f32 %v1349, %v1412
    %v1414 = vpop.f32.mrf.mxu0
    %v1415 = vpop.f32.mrf.mxu0
    %v1416 = vadd.f32 %v1352, %v1415
    %v1417 = vpop.f32.mrf.mxu0
    %1418 = vmatprep.mubr.bf16.mxu0 %v512
    %1419 = vmatmul.mubr.bf16.gmra.mxu0 %v511
    %v1420 = vpop.f32.mrf.mxu0
    %v1421 = vadd.f32 %v1357, %v1420
    %v1422 = vpop.f32.mrf.mxu0
    %v1423 = vpop.f32.mrf.mxu0
    %v1424 = vpop.f32.mrf.mxu0
    %1425 = vdwg.mxu0
    %1426 = vmatprep.subr.bf16.mxu0 0
    %1427 = vmatpush1.bf16.msra.mxu0 %v1060
    %1428 = vmatprep.subr.bf16.mxu0 0
    %1429 = vmatpush1.bf16.msra.mxu0 %v1059
    %1430 = vmatprep.subr.bf16.mxu0 0
    %1431 = vmatpush1.bf16.msra.mxu0 %v1058
    %1432 = vmatprep.subr.bf16.mxu0 0
    %1433 = vmatpush1.bf16.msra.mxu0 %v1057
    %1434 = vmatprep.subr.bf16.mxu0 0
    %1435 = vmatpush1.bf16.msra.mxu0 %v1056
    %1436 = vmatprep.subr.bf16.mxu0 0
    %1437 = vmatpush1.bf16.msra.mxu0 %v1055
    %1438 = vmatprep.subr.bf16.mxu0 0
    %1439 = vmatpush1.bf16.msra.mxu0 %v1054
    %1440 = vmatprep.subr.bf16.mxu0 0
    %1441 = vmatpush1.bf16.msra.mxu0 %v1053
    %1442 = vmatprep.subr.bf16.mxu0 0
    %1443 = vmatpush2.bf16.msra.mxu0 %v1068
    %1444 = vmatprep.subr.bf16.mxu0 0
    %1445 = vmatpush2.bf16.msra.mxu0 %v1067
    %1446 = vmatprep.subr.bf16.mxu0 0
    %1447 = vmatpush2.bf16.msra.mxu0 %v1066
    %1448 = vmatprep.subr.bf16.mxu0 0
    %1449 = vmatpush2.bf16.msra.mxu0 %v1065
    %1450 = vmatprep.subr.bf16.mxu0 0
    %1451 = vmatpush2.bf16.msra.mxu0 %v1064
    %1452 = vmatprep.subr.bf16.mxu0 0
    %1453 = vmatpush2.bf16.msra.mxu0 %v1063
    %1454 = vmatprep.subr.bf16.mxu0 0
    %1455 = vmatpush2.bf16.msra.mxu0 %v1062
    %1456 = vmatprep.subr.bf16.mxu0 0
    %1457 = vmatpush2.bf16.msra.mxu0 %v1061
    %1458 = vmatprep.mubr.bf16.mxu0 %v472
    %1459 = vmatmul.mubr.bf16.gmra.mxu0 %v471
    %v1460 = vpop.f32.mrf.mxu0
    %v1461 = vadd.f32 %v1397, %v1460
    %v1462 = vpop.f32.mrf.mxu0
    %v1463 = vpop.f32.mrf.mxu0
    %v1464 = vadd.f32 %v1400, %v1463
    %v1465 = vpop.f32.mrf.mxu0
    %1466 = vmatprep.mubr.bf16.mxu0 %v486
    %1467 = vmatmul.mubr.bf16.gmra.mxu0 %v485
    %v1468 = vpop.f32.mrf.mxu0
    %v1469 = vadd.f32 %v1405, %v1468
    %v1470 = vpop.f32.mrf.mxu0
    %v1471 = vpop.f32.mrf.mxu0
    %v1472 = vadd.f32 %v1408, %v1471
    %v1473 = vpop.f32.mrf.mxu0
    %1474 = vmatprep.mubr.bf16.mxu0 %v500
    %1475 = vmatmul.mubr.bf16.gmra.mxu0 %v499
    %v1476 = vpop.f32.mrf.mxu0
    %v1477 = vadd.f32 %v1413, %v1476
    %v1478 = vpop.f32.mrf.mxu0
    %v1479 = vpop.f32.mrf.mxu0
    %v1480 = vadd.f32 %v1416, %v1479
    %v1481 = vpop.f32.mrf.mxu0
    %1482 = vmatprep.mubr.bf16.mxu0 %v514
    %1483 = vmatmul.mubr.bf16.gmra.mxu0 %v513
    %v1484 = vpop.f32.mrf.mxu0
    %v1485 = vadd.f32 %v1421, %v1484
    %v1486 = vpop.f32.mrf.mxu0
    %v1487 = vpop.f32.mrf.mxu0
    %v1488 = vpop.f32.mrf.mxu0
    %1489 = vdwg.mxu0
    %1490 = vmatprep.subr.bf16.mxu0 0
    %1491 = vmatpush1.bf16.msra.mxu0 %v1076
    %1492 = vmatprep.subr.bf16.mxu0 0
    %1493 = vmatpush1.bf16.msra.mxu0 %v1075
    %1494 = vmatprep.subr.bf16.mxu0 0
    %1495 = vmatpush1.bf16.msra.mxu0 %v1074
    %1496 = vmatprep.subr.bf16.mxu0 0
    %1497 = vmatpush1.bf16.msra.mxu0 %v1073
    %1498 = vmatprep.subr.bf16.mxu0 0
    %1499 = vmatpush1.bf16.msra.mxu0 %v1072
    %1500 = vmatprep.subr.bf16.mxu0 0
    %1501 = vmatpush1.bf16.msra.mxu0 %v1071
    %1502 = vmatprep.subr.bf16.mxu0 0
    %1503 = vmatpush1.bf16.msra.mxu0 %v1070
    %1504 = vmatprep.subr.bf16.mxu0 0
    %1505 = vmatpush1.bf16.msra.mxu0 %v1069
    %1506 = vmatprep.subr.bf16.mxu0 0
    %1507 = vmatpush2.bf16.msra.mxu0 %v1084
    %1508 = vmatprep.subr.bf16.mxu0 0
    %1509 = vmatpush2.bf16.msra.mxu0 %v1083
    %1510 = vmatprep.subr.bf16.mxu0 0
    %1511 = vmatpush2.bf16.msra.mxu0 %v1082
    %1512 = vmatprep.subr.bf16.mxu0 0
    %1513 = vmatpush2.bf16.msra.mxu0 %v1081
    %1514 = vmatprep.subr.bf16.mxu0 0
    %1515 = vmatpush2.bf16.msra.mxu0 %v1080
    %1516 = vmatprep.subr.bf16.mxu0 0
    %1517 = vmatpush2.bf16.msra.mxu0 %v1079
    %1518 = vmatprep.subr.bf16.mxu0 0
    %1519 = vmatpush2.bf16.msra.mxu0 %v1078
    %1520 = vmatprep.subr.bf16.mxu0 0
    %1521 = vmatpush2.bf16.msra.mxu0 %v1077
    %1522 = vmatprep.mubr.bf16.mxu0 %v474
    %1523 = vmatmul.mubr.bf16.gmra.mxu0 %v473
    %v1524 = vpop.f32.mrf.mxu0
    %v1525 = vadd.f32 %v1461, %v1524
    %v1526 = vpop.f32.mrf.mxu0
    %v1527 = vpop.f32.mrf.mxu0
    %v1528 = vadd.f32 %v1464, %v1527
    %v1529 = vpop.f32.mrf.mxu0
    %1530 = vmatprep.mubr.bf16.mxu0 %v488
    %1531 = vmatmul.mubr.bf16.gmra.mxu0 %v487
    %v1532 = vpop.f32.mrf.mxu0
    %v1533 = vadd.f32 %v1469, %v1532
    %v1534 = vpop.f32.mrf.mxu0
    %v1535 = vpop.f32.mrf.mxu0
    %v1536 = vadd.f32 %v1472, %v1535
    %v1537 = vpop.f32.mrf.mxu0
    %1538 = vmatprep.mubr.bf16.mxu0 %v502
    %1539 = vmatmul.mubr.bf16.gmra.mxu0 %v501
    %v1540 = vpop.f32.mrf.mxu0
    %v1541 = vadd.f32 %v1477, %v1540
    %v1542 = vpop.f32.mrf.mxu0
    %v1543 = vpop.f32.mrf.mxu0
    %v1544 = vadd.f32 %v1480, %v1543
    %v1545 = vpop.f32.mrf.mxu0
    %1546 = vmatprep.mubr.bf16.mxu0 %v516
    %1547 = vmatmul.mubr.bf16.gmra.mxu0 %v515
    %v1548 = vpop.f32.mrf.mxu0
    %v1549 = vadd.f32 %v1485, %v1548
    %v1550 = vpop.f32.mrf.mxu0
    %v1551 = vpop.f32.mrf.mxu0
    %v1552 = vpop.f32.mrf.mxu0
    %1553 = vdwg.mxu0
    %1554 = vmatprep.subr.bf16.mxu0 0
    %1555 = vmatpush1.bf16.msra.mxu0 %v1092
    %1556 = vmatprep.subr.bf16.mxu0 0
    %1557 = vmatpush1.bf16.msra.mxu0 %v1091
    %1558 = vmatprep.subr.bf16.mxu0 0
    %1559 = vmatpush1.bf16.msra.mxu0 %v1090
    %1560 = vmatprep.subr.bf16.mxu0 0
    %1561 = vmatpush1.bf16.msra.mxu0 %v1089
    %1562 = vmatprep.subr.bf16.mxu0 0
    %1563 = vmatpush1.bf16.msra.mxu0 %v1088
    %1564 = vmatprep.subr.bf16.mxu0 0
    %1565 = vmatpush1.bf16.msra.mxu0 %v1087
    %1566 = vmatprep.subr.bf16.mxu0 0
    %1567 = vmatpush1.bf16.msra.mxu0 %v1086
    %1568 = vmatprep.subr.bf16.mxu0 0
    %1569 = vmatpush1.bf16.msra.mxu0 %v1085
    %1570 = vmatprep.subr.bf16.mxu0 0
    %1571 = vmatpush2.bf16.msra.mxu0 %v1100
    %1572 = vmatprep.subr.bf16.mxu0 0
    %1573 = vmatpush2.bf16.msra.mxu0 %v1099
    %1574 = vmatprep.subr.bf16.mxu0 0
    %1575 = vmatpush2.bf16.msra.mxu0 %v1098
    %1576 = vmatprep.subr.bf16.mxu0 0
    %1577 = vmatpush2.bf16.msra.mxu0 %v1097
    %1578 = vmatprep.subr.bf16.mxu0 0
    %1579 = vmatpush2.bf16.msra.mxu0 %v1096
    %1580 = vmatprep.subr.bf16.mxu0 0
    %1581 = vmatpush2.bf16.msra.mxu0 %v1095
    %1582 = vmatprep.subr.bf16.mxu0 0
    %1583 = vmatpush2.bf16.msra.mxu0 %v1094
    %1584 = vmatprep.subr.bf16.mxu0 0
    %1585 = vmatpush2.bf16.msra.mxu0 %v1093
    %1586 = vmatprep.mubr.bf16.mxu0 %v476
    %1587 = vmatmul.mubr.bf16.gmra.mxu0 %v475
    %v1588 = vpop.f32.mrf.mxu0
    %v1589 = vadd.f32 %v1525, %v1588
    %v1590 = vpop.f32.mrf.mxu0
    %v1591 = vpop.f32.mrf.mxu0
    %v1592 = vadd.f32 %v1528, %v1591
    %v1593 = vpop.f32.mrf.mxu0
    %1594 = vmatprep.mubr.bf16.mxu0 %v490
    %1595 = vmatmul.mubr.bf16.gmra.mxu0 %v489
    %v1596 = vpop.f32.mrf.mxu0
    %v1597 = vadd.f32 %v1533, %v1596
    %v1598 = vpop.f32.mrf.mxu0
    %v1599 = vpop.f32.mrf.mxu0
    %v1600 = vadd.f32 %v1536, %v1599
    %v1601 = vpop.f32.mrf.mxu0
    %1602 = vmatprep.mubr.bf16.mxu0 %v504
    %1603 = vmatmul.mubr.bf16.gmra.mxu0 %v503
    %v1604 = vpop.f32.mrf.mxu0
    %v1605 = vadd.f32 %v1541, %v1604
    %v1606 = vpop.f32.mrf.mxu0
    %v1607 = vpop.f32.mrf.mxu0
    %v1608 = vadd.f32 %v1544, %v1607
    %v1609 = vpop.f32.mrf.mxu0
    %1610 = vmatprep.mubr.bf16.mxu0 %v518
    %1611 = vmatmul.mubr.bf16.gmra.mxu0 %v517
    %v1612 = vpop.f32.mrf.mxu0
    %v1613 = vadd.f32 %v1549, %v1612
    %v1614 = vpop.f32.mrf.mxu0
    %v1615 = vpop.f32.mrf.mxu0
    %v1616 = vpop.f32.mrf.mxu0
    %1617 = vdwg.mxu0
    %1618 = vmatprep.subr.bf16.mxu0 0
    %1619 = vmatpush1.bf16.msra.mxu0 %v1108
    %1620 = vmatprep.subr.bf16.mxu0 0
    %1621 = vmatpush1.bf16.msra.mxu0 %v1107
    %1622 = vmatprep.subr.bf16.mxu0 0
    %1623 = vmatpush1.bf16.msra.mxu0 %v1106
    %1624 = vmatprep.subr.bf16.mxu0 0
    %1625 = vmatpush1.bf16.msra.mxu0 %v1105
    %1626 = vmatprep.subr.bf16.mxu0 0
    %1627 = vmatpush1.bf16.msra.mxu0 %v1104
    %1628 = vmatprep.subr.bf16.mxu0 0
    %1629 = vmatpush1.bf16.msra.mxu0 %v1103
    %1630 = vmatprep.subr.bf16.mxu0 0
    %1631 = vmatpush1.bf16.msra.mxu0 %v1102
    %1632 = vmatprep.subr.bf16.mxu0 0
    %1633 = vmatpush1.bf16.msra.mxu0 %v1101
    %1634 = vmatprep.subr.bf16.mxu0 0
    %1635 = vmatpush2.bf16.msra.mxu0 0
    %1636 = vmatprep.subr.bf16.mxu0 0
    %1637 = vmatpush2.bf16.msra.mxu0 0
    %1638 = vmatprep.subr.bf16.mxu0 0
    %1639 = vmatpush2.bf16.msra.mxu0 0
    %1640 = vmatprep.subr.bf16.mxu0 0
    %1641 = vmatpush2.bf16.msra.mxu0 0
    %1642 = vmatprep.subr.bf16.mxu0 0
    %1643 = vmatpush2.bf16.msra.mxu0 %v1112
    %1644 = vmatprep.subr.bf16.mxu0 0
    %1645 = vmatpush2.bf16.msra.mxu0 %v1111
    %1646 = vmatprep.subr.bf16.mxu0 0
    %1647 = vmatpush2.bf16.msra.mxu0 %v1110
    %1648 = vmatprep.subr.bf16.mxu0 0
    %1649 = vmatpush2.bf16.msra.mxu0 %v1109
    %1650 = vmatprep.mubr.bf16.mxu0 %v1223
    %1651 = vmatmul.mubr.bf16.gmra.mxu0 %v477
    %v1652 = vpop.f32.mrf.mxu0
    %v1653 = vadd.f32 %v1589, %v1652
    %v1654 = vpop.f32.mrf.mxu0
    %v1655 = vpop.f32.mrf.mxu0
    %v1656 = vadd.f32 %v1592, %v1655
    %v1657 = vpop.f32.mrf.mxu0
    %1658 = vmatprep.mubr.bf16.mxu0 %v1226
    %1659 = vmatmul.mubr.bf16.gmra.mxu0 %v491
    %v1660 = vpop.f32.mrf.mxu0
    %v1661 = vadd.f32 %v1597, %v1660
    %v1662 = vpop.f32.mrf.mxu0
    %v1663 = vpop.f32.mrf.mxu0
    %v1664 = vadd.f32 %v1600, %v1663
    %v1665 = vpop.f32.mrf.mxu0
    %1666 = vmatprep.mubr.bf16.mxu0 %v1229
    %1667 = vmatmul.mubr.bf16.gmra.mxu0 %v505
    %v1668 = vpop.f32.mrf.mxu0
    %v1669 = vadd.f32 %v1605, %v1668
    %v1670 = vpop.f32.mrf.mxu0
    %v1671 = vpop.f32.mrf.mxu0
    %v1672 = vadd.f32 %v1608, %v1671
    %v1673 = vpop.f32.mrf.mxu0
    %1674 = vmatprep.mubr.bf16.mxu0 %v1232
    %1675 = vmatmul.mubr.bf16.gmra.mxu0 %v519
    %v1676 = vpop.f32.mrf.mxu0
    %v1677 = vadd.f32 %v1613, %v1676
    %v1678 = vpop.f32.mrf.mxu0
    %v1679 = vpop.f32.mrf.mxu0
    %v1680 = vpop.f32.mrf.mxu0
    %1681 = vdwg.mxu0
    %v1682 = vmax.f32 %v1653, 0.0
    %v1683 = vmax.f32 %v1656, 0.0
    %v1684 = vmax.f32 %v1661, 0.0
    %v1685 = vmax.f32 %v1664, 0.0
    %v1686 = vmax.f32 %v1669, 0.0
    %v1687 = vmax.f32 %v1672, 0.0
    %v1688 = vmax.f32 %v1677, 0.0
    %vm1689 = vcmask 1042432
    %v1690 = vsel %vm1689, %v1685, -inf
    %v1691 = vmax.f32 %v1682, %v1683
    %v1692 = vmax.f32 %v1684, %v1690
    %v1693 = vmax.f32 %v1691, %v1692
    %v1694 = vrot.slane %v1693, 4
    %v1695 = vmax.f32 %v1693, %v1694
    %v1696 = vrot.slane %v1695, 2
    %v1697 = vmax.f32 %v1695, %v1696
    %v1698 = vrot.slane %v1697, 1
    %v1699 = vmax.f32 %v1697, %v1698
    %1700 = vst [vmem:[#allocation2] sm:$0x1] %v1699
    %vm1701 = vcmask 1047555
    %v1702 = vsel %vm1701, %v1685, -inf
    %vm1703 = vcmask 1045504
    %v1704 = vsel %vm1703, %v1688, -inf
    %v1705 = vmax.f32 %v1702, %v1686
    %v1706 = vmax.f32 %v1687, %v1704
    %v1707 = vmax.f32 %v1705, %v1706
    %v1708 = vrot.slane %v1707, 4
    %v1709 = vmax.f32 %v1707, %v1708
    %v1710 = vrot.slane %v1709, 2
    %v1711 = vmax.f32 %v1709, %v1710
    %v1712 = vrot.slane %v1711, 1
    %v1713 = vmax.f32 %v1711, %v1712
    %1714 = vst [vmem:[#allocation2 + $0x1] sm:$0x1] %v1713
    %v1715 = vld [vmem:[#allocation2] sm:$0x3]
    %v1716 = vpack.c.bf16 %v1715, %v1715
    %v1717 = vld [vmem:[%s3] sm:$0xff]
    %v1718 = vld [vmem:[%s3 + $0x8] sm:$0xff]
    %v1719 = vld [vmem:[%s3 + $0x10] sm:$0xff]
    %v1720 = vld [vmem:[%s3 + $0x18] sm:$0xff]
    %v1721 = vld [vmem:[%s3 + $0x20] sm:$0xff]
    %v1722 = vld [vmem:[%s3 + $0x28] sm:$0xff]
    %v1723 = vld [vmem:[%s3 + $0x30] sm:$0xff]
    %v1724 = vld [vmem:[%s3 + $0x38] sm:$0xff]
    %v1725 = vld [vmem:[%s3 + $0x40] sm:$0xff]
    %v1726 = vld [vmem:[%s3 + $0x48] sm:$0xff]
    %v1727 = vld [vmem:[%s3 + $0x50] sm:$0xff]
    %v1728 = vld [vmem:[%s3 + $0x58] sm:$0xff]
    %v1729 = vld [vmem:[%s3 + $0x60] sm:$0xff]
    %v1730 = vld [vmem:[%s3 + $0x68] sm:$0xff]
    %v1731 = vld [vmem:[%s3 + $0x70] sm:$0xff]
    %v1732 = vld [vmem:[%s3 + $0x78] sm:$0xff]
    %v1733 = vld [vmem:[%s4] sm:$0x3]
    %v1735 = vlaneseq
    %v1736 = vshrl.u32 %v1735, 7
    %v1737 = vsub.s32 0, %v1736
    %v1738 = vrot.slane %v1733, %v1737
    %v1739 = vlaneseq
    %v1740 = vshrl.u32 %v1739, 7
    %v1741 = vsub.s32 1, %v1740
    %v1742 = vrot.slane %v1733, %v1741
    %v1761 = vunpack.c.l.b16 %v1717
    %v1762 = vunpack.c.h.b16 %v1717
    %v1763 = vunpack.c.l.b16 %v1718
    %v1764 = vunpack.c.h.b16 %v1718
    %v1765 = vunpack.c.l.b16 %v1719
    %v1766 = vunpack.c.h.b16 %v1719
    %v1767 = vunpack.c.l.b16 %v1720
    %v1768 = vunpack.c.h.b16 %v1720
    %v1769 = vunpack.c.l.b16 %v1721
    %v1770 = vunpack.c.h.b16 %v1721
    %v1771 = vunpack.c.l.b16 %v1722
    %v1772 = vunpack.c.h.b16 %v1722
    %v1773 = vunpack.c.l.b16 %v1723
    %v1774 = vunpack.c.h.b16 %v1723
    %v1775 = vunpack.c.l.b16 %v1724
    %v1776 = vunpack.c.h.b16 %v1724
    %v1777 = vunpack.c.l.b16 %v1725
    %v1778 = vunpack.c.h.b16 %v1725
    %v1779 = vunpack.c.l.b16 %v1726
    %v1780 = vunpack.c.h.b16 %v1726
    %v1781 = vunpack.c.l.b16 %v1727
    %v1782 = vunpack.c.h.b16 %v1727
    %v1783 = vunpack.c.l.b16 %v1728
    %v1784 = vunpack.c.h.b16 %v1728
    %v1785 = vunpack.c.l.b16 %v1729
    %v1786 = vunpack.c.h.b16 %v1729
    %v1787 = vunpack.c.l.b16 %v1730
    %v1788 = vunpack.c.h.b16 %v1730
    %v1789 = vunpack.c.l.b16 %v1731
    %v1790 = vunpack.c.h.b16 %v1731
    %v1791 = vunpack.c.l.b16 %v1732
    %v1792 = vunpack.c.h.b16 %v1732
    %v1793 = vpack.c.b16 %v1763, %v1761
    %v1794 = vpack.c.b16 %v1764, %v1762
    %v1795 = vpack.c.b16 %v1767, %v1765
    %v1796 = vpack.c.b16 %v1768, %v1766
    %v1797 = vpack.c.b16 %v1771, %v1769
    %v1798 = vpack.c.b16 %v1772, %v1770
    %v1799 = vpack.c.b16 %v1775, %v1773
    %v1800 = vpack.c.b16 %v1776, %v1774
    %v1801 = vpack.c.b16 %v1779, %v1777
    %v1802 = vpack.c.b16 %v1780, %v1778
    %v1803 = vpack.c.b16 %v1783, %v1781
    %v1804 = vpack.c.b16 %v1784, %v1782
    %v1805 = vpack.c.b16 %v1787, %v1785
    %v1806 = vpack.c.b16 %v1788, %v1786
    %v1807 = vpack.c.b16 %v1791, %v1789
    %v1808 = vpack.c.b16 %v1792, %v1790
    %1825 = vmatprep.subr.bf16.mxu0 %v1808
    %1826 = vmatpush1.bf16.msra.mxu0 %v1807
    %1827 = vmatprep.subr.bf16.mxu0 %v1806
    %1828 = vmatpush1.bf16.msra.mxu0 %v1805
    %1829 = vmatprep.subr.bf16.mxu0 %v1804
    %1830 = vmatpush1.bf16.msra.mxu0 %v1803
    %1831 = vmatprep.subr.bf16.mxu0 %v1802
    %1832 = vmatpush1.bf16.msra.mxu0 %v1801
    %1833 = vmatprep.subr.bf16.mxu0 %v1800
    %1834 = vmatpush1.bf16.msra.mxu0 %v1799
    %1835 = vmatprep.subr.bf16.mxu0 %v1798
    %1836 = vmatpush1.bf16.msra.mxu0 %v1797
    %1837 = vmatprep.subr.bf16.mxu0 %v1796
    %1838 = vmatpush1.bf16.msra.mxu0 %v1795
    %1839 = vmatprep.subr.bf16.mxu0 %v1794
    %1840 = vmatpush1.bf16.msra.mxu0 %v1793
    %1841 = vmatprep.subr.bf16.mxu0 0
    %1842 = vmatpush2.bf16.msra.mxu0 0
    %1843 = vmatprep.subr.bf16.mxu0 0
    %1844 = vmatpush2.bf16.msra.mxu0 0
    %1845 = vmatprep.subr.bf16.mxu0 0
    %1846 = vmatpush2.bf16.msra.mxu0 0
    %1847 = vmatprep.subr.bf16.mxu0 0
    %1848 = vmatpush2.bf16.msra.mxu0 0
    %1849 = vmatprep.subr.bf16.mxu0 0
    %1850 = vmatpush2.bf16.msra.mxu0 0
    %1851 = vmatprep.subr.bf16.mxu0 0
    %1852 = vmatpush2.bf16.msra.mxu0 0
    %1853 = vmatprep.subr.bf16.mxu0 0
    %1854 = vmatpush2.bf16.msra.mxu0 0
    %1855 = vmatprep.subr.bf16.mxu0 0
    %1856 = vmatpush2.bf16.msra.mxu0 0
    %1857 = vmatprep.mubr.bf16.mxu0 0
    %1858 = vmatmul.mubr.bf16.gmra.mxu0 %v1716
    %v1859 = vpop.f32.mrf.mxu0
    %v1860 = vadd.f32 %v1738, %v1859
    %v1861 = vpop.f32.mrf.mxu0
    %v1862 = vadd.f32 %v1742, %v1861
    %v1863 = vpop.f32.mrf.mxu0
    %v1864 = vpop.f32.mrf.mxu0
    %1865 = vdwg.mxu0
    %v1866 = vmax.f32 %v1860, 0.0
    %v1867 = vmax.f32 %v1862, 0.0
    %v1868 = vpack.c.bf16 %v1866, %v1866
    %v1869 = vpack.c.bf16 %v1867, %v1867
    %v1870 = vld [vmem:[%s5] sm:$0xff]
    %v1871 = vld [vmem:[%s5 + $0x8] sm:$0xff]
    %v1872 = vld [vmem:[%s5 + $0x10] sm:$0xff]
    %v1873 = vld [vmem:[%s5 + $0x18] sm:$0xff]
    %v1874 = vld [vmem:[%s5 + $0x20] sm:$0xff]
    %v1875 = vld [vmem:[%s5 + $0x28] sm:$0xff]
    %v1876 = vld [vmem:[%s5 + $0x30] sm:$0xff]
    %v1877 = vld [vmem:[%s5 + $0x38] sm:$0xff]
    %v1878 = vld [vmem:[%s5 + $0x40] sm:$0xff]
    %v1879 = vld [vmem:[%s5 + $0x48] sm:$0xff]
    %v1880 = vld [vmem:[%s5 + $0x50] sm:$0xff]
    %v1881 = vld [vmem:[%s5 + $0x58] sm:$0xff]
    %v1882 = vld [vmem:[%s5 + $0x60] sm:$0xff]
    %v1883 = vld [vmem:[%s5 + $0x68] sm:$0xff]
    %v1884 = vld [vmem:[%s5 + $0x70] sm:$0xff]
    %v1885 = vld [vmem:[%s5 + $0x78] sm:$0xff]
    %v1886 = vld [vmem:[%s5 + $0x80] sm:$0xff]
    %v1887 = vld [vmem:[%s5 + $0x88] sm:$0xff]
    %v1888 = vld [vmem:[%s5 + $0x90] sm:$0xff]
    %v1889 = vld [vmem:[%s5 + $0x98] sm:$0xff]
    %v1890 = vld [vmem:[%s5 + $0xa0] sm:$0xff]
    %v1891 = vld [vmem:[%s5 + $0xa8] sm:$0xff]
    %v1892 = vld [vmem:[%s5 + $0xb0] sm:$0xff]
    %v1893 = vld [vmem:[%s5 + $0xb8] sm:$0xff]
    %v1894 = vld [vmem:[%s6] sm:$0x3]
    %v1896 = vlaneseq
    %v1897 = vshrl.u32 %v1896, 7
    %v1898 = vsub.s32 0, %v1897
    %v1899 = vrot.slane %v1894, %v1898
    %v1900 = vlaneseq
    %v1901 = vshrl.u32 %v1900, 7
    %v1902 = vsub.s32 1, %v1901
    %v1903 = vrot.slane %v1894, %v1902
    %v1930 = vunpack.c.l.b16 %v1870
    %v1931 = vunpack.c.h.b16 %v1870
    %v1932 = vunpack.c.l.b16 %v1871
    %v1933 = vunpack.c.h.b16 %v1871
    %v1934 = vunpack.c.l.b16 %v1872
    %v1935 = vunpack.c.h.b16 %v1872
    %v1936 = vunpack.c.l.b16 %v1873
    %v1937 = vunpack.c.h.b16 %v1873
    %v1938 = vunpack.c.l.b16 %v1874
    %v1939 = vunpack.c.h.b16 %v1874
    %v1940 = vunpack.c.l.b16 %v1875
    %v1941 = vunpack.c.h.b16 %v1875
    %v1942 = vunpack.c.l.b16 %v1876
    %v1943 = vunpack.c.h.b16 %v1876
    %v1944 = vunpack.c.l.b16 %v1877
    %v1945 = vunpack.c.h.b16 %v1877
    %v1946 = vunpack.c.l.b16 %v1878
    %v1947 = vunpack.c.h.b16 %v1878
    %v1948 = vunpack.c.l.b16 %v1879
    %v1949 = vunpack.c.h.b16 %v1879
    %v1950 = vunpack.c.l.b16 %v1880
    %v1951 = vunpack.c.h.b16 %v1880
    %v1952 = vunpack.c.l.b16 %v1881
    %v1953 = vunpack.c.h.b16 %v1881
    %v1954 = vunpack.c.l.b16 %v1882
    %v1955 = vunpack.c.h.b16 %v1882
    %v1956 = vunpack.c.l.b16 %v1883
    %v1957 = vunpack.c.h.b16 %v1883
    %v1958 = vunpack.c.l.b16 %v1884
    %v1959 = vunpack.c.h.b16 %v1884
    %v1960 = vunpack.c.l.b16 %v1885
    %v1961 = vunpack.c.h.b16 %v1885
    %v1962 = vunpack.c.l.b16 %v1886
    %v1963 = vunpack.c.h.b16 %v1886
    %v1964 = vunpack.c.l.b16 %v1887
    %v1965 = vunpack.c.h.b16 %v1887
    %v1966 = vunpack.c.l.b16 %v1888
    %v1967 = vunpack.c.h.b16 %v1888
    %v1968 = vunpack.c.l.b16 %v1889
    %v1969 = vunpack.c.h.b16 %v1889
    %v1970 = vunpack.c.l.b16 %v1890
    %v1971 = vunpack.c.h.b16 %v1890
    %v1972 = vunpack.c.l.b16 %v1891
    %v1973 = vunpack.c.h.b16 %v1891
    %v1974 = vunpack.c.l.b16 %v1892
    %v1975 = vunpack.c.h.b16 %v1892
    %v1976 = vunpack.c.l.b16 %v1893
    %v1977 = vunpack.c.h.b16 %v1893
    %v1978 = vpack.c.b16 %v1932, %v1930
    %v1979 = vpack.c.b16 %v1933, %v1931
    %v1980 = vpack.c.b16 %v1936, %v1934
    %v1981 = vpack.c.b16 %v1937, %v1935
    %v1982 = vpack.c.b16 %v1940, %v1938
    %v1983 = vpack.c.b16 %v1941, %v1939
    %v1984 = vpack.c.b16 %v1944, %v1942
    %v1985 = vpack.c.b16 %v1945, %v1943
    %v1986 = vpack.c.b16 %v1948, %v1946
    %v1987 = vpack.c.b16 %v1949, %v1947
    %v1988 = vpack.c.b16 %v1952, %v1950
    %v1989 = vpack.c.b16 %v1953, %v1951
    %v1990 = vpack.c.b16 %v1956, %v1954
    %v1991 = vpack.c.b16 %v1957, %v1955
    %v1992 = vpack.c.b16 %v1960, %v1958
    %v1993 = vpack.c.b16 %v1961, %v1959
    %v1994 = vpack.c.b16 %v1964, %v1962
    %v1995 = vpack.c.b16 %v1965, %v1963
    %v1996 = vpack.c.b16 %v1968, %v1966
    %v1997 = vpack.c.b16 %v1969, %v1967
    %v1998 = vpack.c.b16 %v1972, %v1970
    %v1999 = vpack.c.b16 %v1973, %v1971
    %v2000 = vpack.c.b16 %v1976, %v1974
    %v2001 = vpack.c.b16 %v1977, %v1975
    %v2027 = vsel %vm1221, %v1869, 0
    %2029 = vmatprep.subr.bf16.mxu0 %v1993
    %2030 = vmatpush1.bf16.msra.mxu0 %v1992
    %2031 = vmatprep.subr.bf16.mxu0 %v1991
    %2032 = vmatpush1.bf16.msra.mxu0 %v1990
    %2033 = vmatprep.subr.bf16.mxu0 %v1989
    %2034 = vmatpush1.bf16.msra.mxu0 %v1988
    %2035 = vmatprep.subr.bf16.mxu0 %v1987
    %2036 = vmatpush1.bf16.msra.mxu0 %v1986
    %2037 = vmatprep.subr.bf16.mxu0 %v1985
    %2038 = vmatpush1.bf16.msra.mxu0 %v1984
    %2039 = vmatprep.subr.bf16.mxu0 %v1983
    %2040 = vmatpush1.bf16.msra.mxu0 %v1982
    %2041 = vmatprep.subr.bf16.mxu0 %v1981
    %2042 = vmatpush1.bf16.msra.mxu0 %v1980
    %2043 = vmatprep.subr.bf16.mxu0 %v1979
    %2044 = vmatpush1.bf16.msra.mxu0 %v1978
    %2045 = vmatprep.subr.bf16.mxu0 0
    %2046 = vmatpush2.bf16.msra.mxu0 0
    %2047 = vmatprep.subr.bf16.mxu0 0
    %2048 = vmatpush2.bf16.msra.mxu0 0
    %2049 = vmatprep.subr.bf16.mxu0 0
    %2050 = vmatpush2.bf16.msra.mxu0 0
    %2051 = vmatprep.subr.bf16.mxu0 0
    %2052 = vmatpush2.bf16.msra.mxu0 0
    %2053 = vmatprep.subr.bf16.mxu0 %v2001
    %2054 = vmatpush2.bf16.msra.mxu0 %v2000
    %2055 = vmatprep.subr.bf16.mxu0 %v1999
    %2056 = vmatpush2.bf16.msra.mxu0 %v1998
    %2057 = vmatprep.subr.bf16.mxu0 %v1997
    %2058 = vmatpush2.bf16.msra.mxu0 %v1996
    %2059 = vmatprep.subr.bf16.mxu0 %v1995
    %2060 = vmatpush2.bf16.msra.mxu0 %v1994
    %2061 = vmatprep.mubr.bf16.mxu0 %v2027
    %2062 = vmatmul.mubr.bf16.gmra.mxu0 %v1868
    %v2063 = vpop.f32.mrf.mxu0
    %v2064 = vadd.f32 %v1899, %v2063
    %v2065 = vpop.f32.mrf.mxu0
    %v2066 = vadd.f32 %v1903, %v2065
    %v2067 = vpop.f32.mrf.mxu0
    %v2068 = vpop.f32.mrf.mxu0
    %2069 = vdwg.mxu0
    %v2070 = vmax.f32 %v2064, 0.0
    %v2071 = vmax.f32 %v2066, 0.0
    %v2072 = vpack.c.bf16 %v2070, %v2070
    %v2073 = vpack.c.bf16 %v2071, %v2071
    %v2074 = vld [vmem:[%s7] sm:$0xf]
    %v2075 = vld [vmem:[%s7 + $0x4] sm:$0xf]
    %v2076 = vld [vmem:[%s7 + $0x8] sm:$0xf]
    %v2077 = vld [vmem:[%s7 + $0xc] sm:$0xf]
    %v2078 = vld [vmem:[%s7 + $0x10] sm:$0xf]
    %v2079 = vld [vmem:[%s7 + $0x14] sm:$0xf]
    %v2080 = vld [vmem:[%s7 + $0x18] sm:$0xf]
    %v2081 = vld [vmem:[%s7 + $0x1c] sm:$0xf]
    %v2082 = vld [vmem:[%s7 + $0x20] sm:$0xf]
    %v2083 = vld [vmem:[%s7 + $0x24] sm:$0xf]
    %v2084 = vld [vmem:[%s7 + $0x28] sm:$0xf]
    %v2085 = vld [vmem:[%s7 + $0x2c] sm:$0xf]
    %v2086 = vld [vmem:[%s7 + $0x30] sm:$0xf]
    %v2087 = vld [vmem:[%s7 + $0x34] sm:$0xf]
    %v2088 = vld [vmem:[%s7 + $0x38] sm:$0xf]
    %v2089 = vld [vmem:[%s7 + $0x3c] sm:$0xf]
    %v2090 = vld [vmem:[%s7 + $0x40] sm:$0xf]
    %v2091 = vld [vmem:[%s7 + $0x44] sm:$0xf]
    %v2092 = vld [vmem:[%s7 + $0x48] sm:$0xf]
    %v2093 = vld [vmem:[%s7 + $0x4c] sm:$0xf]
    %v2094 = vld [vmem:[%s7 + $0x50] sm:$0xf]
    %v2095 = vld [vmem:[%s7 + $0x54] sm:$0xf]
    %v2096 = vld [vmem:[%s7 + $0x58] sm:$0xf]
    %v2097 = vld [vmem:[%s7 + $0x5c] sm:$0xf]
    %v2098 = vld [vmem:[%s8] sm:$0x1]
    %v2100 = vlaneseq
    %v2101 = vshrl.u32 %v2100, 7
    %v2102 = vsub.s32 0, %v2101
    %v2103 = vrot.slane %v2098, %v2102
    %v2129 = vunpack.c.l.b16 %v2074
    %v2130 = vunpack.c.l.b16 %v2075
    %v2131 = vunpack.c.l.b16 %v2076
    %v2132 = vunpack.c.l.b16 %v2077
    %v2133 = vunpack.c.l.b16 %v2078
    %v2134 = vunpack.c.l.b16 %v2079
    %v2135 = vunpack.c.l.b16 %v2080
    %v2136 = vunpack.c.l.b16 %v2081
    %v2137 = vunpack.c.l.b16 %v2082
    %v2138 = vunpack.c.l.b16 %v2083
    %v2139 = vunpack.c.l.b16 %v2084
    %v2140 = vunpack.c.l.b16 %v2085
    %v2141 = vunpack.c.l.b16 %v2086
    %v2142 = vunpack.c.l.b16 %v2087
    %v2143 = vunpack.c.l.b16 %v2088
    %v2144 = vunpack.c.l.b16 %v2089
    %v2145 = vunpack.c.l.b16 %v2090
    %v2146 = vunpack.c.l.b16 %v2091
    %v2147 = vunpack.c.l.b16 %v2092
    %v2148 = vunpack.c.l.b16 %v2093
    %v2149 = vunpack.c.l.b16 %v2094
    %v2150 = vunpack.c.l.b16 %v2095
    %v2151 = vunpack.c.l.b16 %v2096
    %v2152 = vunpack.c.l.b16 %v2097
    %v2153 = vpack.c.b16 %v2130, %v2129
    %v2154 = vpack.c.b16 %v2132, %v2131
    %v2155 = vpack.c.b16 %v2134, %v2133
    %v2156 = vpack.c.b16 %v2136, %v2135
    %v2157 = vpack.c.b16 %v2138, %v2137
    %v2158 = vpack.c.b16 %v2140, %v2139
    %v2159 = vpack.c.b16 %v2142, %v2141
    %v2160 = vpack.c.b16 %v2144, %v2143
    %v2161 = vpack.c.b16 %v2146, %v2145
    %v2162 = vpack.c.b16 %v2148, %v2147
    %v2163 = vpack.c.b16 %v2150, %v2149
    %v2164 = vpack.c.b16 %v2152, %v2151
    %v2178 = vsel %vm1221, %v2073, 0
    %2180 = vmatprep.subr.bf16.mxu0 0
    %2181 = vmatpush1.bf16.msra.mxu0 %v2160
    %2182 = vmatprep.subr.bf16.mxu0 0
    %2183 = vmatpush1.bf16.msra.mxu0 %v2159
    %2184 = vmatprep.subr.bf16.mxu0 0
    %2185 = vmatpush1.bf16.msra.mxu0 %v2158
    %2186 = vmatprep.subr.bf16.mxu0 0
    %2187 = vmatpush1.bf16.msra.mxu0 %v2157
    %2188 = vmatprep.subr.bf16.mxu0 0
    %2189 = vmatpush1.bf16.msra.mxu0 %v2156
    %2190 = vmatprep.subr.bf16.mxu0 0
    %2191 = vmatpush1.bf16.msra.mxu0 %v2155
    %2192 = vmatprep.subr.bf16.mxu0 0
    %2193 = vmatpush1.bf16.msra.mxu0 %v2154
    %2194 = vmatprep.subr.bf16.mxu0 0
    %2195 = vmatpush1.bf16.msra.mxu0 %v2153
    %2196 = vmatprep.subr.bf16.mxu0 0
    %2197 = vmatpush2.bf16.msra.mxu0 0
    %2198 = vmatprep.subr.bf16.mxu0 0
    %2199 = vmatpush2.bf16.msra.mxu0 0
    %2200 = vmatprep.subr.bf16.mxu0 0
    %2201 = vmatpush2.bf16.msra.mxu0 0
    %2202 = vmatprep.subr.bf16.mxu0 0
    %2203 = vmatpush2.bf16.msra.mxu0 0
    %2204 = vmatprep.subr.bf16.mxu0 0
    %2205 = vmatpush2.bf16.msra.mxu0 %v2164
    %2206 = vmatprep.subr.bf16.mxu0 0
    %2207 = vmatpush2.bf16.msra.mxu0 %v2163
    %2208 = vmatprep.subr.bf16.mxu0 0
    %2209 = vmatpush2.bf16.msra.mxu0 %v2162
    %2210 = vmatprep.subr.bf16.mxu0 0
    %2211 = vmatpush2.bf16.msra.mxu0 %v2161
    %2212 = vmatprep.mubr.bf16.mxu0 %v2178
    %2213 = vmatmul.mubr.bf16.gmra.mxu0 %v2072
    %v2214 = vpop.f32.mrf.mxu0
    %v2215 = vadd.f32 %v2103, %v2214
    %v2216 = vpop.f32.mrf.mxu0
    %v2217 = vpop.f32.mrf.mxu0
    %v2218 = vpop.f32.mrf.mxu0
    %2219 = vdwg.mxu0
    %v2220 = vmax.f32 %v2215, 0.0
    %v2221 = vpack.c.bf16 %v2220, %v2220
    %v2222 = vld [vmem:[%s9] sm:$0xf]
    %v2223 = vld [vmem:[%s9 + $0x4] sm:$0xf]
    %v2224 = vld [vmem:[%s9 + $0x8] sm:$0xf]
    %v2225 = vld [vmem:[%s9 + $0xc] sm:$0xf]
    %v2226 = vld [vmem:[%s9 + $0x10] sm:$0xf]
    %v2227 = vld [vmem:[%s9 + $0x14] sm:$0xf]
    %v2228 = vld [vmem:[%s9 + $0x18] sm:$0xf]
    %v2229 = vld [vmem:[%s9 + $0x1c] sm:$0xf]
    %v2230 = vld [vmem:[%s9 + $0x20] sm:$0xf]
    %v2231 = vld [vmem:[%s9 + $0x24] sm:$0xf]
    %v2232 = vld [vmem:[%s9 + $0x28] sm:$0xf]
    %v2233 = vld [vmem:[%s9 + $0x2c] sm:$0xf]
    %v2234 = vld [vmem:[%s9 + $0x30] sm:$0xf]
    %v2235 = vld [vmem:[%s9 + $0x34] sm:$0xf]
    %v2236 = vld [vmem:[%s9 + $0x38] sm:$0xf]
    %v2237 = vld [vmem:[%s9 + $0x3c] sm:$0xf]
    %v2238 = vld [vmem:[%s10] sm:$0x1]
    %v2240 = vlaneseq
    %v2241 = vshrl.u32 %v2240, 7
    %v2242 = vsub.s32 0, %v2241
    %v2243 = vrot.slane %v2238, %v2242
    %v2261 = vunpack.c.l.b16 %v2222
    %v2262 = vunpack.c.l.b16 %v2223
    %v2263 = vunpack.c.l.b16 %v2224
    %v2264 = vunpack.c.l.b16 %v2225
    %v2265 = vunpack.c.l.b16 %v2226
    %v2266 = vunpack.c.l.b16 %v2227
    %v2267 = vunpack.c.l.b16 %v2228
    %v2268 = vunpack.c.l.b16 %v2229
    %v2269 = vunpack.c.l.b16 %v2230
    %v2270 = vunpack.c.l.b16 %v2231
    %v2271 = vunpack.c.l.b16 %v2232
    %v2272 = vunpack.c.l.b16 %v2233
    %v2273 = vunpack.c.l.b16 %v2234
    %v2274 = vunpack.c.l.b16 %v2235
    %v2275 = vunpack.c.l.b16 %v2236
    %v2276 = vunpack.c.l.b16 %v2237
    %v2277 = vpack.c.b16 %v2262, %v2261
    %v2278 = vpack.c.b16 %v2264, %v2263
    %v2279 = vpack.c.b16 %v2266, %v2265
    %v2280 = vpack.c.b16 %v2268, %v2267
    %v2281 = vpack.c.b16 %v2270, %v2269
    %v2282 = vpack.c.b16 %v2272, %v2271
    %v2283 = vpack.c.b16 %v2274, %v2273
    %v2284 = vpack.c.b16 %v2276, %v2275
    %2293 = vmatprep.subr.bf16.mxu0 0
    %2294 = vmatpush1.bf16.msra.mxu0 %v2284
    %2295 = vmatprep.subr.bf16.mxu0 0
    %2296 = vmatpush1.bf16.msra.mxu0 %v2283
    %2297 = vmatprep.subr.bf16.mxu0 0
    %2298 = vmatpush1.bf16.msra.mxu0 %v2282
    %2299 = vmatprep.subr.bf16.mxu0 0
    %2300 = vmatpush1.bf16.msra.mxu0 %v2281
    %2301 = vmatprep.subr.bf16.mxu0 0
    %2302 = vmatpush1.bf16.msra.mxu0 %v2280
    %2303 = vmatprep.subr.bf16.mxu0 0
    %2304 = vmatpush1.bf16.msra.mxu0 %v2279
    %2305 = vmatprep.subr.bf16.mxu0 0
    %2306 = vmatpush1.bf16.msra.mxu0 %v2278
    %2307 = vmatprep.subr.bf16.mxu0 0
    %2308 = vmatpush1.bf16.msra.mxu0 %v2277
    %2309 = vmatprep.subr.bf16.mxu0 0
    %2310 = vmatpush2.bf16.msra.mxu0 0
    %2311 = vmatprep.subr.bf16.mxu0 0
    %2312 = vmatpush2.bf16.msra.mxu0 0
    %2313 = vmatprep.subr.bf16.mxu0 0
    %2314 = vmatpush2.bf16.msra.mxu0 0
    %2315 = vmatprep.subr.bf16.mxu0 0
    %2316 = vmatpush2.bf16.msra.mxu0 0
    %2317 = vmatprep.subr.bf16.mxu0 0
    %2318 = vmatpush2.bf16.msra.mxu0 0
    %2319 = vmatprep.subr.bf16.mxu0 0
    %2320 = vmatpush2.bf16.msra.mxu0 0
    %2321 = vmatprep.subr.bf16.mxu0 0
    %2322 = vmatpush2.bf16.msra.mxu0 0
    %2323 = vmatprep.subr.bf16.mxu0 0
    %2324 = vmatpush2.bf16.msra.mxu0 0
    %2325 = vmatprep.mubr.bf16.mxu0 0
    %2326 = vmatmul.mubr.bf16.gmra.mxu0 %v2221
    %v2327 = vpop.f32.mrf.mxu0
    %v2328 = vadd.f32 %v2243, %v2327
    %v2329 = vpop.f32.mrf.mxu0
    %v2330 = vpop.f32.mrf.mxu0
    %v2331 = vpop.f32.mrf.mxu0
    %2332 = vdwg.mxu0
    %v2333 = vmax.f32 %v2328, 0.0
    %v2334 = vpack.c.bf16 %v2333, %v2333
    %v2335 = vld [vmem:[%s11] sm:$0xf]
    %v2336 = vld [vmem:[%s11 + $0x4] sm:$0xf]
    %v2337 = vld [vmem:[%s11 + $0x8] sm:$0xf]
    %v2338 = vld [vmem:[%s11 + $0xc] sm:$0xf]
    %v2339 = vld [vmem:[%s11 + $0x10] sm:$0xf]
    %v2340 = vld [vmem:[%s11 + $0x14] sm:$0xf]
    %v2341 = vld [vmem:[%s11 + $0x18] sm:$0xf]
    %v2342 = vld [vmem:[%s11 + $0x1c] sm:$0xf]
    %v2343 = vld [vmem:[%s12] sm:$0x1]
    %v2345 = vlaneseq
    %v2346 = vshrl.u32 %v2345, 7
    %v2347 = vsub.s32 0, %v2346
    %v2348 = vrot.slane %v2343, %v2347
    %v2358 = vunpack.c.l.b16 %v2335
    %v2359 = vunpack.c.l.b16 %v2336
    %v2360 = vunpack.c.l.b16 %v2337
    %v2361 = vunpack.c.l.b16 %v2338
    %v2362 = vunpack.c.l.b16 %v2339
    %v2363 = vunpack.c.l.b16 %v2340
    %v2364 = vunpack.c.l.b16 %v2341
    %v2365 = vunpack.c.l.b16 %v2342
    %v2366 = vpack.c.b16 %v2359, %v2358
    %v2367 = vpack.c.b16 %v2361, %v2360
    %v2368 = vpack.c.b16 %v2363, %v2362
    %v2369 = vpack.c.b16 %v2365, %v2364
    %v2375 = vsel %vm1221, %v2334, 0
    %2377 = vmatprep.subr.bf16.mxu0 0
    %2378 = vmatpush1.bf16.msra.mxu0 0
    %2379 = vmatprep.subr.bf16.mxu0 0
    %2380 = vmatpush1.bf16.msra.mxu0 0
    %2381 = vmatprep.subr.bf16.mxu0 0
    %2382 = vmatpush1.bf16.msra.mxu0 0
    %2383 = vmatprep.subr.bf16.mxu0 0
    %2384 = vmatpush1.bf16.msra.mxu0 0
    %2385 = vmatprep.subr.bf16.mxu0 0
    %2386 = vmatpush1.bf16.msra.mxu0 %v2369
    %2387 = vmatprep.subr.bf16.mxu0 0
    %2388 = vmatpush1.bf16.msra.mxu0 %v2368
    %2389 = vmatprep.subr.bf16.mxu0 0
    %2390 = vmatpush1.bf16.msra.mxu0 %v2367
    %2391 = vmatprep.subr.bf16.mxu0 0
    %2392 = vmatpush1.bf16.msra.mxu0 %v2366
    %2393 = vmatprep.subr.bf16.mxu0 0
    %2394 = vmatpush2.bf16.msra.mxu0 0
    %2395 = vmatprep.subr.bf16.mxu0 0
    %2396 = vmatpush2.bf16.msra.mxu0 0
    %2397 = vmatprep.subr.bf16.mxu0 0
    %2398 = vmatpush2.bf16.msra.mxu0 0
    %2399 = vmatprep.subr.bf16.mxu0 0
    %2400 = vmatpush2.bf16.msra.mxu0 0
    %2401 = vmatprep.subr.bf16.mxu0 0
    %2402 = vmatpush2.bf16.msra.mxu0 0
    %2403 = vmatprep.subr.bf16.mxu0 0
    %2404 = vmatpush2.bf16.msra.mxu0 0
    %2405 = vmatprep.subr.bf16.mxu0 0
    %2406 = vmatpush2.bf16.msra.mxu0 0
    %2407 = vmatprep.subr.bf16.mxu0 0
    %2408 = vmatpush2.bf16.msra.mxu0 0
    %2409 = vmatprep.mubr.bf16.mxu0 0
    %2410 = vmatmul.mubr.bf16.gmra.mxu0 %v2375
    %v2411 = vpop.f32.mrf.mxu0
    %v2412 = vadd.f32 %v2348, %v2411
    %v2413 = vpop.f32.mrf.mxu0
    %v2414 = vpop.f32.mrf.mxu0
    %v2415 = vpop.f32.mrf.mxu0
    %2416 = vdwg.mxu0
    %vm2417 = vcmask 9216
    %2418 = vst.msk [vmem:[#allocation3] sm:$0x3] %vm2417, %v2412
    // Predicated region
    $region54: #{mrinet_forward.5} parent=1 // pred_check
      _
    $region55: #{mrinet_forward.5} parent=1 // pred_check_branch
      %2420 = sbr.rel (0) target = $region57
    $region56: #{mrinet_forward.5} parent=1 // pred_region
      %s2422 = ssub.s32 32, 32
      %2423 = vsyncadd [#allocation4], %s2422
      %s2425 = sshll.u32 [#allocation3], 4
      %s2426 = int_to_ptr.vmem [resolvable:$true] %s2425
      %2428 = dma.vmem_to_hbm [thread:$0]  %s2426, 32, %s13, [#allocation4]
    $region57: #{mrinet_forward.5} parent=1 // pred_fallthru
      _
    // Predicated region
    $region58: #{mrinet_forward.5} parent=1 // pred_check
      _
    $region59: #{mrinet_forward.5} parent=1 // pred_check_branch
      %2430 = sbr.rel (0) target = $region61
    $region60: #{mrinet_forward.5} parent=1 // pred_region
      %2431 = dma.done [#allocation4], 32
    $region61: #{mrinet_forward.5} parent=1 // pred_fallthru
      _
    %2432 = vsyncpa [#allocation4], 1

</llo_original>
